<compile_context>
chip_gen: v7x
topology: tpu7x:2x2x1
jax: 0.10.0
libtpu: 0.0.40
codegen_flags: <defaults>
</compile_context>

<pallas_src>
import functools

import jax
import jax.numpy as jnp
from jax.experimental import pallas as pl
from jax.experimental.pallas import tpu as pltpu

INPUT_SIZE = 3
HIDDEN1 = 32
HIDDEN2 = 64


def _sigmoid(x):
    # sigmoid(x) = 0.5 * tanh(0.5 * x) + 0.5 : one EUP op instead of exp+recip.
    return 0.5 * jnp.tanh(0.5 * x) + 0.5


# ---------------------------------------------------------------------------
# Fused kernel: LSTM1 + LSTM2 + final Linear, single invocation, grid=().
#
# Layouts (gate-major; batch on lanes; kernel gate order [i, f, o, g]):
#   x_ref     (INPUT_SIZE+1, T*B)   columns ordered t*B + b, last row == 1.0
#   w1cat_ref (4*H1, INPUT_SIZE+1)  [W1_ih | b1]
#   w1hh_ref  (4*H1, H1)
#   w2cat_ref (4*H2, H1+H2+1)       [W2_ih | W2_hh | b2]
#   fccat_ref (O_pad, H2+1)         [fc_w | fc_b], zero-padded rows
#   o_ref     (O_pad, B)
# ---------------------------------------------------------------------------
def fused_lstm_kernel(x_ref, w1cat_ref, w1hh_ref, w2cat_ref, fccat_ref, o_ref):
    B = o_ref.shape[1]
    T = x_ref.shape[1] // B
    H1, H2 = HIDDEN1, HIDDEN2
    f32 = jnp.float32

    # ---- Prologue: whole-sequence layer-1 input projection in ONE matmul ----
    # (bias folded via the ones row of x).  Result (4H1, T*B), off the chain.
    xp1_all = jnp.dot(w1cat_ref[...], x_ref[...], preferred_element_type=f32)

    # Loop-invariant values hoisted once.
    w1hh = w1hh_ref[...]
    ones_row = jnp.ones((1, B), f32)

    def cell(gates, c, H):
        # Rows pre-permuted to [i, f, o, g]: one sigmoid over (3H, B),
        # one tanh over (H, B)  -> 3 EUP round trips per cell per step.
        ifo = _sigmoid(gates[0:3 * H])
        g = jnp.tanh(gates[3 * H:4 * H])
        i = ifo[0:H]
        f = ifo[H:2 * H]
        o = ifo[2 * H:3 * H]
        c_new = f * c + i * g
        h_new = o * jnp.tanh(c_new)
        return h_new, c_new

    # Recurrent state lives in vregs as loop carries (no scratch refs).
    h1 = jnp.zeros((H1, B), f32)
    c1 = jnp.zeros((H1, B), f32)
    h2 = jnp.zeros((H2, B), f32)
    c2 = jnp.zeros((H2, B), f32)

    # Fully unrolled recurrence (T small & static).
    for t in range(T):
        # Layer 1: only W_hh @ h is on the serial dependent chain.
        g1 = xp1_all[:, t * B:(t + 1) * B] + jnp.dot(
            w1hh, h1, preferred_element_type=f32)
        h1, c1 = cell(g1, c1, H1)

        # Layer 2: single fused matmul [W_ih | W_hh | b2] @ [h1; h2; 1].
        s = jnp.concatenate([h1, h2, ones_row], axis=0)          # (H1+H2+1, B)
        g2 = jnp.dot(w2cat_ref[...], s, preferred_element_type=f32)
        h2, c2 = cell(g2, c2, H2)

    # Final linear on the last hidden state only (bias folded via ones row).
    h2_aug = jnp.concatenate([h2, ones_row], axis=0)             # (H2+1, B)
    o_ref[...] = jnp.dot(fccat_ref[...], h2_aug,
                         preferred_element_type=f32).astype(o_ref.dtype)


def fused_forward(x_aug, packed, batch):
    """x_aug: (INPUT_SIZE+1, T*B) f32. Returns (O_pad, B) f32."""
    o_pad = packed["fccat"].shape[0]
    vmem = pltpu.MemorySpace.VMEM
    return pl.pallas_call(
        fused_lstm_kernel,
        out_shape=jax.ShapeDtypeStruct((o_pad, batch), jnp.float32),
        in_specs=[pl.BlockSpec(memory_space=vmem)] * 5,
        out_specs=pl.BlockSpec(memory_space=vmem),
    )(x_aug, packed["w1cat"], packed["w1hh"], packed["w2cat"], packed["fccat"])


# ---------------------------------------------------------------------------
# Parameters: PyTorch-layout init + kernel-layout packing.
# ---------------------------------------------------------------------------
def init_params(key, output_size):
    """PyTorch-style params: gate order [i, f, g, o], U(-1/sqrt(H), 1/sqrt(H))."""
    ks = jax.random.split(key, 10)

    def u(k, shape, bound):
        return jax.random.uniform(k, shape, jnp.float32, -bound, bound)

    b1 = 1.0 / jnp.sqrt(HIDDEN1)
    b2 = 1.0 / jnp.sqrt(HIDDEN2)
    bf = 1.0 / jnp.sqrt(HIDDEN2)
    return {
        "l1_w_ih": u(ks[0], (4 * HIDDEN1, INPUT_SIZE), b1),
        "l1_w_hh": u(ks[1], (4 * HIDDEN1, HIDDEN1), b1),
        "l1_b": u(ks[2], (4 * HIDDEN1, 1), b1) + u(ks[3], (4 * HIDDEN1, 1), b1),
        "l2_w_ih": u(ks[4], (4 * HIDDEN2, HIDDEN1), b2),
        "l2_w_hh": u(ks[5], (4 * HIDDEN2, HIDDEN2), b2),
        "l2_b": u(ks[6], (4 * HIDDEN2, 1), b2) + u(ks[7], (4 * HIDDEN2, 1), b2),
        "fc_w": u(ks[8], (output_size, HIDDEN2), bf),
        "fc_b": u(ks[9], (output_size, 1), bf),
    }


def pack_params(p, output_size):
    """Repack PyTorch-layout params into the kernel's fused layout."""

    def perm(a, h):
        # PyTorch gate order [i, f, g, o] -> kernel order [i, f, o, g].
        return jnp.concatenate([a[:2 * h], a[3 * h:4 * h], a[2 * h:3 * h]],
                               axis=0)

    w1cat = jnp.concatenate(
        [perm(p["l1_w_ih"], HIDDEN1), perm(p["l1_b"], HIDDEN1)], axis=1)
    w1hh = perm(p["l1_w_hh"], HIDDEN1)
    w2cat = jnp.concatenate(
        [perm(p["l2_w_ih"], HIDDEN2), perm(p["l2_w_hh"], HIDDEN2),
         perm(p["l2_b"], HIDDEN2)], axis=1)
    o_pad = max(8, ((output_size + 7) // 8) * 8)
    fc = jnp.concatenate([p["fc_w"], p["fc_b"]], axis=1)           # (O, H2+1)
    fccat = jnp.zeros((o_pad, HIDDEN2 + 1), jnp.float32).at[:output_size].set(fc)
    return {"w1cat": w1cat, "w1hh": w1hh, "w2cat": w2cat, "fccat": fccat}


@functools.partial(jax.jit, static_argnames=("output_size",))
def lstm_01_forward(packed, x, *, output_size):
    """x: (B, 1, T, 3) float32 -> (B, output_size) float32."""
    x = jnp.squeeze(x, axis=1)                            # (B, T, 3)
    B, T, _ = x.shape
    x_ftb = jnp.transpose(x, (2, 1, 0))                   # (3, T, B)
    x_flat = x_ftb.reshape(INPUT_SIZE, T * B)             # columns = t*B + b
    x_aug = jnp.concatenate(
        [x_flat, jnp.ones((1, T * B), jnp.float32)], axis=0)
    out = fused_forward(x_aug, packed, B)                 # (O_pad, B)
    return out[:output_size, :].T                         # (B, output_size)


# ---------------------------------------------------------------------------
# Pure-JAX reference (PyTorch semantics) for validation.
# ---------------------------------------------------------------------------
def reference_forward(p, x, output_size):
    x = jnp.squeeze(x, axis=1)                            # (B, T, 3)
    B, T, _ = x.shape

    def run(xs, w_ih, w_hh, b, h_dim):
        h = jnp.zeros((B, h_dim), jnp.float32)
        c = jnp.zeros((B, h_dim), jnp.float32)
        outs = []
        for t in range(T):
            g = xs[:, t] @ w_ih.T + h @ w_hh.T + b[:, 0]
            i = jax.nn.sigmoid(g[:, 0:h_dim])
            f = jax.nn.sigmoid(g[:, h_dim:2 * h_dim])
            gg = jnp.tanh(g[:, 2 * h_dim:3 * h_dim])
            o = jax.nn.sigmoid(g[:, 3 * h_dim:4 * h_dim])
            c = f * c + i * gg
            h = o * jnp.tanh(c)
            outs.append(h)
        return jnp.stack(outs, axis=1)

    o1 = run(x, p["l1_w_ih"], p["l1_w_hh"], p["l1_b"], HIDDEN1)
    o2 = run(o1, p["l2_w_ih"], p["l2_w_hh"], p["l2_b"], HIDDEN2)
    last = o2[:, -1, :]
    return last @ p["fc_w"].T + p["fc_b"][:, 0]


if __name__ == "__main__":
    B, T, OUTPUT_SIZE = 2, 8, 5
    key = jax.random.PRNGKey(0)
    k_param, k_x = jax.random.split(key)

    params = init_params(k_param, OUTPUT_SIZE)
    packed = pack_params(params, OUTPUT_SIZE)
    x = jax.random.normal(k_x, (B, 1, T, INPUT_SIZE), dtype=jnp.float32)

    out = lstm_01_forward(packed, x, output_size=OUTPUT_SIZE)
    jax.block_until_ready(out)
    assert out.shape == (B, OUTPUT_SIZE), out.shape

    ref = reference_forward(params, x, OUTPUT_SIZE)
    assert jnp.allclose(out, ref, rtol=1e-4, atol=1e-4), (
        float(jnp.max(jnp.abs(out - ref))))
    print("KERNEL_OK")
</pallas_src>

<mosaic_0001>
module attributes {stable_mosaic.version = 11 : i64} {
  func.func @fused_lstm_kernel(%arg0: memref<4x16xf32, #tpu.memory_space<vmem>>, %arg1: memref<128x4xf32, #tpu.memory_space<vmem>>, %arg2: memref<128x32xf32, #tpu.memory_space<vmem>>, %arg3: memref<256x97xf32, #tpu.memory_space<vmem>>, %arg4: memref<8x65xf32, #tpu.memory_space<vmem>>, %arg5: memref<8x2xf32, #tpu.memory_space<vmem>>) attributes {dimension_semantics = [], scalar_prefetch = 0 : i64, scratch_operands = 0 : i64, tpu.core_type = #tpu.core_type<tc>} {
    %c0 = arith.constant 0 : index
    %c0_0 = arith.constant 0 : index
    %0 = vector.load %arg1[%c0, %c0_0] : memref<128x4xf32, #tpu.memory_space<vmem>>, vector<128x4xf32>
    %c0_1 = arith.constant 0 : index
    %c0_2 = arith.constant 0 : index
    %1 = vector.load %arg0[%c0_1, %c0_2] : memref<4x16xf32, #tpu.memory_space<vmem>>, vector<4x16xf32>
    %cst = arith.constant dense<0.000000e+00> : vector<128x16xf32>
    %2 = tpu.matmul %0, %1, %cst {dimension_numbers = #tpu.dot_dimension_numbers<[1], [0], [0], [1], [0, 0, 1, 1], [], []>} : vector<128x4xf32>, vector<4x16xf32>, vector<128x16xf32> -> vector<128x16xf32>
    %c0_3 = arith.constant 0 : index
    %c0_4 = arith.constant 0 : index
    %3 = vector.load %arg2[%c0_3, %c0_4] : memref<128x32xf32, #tpu.memory_space<vmem>>, vector<128x32xf32>
    %cst_5 = arith.constant 1.000000e+00 : f32
    %4 = vector.broadcast %cst_5 : f32 to vector<1x2xf32>
    %cst_6 = arith.constant 0.000000e+00 : f32
    %5 = vector.broadcast %cst_6 : f32 to vector<32x2xf32>
    %cst_7 = arith.constant 0.000000e+00 : f32
    %6 = vector.broadcast %cst_7 : f32 to vector<32x2xf32>
    %cst_8 = arith.constant 0.000000e+00 : f32
    %7 = vector.broadcast %cst_8 : f32 to vector<64x2xf32>
    %cst_9 = arith.constant 0.000000e+00 : f32
    %8 = vector.broadcast %cst_9 : f32 to vector<64x2xf32>
    %9 = vector.extract_strided_slice %2 {offsets = [0, 0], sizes = [128, 2], strides = [1, 1]} : vector<128x16xf32> to vector<128x2xf32>
    %cst_10 = arith.constant dense<0.000000e+00> : vector<128x2xf32>
    %10 = tpu.matmul %3, %5, %cst_10 {dimension_numbers = #tpu.dot_dimension_numbers<[1], [0], [0], [1], [0, 0, 1, 1], [], []>} : vector<128x32xf32>, vector<32x2xf32>, vector<128x2xf32> -> vector<128x2xf32>
    %11 = arith.addf %9, %10 : vector<128x2xf32>
    %12 = vector.extract_strided_slice %11 {offsets = [0, 0], sizes = [96, 2], strides = [1, 1]} : vector<128x2xf32> to vector<96x2xf32>
    %cst_11 = arith.constant 5.000000e-01 : f32
    %13 = vector.broadcast %cst_11 : f32 to vector<96x2xf32>
    %14 = arith.mulf %13, %12 : vector<96x2xf32>
    %15 = math.tanh %14 : vector<96x2xf32>
    %cst_12 = arith.constant 5.000000e-01 : f32
    %16 = vector.broadcast %cst_12 : f32 to vector<96x2xf32>
    %17 = arith.mulf %16, %15 : vector<96x2xf32>
    %cst_13 = arith.constant 5.000000e-01 : f32
    %18 = vector.broadcast %cst_13 : f32 to vector<96x2xf32>
    %19 = arith.addf %17, %18 : vector<96x2xf32>
    %20 = vector.extract_strided_slice %11 {offsets = [96, 0], sizes = [32, 2], strides = [1, 1]} : vector<128x2xf32> to vector<32x2xf32>
    %21 = math.tanh %20 : vector<32x2xf32>
    %22 = vector.extract_strided_slice %19 {offsets = [0, 0], sizes = [32, 2], strides = [1, 1]} : vector<96x2xf32> to vector<32x2xf32>
    %23 = vector.extract_strided_slice %19 {offsets = [32, 0], sizes = [32, 2], strides = [1, 1]} : vector<96x2xf32> to vector<32x2xf32>
    %24 = vector.extract_strided_slice %19 {offsets = [64, 0], sizes = [32, 2], strides = [1, 1]} : vector<96x2xf32> to vector<32x2xf32>
    %25 = arith.mulf %23, %6 : vector<32x2xf32>
    %26 = arith.mulf %22, %21 : vector<32x2xf32>
    %27 = arith.addf %25, %26 : vector<32x2xf32>
    %28 = math.tanh %27 : vector<32x2xf32>
    %29 = arith.mulf %24, %28 : vector<32x2xf32>
    %30 = tpu.concatenate %29, %7, %4 in 0 : vector<32x2xf32>, vector<64x2xf32>, vector<1x2xf32> -> vector<97x2xf32>
    %c0_14 = arith.constant 0 : index
    %c0_15 = arith.constant 0 : index
    %31 = vector.load %arg3[%c0_14, %c0_15] : memref<256x97xf32, #tpu.memory_space<vmem>>, vector<256x97xf32>
    %cst_16 = arith.constant dense<0.000000e+00> : vector<256x2xf32>
    %32 = tpu.matmul %31, %30, %cst_16 {dimension_numbers = #tpu.dot_dimension_numbers<[1], [0], [0], [1], [0, 0, 1, 1], [], []>} : vector<256x97xf32>, vector<97x2xf32>, vector<256x2xf32> -> vector<256x2xf32>
    %33 = vector.extract_strided_slice %32 {offsets = [0, 0], sizes = [192, 2], strides = [1, 1]} : vector<256x2xf32> to vector<192x2xf32>
    %cst_17 = arith.constant 5.000000e-01 : f32
    %34 = vector.broadcast %cst_17 : f32 to vector<192x2xf32>
    %35 = arith.mulf %34, %33 : vector<192x2xf32>
    %36 = math.tanh %35 : vector<192x2xf32>
    %cst_18 = arith.constant 5.000000e-01 : f32
    %37 = vector.broadcast %cst_18 : f32 to vector<192x2xf32>
    %38 = arith.mulf %37, %36 : vector<192x2xf32>
    %cst_19 = arith.constant 5.000000e-01 : f32
    %39 = vector.broadcast %cst_19 : f32 to vector<192x2xf32>
    %40 = arith.addf %38, %39 : vector<192x2xf32>
    %41 = vector.extract_strided_slice %32 {offsets = [192, 0], sizes = [64, 2], strides = [1, 1]} : vector<256x2xf32> to vector<64x2xf32>
    %42 = math.tanh %41 : vector<64x2xf32>
    %43 = vector.extract_strided_slice %40 {offsets = [0, 0], sizes = [64, 2], strides = [1, 1]} : vector<192x2xf32> to vector<64x2xf32>
    %44 = vector.extract_strided_slice %40 {offsets = [64, 0], sizes = [64, 2], strides = [1, 1]} : vector<192x2xf32> to vector<64x2xf32>
    %45 = vector.extract_strided_slice %40 {offsets = [128, 0], sizes = [64, 2], strides = [1, 1]} : vector<192x2xf32> to vector<64x2xf32>
    %46 = arith.mulf %44, %8 : vector<64x2xf32>
    %47 = arith.mulf %43, %42 : vector<64x2xf32>
    %48 = arith.addf %46, %47 : vector<64x2xf32>
    %49 = math.tanh %48 : vector<64x2xf32>
    %50 = arith.mulf %45, %49 : vector<64x2xf32>
    %51 = vector.extract_strided_slice %2 {offsets = [0, 2], sizes = [128, 2], strides = [1, 1]} : vector<128x16xf32> to vector<128x2xf32>
    %cst_20 = arith.constant dense<0.000000e+00> : vector<128x2xf32>
    %52 = tpu.matmul %3, %29, %cst_20 {dimension_numbers = #tpu.dot_dimension_numbers<[1], [0], [0], [1], [0, 0, 1, 1], [], []>} : vector<128x32xf32>, vector<32x2xf32>, vector<128x2xf32> -> vector<128x2xf32>
    %53 = arith.addf %51, %52 : vector<128x2xf32>
    %54 = vector.extract_strided_slice %53 {offsets = [0, 0], sizes = [96, 2], strides = [1, 1]} : vector<128x2xf32> to vector<96x2xf32>
    %cst_21 = arith.constant 5.000000e-01 : f32
    %55 = vector.broadcast %cst_21 : f32 to vector<96x2xf32>
    %56 = arith.mulf %55, %54 : vector<96x2xf32>
    %57 = math.tanh %56 : vector<96x2xf32>
    %cst_22 = arith.constant 5.000000e-01 : f32
    %58 = vector.broadcast %cst_22 : f32 to vector<96x2xf32>
    %59 = arith.mulf %58, %57 : vector<96x2xf32>
    %cst_23 = arith.constant 5.000000e-01 : f32
    %60 = vector.broadcast %cst_23 : f32 to vector<96x2xf32>
    %61 = arith.addf %59, %60 : vector<96x2xf32>
    %62 = vector.extract_strided_slice %53 {offsets = [96, 0], sizes = [32, 2], strides = [1, 1]} : vector<128x2xf32> to vector<32x2xf32>
    %63 = math.tanh %62 : vector<32x2xf32>
    %64 = vector.extract_strided_slice %61 {offsets = [0, 0], sizes = [32, 2], strides = [1, 1]} : vector<96x2xf32> to vector<32x2xf32>
    %65 = vector.extract_strided_slice %61 {offsets = [32, 0], sizes = [32, 2], strides = [1, 1]} : vector<96x2xf32> to vector<32x2xf32>
    %66 = vector.extract_strided_slice %61 {offsets = [64, 0], sizes = [32, 2], strides = [1, 1]} : vector<96x2xf32> to vector<32x2xf32>
    %67 = arith.mulf %65, %27 : vector<32x2xf32>
    %68 = arith.mulf %64, %63 : vector<32x2xf32>
    %69 = arith.addf %67, %68 : vector<32x2xf32>
    %70 = math.tanh %69 : vector<32x2xf32>
    %71 = arith.mulf %66, %70 : vector<32x2xf32>
    %72 = tpu.concatenate %71, %50, %4 in 0 : vector<32x2xf32>, vector<64x2xf32>, vector<1x2xf32> -> vector<97x2xf32>
    %c0_24 = arith.constant 0 : index
    %c0_25 = arith.constant 0 : index
    %73 = vector.load %arg3[%c0_24, %c0_25] : memref<256x97xf32, #tpu.memory_space<vmem>>, vector<256x97xf32>
    %cst_26 = arith.constant dense<0.000000e+00> : vector<256x2xf32>
    %74 = tpu.matmul %73, %72, %cst_26 {dimension_numbers = #tpu.dot_dimension_numbers<[1], [0], [0], [1], [0, 0, 1, 1], [], []>} : vector<256x97xf32>, vector<97x2xf32>, vector<256x2xf32> -> vector<256x2xf32>
    %75 = vector.extract_strided_slice %74 {offsets = [0, 0], sizes = [192, 2], strides = [1, 1]} : vector<256x2xf32> to vector<192x2xf32>
    %cst_27 = arith.constant 5.000000e-01 : f32
    %76 = vector.broadcast %cst_27 : f32 to vector<192x2xf32>
    %77 = arith.mulf %76, %75 : vector<192x2xf32>
    %78 = math.tanh %77 : vector<192x2xf32>
    %cst_28 = arith.constant 5.000000e-01 : f32
    %79 = vector.broadcast %cst_28 : f32 to vector<192x2xf32>
    %80 = arith.mulf %79, %78 : vector<192x2xf32>
    %cst_29 = arith.constant 5.000000e-01 : f32
    %81 = vector.broadcast %cst_29 : f32 to vector<192x2xf32>
    %82 = arith.addf %80, %81 : vector<192x2xf32>
    %83 = vector.extract_strided_slice %74 {offsets = [192, 0], sizes = [64, 2], strides = [1, 1]} : vector<256x2xf32> to vector<64x2xf32>
    %84 = math.tanh %83 : vector<64x2xf32>
    %85 = vector.extract_strided_slice %82 {offsets = [0, 0], sizes = [64, 2], strides = [1, 1]} : vector<192x2xf32> to vector<64x2xf32>
    %86 = vector.extract_strided_slice %82 {offsets = [64, 0], sizes = [64, 2], strides = [1, 1]} : vector<192x2xf32> to vector<64x2xf32>
    %87 = vector.extract_strided_slice %82 {offsets = [128, 0], sizes = [64, 2], strides = [1, 1]} : vector<192x2xf32> to vector<64x2xf32>
    %88 = arith.mulf %86, %48 : vector<64x2xf32>
    %89 = arith.mulf %85, %84 : vector<64x2xf32>
    %90 = arith.addf %88, %89 : vector<64x2xf32>
    %91 = math.tanh %90 : vector<64x2xf32>
    %92 = arith.mulf %87, %91 : vector<64x2xf32>
    %93 = vector.extract_strided_slice %2 {offsets = [0, 4], sizes = [128, 2], strides = [1, 1]} : vector<128x16xf32> to vector<128x2xf32>
    %cst_30 = arith.constant dense<0.000000e+00> : vector<128x2xf32>
    %94 = tpu.matmul %3, %71, %cst_30 {dimension_numbers = #tpu.dot_dimension_numbers<[1], [0], [0], [1], [0, 0, 1, 1], [], []>} : vector<128x32xf32>, vector<32x2xf32>, vector<128x2xf32> -> vector<128x2xf32>
    %95 = arith.addf %93, %94 : vector<128x2xf32>
    %96 = vector.extract_strided_slice %95 {offsets = [0, 0], sizes = [96, 2], strides = [1, 1]} : vector<128x2xf32> to vector<96x2xf32>
    %cst_31 = arith.constant 5.000000e-01 : f32
    %97 = vector.broadcast %cst_31 : f32 to vector<96x2xf32>
    %98 = arith.mulf %97, %96 : vector<96x2xf32>
    %99 = math.tanh %98 : vector<96x2xf32>
    %cst_32 = arith.constant 5.000000e-01 : f32
    %100 = vector.broadcast %cst_32 : f32 to vector<96x2xf32>
    %101 = arith.mulf %100, %99 : vector<96x2xf32>
    %cst_33 = arith.constant 5.000000e-01 : f32
    %102 = vector.broadcast %cst_33 : f32 to vector<96x2xf32>
    %103 = arith.addf %101, %102 : vector<96x2xf32>
    %104 = vector.extract_strided_slice %95 {offsets = [96, 0], sizes = [32, 2], strides = [1, 1]} : vector<128x2xf32> to vector<32x2xf32>
    %105 = math.tanh %104 : vector<32x2xf32>
    %106 = vector.extract_strided_slice %103 {offsets = [0, 0], sizes = [32, 2], strides = [1, 1]} : vector<96x2xf32> to vector<32x2xf32>
    %107 = vector.extract_strided_slice %103 {offsets = [32, 0], sizes = [32, 2], strides = [1, 1]} : vector<96x2xf32> to vector<32x2xf32>
    %108 = vector.extract_strided_slice %103 {offsets = [64, 0], sizes = [32, 2], strides = [1, 1]} : vector<96x2xf32> to vector<32x2xf32>
    %109 = arith.mulf %107, %69 : vector<32x2xf32>
    %110 = arith.mulf %106, %105 : vector<32x2xf32>
    %111 = arith.addf %109, %110 : vector<32x2xf32>
    %112 = math.tanh %111 : vector<32x2xf32>
    %113 = arith.mulf %108, %112 : vector<32x2xf32>
    %114 = tpu.concatenate %113, %92, %4 in 0 : vector<32x2xf32>, vector<64x2xf32>, vector<1x2xf32> -> vector<97x2xf32>
    %c0_34 = arith.constant 0 : index
    %c0_35 = arith.constant 0 : index
    %115 = vector.load %arg3[%c0_34, %c0_35] : memref<256x97xf32, #tpu.memory_space<vmem>>, vector<256x97xf32>
    %cst_36 = arith.constant dense<0.000000e+00> : vector<256x2xf32>
    %116 = tpu.matmul %115, %114, %cst_36 {dimension_numbers = #tpu.dot_dimension_numbers<[1], [0], [0], [1], [0, 0, 1, 1], [], []>} : vector<256x97xf32>, vector<97x2xf32>, vector<256x2xf32> -> vector<256x2xf32>
    %117 = vector.extract_strided_slice %116 {offsets = [0, 0], sizes = [192, 2], strides = [1, 1]} : vector<256x2xf32> to vector<192x2xf32>
    %cst_37 = arith.constant 5.000000e-01 : f32
    %118 = vector.broadcast %cst_37 : f32 to vector<192x2xf32>
    %119 = arith.mulf %118, %117 : vector<192x2xf32>
    %120 = math.tanh %119 : vector<192x2xf32>
    %cst_38 = arith.constant 5.000000e-01 : f32
    %121 = vector.broadcast %cst_38 : f32 to vector<192x2xf32>
    %122 = arith.mulf %121, %120 : vector<192x2xf32>
    %cst_39 = arith.constant 5.000000e-01 : f32
    %123 = vector.broadcast %cst_39 : f32 to vector<192x2xf32>
    %124 = arith.addf %122, %123 : vector<192x2xf32>
    %125 = vector.extract_strided_slice %116 {offsets = [192, 0], sizes = [64, 2], strides = [1, 1]} : vector<256x2xf32> to vector<64x2xf32>
    %126 = math.tanh %125 : vector<64x2xf32>
    %127 = vector.extract_strided_slice %124 {offsets = [0, 0], sizes = [64, 2], strides = [1, 1]} : vector<192x2xf32> to vector<64x2xf32>
    %128 = vector.extract_strided_slice %124 {offsets = [64, 0], sizes = [64, 2], strides = [1, 1]} : vector<192x2xf32> to vector<64x2xf32>
    %129 = vector.extract_strided_slice %124 {offsets = [128, 0], sizes = [64, 2], strides = [1, 1]} : vector<192x2xf32> to vector<64x2xf32>
    %130 = arith.mulf %128, %90 : vector<64x2xf32>
    %131 = arith.mulf %127, %126 : vector<64x2xf32>
    %132 = arith.addf %130, %131 : vector<64x2xf32>
    %133 = math.tanh %132 : vector<64x2xf32>
    %134 = arith.mulf %129, %133 : vector<64x2xf32>
    %135 = vector.extract_strided_slice %2 {offsets = [0, 6], sizes = [128, 2], strides = [1, 1]} : vector<128x16xf32> to vector<128x2xf32>
    %cst_40 = arith.constant dense<0.000000e+00> : vector<128x2xf32>
    %136 = tpu.matmul %3, %113, %cst_40 {dimension_numbers = #tpu.dot_dimension_numbers<[1], [0], [0], [1], [0, 0, 1, 1], [], []>} : vector<128x32xf32>, vector<32x2xf32>, vector<128x2xf32> -> vector<128x2xf32>
    %137 = arith.addf %135, %136 : vector<128x2xf32>
    %138 = vector.extract_strided_slice %137 {offsets = [0, 0], sizes = [96, 2], strides = [1, 1]} : vector<128x2xf32> to vector<96x2xf32>
    %cst_41 = arith.constant 5.000000e-01 : f32
    %139 = vector.broadcast %cst_41 : f32 to vector<96x2xf32>
    %140 = arith.mulf %139, %138 : vector<96x2xf32>
    %141 = math.tanh %140 : vector<96x2xf32>
    %cst_42 = arith.constant 5.000000e-01 : f32
    %142 = vector.broadcast %cst_42 : f32 to vector<96x2xf32>
    %143 = arith.mulf %142, %141 : vector<96x2xf32>
    %cst_43 = arith.constant 5.000000e-01 : f32
    %144 = vector.broadcast %cst_43 : f32 to vector<96x2xf32>
    %145 = arith.addf %143, %144 : vector<96x2xf32>
    %146 = vector.extract_strided_slice %137 {offsets = [96, 0], sizes = [32, 2], strides = [1, 1]} : vector<128x2xf32> to vector<32x2xf32>
    %147 = math.tanh %146 : vector<32x2xf32>
    %148 = vector.extract_strided_slice %145 {offsets = [0, 0], sizes = [32, 2], strides = [1, 1]} : vector<96x2xf32> to vector<32x2xf32>
    %149 = vector.extract_strided_slice %145 {offsets = [32, 0], sizes = [32, 2], strides = [1, 1]} : vector<96x2xf32> to vector<32x2xf32>
    %150 = vector.extract_strided_slice %145 {offsets = [64, 0], sizes = [32, 2], strides = [1, 1]} : vector<96x2xf32> to vector<32x2xf32>
    %151 = arith.mulf %149, %111 : vector<32x2xf32>
    %152 = arith.mulf %148, %147 : vector<32x2xf32>
    %153 = arith.addf %151, %152 : vector<32x2xf32>
    %154 = math.tanh %153 : vector<32x2xf32>
    %155 = arith.mulf %150, %154 : vector<32x2xf32>
    %156 = tpu.concatenate %155, %134, %4 in 0 : vector<32x2xf32>, vector<64x2xf32>, vector<1x2xf32> -> vector<97x2xf32>
    %c0_44 = arith.constant 0 : index
    %c0_45 = arith.constant 0 : index
    %157 = vector.load %arg3[%c0_44, %c0_45] : memref<256x97xf32, #tpu.memory_space<vmem>>, vector<256x97xf32>
    %cst_46 = arith.constant dense<0.000000e+00> : vector<256x2xf32>
    %158 = tpu.matmul %157, %156, %cst_46 {dimension_numbers = #tpu.dot_dimension_numbers<[1], [0], [0], [1], [0, 0, 1, 1], [], []>} : vector<256x97xf32>, vector<97x2xf32>, vector<256x2xf32> -> vector<256x2xf32>
    %159 = vector.extract_strided_slice %158 {offsets = [0, 0], sizes = [192, 2], strides = [1, 1]} : vector<256x2xf32> to vector<192x2xf32>
    %cst_47 = arith.constant 5.000000e-01 : f32
    %160 = vector.broadcast %cst_47 : f32 to vector<192x2xf32>
    %161 = arith.mulf %160, %159 : vector<192x2xf32>
    %162 = math.tanh %161 : vector<192x2xf32>
    %cst_48 = arith.constant 5.000000e-01 : f32
    %163 = vector.broadcast %cst_48 : f32 to vector<192x2xf32>
    %164 = arith.mulf %163, %162 : vector<192x2xf32>
    %cst_49 = arith.constant 5.000000e-01 : f32
    %165 = vector.broadcast %cst_49 : f32 to vector<192x2xf32>
    %166 = arith.addf %164, %165 : vector<192x2xf32>
    %167 = vector.extract_strided_slice %158 {offsets = [192, 0], sizes = [64, 2], strides = [1, 1]} : vector<256x2xf32> to vector<64x2xf32>
    %168 = math.tanh %167 : vector<64x2xf32>
    %169 = vector.extract_strided_slice %166 {offsets = [0, 0], sizes = [64, 2], strides = [1, 1]} : vector<192x2xf32> to vector<64x2xf32>
    %170 = vector.extract_strided_slice %166 {offsets = [64, 0], sizes = [64, 2], strides = [1, 1]} : vector<192x2xf32> to vector<64x2xf32>
    %171 = vector.extract_strided_slice %166 {offsets = [128, 0], sizes = [64, 2], strides = [1, 1]} : vector<192x2xf32> to vector<64x2xf32>
    %172 = arith.mulf %170, %132 : vector<64x2xf32>
    %173 = arith.mulf %169, %168 : vector<64x2xf32>
    %174 = arith.addf %172, %173 : vector<64x2xf32>
    %175 = math.tanh %174 : vector<64x2xf32>
    %176 = arith.mulf %171, %175 : vector<64x2xf32>
    %177 = vector.extract_strided_slice %2 {offsets = [0, 8], sizes = [128, 2], strides = [1, 1]} : vector<128x16xf32> to vector<128x2xf32>
    %cst_50 = arith.constant dense<0.000000e+00> : vector<128x2xf32>
    %178 = tpu.matmul %3, %155, %cst_50 {dimension_numbers = #tpu.dot_dimension_numbers<[1], [0], [0], [1], [0, 0, 1, 1], [], []>} : vector<128x32xf32>, vector<32x2xf32>, vector<128x2xf32> -> vector<128x2xf32>
    %179 = arith.addf %177, %178 : vector<128x2xf32>
    %180 = vector.extract_strided_slice %179 {offsets = [0, 0], sizes = [96, 2], strides = [1, 1]} : vector<128x2xf32> to vector<96x2xf32>
    %cst_51 = arith.constant 5.000000e-01 : f32
    %181 = vector.broadcast %cst_51 : f32 to vector<96x2xf32>
    %182 = arith.mulf %181, %180 : vector<96x2xf32>
    %183 = math.tanh %182 : vector<96x2xf32>
    %cst_52 = arith.constant 5.000000e-01 : f32
    %184 = vector.broadcast %cst_52 : f32 to vector<96x2xf32>
    %185 = arith.mulf %184, %183 : vector<96x2xf32>
    %cst_53 = arith.constant 5.000000e-01 : f32
    %186 = vector.broadcast %cst_53 : f32 to vector<96x2xf32>
    %187 = arith.addf %185, %186 : vector<96x2xf32>
    %188 = vector.extract_strided_slice %179 {offsets = [96, 0], sizes = [32, 2], strides = [1, 1]} : vector<128x2xf32> to vector<32x2xf32>
    %189 = math.tanh %188 : vector<32x2xf32>
    %190 = vector.extract_strided_slice %187 {offsets = [0, 0], sizes = [32, 2], strides = [1, 1]} : vector<96x2xf32> to vector<32x2xf32>
    %191 = vector.extract_strided_slice %187 {offsets = [32, 0], sizes = [32, 2], strides = [1, 1]} : vector<96x2xf32> to vector<32x2xf32>
    %192 = vector.extract_strided_slice %187 {offsets = [64, 0], sizes = [32, 2], strides = [1, 1]} : vector<96x2xf32> to vector<32x2xf32>
    %193 = arith.mulf %191, %153 : vector<32x2xf32>
    %194 = arith.mulf %190, %189 : vector<32x2xf32>
    %195 = arith.addf %193, %194 : vector<32x2xf32>
    %196 = math.tanh %195 : vector<32x2xf32>
    %197 = arith.mulf %192, %196 : vector<32x2xf32>
    %198 = tpu.concatenate %197, %176, %4 in 0 : vector<32x2xf32>, vector<64x2xf32>, vector<1x2xf32> -> vector<97x2xf32>
    %c0_54 = arith.constant 0 : index
    %c0_55 = arith.constant 0 : index
    %199 = vector.load %arg3[%c0_54, %c0_55] : memref<256x97xf32, #tpu.memory_space<vmem>>, vector<256x97xf32>
    %cst_56 = arith.constant dense<0.000000e+00> : vector<256x2xf32>
    %200 = tpu.matmul %199, %198, %cst_56 {dimension_numbers = #tpu.dot_dimension_numbers<[1], [0], [0], [1], [0, 0, 1, 1], [], []>} : vector<256x97xf32>, vector<97x2xf32>, vector<256x2xf32> -> vector<256x2xf32>
    %201 = vector.extract_strided_slice %200 {offsets = [0, 0], sizes = [192, 2], strides = [1, 1]} : vector<256x2xf32> to vector<192x2xf32>
    %cst_57 = arith.constant 5.000000e-01 : f32
    %202 = vector.broadcast %cst_57 : f32 to vector<192x2xf32>
    %203 = arith.mulf %202, %201 : vector<192x2xf32>
    %204 = math.tanh %203 : vector<192x2xf32>
    %cst_58 = arith.constant 5.000000e-01 : f32
    %205 = vector.broadcast %cst_58 : f32 to vector<192x2xf32>
    %206 = arith.mulf %205, %204 : vector<192x2xf32>
    %cst_59 = arith.constant 5.000000e-01 : f32
    %207 = vector.broadcast %cst_59 : f32 to vector<192x2xf32>
    %208 = arith.addf %206, %207 : vector<192x2xf32>
    %209 = vector.extract_strided_slice %200 {offsets = [192, 0], sizes = [64, 2], strides = [1, 1]} : vector<256x2xf32> to vector<64x2xf32>
    %210 = math.tanh %209 : vector<64x2xf32>
    %211 = vector.extract_strided_slice %208 {offsets = [0, 0], sizes = [64, 2], strides = [1, 1]} : vector<192x2xf32> to vector<64x2xf32>
    %212 = vector.extract_strided_slice %208 {offsets = [64, 0], sizes = [64, 2], strides = [1, 1]} : vector<192x2xf32> to vector<64x2xf32>
    %213 = vector.extract_strided_slice %208 {offsets = [128, 0], sizes = [64, 2], strides = [1, 1]} : vector<192x2xf32> to vector<64x2xf32>
    %214 = arith.mulf %212, %174 : vector<64x2xf32>
    %215 = arith.mulf %211, %210 : vector<64x2xf32>
    %216 = arith.addf %214, %215 : vector<64x2xf32>
    %217 = math.tanh %216 : vector<64x2xf32>
    %218 = arith.mulf %213, %217 : vector<64x2xf32>
    %219 = vector.extract_strided_slice %2 {offsets = [0, 10], sizes = [128, 2], strides = [1, 1]} : vector<128x16xf32> to vector<128x2xf32>
    %cst_60 = arith.constant dense<0.000000e+00> : vector<128x2xf32>
    %220 = tpu.matmul %3, %197, %cst_60 {dimension_numbers = #tpu.dot_dimension_numbers<[1], [0], [0], [1], [0, 0, 1, 1], [], []>} : vector<128x32xf32>, vector<32x2xf32>, vector<128x2xf32> -> vector<128x2xf32>
    %221 = arith.addf %219, %220 : vector<128x2xf32>
    %222 = vector.extract_strided_slice %221 {offsets = [0, 0], sizes = [96, 2], strides = [1, 1]} : vector<128x2xf32> to vector<96x2xf32>
    %cst_61 = arith.constant 5.000000e-01 : f32
    %223 = vector.broadcast %cst_61 : f32 to vector<96x2xf32>
    %224 = arith.mulf %223, %222 : vector<96x2xf32>
    %225 = math.tanh %224 : vector<96x2xf32>
    %cst_62 = arith.constant 5.000000e-01 : f32
    %226 = vector.broadcast %cst_62 : f32 to vector<96x2xf32>
    %227 = arith.mulf %226, %225 : vector<96x2xf32>
    %cst_63 = arith.constant 5.000000e-01 : f32
    %228 = vector.broadcast %cst_63 : f32 to vector<96x2xf32>
    %229 = arith.addf %227, %228 : vector<96x2xf32>
    %230 = vector.extract_strided_slice %221 {offsets = [96, 0], sizes = [32, 2], strides = [1, 1]} : vector<128x2xf32> to vector<32x2xf32>
    %231 = math.tanh %230 : vector<32x2xf32>
    %232 = vector.extract_strided_slice %229 {offsets = [0, 0], sizes = [32, 2], strides = [1, 1]} : vector<96x2xf32> to vector<32x2xf32>
    %233 = vector.extract_strided_slice %229 {offsets = [32, 0], sizes = [32, 2], strides = [1, 1]} : vector<96x2xf32> to vector<32x2xf32>
    %234 = vector.extract_strided_slice %229 {offsets = [64, 0], sizes = [32, 2], strides = [1, 1]} : vector<96x2xf32> to vector<32x2xf32>
    %235 = arith.mulf %233, %195 : vector<32x2xf32>
    %236 = arith.mulf %232, %231 : vector<32x2xf32>
    %237 = arith.addf %235, %236 : vector<32x2xf32>
    %238 = math.tanh %237 : vector<32x2xf32>
    %239 = arith.mulf %234, %238 : vector<32x2xf32>
    %240 = tpu.concatenate %239, %218, %4 in 0 : vector<32x2xf32>, vector<64x2xf32>, vector<1x2xf32> -> vector<97x2xf32>
    %c0_64 = arith.constant 0 : index
    %c0_65 = arith.constant 0 : index
    %241 = vector.load %arg3[%c0_64, %c0_65] : memref<256x97xf32, #tpu.memory_space<vmem>>, vector<256x97xf32>
    %cst_66 = arith.constant dense<0.000000e+00> : vector<256x2xf32>
    %242 = tpu.matmul %241, %240, %cst_66 {dimension_numbers = #tpu.dot_dimension_numbers<[1], [0], [0], [1], [0, 0, 1, 1], [], []>} : vector<256x97xf32>, vector<97x2xf32>, vector<256x2xf32> -> vector<256x2xf32>
    %243 = vector.extract_strided_slice %242 {offsets = [0, 0], sizes = [192, 2], strides = [1, 1]} : vector<256x2xf32> to vector<192x2xf32>
    %cst_67 = arith.constant 5.000000e-01 : f32
    %244 = vector.broadcast %cst_67 : f32 to vector<192x2xf32>
    %245 = arith.mulf %244, %243 : vector<192x2xf32>
    %246 = math.tanh %245 : vector<192x2xf32>
    %cst_68 = arith.constant 5.000000e-01 : f32
    %247 = vector.broadcast %cst_68 : f32 to vector<192x2xf32>
    %248 = arith.mulf %247, %246 : vector<192x2xf32>
    %cst_69 = arith.constant 5.000000e-01 : f32
    %249 = vector.broadcast %cst_69 : f32 to vector<192x2xf32>
    %250 = arith.addf %248, %249 : vector<192x2xf32>
    %251 = vector.extract_strided_slice %242 {offsets = [192, 0], sizes = [64, 2], strides = [1, 1]} : vector<256x2xf32> to vector<64x2xf32>
    %252 = math.tanh %251 : vector<64x2xf32>
    %253 = vector.extract_strided_slice %250 {offsets = [0, 0], sizes = [64, 2], strides = [1, 1]} : vector<192x2xf32> to vector<64x2xf32>
    %254 = vector.extract_strided_slice %250 {offsets = [64, 0], sizes = [64, 2], strides = [1, 1]} : vector<192x2xf32> to vector<64x2xf32>
    %255 = vector.extract_strided_slice %250 {offsets = [128, 0], sizes = [64, 2], strides = [1, 1]} : vector<192x2xf32> to vector<64x2xf32>
    %256 = arith.mulf %254, %216 : vector<64x2xf32>
    %257 = arith.mulf %253, %252 : vector<64x2xf32>
    %258 = arith.addf %256, %257 : vector<64x2xf32>
    %259 = math.tanh %258 : vector<64x2xf32>
    %260 = arith.mulf %255, %259 : vector<64x2xf32>
    %261 = vector.extract_strided_slice %2 {offsets = [0, 12], sizes = [128, 2], strides = [1, 1]} : vector<128x16xf32> to vector<128x2xf32>
    %cst_70 = arith.constant dense<0.000000e+00> : vector<128x2xf32>
    %262 = tpu.matmul %3, %239, %cst_70 {dimension_numbers = #tpu.dot_dimension_numbers<[1], [0], [0], [1], [0, 0, 1, 1], [], []>} : vector<128x32xf32>, vector<32x2xf32>, vector<128x2xf32> -> vector<128x2xf32>
    %263 = arith.addf %261, %262 : vector<128x2xf32>
    %264 = vector.extract_strided_slice %263 {offsets = [0, 0], sizes = [96, 2], strides = [1, 1]} : vector<128x2xf32> to vector<96x2xf32>
    %cst_71 = arith.constant 5.000000e-01 : f32
    %265 = vector.broadcast %cst_71 : f32 to vector<96x2xf32>
    %266 = arith.mulf %265, %264 : vector<96x2xf32>
    %267 = math.tanh %266 : vector<96x2xf32>
    %cst_72 = arith.constant 5.000000e-01 : f32
    %268 = vector.broadcast %cst_72 : f32 to vector<96x2xf32>
    %269 = arith.mulf %268, %267 : vector<96x2xf32>
    %cst_73 = arith.constant 5.000000e-01 : f32
    %270 = vector.broadcast %cst_73 : f32 to vector<96x2xf32>
    %271 = arith.addf %269, %270 : vector<96x2xf32>
    %272 = vector.extract_strided_slice %263 {offsets = [96, 0], sizes = [32, 2], strides = [1, 1]} : vector<128x2xf32> to vector<32x2xf32>
    %273 = math.tanh %272 : vector<32x2xf32>
    %274 = vector.extract_strided_slice %271 {offsets = [0, 0], sizes = [32, 2], strides = [1, 1]} : vector<96x2xf32> to vector<32x2xf32>
    %275 = vector.extract_strided_slice %271 {offsets = [32, 0], sizes = [32, 2], strides = [1, 1]} : vector<96x2xf32> to vector<32x2xf32>
    %276 = vector.extract_strided_slice %271 {offsets = [64, 0], sizes = [32, 2], strides = [1, 1]} : vector<96x2xf32> to vector<32x2xf32>
    %277 = arith.mulf %275, %237 : vector<32x2xf32>
    %278 = arith.mulf %274, %273 : vector<32x2xf32>
    %279 = arith.addf %277, %278 : vector<32x2xf32>
    %280 = math.tanh %279 : vector<32x2xf32>
    %281 = arith.mulf %276, %280 : vector<32x2xf32>
    %282 = tpu.concatenate %281, %260, %4 in 0 : vector<32x2xf32>, vector<64x2xf32>, vector<1x2xf32> -> vector<97x2xf32>
    %c0_74 = arith.constant 0 : index
    %c0_75 = arith.constant 0 : index
    %283 = vector.load %arg3[%c0_74, %c0_75] : memref<256x97xf32, #tpu.memory_space<vmem>>, vector<256x97xf32>
    %cst_76 = arith.constant dense<0.000000e+00> : vector<256x2xf32>
    %284 = tpu.matmul %283, %282, %cst_76 {dimension_numbers = #tpu.dot_dimension_numbers<[1], [0], [0], [1], [0, 0, 1, 1], [], []>} : vector<256x97xf32>, vector<97x2xf32>, vector<256x2xf32> -> vector<256x2xf32>
    %285 = vector.extract_strided_slice %284 {offsets = [0, 0], sizes = [192, 2], strides = [1, 1]} : vector<256x2xf32> to vector<192x2xf32>
    %cst_77 = arith.constant 5.000000e-01 : f32
    %286 = vector.broadcast %cst_77 : f32 to vector<192x2xf32>
    %287 = arith.mulf %286, %285 : vector<192x2xf32>
    %288 = math.tanh %287 : vector<192x2xf32>
    %cst_78 = arith.constant 5.000000e-01 : f32
    %289 = vector.broadcast %cst_78 : f32 to vector<192x2xf32>
    %290 = arith.mulf %289, %288 : vector<192x2xf32>
    %cst_79 = arith.constant 5.000000e-01 : f32
    %291 = vector.broadcast %cst_79 : f32 to vector<192x2xf32>
    %292 = arith.addf %290, %291 : vector<192x2xf32>
    %293 = vector.extract_strided_slice %284 {offsets = [192, 0], sizes = [64, 2], strides = [1, 1]} : vector<256x2xf32> to vector<64x2xf32>
    %294 = math.tanh %293 : vector<64x2xf32>
    %295 = vector.extract_strided_slice %292 {offsets = [0, 0], sizes = [64, 2], strides = [1, 1]} : vector<192x2xf32> to vector<64x2xf32>
    %296 = vector.extract_strided_slice %292 {offsets = [64, 0], sizes = [64, 2], strides = [1, 1]} : vector<192x2xf32> to vector<64x2xf32>
    %297 = vector.extract_strided_slice %292 {offsets = [128, 0], sizes = [64, 2], strides = [1, 1]} : vector<192x2xf32> to vector<64x2xf32>
    %298 = arith.mulf %296, %258 : vector<64x2xf32>
    %299 = arith.mulf %295, %294 : vector<64x2xf32>
    %300 = arith.addf %298, %299 : vector<64x2xf32>
    %301 = math.tanh %300 : vector<64x2xf32>
    %302 = arith.mulf %297, %301 : vector<64x2xf32>
    %303 = vector.extract_strided_slice %2 {offsets = [0, 14], sizes = [128, 2], strides = [1, 1]} : vector<128x16xf32> to vector<128x2xf32>
    %cst_80 = arith.constant dense<0.000000e+00> : vector<128x2xf32>
    %304 = tpu.matmul %3, %281, %cst_80 {dimension_numbers = #tpu.dot_dimension_numbers<[1], [0], [0], [1], [0, 0, 1, 1], [], []>} : vector<128x32xf32>, vector<32x2xf32>, vector<128x2xf32> -> vector<128x2xf32>
    %305 = arith.addf %303, %304 : vector<128x2xf32>
    %306 = vector.extract_strided_slice %305 {offsets = [0, 0], sizes = [96, 2], strides = [1, 1]} : vector<128x2xf32> to vector<96x2xf32>
    %cst_81 = arith.constant 5.000000e-01 : f32
    %307 = vector.broadcast %cst_81 : f32 to vector<96x2xf32>
    %308 = arith.mulf %307, %306 : vector<96x2xf32>
    %309 = math.tanh %308 : vector<96x2xf32>
    %cst_82 = arith.constant 5.000000e-01 : f32
    %310 = vector.broadcast %cst_82 : f32 to vector<96x2xf32>
    %311 = arith.mulf %310, %309 : vector<96x2xf32>
    %cst_83 = arith.constant 5.000000e-01 : f32
    %312 = vector.broadcast %cst_83 : f32 to vector<96x2xf32>
    %313 = arith.addf %311, %312 : vector<96x2xf32>
    %314 = vector.extract_strided_slice %305 {offsets = [96, 0], sizes = [32, 2], strides = [1, 1]} : vector<128x2xf32> to vector<32x2xf32>
    %315 = math.tanh %314 : vector<32x2xf32>
    %316 = vector.extract_strided_slice %313 {offsets = [0, 0], sizes = [32, 2], strides = [1, 1]} : vector<96x2xf32> to vector<32x2xf32>
    %317 = vector.extract_strided_slice %313 {offsets = [32, 0], sizes = [32, 2], strides = [1, 1]} : vector<96x2xf32> to vector<32x2xf32>
    %318 = vector.extract_strided_slice %313 {offsets = [64, 0], sizes = [32, 2], strides = [1, 1]} : vector<96x2xf32> to vector<32x2xf32>
    %319 = arith.mulf %317, %279 : vector<32x2xf32>
    %320 = arith.mulf %316, %315 : vector<32x2xf32>
    %321 = arith.addf %319, %320 : vector<32x2xf32>
    %322 = math.tanh %321 : vector<32x2xf32>
    %323 = arith.mulf %318, %322 : vector<32x2xf32>
    %324 = tpu.concatenate %323, %302, %4 in 0 : vector<32x2xf32>, vector<64x2xf32>, vector<1x2xf32> -> vector<97x2xf32>
    %c0_84 = arith.constant 0 : index
    %c0_85 = arith.constant 0 : index
    %325 = vector.load %arg3[%c0_84, %c0_85] : memref<256x97xf32, #tpu.memory_space<vmem>>, vector<256x97xf32>
    %cst_86 = arith.constant dense<0.000000e+00> : vector<256x2xf32>
    %326 = tpu.matmul %325, %324, %cst_86 {dimension_numbers = #tpu.dot_dimension_numbers<[1], [0], [0], [1], [0, 0, 1, 1], [], []>} : vector<256x97xf32>, vector<97x2xf32>, vector<256x2xf32> -> vector<256x2xf32>
    %327 = vector.extract_strided_slice %326 {offsets = [0, 0], sizes = [192, 2], strides = [1, 1]} : vector<256x2xf32> to vector<192x2xf32>
    %cst_87 = arith.constant 5.000000e-01 : f32
    %328 = vector.broadcast %cst_87 : f32 to vector<192x2xf32>
    %329 = arith.mulf %328, %327 : vector<192x2xf32>
    %330 = math.tanh %329 : vector<192x2xf32>
    %cst_88 = arith.constant 5.000000e-01 : f32
    %331 = vector.broadcast %cst_88 : f32 to vector<192x2xf32>
    %332 = arith.mulf %331, %330 : vector<192x2xf32>
    %cst_89 = arith.constant 5.000000e-01 : f32
    %333 = vector.broadcast %cst_89 : f32 to vector<192x2xf32>
    %334 = arith.addf %332, %333 : vector<192x2xf32>
    %335 = vector.extract_strided_slice %326 {offsets = [192, 0], sizes = [64, 2], strides = [1, 1]} : vector<256x2xf32> to vector<64x2xf32>
    %336 = math.tanh %335 : vector<64x2xf32>
    %337 = vector.extract_strided_slice %334 {offsets = [0, 0], sizes = [64, 2], strides = [1, 1]} : vector<192x2xf32> to vector<64x2xf32>
    %338 = vector.extract_strided_slice %334 {offsets = [64, 0], sizes = [64, 2], strides = [1, 1]} : vector<192x2xf32> to vector<64x2xf32>
    %339 = vector.extract_strided_slice %334 {offsets = [128, 0], sizes = [64, 2], strides = [1, 1]} : vector<192x2xf32> to vector<64x2xf32>
    %340 = arith.mulf %338, %300 : vector<64x2xf32>
    %341 = arith.mulf %337, %336 : vector<64x2xf32>
    %342 = arith.addf %340, %341 : vector<64x2xf32>
    %343 = math.tanh %342 : vector<64x2xf32>
    %344 = arith.mulf %339, %343 : vector<64x2xf32>
    %345 = tpu.concatenate %344, %4 in 0 : vector<64x2xf32>, vector<1x2xf32> -> vector<65x2xf32>
    %c0_90 = arith.constant 0 : index
    %c0_91 = arith.constant 0 : index
    %346 = vector.load %arg4[%c0_90, %c0_91] : memref<8x65xf32, #tpu.memory_space<vmem>>, vector<8x65xf32>
    %cst_92 = arith.constant dense<0.000000e+00> : vector<8x2xf32>
    %347 = tpu.matmul %346, %345, %cst_92 {dimension_numbers = #tpu.dot_dimension_numbers<[1], [0], [0], [1], [0, 0, 1, 1], [], []>} : vector<8x65xf32>, vector<65x2xf32>, vector<8x2xf32> -> vector<8x2xf32>
    %c0_93 = arith.constant 0 : index
    %c0_94 = arith.constant 0 : index
    %348 = vector.load %arg5[%c0_93, %c0_94] : memref<8x2xf32, #tpu.memory_space<vmem>>, vector<8x2xf32>
    tpu.vector_store %arg5[%c0_93, %c0_94], %347 {strides = array<i32>} : memref<8x2xf32, #tpu.memory_space<vmem>>, vector<8x2xf32>,
    return
  }
}

</mosaic_0001>

<llo_original>
// kernel: lstm_01_forward.1
$region0: #{lstm_01_forward.1}
  #allocation0 [shape = 'u32[]', space=smem, size = 0x4, offset = 0x4, fixed_abs, tag = 'smem constant byte address 0x4 - core index']
  #allocation1 [shape = 'u32[144,128]{1,0:T(1,128)}', space=vmem, size = 0x12000, scoped, tag = 'internal scratch']
  %s0 = inlined_call_operand.vmem [shape: f32[4,16], index: 0, kind: input, shape index: {}]
  %s1 = inlined_call_operand.vmem [shape: f32[128,4], index: 1, kind: input, shape index: {}]
  %s2 = inlined_call_operand.vmem [shape: f32[128,32], index: 2, kind: input, shape index: {}]
  %s3 = inlined_call_operand.vmem [shape: f32[256,97], index: 3, kind: input, shape index: {}]
  %s4 = inlined_call_operand.vmem [shape: f32[8,65], index: 4, kind: input, shape index: {}]
  %s5 = inlined_call_operand.vmem [shape: f32[8,2], index: 5, kind: output, shape index: {}]
  %s6 = sld [smem:[#allocation0]]
  $region30: #{lstm_01_forward.1} parent=0
    _
  %s8 = ssub.s32 1, %s6
  %s9 = scalar_select 0, %s8, %s6
  // Predicated region
  $region2: #{lstm_01_forward.1} parent=0 // pred_check
    _
  $region3: #{lstm_01_forward.1} parent=0 // pred_check_branch
    %11 = sbr.rel (0) target = $region5
  $region4: #{lstm_01_forward.1} parent=0 // pred_region
    _
  $region5: #{lstm_01_forward.1} parent=0 // pred_fallthru
    _
  // Predicated region
  $region6: #{lstm_01_forward.1} parent=0 // pred_check
    _
  $region7: #{lstm_01_forward.1} parent=0 // pred_check_branch
    %13 = sbr.rel (0) target = $region9
  $region8: #{lstm_01_forward.1} parent=0 // pred_region
    _
  $region9: #{lstm_01_forward.1} parent=0 // pred_fallthru
    _
  // Predicated region
  $region10: #{lstm_01_forward.1} parent=0 // pred_check
    _
  $region11: #{lstm_01_forward.1} parent=0 // pred_check_branch
    %15 = sbr.rel (0) target = $region13
  $region12: #{lstm_01_forward.1} parent=0 // pred_region
    _
  $region13: #{lstm_01_forward.1} parent=0 // pred_fallthru
    _
  // Predicated region
  $region14: #{lstm_01_forward.1} parent=0 // pred_check
    _
  $region15: #{lstm_01_forward.1} parent=0 // pred_check_branch
    %17 = sbr.rel (0) target = $region17
  $region16: #{lstm_01_forward.1} parent=0 // pred_region
    _
  $region17: #{lstm_01_forward.1} parent=0 // pred_fallthru
    _
  // Predicated region
  $region18: #{lstm_01_forward.1} parent=0 // pred_check
    _
  $region19: #{lstm_01_forward.1} parent=0 // pred_check_branch
    %19 = sbr.rel (0) target = $region21
  $region20: #{lstm_01_forward.1} parent=0 // pred_region
    _
  $region21: #{lstm_01_forward.1} parent=0 // pred_fallthru
    _
  %v20 = vld [vmem:[%s1] sm:$0xff]
  %v21 = vld [vmem:[%s1 + $0x8] sm:$0xff]
  %v22 = vld [vmem:[%s1 + $0x10] sm:$0xff]
  %v23 = vld [vmem:[%s1 + $0x18] sm:$0xff]
  %v24 = vld [vmem:[%s1 + $0x20] sm:$0xff]
  %v25 = vld [vmem:[%s1 + $0x28] sm:$0xff]
  %v26 = vld [vmem:[%s1 + $0x30] sm:$0xff]
  %v27 = vld [vmem:[%s1 + $0x38] sm:$0xff]
  %v28 = vld [vmem:[%s1 + $0x40] sm:$0xff]
  %v29 = vld [vmem:[%s1 + $0x48] sm:$0xff]
  %v30 = vld [vmem:[%s1 + $0x50] sm:$0xff]
  %v31 = vld [vmem:[%s1 + $0x58] sm:$0xff]
  %v32 = vld [vmem:[%s1 + $0x60] sm:$0xff]
  %v33 = vld [vmem:[%s1 + $0x68] sm:$0xff]
  %v34 = vld [vmem:[%s1 + $0x70] sm:$0xff]
  %v35 = vld [vmem:[%s1 + $0x78] sm:$0xff]
  %v36 = vld [vmem:[%s0] sm:$0xf]
  %vm37 = vcmask 31744
  %v39 = vsel %vm37, %v20, 0
  %v42 = vsel %vm37, %v21, 0
  %v45 = vsel %vm37, %v22, 0
  %v48 = vsel %vm37, %v23, 0
  %v51 = vsel %vm37, %v24, 0
  %v54 = vsel %vm37, %v25, 0
  %v57 = vsel %vm37, %v26, 0
  %v60 = vsel %vm37, %v27, 0
  %v63 = vsel %vm37, %v28, 0
  %v66 = vsel %vm37, %v29, 0
  %v69 = vsel %vm37, %v30, 0
  %v72 = vsel %vm37, %v31, 0
  %v75 = vsel %vm37, %v32, 0
  %v78 = vsel %vm37, %v33, 0
  %v81 = vsel %vm37, %v34, 0
  %v84 = vsel %vm37, %v35, 0
  %vm86 = vcmask 1043456
  %v88 = vsel %vm86, %v36, 0
  %90 = vmatprep.subr.mxu0 0.0
  %91 = vmatpush1.msra.mxu0 %v88
  %92 = vmatprep.subr.mxu0 0.0
  %93 = vmatpush1.msra.mxu0 0.0
  %94 = vmatprep.subr.mxu0 0.0
  %95 = vmatpush1.msra.mxu0 0.0
  %96 = vmatprep.subr.mxu0 0.0
  %97 = vmatpush1.msra.mxu0 0.0
  %98 = vmatprep.subr.mxu0 0.0
  %99 = vmatpush1.msra.mxu0 0.0
  %100 = vmatprep.subr.mxu0 0.0
  %101 = vmatpush1.msra.mxu0 0.0
  %102 = vmatprep.subr.mxu0 0.0
  %103 = vmatpush1.msra.mxu0 0.0
  %104 = vmatprep.subr.mxu0 0.0
  %105 = vmatpush1.msra.mxu0 0.0
  %106 = vmatprep.subr.mxu0 0.0
  %107 = vmatpush1.msra.mxu0 0.0
  %108 = vmatprep.subr.mxu0 0.0
  %109 = vmatpush1.msra.mxu0 0.0
  %110 = vmatprep.subr.mxu0 0.0
  %111 = vmatpush1.msra.mxu0 0.0
  %112 = vmatprep.subr.mxu0 0.0
  %113 = vmatpush1.msra.mxu0 0.0
  %114 = vmatprep.subr.mxu0 0.0
  %115 = vmatpush1.msra.mxu0 0.0
  %116 = vmatprep.subr.mxu0 0.0
  %117 = vmatpush1.msra.mxu0 0.0
  %118 = vmatprep.subr.mxu0 0.0
  %119 = vmatpush1.msra.mxu0 0.0
  %120 = vmatprep.subr.mxu0 0.0
  %121 = vmatpush1.msra.mxu0 0.0
  %122 = vmatprep.subr.mxu0 0.0
  %123 = vmatpush1.msra.mxu0 0.0
  %124 = vmatprep.subr.mxu0 0.0
  %125 = vmatpush1.msra.mxu0 0.0
  %126 = vmatprep.subr.mxu0 0.0
  %127 = vmatpush1.msra.mxu0 0.0
  %128 = vmatprep.subr.mxu0 0.0
  %129 = vmatpush1.msra.mxu0 0.0
  %130 = vmatprep.subr.mxu0 0.0
  %131 = vmatpush1.msra.mxu0 0.0
  %132 = vmatprep.subr.mxu0 0.0
  %133 = vmatpush1.msra.mxu0 0.0
  %134 = vmatprep.subr.mxu0 0.0
  %135 = vmatpush1.msra.mxu0 0.0
  %136 = vmatprep.subr.mxu0 0.0
  %137 = vmatpush1.msra.mxu0 0.0
  %138 = vmatprep.subr.mxu0 0.0
  %139 = vmatpush1.msra.mxu0 0.0
  %140 = vmatprep.subr.mxu0 0.0
  %141 = vmatpush1.msra.mxu0 0.0
  %142 = vmatprep.subr.mxu0 0.0
  %143 = vmatpush1.msra.mxu0 0.0
  %144 = vmatprep.subr.mxu0 0.0
  %145 = vmatpush1.msra.mxu0 0.0
  %146 = vmatprep.subr.mxu0 0.0
  %147 = vmatpush1.msra.mxu0 0.0
  %148 = vmatprep.subr.mxu0 0.0
  %149 = vmatpush1.msra.mxu0 0.0
  %150 = vmatprep.subr.mxu0 0.0
  %151 = vmatpush1.msra.mxu0 0.0
  %152 = vmatprep.subr.mxu0 0.0
  %153 = vmatpush1.msra.mxu0 0.0
  %154 = vmatprep.mubr.f32.mxu0 0.0
  %155 = vmatmul.mubr.f32.gmra.mrb[0].mxu0 %v39
  %v156 = vpop.f32.mrb[0].mxu0
  %v157 = vadd.f32 0.0, %v156
  %v158 = vpop.f32.mrb[0].mxu0
  %159 = vmatprep.mubr.f32.mxu0 0.0
  %160 = vmatmul.mubr.f32.gmra.mrb[0].mxu0 %v42
  %v161 = vpop.f32.mrb[0].mxu0
  %v162 = vadd.f32 0.0, %v161
  %v163 = vpop.f32.mrb[0].mxu0
  %164 = vmatprep.mubr.f32.mxu0 0.0
  %165 = vmatmul.mubr.f32.gmra.mrb[0].mxu0 %v45
  %v166 = vpop.f32.mrb[0].mxu0
  %v167 = vadd.f32 0.0, %v166
  %v168 = vpop.f32.mrb[0].mxu0
  %169 = vmatprep.mubr.f32.mxu0 0.0
  %170 = vmatmul.mubr.f32.gmra.mrb[0].mxu0 %v48
  %v171 = vpop.f32.mrb[0].mxu0
  %v172 = vadd.f32 0.0, %v171
  %v173 = vpop.f32.mrb[0].mxu0
  %174 = vmatprep.mubr.f32.mxu0 0.0
  %175 = vmatmul.mubr.f32.gmra.mrb[0].mxu0 %v51
  %v176 = vpop.f32.mrb[0].mxu0
  %v177 = vadd.f32 0.0, %v176
  %v178 = vpop.f32.mrb[0].mxu0
  %179 = vmatprep.mubr.f32.mxu0 0.0
  %180 = vmatmul.mubr.f32.gmra.mrb[0].mxu0 %v54
  %v181 = vpop.f32.mrb[0].mxu0
  %v182 = vadd.f32 0.0, %v181
  %v183 = vpop.f32.mrb[0].mxu0
  %184 = vmatprep.mubr.f32.mxu0 0.0
  %185 = vmatmul.mubr.f32.gmra.mrb[0].mxu0 %v57
  %v186 = vpop.f32.mrb[0].mxu0
  %v187 = vadd.f32 0.0, %v186
  %v188 = vpop.f32.mrb[0].mxu0
  %189 = vmatprep.mubr.f32.mxu0 0.0
  %190 = vmatmul.mubr.f32.gmra.mrb[0].mxu0 %v60
  %v191 = vpop.f32.mrb[0].mxu0
  %v192 = vadd.f32 0.0, %v191
  %v193 = vpop.f32.mrb[0].mxu0
  %194 = vmatprep.mubr.f32.mxu0 0.0
  %195 = vmatmul.mubr.f32.gmra.mrb[0].mxu0 %v63
  %v196 = vpop.f32.mrb[0].mxu0
  %v197 = vadd.f32 0.0, %v196
  %v198 = vpop.f32.mrb[0].mxu0
  %199 = vmatprep.mubr.f32.mxu0 0.0
  %200 = vmatmul.mubr.f32.gmra.mrb[0].mxu0 %v66
  %v201 = vpop.f32.mrb[0].mxu0
  %v202 = vadd.f32 0.0, %v201
  %v203 = vpop.f32.mrb[0].mxu0
  %204 = vmatprep.mubr.f32.mxu0 0.0
  %205 = vmatmul.mubr.f32.gmra.mrb[0].mxu0 %v69
  %v206 = vpop.f32.mrb[0].mxu0
  %v207 = vadd.f32 0.0, %v206
  %v208 = vpop.f32.mrb[0].mxu0
  %209 = vmatprep.mubr.f32.mxu0 0.0
  %210 = vmatmul.mubr.f32.gmra.mrb[0].mxu0 %v72
  %v211 = vpop.f32.mrb[0].mxu0
  %v212 = vadd.f32 0.0, %v211
  %v213 = vpop.f32.mrb[0].mxu0
  %214 = vmatprep.mubr.f32.mxu0 0.0
  %215 = vmatmul.mubr.f32.gmra.mrb[0].mxu0 %v75
  %v216 = vpop.f32.mrb[0].mxu0
  %v217 = vadd.f32 0.0, %v216
  %v218 = vpop.f32.mrb[0].mxu0
  %219 = vmatprep.mubr.f32.mxu0 0.0
  %220 = vmatmul.mubr.f32.gmra.mrb[0].mxu0 %v78
  %v221 = vpop.f32.mrb[0].mxu0
  %v222 = vadd.f32 0.0, %v221
  %v223 = vpop.f32.mrb[0].mxu0
  %224 = vmatprep.mubr.f32.mxu0 0.0
  %225 = vmatmul.mubr.f32.gmra.mrb[0].mxu0 %v81
  %v226 = vpop.f32.mrb[0].mxu0
  %v227 = vadd.f32 0.0, %v226
  %v228 = vpop.f32.mrb[0].mxu0
  %229 = vmatprep.mubr.f32.mxu0 0.0
  %230 = vmatmul.mubr.f32.gmra.mrb[0].mxu0 %v84
  %v231 = vpop.f32.mrb[0].mxu0
  %v232 = vadd.f32 0.0, %v231
  %v233 = vpop.f32.mrb[0].mxu0
  %234 = vdwg.mxu0
  %v235 = vld [vmem:[%s2] sm:$0xff]
  %v236 = vld [vmem:[%s2 + $0x8] sm:$0xff]
  %v237 = vld [vmem:[%s2 + $0x10] sm:$0xff]
  %v238 = vld [vmem:[%s2 + $0x18] sm:$0xff]
  %v239 = vld [vmem:[%s2 + $0x20] sm:$0xff]
  %v240 = vld [vmem:[%s2 + $0x28] sm:$0xff]
  %v241 = vld [vmem:[%s2 + $0x30] sm:$0xff]
  %v242 = vld [vmem:[%s2 + $0x38] sm:$0xff]
  %v243 = vld [vmem:[%s2 + $0x40] sm:$0xff]
  %v244 = vld [vmem:[%s2 + $0x48] sm:$0xff]
  %v245 = vld [vmem:[%s2 + $0x50] sm:$0xff]
  %v246 = vld [vmem:[%s2 + $0x58] sm:$0xff]
  %v247 = vld [vmem:[%s2 + $0x60] sm:$0xff]
  %v248 = vld [vmem:[%s2 + $0x68] sm:$0xff]
  %v249 = vld [vmem:[%s2 + $0x70] sm:$0xff]
  %v250 = vld [vmem:[%s2 + $0x78] sm:$0xff]
  %vm251 = vcmask 261120
  %v253 = vsel %vm251, %v235, 0
  %v256 = vsel %vm251, %v236, 0
  %v259 = vsel %vm251, %v237, 0
  %v262 = vsel %vm251, %v238, 0
  %v265 = vsel %vm251, %v239, 0
  %v268 = vsel %vm251, %v240, 0
  %v271 = vsel %vm251, %v241, 0
  %v274 = vsel %vm251, %v242, 0
  %v277 = vsel %vm251, %v243, 0
  %v280 = vsel %vm251, %v244, 0
  %v283 = vsel %vm251, %v245, 0
  %v286 = vsel %vm251, %v246, 0
  %v289 = vsel %vm251, %v247, 0
  %v292 = vsel %vm251, %v248, 0
  %v295 = vsel %vm251, %v249, 0
  %v298 = vsel %vm251, %v250, 0
  %300 = vmatprep.subr.mxu0 0.0
  %301 = vmatpush1.msra.mxu0 0.0
  %302 = vmatprep.subr.mxu0 0.0
  %303 = vmatpush1.msra.mxu0 0.0
  %304 = vmatprep.subr.mxu0 0.0
  %305 = vmatpush1.msra.mxu0 0.0
  %306 = vmatprep.subr.mxu0 0.0
  %307 = vmatpush1.msra.mxu0 0.0
  %308 = vmatprep.subr.mxu0 0.0
  %309 = vmatpush1.msra.mxu0 0.0
  %310 = vmatprep.subr.mxu0 0.0
  %311 = vmatpush1.msra.mxu0 0.0
  %312 = vmatprep.subr.mxu0 0.0
  %313 = vmatpush1.msra.mxu0 0.0
  %314 = vmatprep.subr.mxu0 0.0
  %315 = vmatpush1.msra.mxu0 0.0
  %316 = vmatprep.subr.mxu0 0.0
  %317 = vmatpush1.msra.mxu0 0.0
  %318 = vmatprep.subr.mxu0 0.0
  %319 = vmatpush1.msra.mxu0 0.0
  %320 = vmatprep.subr.mxu0 0.0
  %321 = vmatpush1.msra.mxu0 0.0
  %322 = vmatprep.subr.mxu0 0.0
  %323 = vmatpush1.msra.mxu0 0.0
  %324 = vmatprep.subr.mxu0 0.0
  %325 = vmatpush1.msra.mxu0 0.0
  %326 = vmatprep.subr.mxu0 0.0
  %327 = vmatpush1.msra.mxu0 0.0
  %328 = vmatprep.subr.mxu0 0.0
  %329 = vmatpush1.msra.mxu0 0.0
  %330 = vmatprep.subr.mxu0 0.0
  %331 = vmatpush1.msra.mxu0 0.0
  %332 = vmatprep.subr.mxu0 0.0
  %333 = vmatpush1.msra.mxu0 0.0
  %334 = vmatprep.subr.mxu0 0.0
  %335 = vmatpush1.msra.mxu0 0.0
  %336 = vmatprep.subr.mxu0 0.0
  %337 = vmatpush1.msra.mxu0 0.0
  %338 = vmatprep.subr.mxu0 0.0
  %339 = vmatpush1.msra.mxu0 0.0
  %340 = vmatprep.subr.mxu0 0.0
  %341 = vmatpush1.msra.mxu0 0.0
  %342 = vmatprep.subr.mxu0 0.0
  %343 = vmatpush1.msra.mxu0 0.0
  %344 = vmatprep.subr.mxu0 0.0
  %345 = vmatpush1.msra.mxu0 0.0
  %346 = vmatprep.subr.mxu0 0.0
  %347 = vmatpush1.msra.mxu0 0.0
  %348 = vmatprep.subr.mxu0 0.0
  %349 = vmatpush1.msra.mxu0 0.0
  %350 = vmatprep.subr.mxu0 0.0
  %351 = vmatpush1.msra.mxu0 0.0
  %352 = vmatprep.subr.mxu0 0.0
  %353 = vmatpush1.msra.mxu0 0.0
  %354 = vmatprep.subr.mxu0 0.0
  %355 = vmatpush1.msra.mxu0 0.0
  %356 = vmatprep.subr.mxu0 0.0
  %357 = vmatpush1.msra.mxu0 0.0
  %358 = vmatprep.subr.mxu0 0.0
  %359 = vmatpush1.msra.mxu0 0.0
  %360 = vmatprep.subr.mxu0 0.0
  %361 = vmatpush1.msra.mxu0 0.0
  %362 = vmatprep.subr.mxu0 0.0
  %363 = vmatpush1.msra.mxu0 0.0
  %364 = vmatprep.mubr.f32.mxu0 0.0
  %365 = vmatmul.mubr.f32.gmra.mrb[0].mxu0 %v253
  %v366 = vpop.f32.mrb[0].mxu0
  %v367 = vadd.f32 0.0, %v366
  %v368 = vpop.f32.mrb[0].mxu0
  %369 = vmatprep.mubr.f32.mxu0 0.0
  %370 = vmatmul.mubr.f32.gmra.mrb[0].mxu0 %v256
  %v371 = vpop.f32.mrb[0].mxu0
  %v372 = vadd.f32 0.0, %v371
  %v373 = vpop.f32.mrb[0].mxu0
  %374 = vmatprep.mubr.f32.mxu0 0.0
  %375 = vmatmul.mubr.f32.gmra.mrb[0].mxu0 %v259
  %v376 = vpop.f32.mrb[0].mxu0
  %v377 = vadd.f32 0.0, %v376
  %v378 = vpop.f32.mrb[0].mxu0
  %379 = vmatprep.mubr.f32.mxu0 0.0
  %380 = vmatmul.mubr.f32.gmra.mrb[0].mxu0 %v262
  %v381 = vpop.f32.mrb[0].mxu0
  %v382 = vadd.f32 0.0, %v381
  %v383 = vpop.f32.mrb[0].mxu0
  %384 = vmatprep.mubr.f32.mxu0 0.0
  %385 = vmatmul.mubr.f32.gmra.mrb[0].mxu0 %v265
  %v386 = vpop.f32.mrb[0].mxu0
  %v387 = vadd.f32 0.0, %v386
  %v388 = vpop.f32.mrb[0].mxu0
  %389 = vmatprep.mubr.f32.mxu0 0.0
  %390 = vmatmul.mubr.f32.gmra.mrb[0].mxu0 %v268
  %v391 = vpop.f32.mrb[0].mxu0
  %v392 = vadd.f32 0.0, %v391
  %v393 = vpop.f32.mrb[0].mxu0
  %394 = vmatprep.mubr.f32.mxu0 0.0
  %395 = vmatmul.mubr.f32.gmra.mrb[0].mxu0 %v271
  %v396 = vpop.f32.mrb[0].mxu0
  %v397 = vadd.f32 0.0, %v396
  %v398 = vpop.f32.mrb[0].mxu0
  %399 = vmatprep.mubr.f32.mxu0 0.0
  %400 = vmatmul.mubr.f32.gmra.mrb[0].mxu0 %v274
  %v401 = vpop.f32.mrb[0].mxu0
  %v402 = vadd.f32 0.0, %v401
  %v403 = vpop.f32.mrb[0].mxu0
  %404 = vmatprep.mubr.f32.mxu0 0.0
  %405 = vmatmul.mubr.f32.gmra.mrb[0].mxu0 %v277
  %v406 = vpop.f32.mrb[0].mxu0
  %v407 = vadd.f32 0.0, %v406
  %v408 = vpop.f32.mrb[0].mxu0
  %409 = vmatprep.mubr.f32.mxu0 0.0
  %410 = vmatmul.mubr.f32.gmra.mrb[0].mxu0 %v280
  %v411 = vpop.f32.mrb[0].mxu0
  %v412 = vadd.f32 0.0, %v411
  %v413 = vpop.f32.mrb[0].mxu0
  %414 = vmatprep.mubr.f32.mxu0 0.0
  %415 = vmatmul.mubr.f32.gmra.mrb[0].mxu0 %v283
  %v416 = vpop.f32.mrb[0].mxu0
  %v417 = vadd.f32 0.0, %v416
  %v418 = vpop.f32.mrb[0].mxu0
  %419 = vmatprep.mubr.f32.mxu0 0.0
  %420 = vmatmul.mubr.f32.gmra.mrb[0].mxu0 %v286
  %v421 = vpop.f32.mrb[0].mxu0
  %v422 = vadd.f32 0.0, %v421
  %v423 = vpop.f32.mrb[0].mxu0
  %424 = vmatprep.mubr.f32.mxu0 0.0
  %425 = vmatmul.mubr.f32.gmra.mrb[0].mxu0 %v289
  %v426 = vpop.f32.mrb[0].mxu0
  %v427 = vadd.f32 0.0, %v426
  %v428 = vpop.f32.mrb[0].mxu0
  %429 = vmatprep.mubr.f32.mxu0 0.0
  %430 = vmatmul.mubr.f32.gmra.mrb[0].mxu0 %v292
  %v431 = vpop.f32.mrb[0].mxu0
  %v432 = vadd.f32 0.0, %v431
  %v433 = vpop.f32.mrb[0].mxu0
  %434 = vmatprep.mubr.f32.mxu0 0.0
  %435 = vmatmul.mubr.f32.gmra.mrb[0].mxu0 %v295
  %v436 = vpop.f32.mrb[0].mxu0
  %v437 = vadd.f32 0.0, %v436
  %v438 = vpop.f32.mrb[0].mxu0
  %439 = vmatprep.mubr.f32.mxu0 0.0
  %440 = vmatmul.mubr.f32.gmra.mrb[0].mxu0 %v298
  %v441 = vpop.f32.mrb[0].mxu0
  %v442 = vadd.f32 0.0, %v441
  %v443 = vpop.f32.mrb[0].mxu0
  %444 = vdwg.mxu0
  %v445 = vadd.f32 %v157, %v367
  %v446 = vadd.f32 %v162, %v372
  %v447 = vadd.f32 %v167, %v377
  %v448 = vadd.f32 %v172, %v382
  %v449 = vadd.f32 %v177, %v387
  %v450 = vadd.f32 %v182, %v392
  %v451 = vadd.f32 %v187, %v397
  %v452 = vadd.f32 %v192, %v402
  %v453 = vadd.f32 %v197, %v407
  %v454 = vadd.f32 %v202, %v412
  %v455 = vadd.f32 %v207, %v417
  %v456 = vadd.f32 %v212, %v422
  %v457 = vadd.f32 %v217, %v427
  %v458 = vadd.f32 %v222, %v432
  %v459 = vadd.f32 %v227, %v437
  %v460 = vadd.f32 %v232, %v442
  %v461 = vmul.f32 %v445, 0.5
  %v462 = vmul.f32 %v446, 0.5
  %v463 = vmul.f32 %v447, 0.5
  %v464 = vmul.f32 %v448, 0.5
  %v465 = vmul.f32 %v449, 0.5
  %v466 = vmul.f32 %v450, 0.5
  %v467 = vmul.f32 %v451, 0.5
  %v468 = vmul.f32 %v452, 0.5
  %v469 = vmul.f32 %v453, 0.5
  %v470 = vmul.f32 %v454, 0.5
  %v471 = vmul.f32 %v455, 0.5
  %v472 = vmul.f32 %v456, 0.5
  %v473 = vtanh.pop %v461
  %v474 = vtanh.pop %v462
  %v475 = vtanh.pop %v463
  %v476 = vtanh.pop %v464
  %v477 = vtanh.pop %v465
  %v478 = vtanh.pop %v466
  %v479 = vtanh.pop %v467
  %v480 = vtanh.pop %v468
  %v481 = vtanh.pop %v469
  %v482 = vtanh.pop %v470
  %v483 = vtanh.pop %v471
  %v484 = vtanh.pop %v472
  %v485 = vmul.f32 %v473, 0.5
  %v486 = vmul.f32 %v474, 0.5
  %v487 = vmul.f32 %v475, 0.5
  %v488 = vmul.f32 %v476, 0.5
  %v489 = vmul.f32 %v477, 0.5
  %v490 = vmul.f32 %v478, 0.5
  %v491 = vmul.f32 %v479, 0.5
  %v492 = vmul.f32 %v480, 0.5
  %v493 = vmul.f32 %v481, 0.5
  %v494 = vmul.f32 %v482, 0.5
  %v495 = vmul.f32 %v483, 0.5
  %v496 = vmul.f32 %v484, 0.5
  %v497 = vadd.f32 %v485, 0.5
  %v498 = vadd.f32 %v486, 0.5
  %v499 = vadd.f32 %v487, 0.5
  %v500 = vadd.f32 %v488, 0.5
  %v501 = vadd.f32 %v489, 0.5
  %v502 = vadd.f32 %v490, 0.5
  %v503 = vadd.f32 %v491, 0.5
  %v504 = vadd.f32 %v492, 0.5
  %v505 = vadd.f32 %v493, 0.5
  %v506 = vadd.f32 %v494, 0.5
  %v507 = vadd.f32 %v495, 0.5
  %v508 = vadd.f32 %v496, 0.5
  %v509 = vtanh.pop %v457
  %v510 = vtanh.pop %v458
  %v511 = vtanh.pop %v459
  %v512 = vtanh.pop %v460
  %v513 = vmul.f32 %v501, 0.0
  %v514 = vmul.f32 %v502, 0.0
  %v515 = vmul.f32 %v503, 0.0
  %v516 = vmul.f32 %v504, 0.0
  %v517 = vmul.f32 %v497, %v509
  %v518 = vmul.f32 %v498, %v510
  %v519 = vmul.f32 %v499, %v511
  %v520 = vmul.f32 %v500, %v512
  %v521 = vadd.f32 %v513, %v517
  %v522 = vadd.f32 %v514, %v518
  %v523 = vadd.f32 %v515, %v519
  %v524 = vadd.f32 %v516, %v520
  %v525 = vtanh.pop %v521
  %v526 = vtanh.pop %v522
  %v527 = vtanh.pop %v523
  %v528 = vtanh.pop %v524
  %v529 = vmul.f32 %v505, %v525
  %v530 = vmul.f32 %v506, %v526
  %v531 = vmul.f32 %v507, %v527
  %v532 = vmul.f32 %v508, %v528
  %v533 = vld [vmem:[%s3] sm:$0xff]
  %v534 = vld [vmem:[%s3 + $0x8] sm:$0xff]
  %v535 = vld [vmem:[%s3 + $0x10] sm:$0xff]
  %v536 = vld [vmem:[%s3 + $0x18] sm:$0xff]
  %v537 = vld [vmem:[%s3 + $0x20] sm:$0xff]
  %v538 = vld [vmem:[%s3 + $0x28] sm:$0xff]
  %v539 = vld [vmem:[%s3 + $0x30] sm:$0xff]
  %v540 = vld [vmem:[%s3 + $0x38] sm:$0xff]
  %v541 = vld [vmem:[%s3 + $0x40] sm:$0xff]
  %v542 = vld [vmem:[%s3 + $0x48] sm:$0xff]
  %v543 = vld [vmem:[%s3 + $0x50] sm:$0xff]
  %v544 = vld [vmem:[%s3 + $0x58] sm:$0xff]
  %v545 = vld [vmem:[%s3 + $0x60] sm:$0xff]
  %v546 = vld [vmem:[%s3 + $0x68] sm:$0xff]
  %v547 = vld [vmem:[%s3 + $0x70] sm:$0xff]
  %v548 = vld [vmem:[%s3 + $0x78] sm:$0xff]
  %v549 = vld [vmem:[%s3 + $0x80] sm:$0xff]
  %v550 = vld [vmem:[%s3 + $0x88] sm:$0xff]
  %v551 = vld [vmem:[%s3 + $0x90] sm:$0xff]
  %v552 = vld [vmem:[%s3 + $0x98] sm:$0xff]
  %v553 = vld [vmem:[%s3 + $0xa0] sm:$0xff]
  %v554 = vld [vmem:[%s3 + $0xa8] sm:$0xff]
  %v555 = vld [vmem:[%s3 + $0xb0] sm:$0xff]
  %v556 = vld [vmem:[%s3 + $0xb8] sm:$0xff]
  %v557 = vld [vmem:[%s3 + $0xc0] sm:$0xff]
  %v558 = vld [vmem:[%s3 + $0xc8] sm:$0xff]
  %v559 = vld [vmem:[%s3 + $0xd0] sm:$0xff]
  %v560 = vld [vmem:[%s3 + $0xd8] sm:$0xff]
  %v561 = vld [vmem:[%s3 + $0xe0] sm:$0xff]
  %v562 = vld [vmem:[%s3 + $0xe8] sm:$0xff]
  %v563 = vld [vmem:[%s3 + $0xf0] sm:$0xff]
  %v564 = vld [vmem:[%s3 + $0xf8] sm:$0xff]
  %vm565 = vcmask 793600
  %v567 = vsel %vm565, %v533, 0
  %v570 = vsel %vm565, %v534, 0
  %v573 = vsel %vm565, %v535, 0
  %v576 = vsel %vm565, %v536, 0
  %v579 = vsel %vm565, %v537, 0
  %v582 = vsel %vm565, %v538, 0
  %v585 = vsel %vm565, %v539, 0
  %v588 = vsel %vm565, %v540, 0
  %v591 = vsel %vm565, %v541, 0
  %v594 = vsel %vm565, %v542, 0
  %v597 = vsel %vm565, %v543, 0
  %v600 = vsel %vm565, %v544, 0
  %v603 = vsel %vm565, %v545, 0
  %v606 = vsel %vm565, %v546, 0
  %v609 = vsel %vm565, %v547, 0
  %v612 = vsel %vm565, %v548, 0
  %v615 = vsel %vm565, %v549, 0
  %v618 = vsel %vm565, %v550, 0
  %v621 = vsel %vm565, %v551, 0
  %v624 = vsel %vm565, %v552, 0
  %v627 = vsel %vm565, %v553, 0
  %v630 = vsel %vm565, %v554, 0
  %v633 = vsel %vm565, %v555, 0
  %v636 = vsel %vm565, %v556, 0
  %v639 = vsel %vm565, %v557, 0
  %v642 = vsel %vm565, %v558, 0
  %v645 = vsel %vm565, %v559, 0
  %v648 = vsel %vm565, %v560, 0
  %v651 = vsel %vm565, %v561, 0
  %v654 = vsel %vm565, %v562, 0
  %v657 = vsel %vm565, %v563, 0
  %v660 = vsel %vm565, %v564, 0
  %vm662 = vcmask 1040384
  %v664 = vsel %vm662, 1.0, 0
  %666 = vmatprep.subr.mxu0 0.0
  %667 = vmatpush1.msra.mxu0 %v529
  %668 = vmatprep.subr.mxu0 0.0
  %669 = vmatpush1.msra.mxu0 %v530
  %670 = vmatprep.subr.mxu0 0.0
  %671 = vmatpush1.msra.mxu0 %v531
  %672 = vmatprep.subr.mxu0 0.0
  %673 = vmatpush1.msra.mxu0 %v532
  %674 = vmatprep.subr.mxu0 0.0
  %675 = vmatpush1.msra.mxu0 0.0
  %676 = vmatprep.subr.mxu0 0.0
  %677 = vmatpush1.msra.mxu0 0.0
  %678 = vmatprep.subr.mxu0 0.0
  %679 = vmatpush1.msra.mxu0 0.0
  %680 = vmatprep.subr.mxu0 0.0
  %681 = vmatpush1.msra.mxu0 0.0
  %682 = vmatprep.subr.mxu0 0.0
  %683 = vmatpush1.msra.mxu0 0.0
  %684 = vmatprep.subr.mxu0 0.0
  %685 = vmatpush1.msra.mxu0 0.0
  %686 = vmatprep.subr.mxu0 0.0
  %687 = vmatpush1.msra.mxu0 0.0
  %688 = vmatprep.subr.mxu0 0.0
  %689 = vmatpush1.msra.mxu0 0.0
  %690 = vmatprep.subr.mxu0 0.0
  %691 = vmatpush1.msra.mxu0 %v664
  %692 = vmatprep.subr.mxu0 0.0
  %693 = vmatpush1.msra.mxu0 0.0
  %694 = vmatprep.subr.mxu0 0.0
  %695 = vmatpush1.msra.mxu0 0.0
  %696 = vmatprep.subr.mxu0 0.0
  %697 = vmatpush1.msra.mxu0 0.0
  %698 = vmatprep.subr.mxu0 0.0
  %699 = vmatpush1.msra.mxu0 0.0
  %700 = vmatprep.subr.mxu0 0.0
  %701 = vmatpush1.msra.mxu0 0.0
  %702 = vmatprep.subr.mxu0 0.0
  %703 = vmatpush1.msra.mxu0 0.0
  %704 = vmatprep.subr.mxu0 0.0
  %705 = vmatpush1.msra.mxu0 0.0
  %706 = vmatprep.subr.mxu0 0.0
  %707 = vmatpush1.msra.mxu0 0.0
  %708 = vmatprep.subr.mxu0 0.0
  %709 = vmatpush1.msra.mxu0 0.0
  %710 = vmatprep.subr.mxu0 0.0
  %711 = vmatpush1.msra.mxu0 0.0
  %712 = vmatprep.subr.mxu0 0.0
  %713 = vmatpush1.msra.mxu0 0.0
  %714 = vmatprep.subr.mxu0 0.0
  %715 = vmatpush1.msra.mxu0 0.0
  %716 = vmatprep.subr.mxu0 0.0
  %717 = vmatpush1.msra.mxu0 0.0
  %718 = vmatprep.subr.mxu0 0.0
  %719 = vmatpush1.msra.mxu0 0.0
  %720 = vmatprep.subr.mxu0 0.0
  %721 = vmatpush1.msra.mxu0 0.0
  %722 = vmatprep.subr.mxu0 0.0
  %723 = vmatpush1.msra.mxu0 0.0
  %724 = vmatprep.subr.mxu0 0.0
  %725 = vmatpush1.msra.mxu0 0.0
  %726 = vmatprep.subr.mxu0 0.0
  %727 = vmatpush1.msra.mxu0 0.0
  %728 = vmatprep.subr.mxu0 0.0
  %729 = vmatpush1.msra.mxu0 0.0
  %730 = vmatprep.mubr.f32.mxu0 0.0
  %731 = vmatmul.mubr.f32.gmra.mrb[0].mxu0 %v567
  %v732 = vpop.f32.mrb[0].mxu0
  %v733 = vadd.f32 0.0, %v732
  %v734 = vpop.f32.mrb[0].mxu0
  %735 = vmatprep.mubr.f32.mxu0 0.0
  %736 = vmatmul.mubr.f32.gmra.mrb[0].mxu0 %v570
  %v737 = vpop.f32.mrb[0].mxu0
  %v738 = vadd.f32 0.0, %v737
  %v739 = vpop.f32.mrb[0].mxu0
  %740 = vmatprep.mubr.f32.mxu0 0.0
  %741 = vmatmul.mubr.f32.gmra.mrb[0].mxu0 %v573
  %v742 = vpop.f32.mrb[0].mxu0
  %v743 = vadd.f32 0.0, %v742
  %v744 = vpop.f32.mrb[0].mxu0
  %745 = vmatprep.mubr.f32.mxu0 0.0
  %746 = vmatmul.mubr.f32.gmra.mrb[0].mxu0 %v576
  %v747 = vpop.f32.mrb[0].mxu0
  %v748 = vadd.f32 0.0, %v747
  %v749 = vpop.f32.mrb[0].mxu0
  %750 = vmatprep.mubr.f32.mxu0 0.0
  %751 = vmatmul.mubr.f32.gmra.mrb[0].mxu0 %v579
  %v752 = vpop.f32.mrb[0].mxu0
  %v753 = vadd.f32 0.0, %v752
  %v754 = vpop.f32.mrb[0].mxu0
  %755 = vmatprep.mubr.f32.mxu0 0.0
  %756 = vmatmul.mubr.f32.gmra.mrb[0].mxu0 %v582
  %v757 = vpop.f32.mrb[0].mxu0
  %v758 = vadd.f32 0.0, %v757
  %v759 = vpop.f32.mrb[0].mxu0
  %760 = vmatprep.mubr.f32.mxu0 0.0
  %761 = vmatmul.mubr.f32.gmra.mrb[0].mxu0 %v585
  %v762 = vpop.f32.mrb[0].mxu0
  %v763 = vadd.f32 0.0, %v762
  %v764 = vpop.f32.mrb[0].mxu0
  %765 = vmatprep.mubr.f32.mxu0 0.0
  %766 = vmatmul.mubr.f32.gmra.mrb[0].mxu0 %v588
  %v767 = vpop.f32.mrb[0].mxu0
  %v768 = vadd.f32 0.0, %v767
  %v769 = vpop.f32.mrb[0].mxu0
  %770 = vmatprep.mubr.f32.mxu0 0.0
  %771 = vmatmul.mubr.f32.gmra.mrb[0].mxu0 %v591
  %v772 = vpop.f32.mrb[0].mxu0
  %v773 = vadd.f32 0.0, %v772
  %v774 = vpop.f32.mrb[0].mxu0
  %775 = vmatprep.mubr.f32.mxu0 0.0
  %776 = vmatmul.mubr.f32.gmra.mrb[0].mxu0 %v594
  %v777 = vpop.f32.mrb[0].mxu0
  %v778 = vadd.f32 0.0, %v777
  %v779 = vpop.f32.mrb[0].mxu0
  %780 = vmatprep.mubr.f32.mxu0 0.0
  %781 = vmatmul.mubr.f32.gmra.mrb[0].mxu0 %v597
  %v782 = vpop.f32.mrb[0].mxu0
  %v783 = vadd.f32 0.0, %v782
  %v784 = vpop.f32.mrb[0].mxu0
  %785 = vmatprep.mubr.f32.mxu0 0.0
  %786 = vmatmul.mubr.f32.gmra.mrb[0].mxu0 %v600
  %v787 = vpop.f32.mrb[0].mxu0
  %v788 = vadd.f32 0.0, %v787
  %v789 = vpop.f32.mrb[0].mxu0
  %790 = vmatprep.mubr.f32.mxu0 0.0
  %791 = vmatmul.mubr.f32.gmra.mrb[0].mxu0 %v603
  %v792 = vpop.f32.mrb[0].mxu0
  %v793 = vadd.f32 0.0, %v792
  %v794 = vpop.f32.mrb[0].mxu0
  %795 = vmatprep.mubr.f32.mxu0 0.0
  %796 = vmatmul.mubr.f32.gmra.mrb[0].mxu0 %v606
  %v797 = vpop.f32.mrb[0].mxu0
  %v798 = vadd.f32 0.0, %v797
  %v799 = vpop.f32.mrb[0].mxu0
  %800 = vmatprep.mubr.f32.mxu0 0.0
  %801 = vmatmul.mubr.f32.gmra.mrb[0].mxu0 %v609
  %v802 = vpop.f32.mrb[0].mxu0
  %v803 = vadd.f32 0.0, %v802
  %v804 = vpop.f32.mrb[0].mxu0
  %805 = vmatprep.mubr.f32.mxu0 0.0
  %806 = vmatmul.mubr.f32.gmra.mrb[0].mxu0 %v612
  %v807 = vpop.f32.mrb[0].mxu0
  %v808 = vadd.f32 0.0, %v807
  %v809 = vpop.f32.mrb[0].mxu0
  %810 = vmatprep.mubr.f32.mxu0 0.0
  %811 = vmatmul.mubr.f32.gmra.mrb[0].mxu0 %v615
  %v812 = vpop.f32.mrb[0].mxu0
  %v813 = vadd.f32 0.0, %v812
  %v814 = vpop.f32.mrb[0].mxu0
  %815 = vmatprep.mubr.f32.mxu0 0.0
  %816 = vmatmul.mubr.f32.gmra.mrb[0].mxu0 %v618
  %v817 = vpop.f32.mrb[0].mxu0
  %v818 = vadd.f32 0.0, %v817
  %v819 = vpop.f32.mrb[0].mxu0
  %820 = vmatprep.mubr.f32.mxu0 0.0
  %821 = vmatmul.mubr.f32.gmra.mrb[0].mxu0 %v621
  %v822 = vpop.f32.mrb[0].mxu0
  %v823 = vadd.f32 0.0, %v822
  %v824 = vpop.f32.mrb[0].mxu0
  %825 = vmatprep.mubr.f32.mxu0 0.0
  %826 = vmatmul.mubr.f32.gmra.mrb[0].mxu0 %v624
  %v827 = vpop.f32.mrb[0].mxu0
  %v828 = vadd.f32 0.0, %v827
  %v829 = vpop.f32.mrb[0].mxu0
  %830 = vmatprep.mubr.f32.mxu0 0.0
  %831 = vmatmul.mubr.f32.gmra.mrb[0].mxu0 %v627
  %v832 = vpop.f32.mrb[0].mxu0
  %v833 = vadd.f32 0.0, %v832
  %v834 = vpop.f32.mrb[0].mxu0
  %835 = vmatprep.mubr.f32.mxu0 0.0
  %836 = vmatmul.mubr.f32.gmra.mrb[0].mxu0 %v630
  %v837 = vpop.f32.mrb[0].mxu0
  %v838 = vadd.f32 0.0, %v837
  %v839 = vpop.f32.mrb[0].mxu0
  %840 = vmatprep.mubr.f32.mxu0 0.0
  %841 = vmatmul.mubr.f32.gmra.mrb[0].mxu0 %v633
  %v842 = vpop.f32.mrb[0].mxu0
  %v843 = vadd.f32 0.0, %v842
  %v844 = vpop.f32.mrb[0].mxu0
  %845 = vmatprep.mubr.f32.mxu0 0.0
  %846 = vmatmul.mubr.f32.gmra.mrb[0].mxu0 %v636
  %v847 = vpop.f32.mrb[0].mxu0
  %v848 = vadd.f32 0.0, %v847
  %v849 = vpop.f32.mrb[0].mxu0
  %850 = vmatprep.mubr.f32.mxu0 0.0
  %851 = vmatmul.mubr.f32.gmra.mrb[0].mxu0 %v639
  %v852 = vpop.f32.mrb[0].mxu0
  %v853 = vadd.f32 0.0, %v852
  %v854 = vpop.f32.mrb[0].mxu0
  %855 = vmatprep.mubr.f32.mxu0 0.0
  %856 = vmatmul.mubr.f32.gmra.mrb[0].mxu0 %v642
  %v857 = vpop.f32.mrb[0].mxu0
  %v858 = vadd.f32 0.0, %v857
  %v859 = vpop.f32.mrb[0].mxu0
  %860 = vmatprep.mubr.f32.mxu0 0.0
  %861 = vmatmul.mubr.f32.gmra.mrb[0].mxu0 %v645
  %v862 = vpop.f32.mrb[0].mxu0
  %v863 = vadd.f32 0.0, %v862
  %v864 = vpop.f32.mrb[0].mxu0
  %865 = vmatprep.mubr.f32.mxu0 0.0
  %866 = vmatmul.mubr.f32.gmra.mrb[0].mxu0 %v648
  %v867 = vpop.f32.mrb[0].mxu0
  %v868 = vadd.f32 0.0, %v867
  %v869 = vpop.f32.mrb[0].mxu0
  %870 = vmatprep.mubr.f32.mxu0 0.0
  %871 = vmatmul.mubr.f32.gmra.mrb[0].mxu0 %v651
  %v872 = vpop.f32.mrb[0].mxu0
  %v873 = vadd.f32 0.0, %v872
  %v874 = vpop.f32.mrb[0].mxu0
  %875 = vmatprep.mubr.f32.mxu0 0.0
  %876 = vmatmul.mubr.f32.gmra.mrb[0].mxu0 %v654
  %v877 = vpop.f32.mrb[0].mxu0
  %v878 = vadd.f32 0.0, %v877
  %v879 = vpop.f32.mrb[0].mxu0
  %880 = vmatprep.mubr.f32.mxu0 0.0
  %881 = vmatmul.mubr.f32.gmra.mrb[0].mxu0 %v657
  %v882 = vpop.f32.mrb[0].mxu0
  %v883 = vadd.f32 0.0, %v882
  %v884 = vpop.f32.mrb[0].mxu0
  %885 = vmatprep.mubr.f32.mxu0 0.0
  %886 = vmatmul.mubr.f32.gmra.mrb[0].mxu0 %v660
  %v887 = vpop.f32.mrb[0].mxu0
  %v888 = vadd.f32 0.0, %v887
  %v889 = vpop.f32.mrb[0].mxu0
  %890 = vdwg.mxu0
  %v891 = vmul.f32 %v733, 0.5
  %v892 = vmul.f32 %v738, 0.5
  %v893 = vmul.f32 %v743, 0.5
  %v894 = vmul.f32 %v748, 0.5
  %v895 = vmul.f32 %v753, 0.5
  %v896 = vmul.f32 %v758, 0.5
  %v897 = vmul.f32 %v763, 0.5
  %v898 = vmul.f32 %v768, 0.5
  %v899 = vmul.f32 %v773, 0.5
  %v900 = vmul.f32 %v778, 0.5
  %v901 = vmul.f32 %v783, 0.5
  %v902 = vmul.f32 %v788, 0.5
  %v903 = vmul.f32 %v793, 0.5
  %v904 = vmul.f32 %v798, 0.5
  %v905 = vmul.f32 %v803, 0.5
  %v906 = vmul.f32 %v808, 0.5
  %v907 = vmul.f32 %v813, 0.5
  %v908 = vmul.f32 %v818, 0.5
  %v909 = vmul.f32 %v823, 0.5
  %v910 = vmul.f32 %v828, 0.5
  %v911 = vmul.f32 %v833, 0.5
  %v912 = vmul.f32 %v838, 0.5
  %v913 = vmul.f32 %v843, 0.5
  %v914 = vmul.f32 %v848, 0.5
  %v915 = vtanh.pop %v891
  %v916 = vtanh.pop %v892
  %v917 = vtanh.pop %v893
  %v918 = vtanh.pop %v894
  %v919 = vtanh.pop %v895
  %v920 = vtanh.pop %v896
  %v921 = vtanh.pop %v897
  %v922 = vtanh.pop %v898
  %v923 = vtanh.pop %v899
  %v924 = vtanh.pop %v900
  %v925 = vtanh.pop %v901
  %v926 = vtanh.pop %v902
  %v927 = vtanh.pop %v903
  %v928 = vtanh.pop %v904
  %v929 = vtanh.pop %v905
  %v930 = vtanh.pop %v906
  %v931 = vtanh.pop %v907
  %v932 = vtanh.pop %v908
  %v933 = vtanh.pop %v909
  %v934 = vtanh.pop %v910
  %v935 = vtanh.pop %v911
  %v936 = vtanh.pop %v912
  %v937 = vtanh.pop %v913
  %v938 = vtanh.pop %v914
  %v939 = vmul.f32 %v915, 0.5
  %v940 = vmul.f32 %v916, 0.5
  %v941 = vmul.f32 %v917, 0.5
  %v942 = vmul.f32 %v918, 0.5
  %v943 = vmul.f32 %v919, 0.5
  %v944 = vmul.f32 %v920, 0.5
  %v945 = vmul.f32 %v921, 0.5
  %v946 = vmul.f32 %v922, 0.5
  %v947 = vmul.f32 %v923, 0.5
  %v948 = vmul.f32 %v924, 0.5
  %v949 = vmul.f32 %v925, 0.5
  %v950 = vmul.f32 %v926, 0.5
  %v951 = vmul.f32 %v927, 0.5
  %v952 = vmul.f32 %v928, 0.5
  %v953 = vmul.f32 %v929, 0.5
  %v954 = vmul.f32 %v930, 0.5
  %v955 = vmul.f32 %v931, 0.5
  %v956 = vmul.f32 %v932, 0.5
  %v957 = vmul.f32 %v933, 0.5
  %v958 = vmul.f32 %v934, 0.5
  %v959 = vmul.f32 %v935, 0.5
  %v960 = vmul.f32 %v936, 0.5
  %v961 = vmul.f32 %v937, 0.5
  %v962 = vmul.f32 %v938, 0.5
  %v963 = vadd.f32 %v939, 0.5
  %v964 = vadd.f32 %v940, 0.5
  %v965 = vadd.f32 %v941, 0.5
  %v966 = vadd.f32 %v942, 0.5
  %v967 = vadd.f32 %v943, 0.5
  %v968 = vadd.f32 %v944, 0.5
  %v969 = vadd.f32 %v945, 0.5
  %v970 = vadd.f32 %v946, 0.5
  %v971 = vadd.f32 %v947, 0.5
  %v972 = vadd.f32 %v948, 0.5
  %v973 = vadd.f32 %v949, 0.5
  %v974 = vadd.f32 %v950, 0.5
  %v975 = vadd.f32 %v951, 0.5
  %v976 = vadd.f32 %v952, 0.5
  %v977 = vadd.f32 %v953, 0.5
  %v978 = vadd.f32 %v954, 0.5
  %v979 = vadd.f32 %v955, 0.5
  %v980 = vadd.f32 %v956, 0.5
  %v981 = vadd.f32 %v957, 0.5
  %v982 = vadd.f32 %v958, 0.5
  %v983 = vadd.f32 %v959, 0.5
  %v984 = vadd.f32 %v960, 0.5
  %v985 = vadd.f32 %v961, 0.5
  %v986 = vadd.f32 %v962, 0.5
  %v987 = vtanh.pop %v853
  %v988 = vtanh.pop %v858
  %v989 = vtanh.pop %v863
  %v990 = vtanh.pop %v868
  %v991 = vtanh.pop %v873
  %v992 = vtanh.pop %v878
  %v993 = vtanh.pop %v883
  %v994 = vtanh.pop %v888
  %v995 = vmul.f32 %v971, 0.0
  %v996 = vmul.f32 %v972, 0.0
  %v997 = vmul.f32 %v973, 0.0
  %v998 = vmul.f32 %v974, 0.0
  %v999 = vmul.f32 %v975, 0.0
  %v1000 = vmul.f32 %v976, 0.0
  %v1001 = vmul.f32 %v977, 0.0
  %v1002 = vmul.f32 %v978, 0.0
  %v1003 = vmul.f32 %v963, %v987
  %v1004 = vmul.f32 %v964, %v988
  %v1005 = vmul.f32 %v965, %v989
  %v1006 = vmul.f32 %v966, %v990
  %v1007 = vmul.f32 %v967, %v991
  %v1008 = vmul.f32 %v968, %v992
  %v1009 = vmul.f32 %v969, %v993
  %v1010 = vmul.f32 %v970, %v994
  %v1011 = vadd.f32 %v995, %v1003
  %v1012 = vadd.f32 %v996, %v1004
  %v1013 = vadd.f32 %v997, %v1005
  %v1014 = vadd.f32 %v998, %v1006
  %v1015 = vadd.f32 %v999, %v1007
  %v1016 = vadd.f32 %v1000, %v1008
  %v1017 = vadd.f32 %v1001, %v1009
  %v1018 = vadd.f32 %v1002, %v1010
  %v1019 = vtanh.pop %v1011
  %v1020 = vtanh.pop %v1012
  %v1021 = vtanh.pop %v1013
  %v1022 = vtanh.pop %v1014
  %v1023 = vtanh.pop %v1015
  %v1024 = vtanh.pop %v1016
  %v1025 = vtanh.pop %v1017
  %v1026 = vtanh.pop %v1018
  %v1027 = vmul.f32 %v979, %v1019
  %v1028 = vmul.f32 %v980, %v1020
  %v1029 = vmul.f32 %v981, %v1021
  %v1030 = vmul.f32 %v982, %v1022
  %v1031 = vmul.f32 %v983, %v1023
  %v1032 = vmul.f32 %v984, %v1024
  %v1033 = vmul.f32 %v985, %v1025
  %v1034 = vmul.f32 %v986, %v1026
  %1035 = vmatprep.subr.mxu0 0.0
  %1036 = vmatpush1.msra.mxu0 %v529
  %1037 = vmatprep.subr.mxu0 0.0
  %1038 = vmatpush1.msra.mxu0 %v530
  %1039 = vmatprep.subr.mxu0 0.0
  %1040 = vmatpush1.msra.mxu0 %v531
  %1041 = vmatprep.subr.mxu0 0.0
  %1042 = vmatpush1.msra.mxu0 %v532
  %1043 = vmatprep.subr.mxu0 0.0
  %1044 = vmatpush1.msra.mxu0 0.0
  %1045 = vmatprep.subr.mxu0 0.0
  %1046 = vmatpush1.msra.mxu0 0.0
  %1047 = vmatprep.subr.mxu0 0.0
  %1048 = vmatpush1.msra.mxu0 0.0
  %1049 = vmatprep.subr.mxu0 0.0
  %1050 = vmatpush1.msra.mxu0 0.0
  %1051 = vmatprep.subr.mxu0 0.0
  %1052 = vmatpush1.msra.mxu0 0.0
  %1053 = vmatprep.subr.mxu0 0.0
  %1054 = vmatpush1.msra.mxu0 0.0
  %1055 = vmatprep.subr.mxu0 0.0
  %1056 = vmatpush1.msra.mxu0 0.0
  %1057 = vmatprep.subr.mxu0 0.0
  %1058 = vmatpush1.msra.mxu0 0.0
  %1059 = vmatprep.subr.mxu0 0.0
  %1060 = vmatpush1.msra.mxu0 0.0
  %1061 = vmatprep.subr.mxu0 0.0
  %1062 = vmatpush1.msra.mxu0 0.0
  %1063 = vmatprep.subr.mxu0 0.0
  %1064 = vmatpush1.msra.mxu0 0.0
  %1065 = vmatprep.subr.mxu0 0.0
  %1066 = vmatpush1.msra.mxu0 0.0
  %1067 = vmatprep.subr.mxu0 0.0
  %1068 = vmatpush1.msra.mxu0 0.0
  %1069 = vmatprep.subr.mxu0 0.0
  %1070 = vmatpush1.msra.mxu0 0.0
  %1071 = vmatprep.subr.mxu0 0.0
  %1072 = vmatpush1.msra.mxu0 0.0
  %1073 = vmatprep.subr.mxu0 0.0
  %1074 = vmatpush1.msra.mxu0 0.0
  %1075 = vmatprep.subr.mxu0 0.0
  %1076 = vmatpush1.msra.mxu0 0.0
  %1077 = vmatprep.subr.mxu0 0.0
  %1078 = vmatpush1.msra.mxu0 0.0
  %1079 = vmatprep.subr.mxu0 0.0
  %1080 = vmatpush1.msra.mxu0 0.0
  %1081 = vmatprep.subr.mxu0 0.0
  %1082 = vmatpush1.msra.mxu0 0.0
  %1083 = vmatprep.subr.mxu0 0.0
  %1084 = vmatpush1.msra.mxu0 0.0
  %1085 = vmatprep.subr.mxu0 0.0
  %1086 = vmatpush1.msra.mxu0 0.0
  %1087 = vmatprep.subr.mxu0 0.0
  %1088 = vmatpush1.msra.mxu0 0.0
  %1089 = vmatprep.subr.mxu0 0.0
  %1090 = vmatpush1.msra.mxu0 0.0
  %1091 = vmatprep.subr.mxu0 0.0
  %1092 = vmatpush1.msra.mxu0 0.0
  %1093 = vmatprep.subr.mxu0 0.0
  %1094 = vmatpush1.msra.mxu0 0.0
  %1095 = vmatprep.subr.mxu0 0.0
  %1096 = vmatpush1.msra.mxu0 0.0
  %1097 = vmatprep.subr.mxu0 0.0
  %1098 = vmatpush1.msra.mxu0 0.0
  %1099 = vmatprep.mubr.f32.mxu0 0.0
  %1100 = vmatmul.mubr.f32.gmra.mrb[0].mxu0 %v253
  %v1101 = vpop.f32.mrb[0].mxu0
  %v1102 = vadd.f32 0.0, %v1101
  %v1103 = vpop.f32.mrb[0].mxu0
  %1104 = vmatprep.mubr.f32.mxu0 0.0
  %1105 = vmatmul.mubr.f32.gmra.mrb[0].mxu0 %v256
  %v1106 = vpop.f32.mrb[0].mxu0
  %v1107 = vadd.f32 0.0, %v1106
  %v1108 = vpop.f32.mrb[0].mxu0
  %1109 = vmatprep.mubr.f32.mxu0 0.0
  %1110 = vmatmul.mubr.f32.gmra.mrb[0].mxu0 %v259
  %v1111 = vpop.f32.mrb[0].mxu0
  %v1112 = vadd.f32 0.0, %v1111
  %v1113 = vpop.f32.mrb[0].mxu0
  %1114 = vmatprep.mubr.f32.mxu0 0.0
  %1115 = vmatmul.mubr.f32.gmra.mrb[0].mxu0 %v262
  %v1116 = vpop.f32.mrb[0].mxu0
  %v1117 = vadd.f32 0.0, %v1116
  %v1118 = vpop.f32.mrb[0].mxu0
  %1119 = vmatprep.mubr.f32.mxu0 0.0
  %1120 = vmatmul.mubr.f32.gmra.mrb[0].mxu0 %v265
  %v1121 = vpop.f32.mrb[0].mxu0
  %v1122 = vadd.f32 0.0, %v1121
  %v1123 = vpop.f32.mrb[0].mxu0
  %1124 = vmatprep.mubr.f32.mxu0 0.0
  %1125 = vmatmul.mubr.f32.gmra.mrb[0].mxu0 %v268
  %v1126 = vpop.f32.mrb[0].mxu0
  %v1127 = vadd.f32 0.0, %v1126
  %v1128 = vpop.f32.mrb[0].mxu0
  %1129 = vmatprep.mubr.f32.mxu0 0.0
  %1130 = vmatmul.mubr.f32.gmra.mrb[0].mxu0 %v271
  %v1131 = vpop.f32.mrb[0].mxu0
  %v1132 = vadd.f32 0.0, %v1131
  %v1133 = vpop.f32.mrb[0].mxu0
  %1134 = vmatprep.mubr.f32.mxu0 0.0
  %1135 = vmatmul.mubr.f32.gmra.mrb[0].mxu0 %v274
  %v1136 = vpop.f32.mrb[0].mxu0
  %v1137 = vadd.f32 0.0, %v1136
  %v1138 = vpop.f32.mrb[0].mxu0
  %1139 = vmatprep.mubr.f32.mxu0 0.0
  %1140 = vmatmul.mubr.f32.gmra.mrb[0].mxu0 %v277
  %v1141 = vpop.f32.mrb[0].mxu0
  %v1142 = vadd.f32 0.0, %v1141
  %v1143 = vpop.f32.mrb[0].mxu0
  %1144 = vmatprep.mubr.f32.mxu0 0.0
  %1145 = vmatmul.mubr.f32.gmra.mrb[0].mxu0 %v280
  %v1146 = vpop.f32.mrb[0].mxu0
  %v1147 = vadd.f32 0.0, %v1146
  %v1148 = vpop.f32.mrb[0].mxu0
  %1149 = vmatprep.mubr.f32.mxu0 0.0
  %1150 = vmatmul.mubr.f32.gmra.mrb[0].mxu0 %v283
  %v1151 = vpop.f32.mrb[0].mxu0
  %v1152 = vadd.f32 0.0, %v1151
  %v1153 = vpop.f32.mrb[0].mxu0
  %1154 = vmatprep.mubr.f32.mxu0 0.0
  %1155 = vmatmul.mubr.f32.gmra.mrb[0].mxu0 %v286
  %v1156 = vpop.f32.mrb[0].mxu0
  %v1157 = vadd.f32 0.0, %v1156
  %v1158 = vpop.f32.mrb[0].mxu0
  %1159 = vmatprep.mubr.f32.mxu0 0.0
  %1160 = vmatmul.mubr.f32.gmra.mrb[0].mxu0 %v289
  %v1161 = vpop.f32.mrb[0].mxu0
  %v1162 = vadd.f32 0.0, %v1161
  %v1163 = vpop.f32.mrb[0].mxu0
  %1164 = vmatprep.mubr.f32.mxu0 0.0
  %1165 = vmatmul.mubr.f32.gmra.mrb[0].mxu0 %v292
  %v1166 = vpop.f32.mrb[0].mxu0
  %v1167 = vadd.f32 0.0, %v1166
  %v1168 = vpop.f32.mrb[0].mxu0
  %1169 = vmatprep.mubr.f32.mxu0 0.0
  %1170 = vmatmul.mubr.f32.gmra.mrb[0].mxu0 %v295
  %v1171 = vpop.f32.mrb[0].mxu0
  %v1172 = vadd.f32 0.0, %v1171
  %v1173 = vpop.f32.mrb[0].mxu0
  %1174 = vmatprep.mubr.f32.mxu0 0.0
  %1175 = vmatmul.mubr.f32.gmra.mrb[0].mxu0 %v298
  %v1176 = vpop.f32.mrb[0].mxu0
  %v1177 = vadd.f32 0.0, %v1176
  %v1178 = vpop.f32.mrb[0].mxu0
  %1179 = vdwg.mxu0
  %1196 = vrot.lane.b32.xlu0 %v1102, 2
  %v1197 = vpop.permute.xlu0 %1196
  %1198 = vrot.lane.b32.xlu0 %v1107, 2
  %v1199 = vpop.permute.xlu0 %1198
  %1200 = vrot.lane.b32.xlu0 %v1112, 2
  %v1201 = vpop.permute.xlu0 %1200
  %1202 = vrot.lane.b32.xlu0 %v1117, 2
  %v1203 = vpop.permute.xlu0 %1202
  %1204 = vrot.lane.b32.xlu0 %v1122, 2
  %v1205 = vpop.permute.xlu0 %1204
  %1206 = vrot.lane.b32.xlu0 %v1127, 2
  %v1207 = vpop.permute.xlu0 %1206
  %1208 = vrot.lane.b32.xlu0 %v1132, 2
  %v1209 = vpop.permute.xlu0 %1208
  %1210 = vrot.lane.b32.xlu0 %v1137, 2
  %v1211 = vpop.permute.xlu0 %1210
  %1212 = vrot.lane.b32.xlu0 %v1142, 2
  %v1213 = vpop.permute.xlu0 %1212
  %1214 = vrot.lane.b32.xlu0 %v1147, 2
  %v1215 = vpop.permute.xlu0 %1214
  %1216 = vrot.lane.b32.xlu0 %v1152, 2
  %v1217 = vpop.permute.xlu0 %1216
  %1218 = vrot.lane.b32.xlu0 %v1157, 2
  %v1219 = vpop.permute.xlu0 %1218
  %1220 = vrot.lane.b32.xlu0 %v1162, 2
  %v1221 = vpop.permute.xlu0 %1220
  %1222 = vrot.lane.b32.xlu0 %v1167, 2
  %v1223 = vpop.permute.xlu0 %1222
  %1224 = vrot.lane.b32.xlu0 %v1172, 2
  %v1225 = vpop.permute.xlu0 %1224
  %1226 = vrot.lane.b32.xlu0 %v1177, 2
  %v1227 = vpop.permute.xlu0 %1226
  %v1244 = vadd.f32 %v157, %v1197
  %v1245 = vadd.f32 %v162, %v1199
  %v1246 = vadd.f32 %v167, %v1201
  %v1247 = vadd.f32 %v172, %v1203
  %v1248 = vadd.f32 %v177, %v1205
  %v1249 = vadd.f32 %v182, %v1207
  %v1250 = vadd.f32 %v187, %v1209
  %v1251 = vadd.f32 %v192, %v1211
  %v1252 = vadd.f32 %v197, %v1213
  %v1253 = vadd.f32 %v202, %v1215
  %v1254 = vadd.f32 %v207, %v1217
  %v1255 = vadd.f32 %v212, %v1219
  %v1256 = vadd.f32 %v217, %v1221
  %v1257 = vadd.f32 %v222, %v1223
  %v1258 = vadd.f32 %v227, %v1225
  %v1259 = vadd.f32 %v232, %v1227
  %v1260 = vmul.f32 %v1244, 0.5
  %v1261 = vmul.f32 %v1245, 0.5
  %v1262 = vmul.f32 %v1246, 0.5
  %v1263 = vmul.f32 %v1247, 0.5
  %v1264 = vmul.f32 %v1248, 0.5
  %v1265 = vmul.f32 %v1249, 0.5
  %v1266 = vmul.f32 %v1250, 0.5
  %v1267 = vmul.f32 %v1251, 0.5
  %v1268 = vmul.f32 %v1252, 0.5
  %v1269 = vmul.f32 %v1253, 0.5
  %v1270 = vmul.f32 %v1254, 0.5
  %v1271 = vmul.f32 %v1255, 0.5
  %v1272 = vtanh.pop %v1260
  %v1273 = vtanh.pop %v1261
  %v1274 = vtanh.pop %v1262
  %v1275 = vtanh.pop %v1263
  %v1276 = vtanh.pop %v1264
  %v1277 = vtanh.pop %v1265
  %v1278 = vtanh.pop %v1266
  %v1279 = vtanh.pop %v1267
  %v1280 = vtanh.pop %v1268
  %v1281 = vtanh.pop %v1269
  %v1282 = vtanh.pop %v1270
  %v1283 = vtanh.pop %v1271
  %v1284 = vmul.f32 %v1272, 0.5
  %v1285 = vmul.f32 %v1273, 0.5
  %v1286 = vmul.f32 %v1274, 0.5
  %v1287 = vmul.f32 %v1275, 0.5
  %v1288 = vmul.f32 %v1276, 0.5
  %v1289 = vmul.f32 %v1277, 0.5
  %v1290 = vmul.f32 %v1278, 0.5
  %v1291 = vmul.f32 %v1279, 0.5
  %v1292 = vmul.f32 %v1280, 0.5
  %v1293 = vmul.f32 %v1281, 0.5
  %v1294 = vmul.f32 %v1282, 0.5
  %v1295 = vmul.f32 %v1283, 0.5
  %v1296 = vadd.f32 %v1284, 0.5
  %v1297 = vadd.f32 %v1285, 0.5
  %v1298 = vadd.f32 %v1286, 0.5
  %v1299 = vadd.f32 %v1287, 0.5
  %v1300 = vadd.f32 %v1288, 0.5
  %v1301 = vadd.f32 %v1289, 0.5
  %v1302 = vadd.f32 %v1290, 0.5
  %v1303 = vadd.f32 %v1291, 0.5
  %v1304 = vadd.f32 %v1292, 0.5
  %v1305 = vadd.f32 %v1293, 0.5
  %v1306 = vadd.f32 %v1294, 0.5
  %v1307 = vadd.f32 %v1295, 0.5
  %v1308 = vtanh.pop %v1256
  %v1309 = vtanh.pop %v1257
  %v1310 = vtanh.pop %v1258
  %v1311 = vtanh.pop %v1259
  %1316 = vrot.lane.b32.xlu0 %v521, 2
  %v1317 = vpop.permute.xlu0 %1316
  %1318 = vrot.lane.b32.xlu0 %v522, 2
  %v1319 = vpop.permute.xlu0 %1318
  %1320 = vrot.lane.b32.xlu0 %v523, 2
  %v1321 = vpop.permute.xlu0 %1320
  %1322 = vrot.lane.b32.xlu0 %v524, 2
  %v1323 = vpop.permute.xlu0 %1322
  %v1328 = vmul.f32 %v1300, %v1317
  %v1329 = vmul.f32 %v1301, %v1319
  %v1330 = vmul.f32 %v1302, %v1321
  %v1331 = vmul.f32 %v1303, %v1323
  %v1332 = vmul.f32 %v1296, %v1308
  %v1333 = vmul.f32 %v1297, %v1309
  %v1334 = vmul.f32 %v1298, %v1310
  %v1335 = vmul.f32 %v1299, %v1311
  %v1336 = vadd.f32 %v1328, %v1332
  %v1337 = vadd.f32 %v1329, %v1333
  %v1338 = vadd.f32 %v1330, %v1334
  %v1339 = vadd.f32 %v1331, %v1335
  %v1340 = vtanh.pop %v1336
  %v1341 = vtanh.pop %v1337
  %v1342 = vtanh.pop %v1338
  %v1343 = vtanh.pop %v1339
  %v1344 = vmul.f32 %v1304, %v1340
  %v1345 = vmul.f32 %v1305, %v1341
  %v1346 = vmul.f32 %v1306, %v1342
  %v1347 = vmul.f32 %v1307, %v1343
  %1356 = vrot.lane.b32.xlu0 %v1027, 2
  %v1357 = vpop.permute.xlu0 %1356
  %1358 = vrot.lane.b32.xlu0 %v1028, 2
  %v1359 = vpop.permute.xlu0 %1358
  %1360 = vrot.lane.b32.xlu0 %v1029, 2
  %v1361 = vpop.permute.xlu0 %1360
  %1362 = vrot.lane.b32.xlu0 %v1030, 2
  %v1363 = vpop.permute.xlu0 %1362
  %1364 = vrot.lane.b32.xlu0 %v1031, 2
  %v1365 = vpop.permute.xlu0 %1364
  %1366 = vrot.lane.b32.xlu0 %v1032, 2
  %v1367 = vpop.permute.xlu0 %1366
  %1368 = vrot.lane.b32.xlu0 %v1033, 2
  %v1369 = vpop.permute.xlu0 %1368
  %1370 = vrot.lane.b32.xlu0 %v1034, 2
  %v1371 = vpop.permute.xlu0 %1370
  %1376 = vrot.lane.b32.xlu0 %v1344, 126
  %v1377 = vpop.permute.xlu0 %1376
  %1378 = vrot.lane.b32.xlu0 %v1345, 126
  %v1379 = vpop.permute.xlu0 %1378
  %1380 = vrot.lane.b32.xlu0 %v1346, 126
  %v1381 = vpop.permute.xlu0 %1380
  %1382 = vrot.lane.b32.xlu0 %v1347, 126
  %v1383 = vpop.permute.xlu0 %1382
  %1384 = vrot.lane.b32.xlu0 %v1357, 126
  %v1385 = vpop.permute.xlu0 %1384
  %1386 = vrot.lane.b32.xlu0 %v1359, 126
  %v1387 = vpop.permute.xlu0 %1386
  %1388 = vrot.lane.b32.xlu0 %v1361, 126
  %v1389 = vpop.permute.xlu0 %1388
  %1390 = vrot.lane.b32.xlu0 %v1363, 126
  %v1391 = vpop.permute.xlu0 %1390
  %1392 = vrot.lane.b32.xlu0 %v1365, 126
  %v1393 = vpop.permute.xlu0 %1392
  %1394 = vrot.lane.b32.xlu0 %v1367, 126
  %v1395 = vpop.permute.xlu0 %1394
  %1396 = vrot.lane.b32.xlu0 %v1369, 126
  %v1397 = vpop.permute.xlu0 %1396
  %1398 = vrot.lane.b32.xlu0 %v1371, 126
  %v1399 = vpop.permute.xlu0 %1398
  %1400 = vrot.lane.b32.xlu0 1.0, 126
  %v1401 = vpop.permute.xlu0 %1400
  %v1414 = vsel %vm662, %v1401, 0
  %1416 = vmatprep.subr.mxu0 0.0
  %1417 = vmatpush1.msra.mxu0 %v1377
  %1418 = vmatprep.subr.mxu0 0.0
  %1419 = vmatpush1.msra.mxu0 %v1379
  %1420 = vmatprep.subr.mxu0 0.0
  %1421 = vmatpush1.msra.mxu0 %v1381
  %1422 = vmatprep.subr.mxu0 0.0
  %1423 = vmatpush1.msra.mxu0 %v1383
  %1424 = vmatprep.subr.mxu0 0.0
  %1425 = vmatpush1.msra.mxu0 %v1385
  %1426 = vmatprep.subr.mxu0 0.0
  %1427 = vmatpush1.msra.mxu0 %v1387
  %1428 = vmatprep.subr.mxu0 0.0
  %1429 = vmatpush1.msra.mxu0 %v1389
  %1430 = vmatprep.subr.mxu0 0.0
  %1431 = vmatpush1.msra.mxu0 %v1391
  %1432 = vmatprep.subr.mxu0 0.0
  %1433 = vmatpush1.msra.mxu0 %v1393
  %1434 = vmatprep.subr.mxu0 0.0
  %1435 = vmatpush1.msra.mxu0 %v1395
  %1436 = vmatprep.subr.mxu0 0.0
  %1437 = vmatpush1.msra.mxu0 %v1397
  %1438 = vmatprep.subr.mxu0 0.0
  %1439 = vmatpush1.msra.mxu0 %v1399
  %1440 = vmatprep.subr.mxu0 0.0
  %1441 = vmatpush1.msra.mxu0 %v1414
  %1442 = vmatprep.subr.mxu0 0.0
  %1443 = vmatpush1.msra.mxu0 0.0
  %1444 = vmatprep.subr.mxu0 0.0
  %1445 = vmatpush1.msra.mxu0 0.0
  %1446 = vmatprep.subr.mxu0 0.0
  %1447 = vmatpush1.msra.mxu0 0.0
  %1448 = vmatprep.subr.mxu0 0.0
  %1449 = vmatpush1.msra.mxu0 0.0
  %1450 = vmatprep.subr.mxu0 0.0
  %1451 = vmatpush1.msra.mxu0 0.0
  %1452 = vmatprep.subr.mxu0 0.0
  %1453 = vmatpush1.msra.mxu0 0.0
  %1454 = vmatprep.subr.mxu0 0.0
  %1455 = vmatpush1.msra.mxu0 0.0
  %1456 = vmatprep.subr.mxu0 0.0
  %1457 = vmatpush1.msra.mxu0 0.0
  %1458 = vmatprep.subr.mxu0 0.0
  %1459 = vmatpush1.msra.mxu0 0.0
  %1460 = vmatprep.subr.mxu0 0.0
  %1461 = vmatpush1.msra.mxu0 0.0
  %1462 = vmatprep.subr.mxu0 0.0
  %1463 = vmatpush1.msra.mxu0 0.0
  %1464 = vmatprep.subr.mxu0 0.0
  %1465 = vmatpush1.msra.mxu0 0.0
  %1466 = vmatprep.subr.mxu0 0.0
  %1467 = vmatpush1.msra.mxu0 0.0
  %1468 = vmatprep.subr.mxu0 0.0
  %1469 = vmatpush1.msra.mxu0 0.0
  %1470 = vmatprep.subr.mxu0 0.0
  %1471 = vmatpush1.msra.mxu0 0.0
  %1472 = vmatprep.subr.mxu0 0.0
  %1473 = vmatpush1.msra.mxu0 0.0
  %1474 = vmatprep.subr.mxu0 0.0
  %1475 = vmatpush1.msra.mxu0 0.0
  %1476 = vmatprep.subr.mxu0 0.0
  %1477 = vmatpush1.msra.mxu0 0.0
  %1478 = vmatprep.subr.mxu0 0.0
  %1479 = vmatpush1.msra.mxu0 0.0
  %1480 = vmatprep.mubr.f32.mxu0 0.0
  %1481 = vmatmul.mubr.f32.gmra.mrb[0].mxu0 %v567
  %v1482 = vpop.f32.mrb[0].mxu0
  %v1483 = vadd.f32 0.0, %v1482
  %v1484 = vpop.f32.mrb[0].mxu0
  %1485 = vmatprep.mubr.f32.mxu0 0.0
  %1486 = vmatmul.mubr.f32.gmra.mrb[0].mxu0 %v570
  %v1487 = vpop.f32.mrb[0].mxu0
  %v1488 = vadd.f32 0.0, %v1487
  %v1489 = vpop.f32.mrb[0].mxu0
  %1490 = vmatprep.mubr.f32.mxu0 0.0
  %1491 = vmatmul.mubr.f32.gmra.mrb[0].mxu0 %v573
  %v1492 = vpop.f32.mrb[0].mxu0
  %v1493 = vadd.f32 0.0, %v1492
  %v1494 = vpop.f32.mrb[0].mxu0
  %1495 = vmatprep.mubr.f32.mxu0 0.0
  %1496 = vmatmul.mubr.f32.gmra.mrb[0].mxu0 %v576
  %v1497 = vpop.f32.mrb[0].mxu0
  %v1498 = vadd.f32 0.0, %v1497
  %v1499 = vpop.f32.mrb[0].mxu0
  %1500 = vmatprep.mubr.f32.mxu0 0.0
  %1501 = vmatmul.mubr.f32.gmra.mrb[0].mxu0 %v579
  %v1502 = vpop.f32.mrb[0].mxu0
  %v1503 = vadd.f32 0.0, %v1502
  %v1504 = vpop.f32.mrb[0].mxu0
  %1505 = vmatprep.mubr.f32.mxu0 0.0
  %1506 = vmatmul.mubr.f32.gmra.mrb[0].mxu0 %v582
  %v1507 = vpop.f32.mrb[0].mxu0
  %v1508 = vadd.f32 0.0, %v1507
  %v1509 = vpop.f32.mrb[0].mxu0
  %1510 = vmatprep.mubr.f32.mxu0 0.0
  %1511 = vmatmul.mubr.f32.gmra.mrb[0].mxu0 %v585
  %v1512 = vpop.f32.mrb[0].mxu0
  %v1513 = vadd.f32 0.0, %v1512
  %v1514 = vpop.f32.mrb[0].mxu0
  %1515 = vmatprep.mubr.f32.mxu0 0.0
  %1516 = vmatmul.mubr.f32.gmra.mrb[0].mxu0 %v588
  %v1517 = vpop.f32.mrb[0].mxu0
  %v1518 = vadd.f32 0.0, %v1517
  %v1519 = vpop.f32.mrb[0].mxu0
  %1520 = vmatprep.mubr.f32.mxu0 0.0
  %1521 = vmatmul.mubr.f32.gmra.mrb[0].mxu0 %v591
  %v1522 = vpop.f32.mrb[0].mxu0
  %v1523 = vadd.f32 0.0, %v1522
  %v1524 = vpop.f32.mrb[0].mxu0
  %1525 = vmatprep.mubr.f32.mxu0 0.0
  %1526 = vmatmul.mubr.f32.gmra.mrb[0].mxu0 %v594
  %v1527 = vpop.f32.mrb[0].mxu0
  %v1528 = vadd.f32 0.0, %v1527
  %v1529 = vpop.f32.mrb[0].mxu0
  %1530 = vmatprep.mubr.f32.mxu0 0.0
  %1531 = vmatmul.mubr.f32.gmra.mrb[0].mxu0 %v597
  %v1532 = vpop.f32.mrb[0].mxu0
  %v1533 = vadd.f32 0.0, %v1532
  %v1534 = vpop.f32.mrb[0].mxu0
  %1535 = vmatprep.mubr.f32.mxu0 0.0
  %1536 = vmatmul.mubr.f32.gmra.mrb[0].mxu0 %v600
  %v1537 = vpop.f32.mrb[0].mxu0
  %v1538 = vadd.f32 0.0, %v1537
  %v1539 = vpop.f32.mrb[0].mxu0
  %1540 = vmatprep.mubr.f32.mxu0 0.0
  %1541 = vmatmul.mubr.f32.gmra.mrb[0].mxu0 %v603
  %v1542 = vpop.f32.mrb[0].mxu0
  %v1543 = vadd.f32 0.0, %v1542
  %v1544 = vpop.f32.mrb[0].mxu0
  %1545 = vmatprep.mubr.f32.mxu0 0.0
  %1546 = vmatmul.mubr.f32.gmra.mrb[0].mxu0 %v606
  %v1547 = vpop.f32.mrb[0].mxu0
  %v1548 = vadd.f32 0.0, %v1547
  %v1549 = vpop.f32.mrb[0].mxu0
  %1550 = vmatprep.mubr.f32.mxu0 0.0
  %1551 = vmatmul.mubr.f32.gmra.mrb[0].mxu0 %v609
  %v1552 = vpop.f32.mrb[0].mxu0
  %v1553 = vadd.f32 0.0, %v1552
  %v1554 = vpop.f32.mrb[0].mxu0
  %1555 = vmatprep.mubr.f32.mxu0 0.0
  %1556 = vmatmul.mubr.f32.gmra.mrb[0].mxu0 %v612
  %v1557 = vpop.f32.mrb[0].mxu0
  %v1558 = vadd.f32 0.0, %v1557
  %v1559 = vpop.f32.mrb[0].mxu0
  %1560 = vmatprep.mubr.f32.mxu0 0.0
  %1561 = vmatmul.mubr.f32.gmra.mrb[0].mxu0 %v615
  %v1562 = vpop.f32.mrb[0].mxu0
  %v1563 = vadd.f32 0.0, %v1562
  %v1564 = vpop.f32.mrb[0].mxu0
  %1565 = vmatprep.mubr.f32.mxu0 0.0
  %1566 = vmatmul.mubr.f32.gmra.mrb[0].mxu0 %v618
  %v1567 = vpop.f32.mrb[0].mxu0
  %v1568 = vadd.f32 0.0, %v1567
  %v1569 = vpop.f32.mrb[0].mxu0
  %1570 = vmatprep.mubr.f32.mxu0 0.0
  %1571 = vmatmul.mubr.f32.gmra.mrb[0].mxu0 %v621
  %v1572 = vpop.f32.mrb[0].mxu0
  %v1573 = vadd.f32 0.0, %v1572
  %v1574 = vpop.f32.mrb[0].mxu0
  %1575 = vmatprep.mubr.f32.mxu0 0.0
  %1576 = vmatmul.mubr.f32.gmra.mrb[0].mxu0 %v624
  %v1577 = vpop.f32.mrb[0].mxu0
  %v1578 = vadd.f32 0.0, %v1577
  %v1579 = vpop.f32.mrb[0].mxu0
  %1580 = vmatprep.mubr.f32.mxu0 0.0
  %1581 = vmatmul.mubr.f32.gmra.mrb[0].mxu0 %v627
  %v1582 = vpop.f32.mrb[0].mxu0
  %v1583 = vadd.f32 0.0, %v1582
  %v1584 = vpop.f32.mrb[0].mxu0
  %1585 = vmatprep.mubr.f32.mxu0 0.0
  %1586 = vmatmul.mubr.f32.gmra.mrb[0].mxu0 %v630
  %v1587 = vpop.f32.mrb[0].mxu0
  %v1588 = vadd.f32 0.0, %v1587
  %v1589 = vpop.f32.mrb[0].mxu0
  %1590 = vmatprep.mubr.f32.mxu0 0.0
  %1591 = vmatmul.mubr.f32.gmra.mrb[0].mxu0 %v633
  %v1592 = vpop.f32.mrb[0].mxu0
  %v1593 = vadd.f32 0.0, %v1592
  %v1594 = vpop.f32.mrb[0].mxu0
  %1595 = vmatprep.mubr.f32.mxu0 0.0
  %1596 = vmatmul.mubr.f32.gmra.mrb[0].mxu0 %v636
  %v1597 = vpop.f32.mrb[0].mxu0
  %v1598 = vadd.f32 0.0, %v1597
  %v1599 = vpop.f32.mrb[0].mxu0
  %1600 = vmatprep.mubr.f32.mxu0 0.0
  %1601 = vmatmul.mubr.f32.gmra.mrb[0].mxu0 %v639
  %v1602 = vpop.f32.mrb[0].mxu0
  %v1603 = vadd.f32 0.0, %v1602
  %v1604 = vpop.f32.mrb[0].mxu0
  %1605 = vmatprep.mubr.f32.mxu0 0.0
  %1606 = vmatmul.mubr.f32.gmra.mrb[0].mxu0 %v642
  %v1607 = vpop.f32.mrb[0].mxu0
  %v1608 = vadd.f32 0.0, %v1607
  %v1609 = vpop.f32.mrb[0].mxu0
  %1610 = vmatprep.mubr.f32.mxu0 0.0
  %1611 = vmatmul.mubr.f32.gmra.mrb[0].mxu0 %v645
  %v1612 = vpop.f32.mrb[0].mxu0
  %v1613 = vadd.f32 0.0, %v1612
  %v1614 = vpop.f32.mrb[0].mxu0
  %1615 = vmatprep.mubr.f32.mxu0 0.0
  %1616 = vmatmul.mubr.f32.gmra.mrb[0].mxu0 %v648
  %v1617 = vpop.f32.mrb[0].mxu0
  %v1618 = vadd.f32 0.0, %v1617
  %v1619 = vpop.f32.mrb[0].mxu0
  %1620 = vmatprep.mubr.f32.mxu0 0.0
  %1621 = vmatmul.mubr.f32.gmra.mrb[0].mxu0 %v651
  %v1622 = vpop.f32.mrb[0].mxu0
  %v1623 = vadd.f32 0.0, %v1622
  %v1624 = vpop.f32.mrb[0].mxu0
  %1625 = vmatprep.mubr.f32.mxu0 0.0
  %1626 = vmatmul.mubr.f32.gmra.mrb[0].mxu0 %v654
  %v1627 = vpop.f32.mrb[0].mxu0
  %v1628 = vadd.f32 0.0, %v1627
  %v1629 = vpop.f32.mrb[0].mxu0
  %1630 = vmatprep.mubr.f32.mxu0 0.0
  %1631 = vmatmul.mubr.f32.gmra.mrb[0].mxu0 %v657
  %v1632 = vpop.f32.mrb[0].mxu0
  %v1633 = vadd.f32 0.0, %v1632
  %v1634 = vpop.f32.mrb[0].mxu0
  %1635 = vmatprep.mubr.f32.mxu0 0.0
  %1636 = vmatmul.mubr.f32.gmra.mrb[0].mxu0 %v660
  %v1637 = vpop.f32.mrb[0].mxu0
  %v1638 = vadd.f32 0.0, %v1637
  %v1639 = vpop.f32.mrb[0].mxu0
  %1640 = vdwg.mxu0
  %v1641 = vmul.f32 %v1483, 0.5
  %v1642 = vmul.f32 %v1488, 0.5
  %v1643 = vmul.f32 %v1493, 0.5
  %v1644 = vmul.f32 %v1498, 0.5
  %v1645 = vmul.f32 %v1503, 0.5
  %v1646 = vmul.f32 %v1508, 0.5
  %v1647 = vmul.f32 %v1513, 0.5
  %v1648 = vmul.f32 %v1518, 0.5
  %v1649 = vmul.f32 %v1523, 0.5
  %v1650 = vmul.f32 %v1528, 0.5
  %v1651 = vmul.f32 %v1533, 0.5
  %v1652 = vmul.f32 %v1538, 0.5
  %v1653 = vmul.f32 %v1543, 0.5
  %v1654 = vmul.f32 %v1548, 0.5
  %v1655 = vmul.f32 %v1553, 0.5
  %v1656 = vmul.f32 %v1558, 0.5
  %v1657 = vmul.f32 %v1563, 0.5
  %v1658 = vmul.f32 %v1568, 0.5
  %v1659 = vmul.f32 %v1573, 0.5
  %v1660 = vmul.f32 %v1578, 0.5
  %v1661 = vmul.f32 %v1583, 0.5
  %v1662 = vmul.f32 %v1588, 0.5
  %v1663 = vmul.f32 %v1593, 0.5
  %v1664 = vmul.f32 %v1598, 0.5
  %v1665 = vtanh.pop %v1641
  %v1666 = vtanh.pop %v1642
  %v1667 = vtanh.pop %v1643
  %v1668 = vtanh.pop %v1644
  %v1669 = vtanh.pop %v1645
  %v1670 = vtanh.pop %v1646
  %v1671 = vtanh.pop %v1647
  %v1672 = vtanh.pop %v1648
  %v1673 = vtanh.pop %v1649
  %v1674 = vtanh.pop %v1650
  %v1675 = vtanh.pop %v1651
  %v1676 = vtanh.pop %v1652
  %v1677 = vtanh.pop %v1653
  %v1678 = vtanh.pop %v1654
  %v1679 = vtanh.pop %v1655
  %v1680 = vtanh.pop %v1656
  %v1681 = vtanh.pop %v1657
  %v1682 = vtanh.pop %v1658
  %v1683 = vtanh.pop %v1659
  %v1684 = vtanh.pop %v1660
  %v1685 = vtanh.pop %v1661
  %v1686 = vtanh.pop %v1662
  %v1687 = vtanh.pop %v1663
  %v1688 = vtanh.pop %v1664
  %v1689 = vmul.f32 %v1665, 0.5
  %v1690 = vmul.f32 %v1666, 0.5
  %v1691 = vmul.f32 %v1667, 0.5
  %v1692 = vmul.f32 %v1668, 0.5
  %v1693 = vmul.f32 %v1669, 0.5
  %v1694 = vmul.f32 %v1670, 0.5
  %v1695 = vmul.f32 %v1671, 0.5
  %v1696 = vmul.f32 %v1672, 0.5
  %v1697 = vmul.f32 %v1673, 0.5
  %v1698 = vmul.f32 %v1674, 0.5
  %v1699 = vmul.f32 %v1675, 0.5
  %v1700 = vmul.f32 %v1676, 0.5
  %v1701 = vmul.f32 %v1677, 0.5
  %v1702 = vmul.f32 %v1678, 0.5
  %v1703 = vmul.f32 %v1679, 0.5
  %v1704 = vmul.f32 %v1680, 0.5
  %v1705 = vmul.f32 %v1681, 0.5
  %v1706 = vmul.f32 %v1682, 0.5
  %v1707 = vmul.f32 %v1683, 0.5
  %v1708 = vmul.f32 %v1684, 0.5
  %v1709 = vmul.f32 %v1685, 0.5
  %v1710 = vmul.f32 %v1686, 0.5
  %v1711 = vmul.f32 %v1687, 0.5
  %v1712 = vmul.f32 %v1688, 0.5
  %v1713 = vadd.f32 %v1689, 0.5
  %v1714 = vadd.f32 %v1690, 0.5
  %v1715 = vadd.f32 %v1691, 0.5
  %v1716 = vadd.f32 %v1692, 0.5
  %v1717 = vadd.f32 %v1693, 0.5
  %v1718 = vadd.f32 %v1694, 0.5
  %v1719 = vadd.f32 %v1695, 0.5
  %v1720 = vadd.f32 %v1696, 0.5
  %v1721 = vadd.f32 %v1697, 0.5
  %v1722 = vadd.f32 %v1698, 0.5
  %v1723 = vadd.f32 %v1699, 0.5
  %v1724 = vadd.f32 %v1700, 0.5
  %v1725 = vadd.f32 %v1701, 0.5
  %v1726 = vadd.f32 %v1702, 0.5
  %v1727 = vadd.f32 %v1703, 0.5
  %v1728 = vadd.f32 %v1704, 0.5
  %v1729 = vadd.f32 %v1705, 0.5
  %v1730 = vadd.f32 %v1706, 0.5
  %v1731 = vadd.f32 %v1707, 0.5
  %v1732 = vadd.f32 %v1708, 0.5
  %v1733 = vadd.f32 %v1709, 0.5
  %v1734 = vadd.f32 %v1710, 0.5
  %v1735 = vadd.f32 %v1711, 0.5
  %v1736 = vadd.f32 %v1712, 0.5
  %v1737 = vtanh.pop %v1603
  %v1738 = vtanh.pop %v1608
  %v1739 = vtanh.pop %v1613
  %v1740 = vtanh.pop %v1618
  %v1741 = vtanh.pop %v1623
  %v1742 = vtanh.pop %v1628
  %v1743 = vtanh.pop %v1633
  %v1744 = vtanh.pop %v1638
  %v1745 = vmul.f32 %v1721, %v1011
  %v1746 = vmul.f32 %v1722, %v1012
  %v1747 = vmul.f32 %v1723, %v1013
  %v1748 = vmul.f32 %v1724, %v1014
  %v1749 = vmul.f32 %v1725, %v1015
  %v1750 = vmul.f32 %v1726, %v1016
  %v1751 = vmul.f32 %v1727, %v1017
  %v1752 = vmul.f32 %v1728, %v1018
  %v1753 = vmul.f32 %v1713, %v1737
  %v1754 = vmul.f32 %v1714, %v1738
  %v1755 = vmul.f32 %v1715, %v1739
  %v1756 = vmul.f32 %v1716, %v1740
  %v1757 = vmul.f32 %v1717, %v1741
  %v1758 = vmul.f32 %v1718, %v1742
  %v1759 = vmul.f32 %v1719, %v1743
  %v1760 = vmul.f32 %v1720, %v1744
  %v1761 = vadd.f32 %v1745, %v1753
  %v1762 = vadd.f32 %v1746, %v1754
  %v1763 = vadd.f32 %v1747, %v1755
  %v1764 = vadd.f32 %v1748, %v1756
  %v1765 = vadd.f32 %v1749, %v1757
  %v1766 = vadd.f32 %v1750, %v1758
  %v1767 = vadd.f32 %v1751, %v1759
  %v1768 = vadd.f32 %v1752, %v1760
  %v1769 = vtanh.pop %v1761
  %v1770 = vtanh.pop %v1762
  %v1771 = vtanh.pop %v1763
  %v1772 = vtanh.pop %v1764
  %v1773 = vtanh.pop %v1765
  %v1774 = vtanh.pop %v1766
  %v1775 = vtanh.pop %v1767
  %v1776 = vtanh.pop %v1768
  %v1777 = vmul.f32 %v1729, %v1769
  %v1778 = vmul.f32 %v1730, %v1770
  %v1779 = vmul.f32 %v1731, %v1771
  %v1780 = vmul.f32 %v1732, %v1772
  %v1781 = vmul.f32 %v1733, %v1773
  %v1782 = vmul.f32 %v1734, %v1774
  %v1783 = vmul.f32 %v1735, %v1775
  %v1784 = vmul.f32 %v1736, %v1776
  %1785 = vmatprep.subr.mxu0 0.0
  %1786 = vmatpush1.msra.mxu0 %v1377
  %1787 = vmatprep.subr.mxu0 0.0
  %1788 = vmatpush1.msra.mxu0 %v1379
  %1789 = vmatprep.subr.mxu0 0.0
  %1790 = vmatpush1.msra.mxu0 %v1381
  %1791 = vmatprep.subr.mxu0 0.0
  %1792 = vmatpush1.msra.mxu0 %v1383
  %1793 = vmatprep.subr.mxu0 0.0
  %1794 = vmatpush1.msra.mxu0 0.0
  %1795 = vmatprep.subr.mxu0 0.0
  %1796 = vmatpush1.msra.mxu0 0.0
  %1797 = vmatprep.subr.mxu0 0.0
  %1798 = vmatpush1.msra.mxu0 0.0
  %1799 = vmatprep.subr.mxu0 0.0
  %1800 = vmatpush1.msra.mxu0 0.0
  %1801 = vmatprep.subr.mxu0 0.0
  %1802 = vmatpush1.msra.mxu0 0.0
  %1803 = vmatprep.subr.mxu0 0.0
  %1804 = vmatpush1.msra.mxu0 0.0
  %1805 = vmatprep.subr.mxu0 0.0
  %1806 = vmatpush1.msra.mxu0 0.0
  %1807 = vmatprep.subr.mxu0 0.0
  %1808 = vmatpush1.msra.mxu0 0.0
  %1809 = vmatprep.subr.mxu0 0.0
  %1810 = vmatpush1.msra.mxu0 0.0
  %1811 = vmatprep.subr.mxu0 0.0
  %1812 = vmatpush1.msra.mxu0 0.0
  %1813 = vmatprep.subr.mxu0 0.0
  %1814 = vmatpush1.msra.mxu0 0.0
  %1815 = vmatprep.subr.mxu0 0.0
  %1816 = vmatpush1.msra.mxu0 0.0
  %1817 = vmatprep.subr.mxu0 0.0
  %1818 = vmatpush1.msra.mxu0 0.0
  %1819 = vmatprep.subr.mxu0 0.0
  %1820 = vmatpush1.msra.mxu0 0.0
  %1821 = vmatprep.subr.mxu0 0.0
  %1822 = vmatpush1.msra.mxu0 0.0
  %1823 = vmatprep.subr.mxu0 0.0
  %1824 = vmatpush1.msra.mxu0 0.0
  %1825 = vmatprep.subr.mxu0 0.0
  %1826 = vmatpush1.msra.mxu0 0.0
  %1827 = vmatprep.subr.mxu0 0.0
  %1828 = vmatpush1.msra.mxu0 0.0
  %1829 = vmatprep.subr.mxu0 0.0
  %1830 = vmatpush1.msra.mxu0 0.0
  %1831 = vmatprep.subr.mxu0 0.0
  %1832 = vmatpush1.msra.mxu0 0.0
  %1833 = vmatprep.subr.mxu0 0.0
  %1834 = vmatpush1.msra.mxu0 0.0
  %1835 = vmatprep.subr.mxu0 0.0
  %1836 = vmatpush1.msra.mxu0 0.0
  %1837 = vmatprep.subr.mxu0 0.0
  %1838 = vmatpush1.msra.mxu0 0.0
  %1839 = vmatprep.subr.mxu0 0.0
  %1840 = vmatpush1.msra.mxu0 0.0
  %1841 = vmatprep.subr.mxu0 0.0
  %1842 = vmatpush1.msra.mxu0 0.0
  %1843 = vmatprep.subr.mxu0 0.0
  %1844 = vmatpush1.msra.mxu0 0.0
  %1845 = vmatprep.subr.mxu0 0.0
  %1846 = vmatpush1.msra.mxu0 0.0
  %1847 = vmatprep.subr.mxu0 0.0
  %1848 = vmatpush1.msra.mxu0 0.0
  %1849 = vmatprep.mubr.f32.mxu0 0.0
  %1850 = vmatmul.mubr.f32.gmra.mrb[0].mxu0 %v253
  %v1851 = vpop.f32.mrb[0].mxu0
  %v1852 = vadd.f32 0.0, %v1851
  %v1853 = vpop.f32.mrb[0].mxu0
  %1854 = vmatprep.mubr.f32.mxu0 0.0
  %1855 = vmatmul.mubr.f32.gmra.mrb[0].mxu0 %v256
  %v1856 = vpop.f32.mrb[0].mxu0
  %v1857 = vadd.f32 0.0, %v1856
  %v1858 = vpop.f32.mrb[0].mxu0
  %1859 = vmatprep.mubr.f32.mxu0 0.0
  %1860 = vmatmul.mubr.f32.gmra.mrb[0].mxu0 %v259
  %v1861 = vpop.f32.mrb[0].mxu0
  %v1862 = vadd.f32 0.0, %v1861
  %v1863 = vpop.f32.mrb[0].mxu0
  %1864 = vmatprep.mubr.f32.mxu0 0.0
  %1865 = vmatmul.mubr.f32.gmra.mrb[0].mxu0 %v262
  %v1866 = vpop.f32.mrb[0].mxu0
  %v1867 = vadd.f32 0.0, %v1866
  %v1868 = vpop.f32.mrb[0].mxu0
  %1869 = vmatprep.mubr.f32.mxu0 0.0
  %1870 = vmatmul.mubr.f32.gmra.mrb[0].mxu0 %v265
  %v1871 = vpop.f32.mrb[0].mxu0
  %v1872 = vadd.f32 0.0, %v1871
  %v1873 = vpop.f32.mrb[0].mxu0
  %1874 = vmatprep.mubr.f32.mxu0 0.0
  %1875 = vmatmul.mubr.f32.gmra.mrb[0].mxu0 %v268
  %v1876 = vpop.f32.mrb[0].mxu0
  %v1877 = vadd.f32 0.0, %v1876
  %v1878 = vpop.f32.mrb[0].mxu0
  %1879 = vmatprep.mubr.f32.mxu0 0.0
  %1880 = vmatmul.mubr.f32.gmra.mrb[0].mxu0 %v271
  %v1881 = vpop.f32.mrb[0].mxu0
  %v1882 = vadd.f32 0.0, %v1881
  %v1883 = vpop.f32.mrb[0].mxu0
  %1884 = vmatprep.mubr.f32.mxu0 0.0
  %1885 = vmatmul.mubr.f32.gmra.mrb[0].mxu0 %v274
  %v1886 = vpop.f32.mrb[0].mxu0
  %v1887 = vadd.f32 0.0, %v1886
  %v1888 = vpop.f32.mrb[0].mxu0
  %1889 = vmatprep.mubr.f32.mxu0 0.0
  %1890 = vmatmul.mubr.f32.gmra.mrb[0].mxu0 %v277
  %v1891 = vpop.f32.mrb[0].mxu0
  %v1892 = vadd.f32 0.0, %v1891
  %v1893 = vpop.f32.mrb[0].mxu0
  %1894 = vmatprep.mubr.f32.mxu0 0.0
  %1895 = vmatmul.mubr.f32.gmra.mrb[0].mxu0 %v280
  %v1896 = vpop.f32.mrb[0].mxu0
  %v1897 = vadd.f32 0.0, %v1896
  %v1898 = vpop.f32.mrb[0].mxu0
  %1899 = vmatprep.mubr.f32.mxu0 0.0
  %1900 = vmatmul.mubr.f32.gmra.mrb[0].mxu0 %v283
  %v1901 = vpop.f32.mrb[0].mxu0
  %v1902 = vadd.f32 0.0, %v1901
  %v1903 = vpop.f32.mrb[0].mxu0
  %1904 = vmatprep.mubr.f32.mxu0 0.0
  %1905 = vmatmul.mubr.f32.gmra.mrb[0].mxu0 %v286
  %v1906 = vpop.f32.mrb[0].mxu0
  %v1907 = vadd.f32 0.0, %v1906
  %v1908 = vpop.f32.mrb[0].mxu0
  %1909 = vmatprep.mubr.f32.mxu0 0.0
  %1910 = vmatmul.mubr.f32.gmra.mrb[0].mxu0 %v289
  %v1911 = vpop.f32.mrb[0].mxu0
  %v1912 = vadd.f32 0.0, %v1911
  %v1913 = vpop.f32.mrb[0].mxu0
  %1914 = vmatprep.mubr.f32.mxu0 0.0
  %1915 = vmatmul.mubr.f32.gmra.mrb[0].mxu0 %v292
  %v1916 = vpop.f32.mrb[0].mxu0
  %v1917 = vadd.f32 0.0, %v1916
  %v1918 = vpop.f32.mrb[0].mxu0
  %1919 = vmatprep.mubr.f32.mxu0 0.0
  %1920 = vmatmul.mubr.f32.gmra.mrb[0].mxu0 %v295
  %v1921 = vpop.f32.mrb[0].mxu0
  %v1922 = vadd.f32 0.0, %v1921
  %v1923 = vpop.f32.mrb[0].mxu0
  %1924 = vmatprep.mubr.f32.mxu0 0.0
  %1925 = vmatmul.mubr.f32.gmra.mrb[0].mxu0 %v298
  %v1926 = vpop.f32.mrb[0].mxu0
  %v1927 = vadd.f32 0.0, %v1926
  %v1928 = vpop.f32.mrb[0].mxu0
  %1929 = vdwg.mxu0
  %1946 = vrot.lane.b32.xlu0 %v1852, 4
  %v1947 = vpop.permute.xlu0 %1946
  %1948 = vrot.lane.b32.xlu0 %v1857, 4
  %v1949 = vpop.permute.xlu0 %1948
  %1950 = vrot.lane.b32.xlu0 %v1862, 4
  %v1951 = vpop.permute.xlu0 %1950
  %1952 = vrot.lane.b32.xlu0 %v1867, 4
  %v1953 = vpop.permute.xlu0 %1952
  %1954 = vrot.lane.b32.xlu0 %v1872, 4
  %v1955 = vpop.permute.xlu0 %1954
  %1956 = vrot.lane.b32.xlu0 %v1877, 4
  %v1957 = vpop.permute.xlu0 %1956
  %1958 = vrot.lane.b32.xlu0 %v1882, 4
  %v1959 = vpop.permute.xlu0 %1958
  %1960 = vrot.lane.b32.xlu0 %v1887, 4
  %v1961 = vpop.permute.xlu0 %1960
  %1962 = vrot.lane.b32.xlu0 %v1892, 4
  %v1963 = vpop.permute.xlu0 %1962
  %1964 = vrot.lane.b32.xlu0 %v1897, 4
  %v1965 = vpop.permute.xlu0 %1964
  %1966 = vrot.lane.b32.xlu0 %v1902, 4
  %v1967 = vpop.permute.xlu0 %1966
  %1968 = vrot.lane.b32.xlu0 %v1907, 4
  %v1969 = vpop.permute.xlu0 %1968
  %1970 = vrot.lane.b32.xlu0 %v1912, 4
  %v1971 = vpop.permute.xlu0 %1970
  %1972 = vrot.lane.b32.xlu0 %v1917, 4
  %v1973 = vpop.permute.xlu0 %1972
  %1974 = vrot.lane.b32.xlu0 %v1922, 4
  %v1975 = vpop.permute.xlu0 %1974
  %1976 = vrot.lane.b32.xlu0 %v1927, 4
  %v1977 = vpop.permute.xlu0 %1976
  %v1994 = vadd.f32 %v157, %v1947
  %v1995 = vadd.f32 %v162, %v1949
  %v1996 = vadd.f32 %v167, %v1951
  %v1997 = vadd.f32 %v172, %v1953
  %v1998 = vadd.f32 %v177, %v1955
  %v1999 = vadd.f32 %v182, %v1957
  %v2000 = vadd.f32 %v187, %v1959
  %v2001 = vadd.f32 %v192, %v1961
  %v2002 = vadd.f32 %v197, %v1963
  %v2003 = vadd.f32 %v202, %v1965
  %v2004 = vadd.f32 %v207, %v1967
  %v2005 = vadd.f32 %v212, %v1969
  %v2006 = vadd.f32 %v217, %v1971
  %v2007 = vadd.f32 %v222, %v1973
  %v2008 = vadd.f32 %v227, %v1975
  %v2009 = vadd.f32 %v232, %v1977
  %v2010 = vmul.f32 %v1994, 0.5
  %v2011 = vmul.f32 %v1995, 0.5
  %v2012 = vmul.f32 %v1996, 0.5
  %v2013 = vmul.f32 %v1997, 0.5
  %v2014 = vmul.f32 %v1998, 0.5
  %v2015 = vmul.f32 %v1999, 0.5
  %v2016 = vmul.f32 %v2000, 0.5
  %v2017 = vmul.f32 %v2001, 0.5
  %v2018 = vmul.f32 %v2002, 0.5
  %v2019 = vmul.f32 %v2003, 0.5
  %v2020 = vmul.f32 %v2004, 0.5
  %v2021 = vmul.f32 %v2005, 0.5
  %v2022 = vtanh.pop %v2010
  %v2023 = vtanh.pop %v2011
  %v2024 = vtanh.pop %v2012
  %v2025 = vtanh.pop %v2013
  %v2026 = vtanh.pop %v2014
  %v2027 = vtanh.pop %v2015
  %v2028 = vtanh.pop %v2016
  %v2029 = vtanh.pop %v2017
  %v2030 = vtanh.pop %v2018
  %v2031 = vtanh.pop %v2019
  %v2032 = vtanh.pop %v2020
  %v2033 = vtanh.pop %v2021
  %v2034 = vmul.f32 %v2022, 0.5
  %v2035 = vmul.f32 %v2023, 0.5
  %v2036 = vmul.f32 %v2024, 0.5
  %v2037 = vmul.f32 %v2025, 0.5
  %v2038 = vmul.f32 %v2026, 0.5
  %v2039 = vmul.f32 %v2027, 0.5
  %v2040 = vmul.f32 %v2028, 0.5
  %v2041 = vmul.f32 %v2029, 0.5
  %v2042 = vmul.f32 %v2030, 0.5
  %v2043 = vmul.f32 %v2031, 0.5
  %v2044 = vmul.f32 %v2032, 0.5
  %v2045 = vmul.f32 %v2033, 0.5
  %v2046 = vadd.f32 %v2034, 0.5
  %v2047 = vadd.f32 %v2035, 0.5
  %v2048 = vadd.f32 %v2036, 0.5
  %v2049 = vadd.f32 %v2037, 0.5
  %v2050 = vadd.f32 %v2038, 0.5
  %v2051 = vadd.f32 %v2039, 0.5
  %v2052 = vadd.f32 %v2040, 0.5
  %v2053 = vadd.f32 %v2041, 0.5
  %v2054 = vadd.f32 %v2042, 0.5
  %v2055 = vadd.f32 %v2043, 0.5
  %v2056 = vadd.f32 %v2044, 0.5
  %v2057 = vadd.f32 %v2045, 0.5
  %v2058 = vtanh.pop %v2006
  %v2059 = vtanh.pop %v2007
  %v2060 = vtanh.pop %v2008
  %v2061 = vtanh.pop %v2009
  %2066 = vrot.lane.b32.xlu0 %v1336, 2
  %v2067 = vpop.permute.xlu0 %2066
  %2068 = vrot.lane.b32.xlu0 %v1337, 2
  %v2069 = vpop.permute.xlu0 %2068
  %2070 = vrot.lane.b32.xlu0 %v1338, 2
  %v2071 = vpop.permute.xlu0 %2070
  %2072 = vrot.lane.b32.xlu0 %v1339, 2
  %v2073 = vpop.permute.xlu0 %2072
  %v2078 = vmul.f32 %v2050, %v2067
  %v2079 = vmul.f32 %v2051, %v2069
  %v2080 = vmul.f32 %v2052, %v2071
  %v2081 = vmul.f32 %v2053, %v2073
  %v2082 = vmul.f32 %v2046, %v2058
  %v2083 = vmul.f32 %v2047, %v2059
  %v2084 = vmul.f32 %v2048, %v2060
  %v2085 = vmul.f32 %v2049, %v2061
  %v2086 = vadd.f32 %v2078, %v2082
  %v2087 = vadd.f32 %v2079, %v2083
  %v2088 = vadd.f32 %v2080, %v2084
  %v2089 = vadd.f32 %v2081, %v2085
  %v2090 = vtanh.pop %v2086
  %v2091 = vtanh.pop %v2087
  %v2092 = vtanh.pop %v2088
  %v2093 = vtanh.pop %v2089
  %v2094 = vmul.f32 %v2054, %v2090
  %v2095 = vmul.f32 %v2055, %v2091
  %v2096 = vmul.f32 %v2056, %v2092
  %v2097 = vmul.f32 %v2057, %v2093
  %2106 = vrot.lane.b32.xlu0 %v1777, 4
  %v2107 = vpop.permute.xlu0 %2106
  %2108 = vrot.lane.b32.xlu0 %v1778, 4
  %v2109 = vpop.permute.xlu0 %2108
  %2110 = vrot.lane.b32.xlu0 %v1779, 4
  %v2111 = vpop.permute.xlu0 %2110
  %2112 = vrot.lane.b32.xlu0 %v1780, 4
  %v2113 = vpop.permute.xlu0 %2112
  %2114 = vrot.lane.b32.xlu0 %v1781, 4
  %v2115 = vpop.permute.xlu0 %2114
  %2116 = vrot.lane.b32.xlu0 %v1782, 4
  %v2117 = vpop.permute.xlu0 %2116
  %2118 = vrot.lane.b32.xlu0 %v1783, 4
  %v2119 = vpop.permute.xlu0 %2118
  %2120 = vrot.lane.b32.xlu0 %v1784, 4
  %v2121 = vpop.permute.xlu0 %2120
  %2126 = vrot.lane.b32.xlu0 %v2094, 124
  %v2127 = vpop.permute.xlu0 %2126
  %2128 = vrot.lane.b32.xlu0 %v2095, 124
  %v2129 = vpop.permute.xlu0 %2128
  %2130 = vrot.lane.b32.xlu0 %v2096, 124
  %v2131 = vpop.permute.xlu0 %2130
  %2132 = vrot.lane.b32.xlu0 %v2097, 124
  %v2133 = vpop.permute.xlu0 %2132
  %2134 = vrot.lane.b32.xlu0 %v2107, 124
  %v2135 = vpop.permute.xlu0 %2134
  %2136 = vrot.lane.b32.xlu0 %v2109, 124
  %v2137 = vpop.permute.xlu0 %2136
  %2138 = vrot.lane.b32.xlu0 %v2111, 124
  %v2139 = vpop.permute.xlu0 %2138
  %2140 = vrot.lane.b32.xlu0 %v2113, 124
  %v2141 = vpop.permute.xlu0 %2140
  %2142 = vrot.lane.b32.xlu0 %v2115, 124
  %v2143 = vpop.permute.xlu0 %2142
  %2144 = vrot.lane.b32.xlu0 %v2117, 124
  %v2145 = vpop.permute.xlu0 %2144
  %2146 = vrot.lane.b32.xlu0 %v2119, 124
  %v2147 = vpop.permute.xlu0 %2146
  %2148 = vrot.lane.b32.xlu0 %v2121, 124
  %v2149 = vpop.permute.xlu0 %2148
  %2150 = vrot.lane.b32.xlu0 1.0, 124
  %v2151 = vpop.permute.xlu0 %2150
  %v2164 = vsel %vm662, %v2151, 0
  %2166 = vmatprep.subr.mxu0 0.0
  %2167 = vmatpush1.msra.mxu0 %v2127
  %2168 = vmatprep.subr.mxu0 0.0
  %2169 = vmatpush1.msra.mxu0 %v2129
  %2170 = vmatprep.subr.mxu0 0.0
  %2171 = vmatpush1.msra.mxu0 %v2131
  %2172 = vmatprep.subr.mxu0 0.0
  %2173 = vmatpush1.msra.mxu0 %v2133
  %2174 = vmatprep.subr.mxu0 0.0
  %2175 = vmatpush1.msra.mxu0 %v2135
  %2176 = vmatprep.subr.mxu0 0.0
  %2177 = vmatpush1.msra.mxu0 %v2137
  %2178 = vmatprep.subr.mxu0 0.0
  %2179 = vmatpush1.msra.mxu0 %v2139
  %2180 = vmatprep.subr.mxu0 0.0
  %2181 = vmatpush1.msra.mxu0 %v2141
  %2182 = vmatprep.subr.mxu0 0.0
  %2183 = vmatpush1.msra.mxu0 %v2143
  %2184 = vmatprep.subr.mxu0 0.0
  %2185 = vmatpush1.msra.mxu0 %v2145
  %2186 = vmatprep.subr.mxu0 0.0
  %2187 = vmatpush1.msra.mxu0 %v2147
  %2188 = vmatprep.subr.mxu0 0.0
  %2189 = vmatpush1.msra.mxu0 %v2149
  %2190 = vmatprep.subr.mxu0 0.0
  %2191 = vmatpush1.msra.mxu0 %v2164
  %2192 = vmatprep.subr.mxu0 0.0
  %2193 = vmatpush1.msra.mxu0 0.0
  %2194 = vmatprep.subr.mxu0 0.0
  %2195 = vmatpush1.msra.mxu0 0.0
  %2196 = vmatprep.subr.mxu0 0.0
  %2197 = vmatpush1.msra.mxu0 0.0
  %2198 = vmatprep.subr.mxu0 0.0
  %2199 = vmatpush1.msra.mxu0 0.0
  %2200 = vmatprep.subr.mxu0 0.0
  %2201 = vmatpush1.msra.mxu0 0.0
  %2202 = vmatprep.subr.mxu0 0.0
  %2203 = vmatpush1.msra.mxu0 0.0
  %2204 = vmatprep.subr.mxu0 0.0
  %2205 = vmatpush1.msra.mxu0 0.0
  %2206 = vmatprep.subr.mxu0 0.0
  %2207 = vmatpush1.msra.mxu0 0.0
  %2208 = vmatprep.subr.mxu0 0.0
  %2209 = vmatpush1.msra.mxu0 0.0
  %2210 = vmatprep.subr.mxu0 0.0
  %2211 = vmatpush1.msra.mxu0 0.0
  %2212 = vmatprep.subr.mxu0 0.0
  %2213 = vmatpush1.msra.mxu0 0.0
  %2214 = vmatprep.subr.mxu0 0.0
  %2215 = vmatpush1.msra.mxu0 0.0
  %2216 = vmatprep.subr.mxu0 0.0
  %2217 = vmatpush1.msra.mxu0 0.0
  %2218 = vmatprep.subr.mxu0 0.0
  %2219 = vmatpush1.msra.mxu0 0.0
  %2220 = vmatprep.subr.mxu0 0.0
  %2221 = vmatpush1.msra.mxu0 0.0
  %2222 = vmatprep.subr.mxu0 0.0
  %2223 = vmatpush1.msra.mxu0 0.0
  %2224 = vmatprep.subr.mxu0 0.0
  %2225 = vmatpush1.msra.mxu0 0.0
  %2226 = vmatprep.subr.mxu0 0.0
  %2227 = vmatpush1.msra.mxu0 0.0
  %2228 = vmatprep.subr.mxu0 0.0
  %2229 = vmatpush1.msra.mxu0 0.0
  %2230 = vmatprep.mubr.f32.mxu0 0.0
  %2231 = vmatmul.mubr.f32.gmra.mrb[0].mxu0 %v567
  %v2232 = vpop.f32.mrb[0].mxu0
  %v2233 = vadd.f32 0.0, %v2232
  %v2234 = vpop.f32.mrb[0].mxu0
  %2235 = vmatprep.mubr.f32.mxu0 0.0
  %2236 = vmatmul.mubr.f32.gmra.mrb[0].mxu0 %v570
  %v2237 = vpop.f32.mrb[0].mxu0
  %v2238 = vadd.f32 0.0, %v2237
  %v2239 = vpop.f32.mrb[0].mxu0
  %2240 = vmatprep.mubr.f32.mxu0 0.0
  %2241 = vmatmul.mubr.f32.gmra.mrb[0].mxu0 %v573
  %v2242 = vpop.f32.mrb[0].mxu0
  %v2243 = vadd.f32 0.0, %v2242
  %v2244 = vpop.f32.mrb[0].mxu0
  %2245 = vmatprep.mubr.f32.mxu0 0.0
  %2246 = vmatmul.mubr.f32.gmra.mrb[0].mxu0 %v576
  %v2247 = vpop.f32.mrb[0].mxu0
  %v2248 = vadd.f32 0.0, %v2247
  %v2249 = vpop.f32.mrb[0].mxu0
  %2250 = vmatprep.mubr.f32.mxu0 0.0
  %2251 = vmatmul.mubr.f32.gmra.mrb[0].mxu0 %v579
  %v2252 = vpop.f32.mrb[0].mxu0
  %v2253 = vadd.f32 0.0, %v2252
  %v2254 = vpop.f32.mrb[0].mxu0
  %2255 = vmatprep.mubr.f32.mxu0 0.0
  %2256 = vmatmul.mubr.f32.gmra.mrb[0].mxu0 %v582
  %v2257 = vpop.f32.mrb[0].mxu0
  %v2258 = vadd.f32 0.0, %v2257
  %v2259 = vpop.f32.mrb[0].mxu0
  %2260 = vmatprep.mubr.f32.mxu0 0.0
  %2261 = vmatmul.mubr.f32.gmra.mrb[0].mxu0 %v585
  %v2262 = vpop.f32.mrb[0].mxu0
  %v2263 = vadd.f32 0.0, %v2262
  %v2264 = vpop.f32.mrb[0].mxu0
  %2265 = vmatprep.mubr.f32.mxu0 0.0
  %2266 = vmatmul.mubr.f32.gmra.mrb[0].mxu0 %v588
  %v2267 = vpop.f32.mrb[0].mxu0
  %v2268 = vadd.f32 0.0, %v2267
  %v2269 = vpop.f32.mrb[0].mxu0
  %2270 = vmatprep.mubr.f32.mxu0 0.0
  %2271 = vmatmul.mubr.f32.gmra.mrb[0].mxu0 %v591
  %v2272 = vpop.f32.mrb[0].mxu0
  %v2273 = vadd.f32 0.0, %v2272
  %v2274 = vpop.f32.mrb[0].mxu0
  %2275 = vmatprep.mubr.f32.mxu0 0.0
  %2276 = vmatmul.mubr.f32.gmra.mrb[0].mxu0 %v594
  %v2277 = vpop.f32.mrb[0].mxu0
  %v2278 = vadd.f32 0.0, %v2277
  %v2279 = vpop.f32.mrb[0].mxu0
  %2280 = vmatprep.mubr.f32.mxu0 0.0
  %2281 = vmatmul.mubr.f32.gmra.mrb[0].mxu0 %v597
  %v2282 = vpop.f32.mrb[0].mxu0
  %v2283 = vadd.f32 0.0, %v2282
  %v2284 = vpop.f32.mrb[0].mxu0
  %2285 = vmatprep.mubr.f32.mxu0 0.0
  %2286 = vmatmul.mubr.f32.gmra.mrb[0].mxu0 %v600
  %v2287 = vpop.f32.mrb[0].mxu0
  %v2288 = vadd.f32 0.0, %v2287
  %v2289 = vpop.f32.mrb[0].mxu0
  %2290 = vmatprep.mubr.f32.mxu0 0.0
  %2291 = vmatmul.mubr.f32.gmra.mrb[0].mxu0 %v603
  %v2292 = vpop.f32.mrb[0].mxu0
  %v2293 = vadd.f32 0.0, %v2292
  %v2294 = vpop.f32.mrb[0].mxu0
  %2295 = vmatprep.mubr.f32.mxu0 0.0
  %2296 = vmatmul.mubr.f32.gmra.mrb[0].mxu0 %v606
  %v2297 = vpop.f32.mrb[0].mxu0
  %v2298 = vadd.f32 0.0, %v2297
  %v2299 = vpop.f32.mrb[0].mxu0
  %2300 = vmatprep.mubr.f32.mxu0 0.0
  %2301 = vmatmul.mubr.f32.gmra.mrb[0].mxu0 %v609
  %v2302 = vpop.f32.mrb[0].mxu0
  %v2303 = vadd.f32 0.0, %v2302
  %v2304 = vpop.f32.mrb[0].mxu0
  %2305 = vmatprep.mubr.f32.mxu0 0.0
  %2306 = vmatmul.mubr.f32.gmra.mrb[0].mxu0 %v612
  %v2307 = vpop.f32.mrb[0].mxu0
  %v2308 = vadd.f32 0.0, %v2307
  %v2309 = vpop.f32.mrb[0].mxu0
  %2310 = vmatprep.mubr.f32.mxu0 0.0
  %2311 = vmatmul.mubr.f32.gmra.mrb[0].mxu0 %v615
  %v2312 = vpop.f32.mrb[0].mxu0
  %v2313 = vadd.f32 0.0, %v2312
  %v2314 = vpop.f32.mrb[0].mxu0
  %2315 = vmatprep.mubr.f32.mxu0 0.0
  %2316 = vmatmul.mubr.f32.gmra.mrb[0].mxu0 %v618
  %v2317 = vpop.f32.mrb[0].mxu0
  %v2318 = vadd.f32 0.0, %v2317
  %v2319 = vpop.f32.mrb[0].mxu0
  %2320 = vmatprep.mubr.f32.mxu0 0.0
  %2321 = vmatmul.mubr.f32.gmra.mrb[0].mxu0 %v621
  %v2322 = vpop.f32.mrb[0].mxu0
  %v2323 = vadd.f32 0.0, %v2322
  %v2324 = vpop.f32.mrb[0].mxu0
  %2325 = vmatprep.mubr.f32.mxu0 0.0
  %2326 = vmatmul.mubr.f32.gmra.mrb[0].mxu0 %v624
  %v2327 = vpop.f32.mrb[0].mxu0
  %v2328 = vadd.f32 0.0, %v2327
  %v2329 = vpop.f32.mrb[0].mxu0
  %2330 = vmatprep.mubr.f32.mxu0 0.0
  %2331 = vmatmul.mubr.f32.gmra.mrb[0].mxu0 %v627
  %v2332 = vpop.f32.mrb[0].mxu0
  %v2333 = vadd.f32 0.0, %v2332
  %v2334 = vpop.f32.mrb[0].mxu0
  %2335 = vmatprep.mubr.f32.mxu0 0.0
  %2336 = vmatmul.mubr.f32.gmra.mrb[0].mxu0 %v630
  %v2337 = vpop.f32.mrb[0].mxu0
  %v2338 = vadd.f32 0.0, %v2337
  %v2339 = vpop.f32.mrb[0].mxu0
  %2340 = vmatprep.mubr.f32.mxu0 0.0
  %2341 = vmatmul.mubr.f32.gmra.mrb[0].mxu0 %v633
  %v2342 = vpop.f32.mrb[0].mxu0
  %v2343 = vadd.f32 0.0, %v2342
  %v2344 = vpop.f32.mrb[0].mxu0
  %2345 = vmatprep.mubr.f32.mxu0 0.0
  %2346 = vmatmul.mubr.f32.gmra.mrb[0].mxu0 %v636
  %v2347 = vpop.f32.mrb[0].mxu0
  %v2348 = vadd.f32 0.0, %v2347
  %v2349 = vpop.f32.mrb[0].mxu0
  %2350 = vmatprep.mubr.f32.mxu0 0.0
  %2351 = vmatmul.mubr.f32.gmra.mrb[0].mxu0 %v639
  %v2352 = vpop.f32.mrb[0].mxu0
  %v2353 = vadd.f32 0.0, %v2352
  %v2354 = vpop.f32.mrb[0].mxu0
  %2355 = vmatprep.mubr.f32.mxu0 0.0
  %2356 = vmatmul.mubr.f32.gmra.mrb[0].mxu0 %v642
  %v2357 = vpop.f32.mrb[0].mxu0
  %v2358 = vadd.f32 0.0, %v2357
  %v2359 = vpop.f32.mrb[0].mxu0
  %2360 = vmatprep.mubr.f32.mxu0 0.0
  %2361 = vmatmul.mubr.f32.gmra.mrb[0].mxu0 %v645
  %v2362 = vpop.f32.mrb[0].mxu0
  %v2363 = vadd.f32 0.0, %v2362
  %v2364 = vpop.f32.mrb[0].mxu0
  %2365 = vmatprep.mubr.f32.mxu0 0.0
  %2366 = vmatmul.mubr.f32.gmra.mrb[0].mxu0 %v648
  %v2367 = vpop.f32.mrb[0].mxu0
  %v2368 = vadd.f32 0.0, %v2367
  %v2369 = vpop.f32.mrb[0].mxu0
  %2370 = vmatprep.mubr.f32.mxu0 0.0
  %2371 = vmatmul.mubr.f32.gmra.mrb[0].mxu0 %v651
  %v2372 = vpop.f32.mrb[0].mxu0
  %v2373 = vadd.f32 0.0, %v2372
  %v2374 = vpop.f32.mrb[0].mxu0
  %2375 = vmatprep.mubr.f32.mxu0 0.0
  %2376 = vmatmul.mubr.f32.gmra.mrb[0].mxu0 %v654
  %v2377 = vpop.f32.mrb[0].mxu0
  %v2378 = vadd.f32 0.0, %v2377
  %v2379 = vpop.f32.mrb[0].mxu0
  %2380 = vmatprep.mubr.f32.mxu0 0.0
  %2381 = vmatmul.mubr.f32.gmra.mrb[0].mxu0 %v657
  %v2382 = vpop.f32.mrb[0].mxu0
  %v2383 = vadd.f32 0.0, %v2382
  %v2384 = vpop.f32.mrb[0].mxu0
  %2385 = vmatprep.mubr.f32.mxu0 0.0
  %2386 = vmatmul.mubr.f32.gmra.mrb[0].mxu0 %v660
  %v2387 = vpop.f32.mrb[0].mxu0
  %v2388 = vadd.f32 0.0, %v2387
  %v2389 = vpop.f32.mrb[0].mxu0
  %2390 = vdwg.mxu0
  %v2391 = vmul.f32 %v2233, 0.5
  %v2392 = vmul.f32 %v2238, 0.5
  %v2393 = vmul.f32 %v2243, 0.5
  %v2394 = vmul.f32 %v2248, 0.5
  %v2395 = vmul.f32 %v2253, 0.5
  %v2396 = vmul.f32 %v2258, 0.5
  %v2397 = vmul.f32 %v2263, 0.5
  %v2398 = vmul.f32 %v2268, 0.5
  %v2399 = vmul.f32 %v2273, 0.5
  %v2400 = vmul.f32 %v2278, 0.5
  %v2401 = vmul.f32 %v2283, 0.5
  %v2402 = vmul.f32 %v2288, 0.5
  %v2403 = vmul.f32 %v2293, 0.5
  %v2404 = vmul.f32 %v2298, 0.5
  %v2405 = vmul.f32 %v2303, 0.5
  %v2406 = vmul.f32 %v2308, 0.5
  %v2407 = vmul.f32 %v2313, 0.5
  %v2408 = vmul.f32 %v2318, 0.5
  %v2409 = vmul.f32 %v2323, 0.5
  %v2410 = vmul.f32 %v2328, 0.5
  %v2411 = vmul.f32 %v2333, 0.5
  %v2412 = vmul.f32 %v2338, 0.5
  %v2413 = vmul.f32 %v2343, 0.5
  %v2414 = vmul.f32 %v2348, 0.5
  %v2415 = vtanh.pop %v2391
  %v2416 = vtanh.pop %v2392
  %v2417 = vtanh.pop %v2393
  %v2418 = vtanh.pop %v2394
  %v2419 = vtanh.pop %v2395
  %v2420 = vtanh.pop %v2396
  %v2421 = vtanh.pop %v2397
  %v2422 = vtanh.pop %v2398
  %v2423 = vtanh.pop %v2399
  %v2424 = vtanh.pop %v2400
  %v2425 = vtanh.pop %v2401
  %v2426 = vtanh.pop %v2402
  %v2427 = vtanh.pop %v2403
  %v2428 = vtanh.pop %v2404
  %v2429 = vtanh.pop %v2405
  %v2430 = vtanh.pop %v2406
  %v2431 = vtanh.pop %v2407
  %v2432 = vtanh.pop %v2408
  %v2433 = vtanh.pop %v2409
  %v2434 = vtanh.pop %v2410
  %v2435 = vtanh.pop %v2411
  %v2436 = vtanh.pop %v2412
  %v2437 = vtanh.pop %v2413
  %v2438 = vtanh.pop %v2414
  %v2439 = vmul.f32 %v2415, 0.5
  %v2440 = vmul.f32 %v2416, 0.5
  %v2441 = vmul.f32 %v2417, 0.5
  %v2442 = vmul.f32 %v2418, 0.5
  %v2443 = vmul.f32 %v2419, 0.5
  %v2444 = vmul.f32 %v2420, 0.5
  %v2445 = vmul.f32 %v2421, 0.5
  %v2446 = vmul.f32 %v2422, 0.5
  %v2447 = vmul.f32 %v2423, 0.5
  %v2448 = vmul.f32 %v2424, 0.5
  %v2449 = vmul.f32 %v2425, 0.5
  %v2450 = vmul.f32 %v2426, 0.5
  %v2451 = vmul.f32 %v2427, 0.5
  %v2452 = vmul.f32 %v2428, 0.5
  %v2453 = vmul.f32 %v2429, 0.5
  %v2454 = vmul.f32 %v2430, 0.5
  %v2455 = vmul.f32 %v2431, 0.5
  %v2456 = vmul.f32 %v2432, 0.5
  %v2457 = vmul.f32 %v2433, 0.5
  %v2458 = vmul.f32 %v2434, 0.5
  %v2459 = vmul.f32 %v2435, 0.5
  %v2460 = vmul.f32 %v2436, 0.5
  %v2461 = vmul.f32 %v2437, 0.5
  %v2462 = vmul.f32 %v2438, 0.5
  %v2463 = vadd.f32 %v2439, 0.5
  %v2464 = vadd.f32 %v2440, 0.5
  %v2465 = vadd.f32 %v2441, 0.5
  %v2466 = vadd.f32 %v2442, 0.5
  %v2467 = vadd.f32 %v2443, 0.5
  %v2468 = vadd.f32 %v2444, 0.5
  %v2469 = vadd.f32 %v2445, 0.5
  %v2470 = vadd.f32 %v2446, 0.5
  %v2471 = vadd.f32 %v2447, 0.5
  %v2472 = vadd.f32 %v2448, 0.5
  %v2473 = vadd.f32 %v2449, 0.5
  %v2474 = vadd.f32 %v2450, 0.5
  %v2475 = vadd.f32 %v2451, 0.5
  %v2476 = vadd.f32 %v2452, 0.5
  %v2477 = vadd.f32 %v2453, 0.5
  %v2478 = vadd.f32 %v2454, 0.5
  %v2479 = vadd.f32 %v2455, 0.5
  %v2480 = vadd.f32 %v2456, 0.5
  %v2481 = vadd.f32 %v2457, 0.5
  %v2482 = vadd.f32 %v2458, 0.5
  %v2483 = vadd.f32 %v2459, 0.5
  %v2484 = vadd.f32 %v2460, 0.5
  %v2485 = vadd.f32 %v2461, 0.5
  %v2486 = vadd.f32 %v2462, 0.5
  %v2487 = vtanh.pop %v2353
  %v2488 = vtanh.pop %v2358
  %v2489 = vtanh.pop %v2363
  %v2490 = vtanh.pop %v2368
  %v2491 = vtanh.pop %v2373
  %v2492 = vtanh.pop %v2378
  %v2493 = vtanh.pop %v2383
  %v2494 = vtanh.pop %v2388
  %v2495 = vmul.f32 %v2471, %v1761
  %v2496 = vmul.f32 %v2472, %v1762
  %v2497 = vmul.f32 %v2473, %v1763
  %v2498 = vmul.f32 %v2474, %v1764
  %v2499 = vmul.f32 %v2475, %v1765
  %v2500 = vmul.f32 %v2476, %v1766
  %v2501 = vmul.f32 %v2477, %v1767
  %v2502 = vmul.f32 %v2478, %v1768
  %v2503 = vmul.f32 %v2463, %v2487
  %v2504 = vmul.f32 %v2464, %v2488
  %v2505 = vmul.f32 %v2465, %v2489
  %v2506 = vmul.f32 %v2466, %v2490
  %v2507 = vmul.f32 %v2467, %v2491
  %v2508 = vmul.f32 %v2468, %v2492
  %v2509 = vmul.f32 %v2469, %v2493
  %v2510 = vmul.f32 %v2470, %v2494
  %v2511 = vadd.f32 %v2495, %v2503
  %v2512 = vadd.f32 %v2496, %v2504
  %v2513 = vadd.f32 %v2497, %v2505
  %v2514 = vadd.f32 %v2498, %v2506
  %v2515 = vadd.f32 %v2499, %v2507
  %v2516 = vadd.f32 %v2500, %v2508
  %v2517 = vadd.f32 %v2501, %v2509
  %v2518 = vadd.f32 %v2502, %v2510
  %v2519 = vtanh.pop %v2511
  %v2520 = vtanh.pop %v2512
  %v2521 = vtanh.pop %v2513
  %v2522 = vtanh.pop %v2514
  %v2523 = vtanh.pop %v2515
  %v2524 = vtanh.pop %v2516
  %v2525 = vtanh.pop %v2517
  %v2526 = vtanh.pop %v2518
  %v2527 = vmul.f32 %v2479, %v2519
  %v2528 = vmul.f32 %v2480, %v2520
  %v2529 = vmul.f32 %v2481, %v2521
  %v2530 = vmul.f32 %v2482, %v2522
  %v2531 = vmul.f32 %v2483, %v2523
  %v2532 = vmul.f32 %v2484, %v2524
  %v2533 = vmul.f32 %v2485, %v2525
  %v2534 = vmul.f32 %v2486, %v2526
  %2535 = vmatprep.subr.mxu0 0.0
  %2536 = vmatpush1.msra.mxu0 %v2127
  %2537 = vmatprep.subr.mxu0 0.0
  %2538 = vmatpush1.msra.mxu0 %v2129
  %2539 = vmatprep.subr.mxu0 0.0
  %2540 = vmatpush1.msra.mxu0 %v2131
  %2541 = vmatprep.subr.mxu0 0.0
  %2542 = vmatpush1.msra.mxu0 %v2133
  %2543 = vmatprep.subr.mxu0 0.0
  %2544 = vmatpush1.msra.mxu0 0.0
  %2545 = vmatprep.subr.mxu0 0.0
  %2546 = vmatpush1.msra.mxu0 0.0
  %2547 = vmatprep.subr.mxu0 0.0
  %2548 = vmatpush1.msra.mxu0 0.0
  %2549 = vmatprep.subr.mxu0 0.0
  %2550 = vmatpush1.msra.mxu0 0.0
  %2551 = vmatprep.subr.mxu0 0.0
  %2552 = vmatpush1.msra.mxu0 0.0
  %2553 = vmatprep.subr.mxu0 0.0
  %2554 = vmatpush1.msra.mxu0 0.0
  %2555 = vmatprep.subr.mxu0 0.0
  %2556 = vmatpush1.msra.mxu0 0.0
  %2557 = vmatprep.subr.mxu0 0.0
  %2558 = vmatpush1.msra.mxu0 0.0
  %2559 = vmatprep.subr.mxu0 0.0
  %2560 = vmatpush1.msra.mxu0 0.0
  %2561 = vmatprep.subr.mxu0 0.0
  %2562 = vmatpush1.msra.mxu0 0.0
  %2563 = vmatprep.subr.mxu0 0.0
  %2564 = vmatpush1.msra.mxu0 0.0
  %2565 = vmatprep.subr.mxu0 0.0
  %2566 = vmatpush1.msra.mxu0 0.0
  %2567 = vmatprep.subr.mxu0 0.0
  %2568 = vmatpush1.msra.mxu0 0.0
  %2569 = vmatprep.subr.mxu0 0.0
  %2570 = vmatpush1.msra.mxu0 0.0
  %2571 = vmatprep.subr.mxu0 0.0
  %2572 = vmatpush1.msra.mxu0 0.0
  %2573 = vmatprep.subr.mxu0 0.0
  %2574 = vmatpush1.msra.mxu0 0.0
  %2575 = vmatprep.subr.mxu0 0.0
  %2576 = vmatpush1.msra.mxu0 0.0
  %2577 = vmatprep.subr.mxu0 0.0
  %2578 = vmatpush1.msra.mxu0 0.0
  %2579 = vmatprep.subr.mxu0 0.0
  %2580 = vmatpush1.msra.mxu0 0.0
  %2581 = vmatprep.subr.mxu0 0.0
  %2582 = vmatpush1.msra.mxu0 0.0
  %2583 = vmatprep.subr.mxu0 0.0
  %2584 = vmatpush1.msra.mxu0 0.0
  %2585 = vmatprep.subr.mxu0 0.0
  %2586 = vmatpush1.msra.mxu0 0.0
  %2587 = vmatprep.subr.mxu0 0.0
  %2588 = vmatpush1.msra.mxu0 0.0
  %2589 = vmatprep.subr.mxu0 0.0
  %2590 = vmatpush1.msra.mxu0 0.0
  %2591 = vmatprep.subr.mxu0 0.0
  %2592 = vmatpush1.msra.mxu0 0.0
  %2593 = vmatprep.subr.mxu0 0.0
  %2594 = vmatpush1.msra.mxu0 0.0
  %2595 = vmatprep.subr.mxu0 0.0
  %2596 = vmatpush1.msra.mxu0 0.0
  %2597 = vmatprep.subr.mxu0 0.0
  %2598 = vmatpush1.msra.mxu0 0.0
  %2599 = vmatprep.mubr.f32.mxu0 0.0
  %2600 = vmatmul.mubr.f32.gmra.mrb[0].mxu0 %v253
  %v2601 = vpop.f32.mrb[0].mxu0
  %v2602 = vadd.f32 0.0, %v2601
  %v2603 = vpop.f32.mrb[0].mxu0
  %2604 = vmatprep.mubr.f32.mxu0 0.0
  %2605 = vmatmul.mubr.f32.gmra.mrb[0].mxu0 %v256
  %v2606 = vpop.f32.mrb[0].mxu0
  %v2607 = vadd.f32 0.0, %v2606
  %v2608 = vpop.f32.mrb[0].mxu0
  %2609 = vmatprep.mubr.f32.mxu0 0.0
  %2610 = vmatmul.mubr.f32.gmra.mrb[0].mxu0 %v259
  %v2611 = vpop.f32.mrb[0].mxu0
  %v2612 = vadd.f32 0.0, %v2611
  %v2613 = vpop.f32.mrb[0].mxu0
  %2614 = vmatprep.mubr.f32.mxu0 0.0
  %2615 = vmatmul.mubr.f32.gmra.mrb[0].mxu0 %v262
  %v2616 = vpop.f32.mrb[0].mxu0
  %v2617 = vadd.f32 0.0, %v2616
  %v2618 = vpop.f32.mrb[0].mxu0
  %2619 = vmatprep.mubr.f32.mxu0 0.0
  %2620 = vmatmul.mubr.f32.gmra.mrb[0].mxu0 %v265
  %v2621 = vpop.f32.mrb[0].mxu0
  %v2622 = vadd.f32 0.0, %v2621
  %v2623 = vpop.f32.mrb[0].mxu0
  %2624 = vmatprep.mubr.f32.mxu0 0.0
  %2625 = vmatmul.mubr.f32.gmra.mrb[0].mxu0 %v268
  %v2626 = vpop.f32.mrb[0].mxu0
  %v2627 = vadd.f32 0.0, %v2626
  %v2628 = vpop.f32.mrb[0].mxu0
  %2629 = vmatprep.mubr.f32.mxu0 0.0
  %2630 = vmatmul.mubr.f32.gmra.mrb[0].mxu0 %v271
  %v2631 = vpop.f32.mrb[0].mxu0
  %v2632 = vadd.f32 0.0, %v2631
  %v2633 = vpop.f32.mrb[0].mxu0
  %2634 = vmatprep.mubr.f32.mxu0 0.0
  %2635 = vmatmul.mubr.f32.gmra.mrb[0].mxu0 %v274
  %v2636 = vpop.f32.mrb[0].mxu0
  %v2637 = vadd.f32 0.0, %v2636
  %v2638 = vpop.f32.mrb[0].mxu0
  %2639 = vmatprep.mubr.f32.mxu0 0.0
  %2640 = vmatmul.mubr.f32.gmra.mrb[0].mxu0 %v277
  %v2641 = vpop.f32.mrb[0].mxu0
  %v2642 = vadd.f32 0.0, %v2641
  %v2643 = vpop.f32.mrb[0].mxu0
  %2644 = vmatprep.mubr.f32.mxu0 0.0
  %2645 = vmatmul.mubr.f32.gmra.mrb[0].mxu0 %v280
  %v2646 = vpop.f32.mrb[0].mxu0
  %v2647 = vadd.f32 0.0, %v2646
  %v2648 = vpop.f32.mrb[0].mxu0
  %2649 = vmatprep.mubr.f32.mxu0 0.0
  %2650 = vmatmul.mubr.f32.gmra.mrb[0].mxu0 %v283
  %v2651 = vpop.f32.mrb[0].mxu0
  %v2652 = vadd.f32 0.0, %v2651
  %v2653 = vpop.f32.mrb[0].mxu0
  %2654 = vmatprep.mubr.f32.mxu0 0.0
  %2655 = vmatmul.mubr.f32.gmra.mrb[0].mxu0 %v286
  %v2656 = vpop.f32.mrb[0].mxu0
  %v2657 = vadd.f32 0.0, %v2656
  %v2658 = vpop.f32.mrb[0].mxu0
  %2659 = vmatprep.mubr.f32.mxu0 0.0
  %2660 = vmatmul.mubr.f32.gmra.mrb[0].mxu0 %v289
  %v2661 = vpop.f32.mrb[0].mxu0
  %v2662 = vadd.f32 0.0, %v2661
  %v2663 = vpop.f32.mrb[0].mxu0
  %2664 = vmatprep.mubr.f32.mxu0 0.0
  %2665 = vmatmul.mubr.f32.gmra.mrb[0].mxu0 %v292
  %v2666 = vpop.f32.mrb[0].mxu0
  %v2667 = vadd.f32 0.0, %v2666
  %v2668 = vpop.f32.mrb[0].mxu0
  %2669 = vmatprep.mubr.f32.mxu0 0.0
  %2670 = vmatmul.mubr.f32.gmra.mrb[0].mxu0 %v295
  %v2671 = vpop.f32.mrb[0].mxu0
  %v2672 = vadd.f32 0.0, %v2671
  %v2673 = vpop.f32.mrb[0].mxu0
  %2674 = vmatprep.mubr.f32.mxu0 0.0
  %2675 = vmatmul.mubr.f32.gmra.mrb[0].mxu0 %v298
  %v2676 = vpop.f32.mrb[0].mxu0
  %v2677 = vadd.f32 0.0, %v2676
  %v2678 = vpop.f32.mrb[0].mxu0
  %2679 = vdwg.mxu0
  %2696 = vrot.lane.b32.xlu0 %v2602, 6
  %v2697 = vpop.permute.xlu0 %2696
  %2698 = vrot.lane.b32.xlu0 %v2607, 6
  %v2699 = vpop.permute.xlu0 %2698
  %2700 = vrot.lane.b32.xlu0 %v2612, 6
  %v2701 = vpop.permute.xlu0 %2700
  %2702 = vrot.lane.b32.xlu0 %v2617, 6
  %v2703 = vpop.permute.xlu0 %2702
  %2704 = vrot.lane.b32.xlu0 %v2622, 6
  %v2705 = vpop.permute.xlu0 %2704
  %2706 = vrot.lane.b32.xlu0 %v2627, 6
  %v2707 = vpop.permute.xlu0 %2706
  %2708 = vrot.lane.b32.xlu0 %v2632, 6
  %v2709 = vpop.permute.xlu0 %2708
  %2710 = vrot.lane.b32.xlu0 %v2637, 6
  %v2711 = vpop.permute.xlu0 %2710
  %2712 = vrot.lane.b32.xlu0 %v2642, 6
  %v2713 = vpop.permute.xlu0 %2712
  %2714 = vrot.lane.b32.xlu0 %v2647, 6
  %v2715 = vpop.permute.xlu0 %2714
  %2716 = vrot.lane.b32.xlu0 %v2652, 6
  %v2717 = vpop.permute.xlu0 %2716
  %2718 = vrot.lane.b32.xlu0 %v2657, 6
  %v2719 = vpop.permute.xlu0 %2718
  %2720 = vrot.lane.b32.xlu0 %v2662, 6
  %v2721 = vpop.permute.xlu0 %2720
  %2722 = vrot.lane.b32.xlu0 %v2667, 6
  %v2723 = vpop.permute.xlu0 %2722
  %2724 = vrot.lane.b32.xlu0 %v2672, 6
  %v2725 = vpop.permute.xlu0 %2724
  %2726 = vrot.lane.b32.xlu0 %v2677, 6
  %v2727 = vpop.permute.xlu0 %2726
  %v2744 = vadd.f32 %v157, %v2697
  %v2745 = vadd.f32 %v162, %v2699
  %v2746 = vadd.f32 %v167, %v2701
  %v2747 = vadd.f32 %v172, %v2703
  %v2748 = vadd.f32 %v177, %v2705
  %v2749 = vadd.f32 %v182, %v2707
  %v2750 = vadd.f32 %v187, %v2709
  %v2751 = vadd.f32 %v192, %v2711
  %v2752 = vadd.f32 %v197, %v2713
  %v2753 = vadd.f32 %v202, %v2715
  %v2754 = vadd.f32 %v207, %v2717
  %v2755 = vadd.f32 %v212, %v2719
  %v2756 = vadd.f32 %v217, %v2721
  %v2757 = vadd.f32 %v222, %v2723
  %v2758 = vadd.f32 %v227, %v2725
  %v2759 = vadd.f32 %v232, %v2727
  %v2760 = vmul.f32 %v2744, 0.5
  %v2761 = vmul.f32 %v2745, 0.5
  %v2762 = vmul.f32 %v2746, 0.5
  %v2763 = vmul.f32 %v2747, 0.5
  %v2764 = vmul.f32 %v2748, 0.5
  %v2765 = vmul.f32 %v2749, 0.5
  %v2766 = vmul.f32 %v2750, 0.5
  %v2767 = vmul.f32 %v2751, 0.5
  %v2768 = vmul.f32 %v2752, 0.5
  %v2769 = vmul.f32 %v2753, 0.5
  %v2770 = vmul.f32 %v2754, 0.5
  %v2771 = vmul.f32 %v2755, 0.5
  %v2772 = vtanh.pop %v2760
  %v2773 = vtanh.pop %v2761
  %v2774 = vtanh.pop %v2762
  %v2775 = vtanh.pop %v2763
  %v2776 = vtanh.pop %v2764
  %v2777 = vtanh.pop %v2765
  %v2778 = vtanh.pop %v2766
  %v2779 = vtanh.pop %v2767
  %v2780 = vtanh.pop %v2768
  %v2781 = vtanh.pop %v2769
  %v2782 = vtanh.pop %v2770
  %v2783 = vtanh.pop %v2771
  %v2784 = vmul.f32 %v2772, 0.5
  %v2785 = vmul.f32 %v2773, 0.5
  %v2786 = vmul.f32 %v2774, 0.5
  %v2787 = vmul.f32 %v2775, 0.5
  %v2788 = vmul.f32 %v2776, 0.5
  %v2789 = vmul.f32 %v2777, 0.5
  %v2790 = vmul.f32 %v2778, 0.5
  %v2791 = vmul.f32 %v2779, 0.5
  %v2792 = vmul.f32 %v2780, 0.5
  %v2793 = vmul.f32 %v2781, 0.5
  %v2794 = vmul.f32 %v2782, 0.5
  %v2795 = vmul.f32 %v2783, 0.5
  %v2796 = vadd.f32 %v2784, 0.5
  %v2797 = vadd.f32 %v2785, 0.5
  %v2798 = vadd.f32 %v2786, 0.5
  %v2799 = vadd.f32 %v2787, 0.5
  %v2800 = vadd.f32 %v2788, 0.5
  %v2801 = vadd.f32 %v2789, 0.5
  %v2802 = vadd.f32 %v2790, 0.5
  %v2803 = vadd.f32 %v2791, 0.5
  %v2804 = vadd.f32 %v2792, 0.5
  %v2805 = vadd.f32 %v2793, 0.5
  %v2806 = vadd.f32 %v2794, 0.5
  %v2807 = vadd.f32 %v2795, 0.5
  %v2808 = vtanh.pop %v2756
  %v2809 = vtanh.pop %v2757
  %v2810 = vtanh.pop %v2758
  %v2811 = vtanh.pop %v2759
  %2816 = vrot.lane.b32.xlu0 %v2086, 2
  %v2817 = vpop.permute.xlu0 %2816
  %2818 = vrot.lane.b32.xlu0 %v2087, 2
  %v2819 = vpop.permute.xlu0 %2818
  %2820 = vrot.lane.b32.xlu0 %v2088, 2
  %v2821 = vpop.permute.xlu0 %2820
  %2822 = vrot.lane.b32.xlu0 %v2089, 2
  %v2823 = vpop.permute.xlu0 %2822
  %v2828 = vmul.f32 %v2800, %v2817
  %v2829 = vmul.f32 %v2801, %v2819
  %v2830 = vmul.f32 %v2802, %v2821
  %v2831 = vmul.f32 %v2803, %v2823
  %v2832 = vmul.f32 %v2796, %v2808
  %v2833 = vmul.f32 %v2797, %v2809
  %v2834 = vmul.f32 %v2798, %v2810
  %v2835 = vmul.f32 %v2799, %v2811
  %v2836 = vadd.f32 %v2828, %v2832
  %v2837 = vadd.f32 %v2829, %v2833
  %v2838 = vadd.f32 %v2830, %v2834
  %v2839 = vadd.f32 %v2831, %v2835
  %v2840 = vtanh.pop %v2836
  %v2841 = vtanh.pop %v2837
  %v2842 = vtanh.pop %v2838
  %v2843 = vtanh.pop %v2839
  %v2844 = vmul.f32 %v2804, %v2840
  %v2845 = vmul.f32 %v2805, %v2841
  %v2846 = vmul.f32 %v2806, %v2842
  %v2847 = vmul.f32 %v2807, %v2843
  %2856 = vrot.lane.b32.xlu0 %v2527, 6
  %v2857 = vpop.permute.xlu0 %2856
  %2858 = vrot.lane.b32.xlu0 %v2528, 6
  %v2859 = vpop.permute.xlu0 %2858
  %2860 = vrot.lane.b32.xlu0 %v2529, 6
  %v2861 = vpop.permute.xlu0 %2860
  %2862 = vrot.lane.b32.xlu0 %v2530, 6
  %v2863 = vpop.permute.xlu0 %2862
  %2864 = vrot.lane.b32.xlu0 %v2531, 6
  %v2865 = vpop.permute.xlu0 %2864
  %2866 = vrot.lane.b32.xlu0 %v2532, 6
  %v2867 = vpop.permute.xlu0 %2866
  %2868 = vrot.lane.b32.xlu0 %v2533, 6
  %v2869 = vpop.permute.xlu0 %2868
  %2870 = vrot.lane.b32.xlu0 %v2534, 6
  %v2871 = vpop.permute.xlu0 %2870
  %2876 = vrot.lane.b32.xlu0 %v2844, 122
  %v2877 = vpop.permute.xlu0 %2876
  %2878 = vrot.lane.b32.xlu0 %v2845, 122
  %v2879 = vpop.permute.xlu0 %2878
  %2880 = vrot.lane.b32.xlu0 %v2846, 122
  %v2881 = vpop.permute.xlu0 %2880
  %2882 = vrot.lane.b32.xlu0 %v2847, 122
  %v2883 = vpop.permute.xlu0 %2882
  %2884 = vrot.lane.b32.xlu0 %v2857, 122
  %v2885 = vpop.permute.xlu0 %2884
  %2886 = vrot.lane.b32.xlu0 %v2859, 122
  %v2887 = vpop.permute.xlu0 %2886
  %2888 = vrot.lane.b32.xlu0 %v2861, 122
  %v2889 = vpop.permute.xlu0 %2888
  %2890 = vrot.lane.b32.xlu0 %v2863, 122
  %v2891 = vpop.permute.xlu0 %2890
  %2892 = vrot.lane.b32.xlu0 %v2865, 122
  %v2893 = vpop.permute.xlu0 %2892
  %2894 = vrot.lane.b32.xlu0 %v2867, 122
  %v2895 = vpop.permute.xlu0 %2894
  %2896 = vrot.lane.b32.xlu0 %v2869, 122
  %v2897 = vpop.permute.xlu0 %2896
  %2898 = vrot.lane.b32.xlu0 %v2871, 122
  %v2899 = vpop.permute.xlu0 %2898
  %2900 = vrot.lane.b32.xlu0 1.0, 122
  %v2901 = vpop.permute.xlu0 %2900
  %v2914 = vsel %vm662, %v2901, 0
  %2916 = vmatprep.subr.mxu0 0.0
  %2917 = vmatpush1.msra.mxu0 %v2877
  %2918 = vmatprep.subr.mxu0 0.0
  %2919 = vmatpush1.msra.mxu0 %v2879
  %2920 = vmatprep.subr.mxu0 0.0
  %2921 = vmatpush1.msra.mxu0 %v2881
  %2922 = vmatprep.subr.mxu0 0.0
  %2923 = vmatpush1.msra.mxu0 %v2883
  %2924 = vmatprep.subr.mxu0 0.0
  %2925 = vmatpush1.msra.mxu0 %v2885
  %2926 = vmatprep.subr.mxu0 0.0
  %2927 = vmatpush1.msra.mxu0 %v2887
  %2928 = vmatprep.subr.mxu0 0.0
  %2929 = vmatpush1.msra.mxu0 %v2889
  %2930 = vmatprep.subr.mxu0 0.0
  %2931 = vmatpush1.msra.mxu0 %v2891
  %2932 = vmatprep.subr.mxu0 0.0
  %2933 = vmatpush1.msra.mxu0 %v2893
  %2934 = vmatprep.subr.mxu0 0.0
  %2935 = vmatpush1.msra.mxu0 %v2895
  %2936 = vmatprep.subr.mxu0 0.0
  %2937 = vmatpush1.msra.mxu0 %v2897
  %2938 = vmatprep.subr.mxu0 0.0
  %2939 = vmatpush1.msra.mxu0 %v2899
  %2940 = vmatprep.subr.mxu0 0.0
  %2941 = vmatpush1.msra.mxu0 %v2914
  %2942 = vmatprep.subr.mxu0 0.0
  %2943 = vmatpush1.msra.mxu0 0.0
  %2944 = vmatprep.subr.mxu0 0.0
  %2945 = vmatpush1.msra.mxu0 0.0
  %2946 = vmatprep.subr.mxu0 0.0
  %2947 = vmatpush1.msra.mxu0 0.0
  %2948 = vmatprep.subr.mxu0 0.0
  %2949 = vmatpush1.msra.mxu0 0.0
  %2950 = vmatprep.subr.mxu0 0.0
  %2951 = vmatpush1.msra.mxu0 0.0
  %2952 = vmatprep.subr.mxu0 0.0
  %2953 = vmatpush1.msra.mxu0 0.0
  %2954 = vmatprep.subr.mxu0 0.0
  %2955 = vmatpush1.msra.mxu0 0.0
  %2956 = vmatprep.subr.mxu0 0.0
  %2957 = vmatpush1.msra.mxu0 0.0
  %2958 = vmatprep.subr.mxu0 0.0
  %2959 = vmatpush1.msra.mxu0 0.0
  %2960 = vmatprep.subr.mxu0 0.0
  %2961 = vmatpush1.msra.mxu0 0.0
  %2962 = vmatprep.subr.mxu0 0.0
  %2963 = vmatpush1.msra.mxu0 0.0
  %2964 = vmatprep.subr.mxu0 0.0
  %2965 = vmatpush1.msra.mxu0 0.0
  %2966 = vmatprep.subr.mxu0 0.0
  %2967 = vmatpush1.msra.mxu0 0.0
  %2968 = vmatprep.subr.mxu0 0.0
  %2969 = vmatpush1.msra.mxu0 0.0
  %2970 = vmatprep.subr.mxu0 0.0
  %2971 = vmatpush1.msra.mxu0 0.0
  %2972 = vmatprep.subr.mxu0 0.0
  %2973 = vmatpush1.msra.mxu0 0.0
  %2974 = vmatprep.subr.mxu0 0.0
  %2975 = vmatpush1.msra.mxu0 0.0
  %2976 = vmatprep.subr.mxu0 0.0
  %2977 = vmatpush1.msra.mxu0 0.0
  %2978 = vmatprep.subr.mxu0 0.0
  %2979 = vmatpush1.msra.mxu0 0.0
  %2980 = vmatprep.mubr.f32.mxu0 0.0
  %2981 = vmatmul.mubr.f32.gmra.mrb[0].mxu0 %v567
  %v2982 = vpop.f32.mrb[0].mxu0
  %v2983 = vadd.f32 0.0, %v2982
  %v2984 = vpop.f32.mrb[0].mxu0
  %2985 = vmatprep.mubr.f32.mxu0 0.0
  %2986 = vmatmul.mubr.f32.gmra.mrb[0].mxu0 %v570
  %v2987 = vpop.f32.mrb[0].mxu0
  %v2988 = vadd.f32 0.0, %v2987
  %v2989 = vpop.f32.mrb[0].mxu0
  %2990 = vmatprep.mubr.f32.mxu0 0.0
  %2991 = vmatmul.mubr.f32.gmra.mrb[0].mxu0 %v573
  %v2992 = vpop.f32.mrb[0].mxu0
  %v2993 = vadd.f32 0.0, %v2992
  %v2994 = vpop.f32.mrb[0].mxu0
  %2995 = vmatprep.mubr.f32.mxu0 0.0
  %2996 = vmatmul.mubr.f32.gmra.mrb[0].mxu0 %v576
  %v2997 = vpop.f32.mrb[0].mxu0
  %v2998 = vadd.f32 0.0, %v2997
  %v2999 = vpop.f32.mrb[0].mxu0
  %3000 = vmatprep.mubr.f32.mxu0 0.0
  %3001 = vmatmul.mubr.f32.gmra.mrb[0].mxu0 %v579
  %v3002 = vpop.f32.mrb[0].mxu0
  %v3003 = vadd.f32 0.0, %v3002
  %v3004 = vpop.f32.mrb[0].mxu0
  %3005 = vmatprep.mubr.f32.mxu0 0.0
  %3006 = vmatmul.mubr.f32.gmra.mrb[0].mxu0 %v582
  %v3007 = vpop.f32.mrb[0].mxu0
  %v3008 = vadd.f32 0.0, %v3007
  %v3009 = vpop.f32.mrb[0].mxu0
  %3010 = vmatprep.mubr.f32.mxu0 0.0
  %3011 = vmatmul.mubr.f32.gmra.mrb[0].mxu0 %v585
  %v3012 = vpop.f32.mrb[0].mxu0
  %v3013 = vadd.f32 0.0, %v3012
  %v3014 = vpop.f32.mrb[0].mxu0
  %3015 = vmatprep.mubr.f32.mxu0 0.0
  %3016 = vmatmul.mubr.f32.gmra.mrb[0].mxu0 %v588
  %v3017 = vpop.f32.mrb[0].mxu0
  %v3018 = vadd.f32 0.0, %v3017
  %v3019 = vpop.f32.mrb[0].mxu0
  %3020 = vmatprep.mubr.f32.mxu0 0.0
  %3021 = vmatmul.mubr.f32.gmra.mrb[0].mxu0 %v591
  %v3022 = vpop.f32.mrb[0].mxu0
  %v3023 = vadd.f32 0.0, %v3022
  %v3024 = vpop.f32.mrb[0].mxu0
  %3025 = vmatprep.mubr.f32.mxu0 0.0
  %3026 = vmatmul.mubr.f32.gmra.mrb[0].mxu0 %v594
  %v3027 = vpop.f32.mrb[0].mxu0
  %v3028 = vadd.f32 0.0, %v3027
  %v3029 = vpop.f32.mrb[0].mxu0
  %3030 = vmatprep.mubr.f32.mxu0 0.0
  %3031 = vmatmul.mubr.f32.gmra.mrb[0].mxu0 %v597
  %v3032 = vpop.f32.mrb[0].mxu0
  %v3033 = vadd.f32 0.0, %v3032
  %v3034 = vpop.f32.mrb[0].mxu0
  %3035 = vmatprep.mubr.f32.mxu0 0.0
  %3036 = vmatmul.mubr.f32.gmra.mrb[0].mxu0 %v600
  %v3037 = vpop.f32.mrb[0].mxu0
  %v3038 = vadd.f32 0.0, %v3037
  %v3039 = vpop.f32.mrb[0].mxu0
  %3040 = vmatprep.mubr.f32.mxu0 0.0
  %3041 = vmatmul.mubr.f32.gmra.mrb[0].mxu0 %v603
  %v3042 = vpop.f32.mrb[0].mxu0
  %v3043 = vadd.f32 0.0, %v3042
  %v3044 = vpop.f32.mrb[0].mxu0
  %3045 = vmatprep.mubr.f32.mxu0 0.0
  %3046 = vmatmul.mubr.f32.gmra.mrb[0].mxu0 %v606
  %v3047 = vpop.f32.mrb[0].mxu0
  %v3048 = vadd.f32 0.0, %v3047
  %v3049 = vpop.f32.mrb[0].mxu0
  %3050 = vmatprep.mubr.f32.mxu0 0.0
  %3051 = vmatmul.mubr.f32.gmra.mrb[0].mxu0 %v609
  %v3052 = vpop.f32.mrb[0].mxu0
  %v3053 = vadd.f32 0.0, %v3052
  %v3054 = vpop.f32.mrb[0].mxu0
  %3055 = vmatprep.mubr.f32.mxu0 0.0
  %3056 = vmatmul.mubr.f32.gmra.mrb[0].mxu0 %v612
  %v3057 = vpop.f32.mrb[0].mxu0
  %v3058 = vadd.f32 0.0, %v3057
  %v3059 = vpop.f32.mrb[0].mxu0
  %3060 = vmatprep.mubr.f32.mxu0 0.0
  %3061 = vmatmul.mubr.f32.gmra.mrb[0].mxu0 %v615
  %v3062 = vpop.f32.mrb[0].mxu0
  %v3063 = vadd.f32 0.0, %v3062
  %v3064 = vpop.f32.mrb[0].mxu0
  %3065 = vmatprep.mubr.f32.mxu0 0.0
  %3066 = vmatmul.mubr.f32.gmra.mrb[0].mxu0 %v618
  %v3067 = vpop.f32.mrb[0].mxu0
  %v3068 = vadd.f32 0.0, %v3067
  %v3069 = vpop.f32.mrb[0].mxu0
  %3070 = vmatprep.mubr.f32.mxu0 0.0
  %3071 = vmatmul.mubr.f32.gmra.mrb[0].mxu0 %v621
  %v3072 = vpop.f32.mrb[0].mxu0
  %v3073 = vadd.f32 0.0, %v3072
  %v3074 = vpop.f32.mrb[0].mxu0
  %3075 = vmatprep.mubr.f32.mxu0 0.0
  %3076 = vmatmul.mubr.f32.gmra.mrb[0].mxu0 %v624
  %v3077 = vpop.f32.mrb[0].mxu0
  %v3078 = vadd.f32 0.0, %v3077
  %v3079 = vpop.f32.mrb[0].mxu0
  %3080 = vmatprep.mubr.f32.mxu0 0.0
  %3081 = vmatmul.mubr.f32.gmra.mrb[0].mxu0 %v627
  %v3082 = vpop.f32.mrb[0].mxu0
  %v3083 = vadd.f32 0.0, %v3082
  %v3084 = vpop.f32.mrb[0].mxu0
  %3085 = vmatprep.mubr.f32.mxu0 0.0
  %3086 = vmatmul.mubr.f32.gmra.mrb[0].mxu0 %v630
  %v3087 = vpop.f32.mrb[0].mxu0
  %v3088 = vadd.f32 0.0, %v3087
  %v3089 = vpop.f32.mrb[0].mxu0
  %3090 = vmatprep.mubr.f32.mxu0 0.0
  %3091 = vmatmul.mubr.f32.gmra.mrb[0].mxu0 %v633
  %v3092 = vpop.f32.mrb[0].mxu0
  %v3093 = vadd.f32 0.0, %v3092
  %v3094 = vpop.f32.mrb[0].mxu0
  %3095 = vmatprep.mubr.f32.mxu0 0.0
  %3096 = vmatmul.mubr.f32.gmra.mrb[0].mxu0 %v636
  %v3097 = vpop.f32.mrb[0].mxu0
  %v3098 = vadd.f32 0.0, %v3097
  %v3099 = vpop.f32.mrb[0].mxu0
  %3100 = vmatprep.mubr.f32.mxu0 0.0
  %3101 = vmatmul.mubr.f32.gmra.mrb[0].mxu0 %v639
  %v3102 = vpop.f32.mrb[0].mxu0
  %v3103 = vadd.f32 0.0, %v3102
  %v3104 = vpop.f32.mrb[0].mxu0
  %3105 = vmatprep.mubr.f32.mxu0 0.0
  %3106 = vmatmul.mubr.f32.gmra.mrb[0].mxu0 %v642
  %v3107 = vpop.f32.mrb[0].mxu0
  %v3108 = vadd.f32 0.0, %v3107
  %v3109 = vpop.f32.mrb[0].mxu0
  %3110 = vmatprep.mubr.f32.mxu0 0.0
  %3111 = vmatmul.mubr.f32.gmra.mrb[0].mxu0 %v645
  %v3112 = vpop.f32.mrb[0].mxu0
  %v3113 = vadd.f32 0.0, %v3112
  %v3114 = vpop.f32.mrb[0].mxu0
  %3115 = vmatprep.mubr.f32.mxu0 0.0
  %3116 = vmatmul.mubr.f32.gmra.mrb[0].mxu0 %v648
  %v3117 = vpop.f32.mrb[0].mxu0
  %v3118 = vadd.f32 0.0, %v3117
  %v3119 = vpop.f32.mrb[0].mxu0
  %3120 = vmatprep.mubr.f32.mxu0 0.0
  %3121 = vmatmul.mubr.f32.gmra.mrb[0].mxu0 %v651
  %v3122 = vpop.f32.mrb[0].mxu0
  %v3123 = vadd.f32 0.0, %v3122
  %v3124 = vpop.f32.mrb[0].mxu0
  %3125 = vmatprep.mubr.f32.mxu0 0.0
  %3126 = vmatmul.mubr.f32.gmra.mrb[0].mxu0 %v654
  %v3127 = vpop.f32.mrb[0].mxu0
  %v3128 = vadd.f32 0.0, %v3127
  %v3129 = vpop.f32.mrb[0].mxu0
  %3130 = vmatprep.mubr.f32.mxu0 0.0
  %3131 = vmatmul.mubr.f32.gmra.mrb[0].mxu0 %v657
  %v3132 = vpop.f32.mrb[0].mxu0
  %v3133 = vadd.f32 0.0, %v3132
  %v3134 = vpop.f32.mrb[0].mxu0
  %3135 = vmatprep.mubr.f32.mxu0 0.0
  %3136 = vmatmul.mubr.f32.gmra.mrb[0].mxu0 %v660
  %v3137 = vpop.f32.mrb[0].mxu0
  %v3138 = vadd.f32 0.0, %v3137
  %v3139 = vpop.f32.mrb[0].mxu0
  %3140 = vdwg.mxu0
  %v3141 = vmul.f32 %v2983, 0.5
  %v3142 = vmul.f32 %v2988, 0.5
  %v3143 = vmul.f32 %v2993, 0.5
  %v3144 = vmul.f32 %v2998, 0.5
  %v3145 = vmul.f32 %v3003, 0.5
  %v3146 = vmul.f32 %v3008, 0.5
  %v3147 = vmul.f32 %v3013, 0.5
  %v3148 = vmul.f32 %v3018, 0.5
  %v3149 = vmul.f32 %v3023, 0.5
  %v3150 = vmul.f32 %v3028, 0.5
  %v3151 = vmul.f32 %v3033, 0.5
  %v3152 = vmul.f32 %v3038, 0.5
  %v3153 = vmul.f32 %v3043, 0.5
  %v3154 = vmul.f32 %v3048, 0.5
  %v3155 = vmul.f32 %v3053, 0.5
  %v3156 = vmul.f32 %v3058, 0.5
  %v3157 = vmul.f32 %v3063, 0.5
  %v3158 = vmul.f32 %v3068, 0.5
  %v3159 = vmul.f32 %v3073, 0.5
  %v3160 = vmul.f32 %v3078, 0.5
  %v3161 = vmul.f32 %v3083, 0.5
  %v3162 = vmul.f32 %v3088, 0.5
  %v3163 = vmul.f32 %v3093, 0.5
  %v3164 = vmul.f32 %v3098, 0.5
  %v3165 = vtanh.pop %v3141
  %v3166 = vtanh.pop %v3142
  %v3167 = vtanh.pop %v3143
  %v3168 = vtanh.pop %v3144
  %v3169 = vtanh.pop %v3145
  %v3170 = vtanh.pop %v3146
  %v3171 = vtanh.pop %v3147
  %v3172 = vtanh.pop %v3148
  %v3173 = vtanh.pop %v3149
  %v3174 = vtanh.pop %v3150
  %v3175 = vtanh.pop %v3151
  %v3176 = vtanh.pop %v3152
  %v3177 = vtanh.pop %v3153
  %v3178 = vtanh.pop %v3154
  %v3179 = vtanh.pop %v3155
  %v3180 = vtanh.pop %v3156
  %v3181 = vtanh.pop %v3157
  %v3182 = vtanh.pop %v3158
  %v3183 = vtanh.pop %v3159
  %v3184 = vtanh.pop %v3160
  %v3185 = vtanh.pop %v3161
  %v3186 = vtanh.pop %v3162
  %v3187 = vtanh.pop %v3163
  %v3188 = vtanh.pop %v3164
  %v3189 = vmul.f32 %v3165, 0.5
  %v3190 = vmul.f32 %v3166, 0.5
  %v3191 = vmul.f32 %v3167, 0.5
  %v3192 = vmul.f32 %v3168, 0.5
  %v3193 = vmul.f32 %v3169, 0.5
  %v3194 = vmul.f32 %v3170, 0.5
  %v3195 = vmul.f32 %v3171, 0.5
  %v3196 = vmul.f32 %v3172, 0.5
  %v3197 = vmul.f32 %v3173, 0.5
  %v3198 = vmul.f32 %v3174, 0.5
  %v3199 = vmul.f32 %v3175, 0.5
  %v3200 = vmul.f32 %v3176, 0.5
  %v3201 = vmul.f32 %v3177, 0.5
  %v3202 = vmul.f32 %v3178, 0.5
  %v3203 = vmul.f32 %v3179, 0.5
  %v3204 = vmul.f32 %v3180, 0.5
  %v3205 = vmul.f32 %v3181, 0.5
  %v3206 = vmul.f32 %v3182, 0.5
  %v3207 = vmul.f32 %v3183, 0.5
  %v3208 = vmul.f32 %v3184, 0.5
  %v3209 = vmul.f32 %v3185, 0.5
  %v3210 = vmul.f32 %v3186, 0.5
  %v3211 = vmul.f32 %v3187, 0.5
  %v3212 = vmul.f32 %v3188, 0.5
  %v3213 = vadd.f32 %v3189, 0.5
  %v3214 = vadd.f32 %v3190, 0.5
  %v3215 = vadd.f32 %v3191, 0.5
  %v3216 = vadd.f32 %v3192, 0.5
  %v3217 = vadd.f32 %v3193, 0.5
  %v3218 = vadd.f32 %v3194, 0.5
  %v3219 = vadd.f32 %v3195, 0.5
  %v3220 = vadd.f32 %v3196, 0.5
  %v3221 = vadd.f32 %v3197, 0.5
  %v3222 = vadd.f32 %v3198, 0.5
  %v3223 = vadd.f32 %v3199, 0.5
  %v3224 = vadd.f32 %v3200, 0.5
  %v3225 = vadd.f32 %v3201, 0.5
  %v3226 = vadd.f32 %v3202, 0.5
  %v3227 = vadd.f32 %v3203, 0.5
  %v3228 = vadd.f32 %v3204, 0.5
  %v3229 = vadd.f32 %v3205, 0.5
  %v3230 = vadd.f32 %v3206, 0.5
  %v3231 = vadd.f32 %v3207, 0.5
  %v3232 = vadd.f32 %v3208, 0.5
  %v3233 = vadd.f32 %v3209, 0.5
  %v3234 = vadd.f32 %v3210, 0.5
  %v3235 = vadd.f32 %v3211, 0.5
  %v3236 = vadd.f32 %v3212, 0.5
  %v3237 = vtanh.pop %v3103
  %v3238 = vtanh.pop %v3108
  %v3239 = vtanh.pop %v3113
  %v3240 = vtanh.pop %v3118
  %v3241 = vtanh.pop %v3123
  %v3242 = vtanh.pop %v3128
  %v3243 = vtanh.pop %v3133
  %v3244 = vtanh.pop %v3138
  %v3245 = vmul.f32 %v3221, %v2511
  %v3246 = vmul.f32 %v3222, %v2512
  %v3247 = vmul.f32 %v3223, %v2513
  %v3248 = vmul.f32 %v3224, %v2514
  %v3249 = vmul.f32 %v3225, %v2515
  %v3250 = vmul.f32 %v3226, %v2516
  %v3251 = vmul.f32 %v3227, %v2517
  %v3252 = vmul.f32 %v3228, %v2518
  %v3253 = vmul.f32 %v3213, %v3237
  %v3254 = vmul.f32 %v3214, %v3238
  %v3255 = vmul.f32 %v3215, %v3239
  %v3256 = vmul.f32 %v3216, %v3240
  %v3257 = vmul.f32 %v3217, %v3241
  %v3258 = vmul.f32 %v3218, %v3242
  %v3259 = vmul.f32 %v3219, %v3243
  %v3260 = vmul.f32 %v3220, %v3244
  %v3261 = vadd.f32 %v3245, %v3253
  %v3262 = vadd.f32 %v3246, %v3254
  %v3263 = vadd.f32 %v3247, %v3255
  %v3264 = vadd.f32 %v3248, %v3256
  %v3265 = vadd.f32 %v3249, %v3257
  %v3266 = vadd.f32 %v3250, %v3258
  %v3267 = vadd.f32 %v3251, %v3259
  %v3268 = vadd.f32 %v3252, %v3260
  %v3269 = vtanh.pop %v3261
  %v3270 = vtanh.pop %v3262
  %v3271 = vtanh.pop %v3263
  %v3272 = vtanh.pop %v3264
  %v3273 = vtanh.pop %v3265
  %v3274 = vtanh.pop %v3266
  %v3275 = vtanh.pop %v3267
  %v3276 = vtanh.pop %v3268
  %v3277 = vmul.f32 %v3229, %v3269
  %v3278 = vmul.f32 %v3230, %v3270
  %v3279 = vmul.f32 %v3231, %v3271
  %v3280 = vmul.f32 %v3232, %v3272
  %v3281 = vmul.f32 %v3233, %v3273
  %v3282 = vmul.f32 %v3234, %v3274
  %v3283 = vmul.f32 %v3235, %v3275
  %v3284 = vmul.f32 %v3236, %v3276
  %3285 = vmatprep.subr.mxu0 0.0
  %3286 = vmatpush1.msra.mxu0 %v2877
  %3287 = vmatprep.subr.mxu0 0.0
  %3288 = vmatpush1.msra.mxu0 %v2879
  %3289 = vmatprep.subr.mxu0 0.0
  %3290 = vmatpush1.msra.mxu0 %v2881
  %3291 = vmatprep.subr.mxu0 0.0
  %3292 = vmatpush1.msra.mxu0 %v2883
  %3293 = vmatprep.subr.mxu0 0.0
  %3294 = vmatpush1.msra.mxu0 0.0
  %3295 = vmatprep.subr.mxu0 0.0
  %3296 = vmatpush1.msra.mxu0 0.0
  %3297 = vmatprep.subr.mxu0 0.0
  %3298 = vmatpush1.msra.mxu0 0.0
  %3299 = vmatprep.subr.mxu0 0.0
  %3300 = vmatpush1.msra.mxu0 0.0
  %3301 = vmatprep.subr.mxu0 0.0
  %3302 = vmatpush1.msra.mxu0 0.0
  %3303 = vmatprep.subr.mxu0 0.0
  %3304 = vmatpush1.msra.mxu0 0.0
  %3305 = vmatprep.subr.mxu0 0.0
  %3306 = vmatpush1.msra.mxu0 0.0
  %3307 = vmatprep.subr.mxu0 0.0
  %3308 = vmatpush1.msra.mxu0 0.0
  %3309 = vmatprep.subr.mxu0 0.0
  %3310 = vmatpush1.msra.mxu0 0.0
  %3311 = vmatprep.subr.mxu0 0.0
  %3312 = vmatpush1.msra.mxu0 0.0
  %3313 = vmatprep.subr.mxu0 0.0
  %3314 = vmatpush1.msra.mxu0 0.0
  %3315 = vmatprep.subr.mxu0 0.0
  %3316 = vmatpush1.msra.mxu0 0.0
  %3317 = vmatprep.subr.mxu0 0.0
  %3318 = vmatpush1.msra.mxu0 0.0
  %3319 = vmatprep.subr.mxu0 0.0
  %3320 = vmatpush1.msra.mxu0 0.0
  %3321 = vmatprep.subr.mxu0 0.0
  %3322 = vmatpush1.msra.mxu0 0.0
  %3323 = vmatprep.subr.mxu0 0.0
  %3324 = vmatpush1.msra.mxu0 0.0
  %3325 = vmatprep.subr.mxu0 0.0
  %3326 = vmatpush1.msra.mxu0 0.0
  %3327 = vmatprep.subr.mxu0 0.0
  %3328 = vmatpush1.msra.mxu0 0.0
  %3329 = vmatprep.subr.mxu0 0.0
  %3330 = vmatpush1.msra.mxu0 0.0
  %3331 = vmatprep.subr.mxu0 0.0
  %3332 = vmatpush1.msra.mxu0 0.0
  %3333 = vmatprep.subr.mxu0 0.0
  %3334 = vmatpush1.msra.mxu0 0.0
  %3335 = vmatprep.subr.mxu0 0.0
  %3336 = vmatpush1.msra.mxu0 0.0
  %3337 = vmatprep.subr.mxu0 0.0
  %3338 = vmatpush1.msra.mxu0 0.0
  %3339 = vmatprep.subr.mxu0 0.0
  %3340 = vmatpush1.msra.mxu0 0.0
  %3341 = vmatprep.subr.mxu0 0.0
  %3342 = vmatpush1.msra.mxu0 0.0
  %3343 = vmatprep.subr.mxu0 0.0
  %3344 = vmatpush1.msra.mxu0 0.0
  %3345 = vmatprep.subr.mxu0 0.0
  %3346 = vmatpush1.msra.mxu0 0.0
  %3347 = vmatprep.subr.mxu0 0.0
  %3348 = vmatpush1.msra.mxu0 0.0
  %3349 = vmatprep.mubr.f32.mxu0 0.0
  %3350 = vmatmul.mubr.f32.gmra.mrb[0].mxu0 %v253
  %v3351 = vpop.f32.mrb[0].mxu0
  %v3352 = vadd.f32 0.0, %v3351
  %v3353 = vpop.f32.mrb[0].mxu0
  %3354 = vmatprep.mubr.f32.mxu0 0.0
  %3355 = vmatmul.mubr.f32.gmra.mrb[0].mxu0 %v256
  %v3356 = vpop.f32.mrb[0].mxu0
  %v3357 = vadd.f32 0.0, %v3356
  %v3358 = vpop.f32.mrb[0].mxu0
  %3359 = vmatprep.mubr.f32.mxu0 0.0
  %3360 = vmatmul.mubr.f32.gmra.mrb[0].mxu0 %v259
  %v3361 = vpop.f32.mrb[0].mxu0
  %v3362 = vadd.f32 0.0, %v3361
  %v3363 = vpop.f32.mrb[0].mxu0
  %3364 = vmatprep.mubr.f32.mxu0 0.0
  %3365 = vmatmul.mubr.f32.gmra.mrb[0].mxu0 %v262
  %v3366 = vpop.f32.mrb[0].mxu0
  %v3367 = vadd.f32 0.0, %v3366
  %v3368 = vpop.f32.mrb[0].mxu0
  %3369 = vmatprep.mubr.f32.mxu0 0.0
  %3370 = vmatmul.mubr.f32.gmra.mrb[0].mxu0 %v265
  %v3371 = vpop.f32.mrb[0].mxu0
  %v3372 = vadd.f32 0.0, %v3371
  %v3373 = vpop.f32.mrb[0].mxu0
  %3374 = vmatprep.mubr.f32.mxu0 0.0
  %3375 = vmatmul.mubr.f32.gmra.mrb[0].mxu0 %v268
  %v3376 = vpop.f32.mrb[0].mxu0
  %v3377 = vadd.f32 0.0, %v3376
  %v3378 = vpop.f32.mrb[0].mxu0
  %3379 = vmatprep.mubr.f32.mxu0 0.0
  %3380 = vmatmul.mubr.f32.gmra.mrb[0].mxu0 %v271
  %v3381 = vpop.f32.mrb[0].mxu0
  %v3382 = vadd.f32 0.0, %v3381
  %v3383 = vpop.f32.mrb[0].mxu0
  %3384 = vmatprep.mubr.f32.mxu0 0.0
  %3385 = vmatmul.mubr.f32.gmra.mrb[0].mxu0 %v274
  %v3386 = vpop.f32.mrb[0].mxu0
  %v3387 = vadd.f32 0.0, %v3386
  %v3388 = vpop.f32.mrb[0].mxu0
  %3389 = vmatprep.mubr.f32.mxu0 0.0
  %3390 = vmatmul.mubr.f32.gmra.mrb[0].mxu0 %v277
  %v3391 = vpop.f32.mrb[0].mxu0
  %v3392 = vadd.f32 0.0, %v3391
  %v3393 = vpop.f32.mrb[0].mxu0
  %3394 = vmatprep.mubr.f32.mxu0 0.0
  %3395 = vmatmul.mubr.f32.gmra.mrb[0].mxu0 %v280
  %v3396 = vpop.f32.mrb[0].mxu0
  %v3397 = vadd.f32 0.0, %v3396
  %v3398 = vpop.f32.mrb[0].mxu0
  %3399 = vmatprep.mubr.f32.mxu0 0.0
  %3400 = vmatmul.mubr.f32.gmra.mrb[0].mxu0 %v283
  %v3401 = vpop.f32.mrb[0].mxu0
  %v3402 = vadd.f32 0.0, %v3401
  %v3403 = vpop.f32.mrb[0].mxu0
  %3404 = vmatprep.mubr.f32.mxu0 0.0
  %3405 = vmatmul.mubr.f32.gmra.mrb[0].mxu0 %v286
  %v3406 = vpop.f32.mrb[0].mxu0
  %v3407 = vadd.f32 0.0, %v3406
  %v3408 = vpop.f32.mrb[0].mxu0
  %3409 = vmatprep.mubr.f32.mxu0 0.0
  %3410 = vmatmul.mubr.f32.gmra.mrb[0].mxu0 %v289
  %v3411 = vpop.f32.mrb[0].mxu0
  %v3412 = vadd.f32 0.0, %v3411
  %v3413 = vpop.f32.mrb[0].mxu0
  %3414 = vmatprep.mubr.f32.mxu0 0.0
  %3415 = vmatmul.mubr.f32.gmra.mrb[0].mxu0 %v292
  %v3416 = vpop.f32.mrb[0].mxu0
  %v3417 = vadd.f32 0.0, %v3416
  %v3418 = vpop.f32.mrb[0].mxu0
  %3419 = vmatprep.mubr.f32.mxu0 0.0
  %3420 = vmatmul.mubr.f32.gmra.mrb[0].mxu0 %v295
  %v3421 = vpop.f32.mrb[0].mxu0
  %v3422 = vadd.f32 0.0, %v3421
  %v3423 = vpop.f32.mrb[0].mxu0
  %3424 = vmatprep.mubr.f32.mxu0 0.0
  %3425 = vmatmul.mubr.f32.gmra.mrb[0].mxu0 %v298
  %v3426 = vpop.f32.mrb[0].mxu0
  %v3427 = vadd.f32 0.0, %v3426
  %v3428 = vpop.f32.mrb[0].mxu0
  %3429 = vdwg.mxu0
  %3446 = vrot.lane.b32.xlu0 %v3352, 8
  %v3447 = vpop.permute.xlu0 %3446
  %3448 = vrot.lane.b32.xlu0 %v3357, 8
  %v3449 = vpop.permute.xlu0 %3448
  %3450 = vrot.lane.b32.xlu0 %v3362, 8
  %v3451 = vpop.permute.xlu0 %3450
  %3452 = vrot.lane.b32.xlu0 %v3367, 8
  %v3453 = vpop.permute.xlu0 %3452
  %3454 = vrot.lane.b32.xlu0 %v3372, 8
  %v3455 = vpop.permute.xlu0 %3454
  %3456 = vrot.lane.b32.xlu0 %v3377, 8
  %v3457 = vpop.permute.xlu0 %3456
  %3458 = vrot.lane.b32.xlu0 %v3382, 8
  %v3459 = vpop.permute.xlu0 %3458
  %3460 = vrot.lane.b32.xlu0 %v3387, 8
  %v3461 = vpop.permute.xlu0 %3460
  %3462 = vrot.lane.b32.xlu0 %v3392, 8
  %v3463 = vpop.permute.xlu0 %3462
  %3464 = vrot.lane.b32.xlu0 %v3397, 8
  %v3465 = vpop.permute.xlu0 %3464
  %3466 = vrot.lane.b32.xlu0 %v3402, 8
  %v3467 = vpop.permute.xlu0 %3466
  %3468 = vrot.lane.b32.xlu0 %v3407, 8
  %v3469 = vpop.permute.xlu0 %3468
  %3470 = vrot.lane.b32.xlu0 %v3412, 8
  %v3471 = vpop.permute.xlu0 %3470
  %3472 = vrot.lane.b32.xlu0 %v3417, 8
  %v3473 = vpop.permute.xlu0 %3472
  %3474 = vrot.lane.b32.xlu0 %v3422, 8
  %v3475 = vpop.permute.xlu0 %3474
  %3476 = vrot.lane.b32.xlu0 %v3427, 8
  %v3477 = vpop.permute.xlu0 %3476
  %v3494 = vadd.f32 %v157, %v3447
  %v3495 = vadd.f32 %v162, %v3449
  %v3496 = vadd.f32 %v167, %v3451
  %v3497 = vadd.f32 %v172, %v3453
  %v3498 = vadd.f32 %v177, %v3455
  %v3499 = vadd.f32 %v182, %v3457
  %v3500 = vadd.f32 %v187, %v3459
  %v3501 = vadd.f32 %v192, %v3461
  %v3502 = vadd.f32 %v197, %v3463
  %v3503 = vadd.f32 %v202, %v3465
  %v3504 = vadd.f32 %v207, %v3467
  %v3505 = vadd.f32 %v212, %v3469
  %v3506 = vadd.f32 %v217, %v3471
  %v3507 = vadd.f32 %v222, %v3473
  %v3508 = vadd.f32 %v227, %v3475
  %v3509 = vadd.f32 %v232, %v3477
  %v3510 = vmul.f32 %v3494, 0.5
  %v3511 = vmul.f32 %v3495, 0.5
  %v3512 = vmul.f32 %v3496, 0.5
  %v3513 = vmul.f32 %v3497, 0.5
  %v3514 = vmul.f32 %v3498, 0.5
  %v3515 = vmul.f32 %v3499, 0.5
  %v3516 = vmul.f32 %v3500, 0.5
  %v3517 = vmul.f32 %v3501, 0.5
  %v3518 = vmul.f32 %v3502, 0.5
  %v3519 = vmul.f32 %v3503, 0.5
  %v3520 = vmul.f32 %v3504, 0.5
  %v3521 = vmul.f32 %v3505, 0.5
  %v3522 = vtanh.pop %v3510
  %v3523 = vtanh.pop %v3511
  %v3524 = vtanh.pop %v3512
  %v3525 = vtanh.pop %v3513
  %v3526 = vtanh.pop %v3514
  %v3527 = vtanh.pop %v3515
  %v3528 = vtanh.pop %v3516
  %v3529 = vtanh.pop %v3517
  %v3530 = vtanh.pop %v3518
  %v3531 = vtanh.pop %v3519
  %v3532 = vtanh.pop %v3520
  %v3533 = vtanh.pop %v3521
  %v3534 = vmul.f32 %v3522, 0.5
  %v3535 = vmul.f32 %v3523, 0.5
  %v3536 = vmul.f32 %v3524, 0.5
  %v3537 = vmul.f32 %v3525, 0.5
  %v3538 = vmul.f32 %v3526, 0.5
  %v3539 = vmul.f32 %v3527, 0.5
  %v3540 = vmul.f32 %v3528, 0.5
  %v3541 = vmul.f32 %v3529, 0.5
  %v3542 = vmul.f32 %v3530, 0.5
  %v3543 = vmul.f32 %v3531, 0.5
  %v3544 = vmul.f32 %v3532, 0.5
  %v3545 = vmul.f32 %v3533, 0.5
  %v3546 = vadd.f32 %v3534, 0.5
  %v3547 = vadd.f32 %v3535, 0.5
  %v3548 = vadd.f32 %v3536, 0.5
  %v3549 = vadd.f32 %v3537, 0.5
  %v3550 = vadd.f32 %v3538, 0.5
  %v3551 = vadd.f32 %v3539, 0.5
  %v3552 = vadd.f32 %v3540, 0.5
  %v3553 = vadd.f32 %v3541, 0.5
  %v3554 = vadd.f32 %v3542, 0.5
  %v3555 = vadd.f32 %v3543, 0.5
  %v3556 = vadd.f32 %v3544, 0.5
  %v3557 = vadd.f32 %v3545, 0.5
  %v3558 = vtanh.pop %v3506
  %v3559 = vtanh.pop %v3507
  %v3560 = vtanh.pop %v3508
  %v3561 = vtanh.pop %v3509
  %3566 = vrot.lane.b32.xlu0 %v2836, 2
  %v3567 = vpop.permute.xlu0 %3566
  %3568 = vrot.lane.b32.xlu0 %v2837, 2
  %v3569 = vpop.permute.xlu0 %3568
  %3570 = vrot.lane.b32.xlu0 %v2838, 2
  %v3571 = vpop.permute.xlu0 %3570
  %3572 = vrot.lane.b32.xlu0 %v2839, 2
  %v3573 = vpop.permute.xlu0 %3572
  %v3578 = vmul.f32 %v3550, %v3567
  %v3579 = vmul.f32 %v3551, %v3569
  %v3580 = vmul.f32 %v3552, %v3571
  %v3581 = vmul.f32 %v3553, %v3573
  %v3582 = vmul.f32 %v3546, %v3558
  %v3583 = vmul.f32 %v3547, %v3559
  %v3584 = vmul.f32 %v3548, %v3560
  %v3585 = vmul.f32 %v3549, %v3561
  %v3586 = vadd.f32 %v3578, %v3582
  %v3587 = vadd.f32 %v3579, %v3583
  %v3588 = vadd.f32 %v3580, %v3584
  %v3589 = vadd.f32 %v3581, %v3585
  %v3590 = vtanh.pop %v3586
  %v3591 = vtanh.pop %v3587
  %v3592 = vtanh.pop %v3588
  %v3593 = vtanh.pop %v3589
  %v3594 = vmul.f32 %v3554, %v3590
  %v3595 = vmul.f32 %v3555, %v3591
  %v3596 = vmul.f32 %v3556, %v3592
  %v3597 = vmul.f32 %v3557, %v3593
  %3606 = vrot.lane.b32.xlu0 %v3277, 8
  %v3607 = vpop.permute.xlu0 %3606
  %3608 = vrot.lane.b32.xlu0 %v3278, 8
  %v3609 = vpop.permute.xlu0 %3608
  %3610 = vrot.lane.b32.xlu0 %v3279, 8
  %v3611 = vpop.permute.xlu0 %3610
  %3612 = vrot.lane.b32.xlu0 %v3280, 8
  %v3613 = vpop.permute.xlu0 %3612
  %3614 = vrot.lane.b32.xlu0 %v3281, 8
  %v3615 = vpop.permute.xlu0 %3614
  %3616 = vrot.lane.b32.xlu0 %v3282, 8
  %v3617 = vpop.permute.xlu0 %3616
  %3618 = vrot.lane.b32.xlu0 %v3283, 8
  %v3619 = vpop.permute.xlu0 %3618
  %3620 = vrot.lane.b32.xlu0 %v3284, 8
  %v3621 = vpop.permute.xlu0 %3620
  %3626 = vrot.lane.b32.xlu0 %v3594, 120
  %v3627 = vpop.permute.xlu0 %3626
  %3628 = vrot.lane.b32.xlu0 %v3595, 120
  %v3629 = vpop.permute.xlu0 %3628
  %3630 = vrot.lane.b32.xlu0 %v3596, 120
  %v3631 = vpop.permute.xlu0 %3630
  %3632 = vrot.lane.b32.xlu0 %v3597, 120
  %v3633 = vpop.permute.xlu0 %3632
  %3634 = vrot.lane.b32.xlu0 %v3607, 120
  %v3635 = vpop.permute.xlu0 %3634
  %3636 = vrot.lane.b32.xlu0 %v3609, 120
  %v3637 = vpop.permute.xlu0 %3636
  %3638 = vrot.lane.b32.xlu0 %v3611, 120
  %v3639 = vpop.permute.xlu0 %3638
  %3640 = vrot.lane.b32.xlu0 %v3613, 120
  %v3641 = vpop.permute.xlu0 %3640
  %3642 = vrot.lane.b32.xlu0 %v3615, 120
  %v3643 = vpop.permute.xlu0 %3642
  %3644 = vrot.lane.b32.xlu0 %v3617, 120
  %v3645 = vpop.permute.xlu0 %3644
  %3646 = vrot.lane.b32.xlu0 %v3619, 120
  %v3647 = vpop.permute.xlu0 %3646
  %3648 = vrot.lane.b32.xlu0 %v3621, 120
  %v3649 = vpop.permute.xlu0 %3648
  %3650 = vrot.lane.b32.xlu0 1.0, 120
  %v3651 = vpop.permute.xlu0 %3650
  %v3664 = vsel %vm662, %v3651, 0
  %3666 = vmatprep.subr.mxu0 0.0
  %3667 = vmatpush1.msra.mxu0 %v3627
  %3668 = vmatprep.subr.mxu0 0.0
  %3669 = vmatpush1.msra.mxu0 %v3629
  %3670 = vmatprep.subr.mxu0 0.0
  %3671 = vmatpush1.msra.mxu0 %v3631
  %3672 = vmatprep.subr.mxu0 0.0
  %3673 = vmatpush1.msra.mxu0 %v3633
  %3674 = vmatprep.subr.mxu0 0.0
  %3675 = vmatpush1.msra.mxu0 %v3635
  %3676 = vmatprep.subr.mxu0 0.0
  %3677 = vmatpush1.msra.mxu0 %v3637
  %3678 = vmatprep.subr.mxu0 0.0
  %3679 = vmatpush1.msra.mxu0 %v3639
  %3680 = vmatprep.subr.mxu0 0.0
  %3681 = vmatpush1.msra.mxu0 %v3641
  %3682 = vmatprep.subr.mxu0 0.0
  %3683 = vmatpush1.msra.mxu0 %v3643
  %3684 = vmatprep.subr.mxu0 0.0
  %3685 = vmatpush1.msra.mxu0 %v3645
  %3686 = vmatprep.subr.mxu0 0.0
  %3687 = vmatpush1.msra.mxu0 %v3647
  %3688 = vmatprep.subr.mxu0 0.0
  %3689 = vmatpush1.msra.mxu0 %v3649
  %3690 = vmatprep.subr.mxu0 0.0
  %3691 = vmatpush1.msra.mxu0 %v3664
  %3692 = vmatprep.subr.mxu0 0.0
  %3693 = vmatpush1.msra.mxu0 0.0
  %3694 = vmatprep.subr.mxu0 0.0
  %3695 = vmatpush1.msra.mxu0 0.0
  %3696 = vmatprep.subr.mxu0 0.0
  %3697 = vmatpush1.msra.mxu0 0.0
  %3698 = vmatprep.subr.mxu0 0.0
  %3699 = vmatpush1.msra.mxu0 0.0
  %3700 = vmatprep.subr.mxu0 0.0
  %3701 = vmatpush1.msra.mxu0 0.0
  %3702 = vmatprep.subr.mxu0 0.0
  %3703 = vmatpush1.msra.mxu0 0.0
  %3704 = vmatprep.subr.mxu0 0.0
  %3705 = vmatpush1.msra.mxu0 0.0
  %3706 = vmatprep.subr.mxu0 0.0
  %3707 = vmatpush1.msra.mxu0 0.0
  %3708 = vmatprep.subr.mxu0 0.0
  %3709 = vmatpush1.msra.mxu0 0.0
  %3710 = vmatprep.subr.mxu0 0.0
  %3711 = vmatpush1.msra.mxu0 0.0
  %3712 = vmatprep.subr.mxu0 0.0
  %3713 = vmatpush1.msra.mxu0 0.0
  %3714 = vmatprep.subr.mxu0 0.0
  %3715 = vmatpush1.msra.mxu0 0.0
  %3716 = vmatprep.subr.mxu0 0.0
  %3717 = vmatpush1.msra.mxu0 0.0
  %3718 = vmatprep.subr.mxu0 0.0
  %3719 = vmatpush1.msra.mxu0 0.0
  %3720 = vmatprep.subr.mxu0 0.0
  %3721 = vmatpush1.msra.mxu0 0.0
  %3722 = vmatprep.subr.mxu0 0.0
  %3723 = vmatpush1.msra.mxu0 0.0
  %3724 = vmatprep.subr.mxu0 0.0
  %3725 = vmatpush1.msra.mxu0 0.0
  %3726 = vmatprep.subr.mxu0 0.0
  %3727 = vmatpush1.msra.mxu0 0.0
  %3728 = vmatprep.subr.mxu0 0.0
  %3729 = vmatpush1.msra.mxu0 0.0
  %3730 = vmatprep.mubr.f32.mxu0 0.0
  %3731 = vmatmul.mubr.f32.gmra.mrb[0].mxu0 %v567
  %v3732 = vpop.f32.mrb[0].mxu0
  %v3733 = vadd.f32 0.0, %v3732
  %v3734 = vpop.f32.mrb[0].mxu0
  %3735 = vmatprep.mubr.f32.mxu0 0.0
  %3736 = vmatmul.mubr.f32.gmra.mrb[0].mxu0 %v570
  %v3737 = vpop.f32.mrb[0].mxu0
  %v3738 = vadd.f32 0.0, %v3737
  %v3739 = vpop.f32.mrb[0].mxu0
  %3740 = vmatprep.mubr.f32.mxu0 0.0
  %3741 = vmatmul.mubr.f32.gmra.mrb[0].mxu0 %v573
  %v3742 = vpop.f32.mrb[0].mxu0
  %v3743 = vadd.f32 0.0, %v3742
  %v3744 = vpop.f32.mrb[0].mxu0
  %3745 = vmatprep.mubr.f32.mxu0 0.0
  %3746 = vmatmul.mubr.f32.gmra.mrb[0].mxu0 %v576
  %v3747 = vpop.f32.mrb[0].mxu0
  %v3748 = vadd.f32 0.0, %v3747
  %v3749 = vpop.f32.mrb[0].mxu0
  %3750 = vmatprep.mubr.f32.mxu0 0.0
  %3751 = vmatmul.mubr.f32.gmra.mrb[0].mxu0 %v579
  %v3752 = vpop.f32.mrb[0].mxu0
  %v3753 = vadd.f32 0.0, %v3752
  %v3754 = vpop.f32.mrb[0].mxu0
  %3755 = vmatprep.mubr.f32.mxu0 0.0
  %3756 = vmatmul.mubr.f32.gmra.mrb[0].mxu0 %v582
  %v3757 = vpop.f32.mrb[0].mxu0
  %v3758 = vadd.f32 0.0, %v3757
  %v3759 = vpop.f32.mrb[0].mxu0
  %3760 = vmatprep.mubr.f32.mxu0 0.0
  %3761 = vmatmul.mubr.f32.gmra.mrb[0].mxu0 %v585
  %v3762 = vpop.f32.mrb[0].mxu0
  %v3763 = vadd.f32 0.0, %v3762
  %v3764 = vpop.f32.mrb[0].mxu0
  %3765 = vmatprep.mubr.f32.mxu0 0.0
  %3766 = vmatmul.mubr.f32.gmra.mrb[0].mxu0 %v588
  %v3767 = vpop.f32.mrb[0].mxu0
  %v3768 = vadd.f32 0.0, %v3767
  %v3769 = vpop.f32.mrb[0].mxu0
  %3770 = vmatprep.mubr.f32.mxu0 0.0
  %3771 = vmatmul.mubr.f32.gmra.mrb[0].mxu0 %v591
  %v3772 = vpop.f32.mrb[0].mxu0
  %v3773 = vadd.f32 0.0, %v3772
  %v3774 = vpop.f32.mrb[0].mxu0
  %3775 = vmatprep.mubr.f32.mxu0 0.0
  %3776 = vmatmul.mubr.f32.gmra.mrb[0].mxu0 %v594
  %v3777 = vpop.f32.mrb[0].mxu0
  %v3778 = vadd.f32 0.0, %v3777
  %v3779 = vpop.f32.mrb[0].mxu0
  %3780 = vmatprep.mubr.f32.mxu0 0.0
  %3781 = vmatmul.mubr.f32.gmra.mrb[0].mxu0 %v597
  %v3782 = vpop.f32.mrb[0].mxu0
  %v3783 = vadd.f32 0.0, %v3782
  %v3784 = vpop.f32.mrb[0].mxu0
  %3785 = vmatprep.mubr.f32.mxu0 0.0
  %3786 = vmatmul.mubr.f32.gmra.mrb[0].mxu0 %v600
  %v3787 = vpop.f32.mrb[0].mxu0
  %v3788 = vadd.f32 0.0, %v3787
  %v3789 = vpop.f32.mrb[0].mxu0
  %3790 = vmatprep.mubr.f32.mxu0 0.0
  %3791 = vmatmul.mubr.f32.gmra.mrb[0].mxu0 %v603
  %v3792 = vpop.f32.mrb[0].mxu0
  %v3793 = vadd.f32 0.0, %v3792
  %v3794 = vpop.f32.mrb[0].mxu0
  %3795 = vmatprep.mubr.f32.mxu0 0.0
  %3796 = vmatmul.mubr.f32.gmra.mrb[0].mxu0 %v606
  %v3797 = vpop.f32.mrb[0].mxu0
  %v3798 = vadd.f32 0.0, %v3797
  %v3799 = vpop.f32.mrb[0].mxu0
  %3800 = vmatprep.mubr.f32.mxu0 0.0
  %3801 = vmatmul.mubr.f32.gmra.mrb[0].mxu0 %v609
  %v3802 = vpop.f32.mrb[0].mxu0
  %v3803 = vadd.f32 0.0, %v3802
  %v3804 = vpop.f32.mrb[0].mxu0
  %3805 = vmatprep.mubr.f32.mxu0 0.0
  %3806 = vmatmul.mubr.f32.gmra.mrb[0].mxu0 %v612
  %v3807 = vpop.f32.mrb[0].mxu0
  %v3808 = vadd.f32 0.0, %v3807
  %v3809 = vpop.f32.mrb[0].mxu0
  %3810 = vmatprep.mubr.f32.mxu0 0.0
  %3811 = vmatmul.mubr.f32.gmra.mrb[0].mxu0 %v615
  %v3812 = vpop.f32.mrb[0].mxu0
  %v3813 = vadd.f32 0.0, %v3812
  %v3814 = vpop.f32.mrb[0].mxu0
  %3815 = vmatprep.mubr.f32.mxu0 0.0
  %3816 = vmatmul.mubr.f32.gmra.mrb[0].mxu0 %v618
  %v3817 = vpop.f32.mrb[0].mxu0
  %v3818 = vadd.f32 0.0, %v3817
  %v3819 = vpop.f32.mrb[0].mxu0
  %3820 = vmatprep.mubr.f32.mxu0 0.0
  %3821 = vmatmul.mubr.f32.gmra.mrb[0].mxu0 %v621
  %v3822 = vpop.f32.mrb[0].mxu0
  %v3823 = vadd.f32 0.0, %v3822
  %v3824 = vpop.f32.mrb[0].mxu0
  %3825 = vmatprep.mubr.f32.mxu0 0.0
  %3826 = vmatmul.mubr.f32.gmra.mrb[0].mxu0 %v624
  %v3827 = vpop.f32.mrb[0].mxu0
  %v3828 = vadd.f32 0.0, %v3827
  %v3829 = vpop.f32.mrb[0].mxu0
  %3830 = vmatprep.mubr.f32.mxu0 0.0
  %3831 = vmatmul.mubr.f32.gmra.mrb[0].mxu0 %v627
  %v3832 = vpop.f32.mrb[0].mxu0
  %v3833 = vadd.f32 0.0, %v3832
  %v3834 = vpop.f32.mrb[0].mxu0
  %3835 = vmatprep.mubr.f32.mxu0 0.0
  %3836 = vmatmul.mubr.f32.gmra.mrb[0].mxu0 %v630
  %v3837 = vpop.f32.mrb[0].mxu0
  %v3838 = vadd.f32 0.0, %v3837
  %v3839 = vpop.f32.mrb[0].mxu0
  %3840 = vmatprep.mubr.f32.mxu0 0.0
  %3841 = vmatmul.mubr.f32.gmra.mrb[0].mxu0 %v633
  %v3842 = vpop.f32.mrb[0].mxu0
  %v3843 = vadd.f32 0.0, %v3842
  %v3844 = vpop.f32.mrb[0].mxu0
  %3845 = vmatprep.mubr.f32.mxu0 0.0
  %3846 = vmatmul.mubr.f32.gmra.mrb[0].mxu0 %v636
  %v3847 = vpop.f32.mrb[0].mxu0
  %v3848 = vadd.f32 0.0, %v3847
  %v3849 = vpop.f32.mrb[0].mxu0
  %3850 = vmatprep.mubr.f32.mxu0 0.0
  %3851 = vmatmul.mubr.f32.gmra.mrb[0].mxu0 %v639
  %v3852 = vpop.f32.mrb[0].mxu0
  %v3853 = vadd.f32 0.0, %v3852
  %v3854 = vpop.f32.mrb[0].mxu0
  %3855 = vmatprep.mubr.f32.mxu0 0.0
  %3856 = vmatmul.mubr.f32.gmra.mrb[0].mxu0 %v642
  %v3857 = vpop.f32.mrb[0].mxu0
  %v3858 = vadd.f32 0.0, %v3857
  %v3859 = vpop.f32.mrb[0].mxu0
  %3860 = vmatprep.mubr.f32.mxu0 0.0
  %3861 = vmatmul.mubr.f32.gmra.mrb[0].mxu0 %v645
  %v3862 = vpop.f32.mrb[0].mxu0
  %v3863 = vadd.f32 0.0, %v3862
  %v3864 = vpop.f32.mrb[0].mxu0
  %3865 = vmatprep.mubr.f32.mxu0 0.0
  %3866 = vmatmul.mubr.f32.gmra.mrb[0].mxu0 %v648
  %v3867 = vpop.f32.mrb[0].mxu0
  %v3868 = vadd.f32 0.0, %v3867
  %v3869 = vpop.f32.mrb[0].mxu0
  %3870 = vmatprep.mubr.f32.mxu0 0.0
  %3871 = vmatmul.mubr.f32.gmra.mrb[0].mxu0 %v651
  %v3872 = vpop.f32.mrb[0].mxu0
  %v3873 = vadd.f32 0.0, %v3872
  %v3874 = vpop.f32.mrb[0].mxu0
  %3875 = vmatprep.mubr.f32.mxu0 0.0
  %3876 = vmatmul.mubr.f32.gmra.mrb[0].mxu0 %v654
  %v3877 = vpop.f32.mrb[0].mxu0
  %v3878 = vadd.f32 0.0, %v3877
  %v3879 = vpop.f32.mrb[0].mxu0
  %3880 = vmatprep.mubr.f32.mxu0 0.0
  %3881 = vmatmul.mubr.f32.gmra.mrb[0].mxu0 %v657
  %v3882 = vpop.f32.mrb[0].mxu0
  %v3883 = vadd.f32 0.0, %v3882
  %v3884 = vpop.f32.mrb[0].mxu0
  %3885 = vmatprep.mubr.f32.mxu0 0.0
  %3886 = vmatmul.mubr.f32.gmra.mrb[0].mxu0 %v660
  %v3887 = vpop.f32.mrb[0].mxu0
  %v3888 = vadd.f32 0.0, %v3887
  %v3889 = vpop.f32.mrb[0].mxu0
  %3890 = vdwg.mxu0
  %v3891 = vmul.f32 %v3733, 0.5
  %v3892 = vmul.f32 %v3738, 0.5
  %v3893 = vmul.f32 %v3743, 0.5
  %v3894 = vmul.f32 %v3748, 0.5
  %v3895 = vmul.f32 %v3753, 0.5
  %v3896 = vmul.f32 %v3758, 0.5
  %v3897 = vmul.f32 %v3763, 0.5
  %v3898 = vmul.f32 %v3768, 0.5
  %v3899 = vmul.f32 %v3773, 0.5
  %v3900 = vmul.f32 %v3778, 0.5
  %v3901 = vmul.f32 %v3783, 0.5
  %v3902 = vmul.f32 %v3788, 0.5
  %v3903 = vmul.f32 %v3793, 0.5
  %v3904 = vmul.f32 %v3798, 0.5
  %v3905 = vmul.f32 %v3803, 0.5
  %v3906 = vmul.f32 %v3808, 0.5
  %v3907 = vmul.f32 %v3813, 0.5
  %v3908 = vmul.f32 %v3818, 0.5
  %v3909 = vmul.f32 %v3823, 0.5
  %v3910 = vmul.f32 %v3828, 0.5
  %v3911 = vmul.f32 %v3833, 0.5
  %v3912 = vmul.f32 %v3838, 0.5
  %v3913 = vmul.f32 %v3843, 0.5
  %v3914 = vmul.f32 %v3848, 0.5
  %v3915 = vtanh.pop %v3891
  %v3916 = vtanh.pop %v3892
  %v3917 = vtanh.pop %v3893
  %v3918 = vtanh.pop %v3894
  %v3919 = vtanh.pop %v3895
  %v3920 = vtanh.pop %v3896
  %v3921 = vtanh.pop %v3897
  %v3922 = vtanh.pop %v3898
  %v3923 = vtanh.pop %v3899
  %v3924 = vtanh.pop %v3900
  %v3925 = vtanh.pop %v3901
  %v3926 = vtanh.pop %v3902
  %v3927 = vtanh.pop %v3903
  %v3928 = vtanh.pop %v3904
  %v3929 = vtanh.pop %v3905
  %v3930 = vtanh.pop %v3906
  %v3931 = vtanh.pop %v3907
  %v3932 = vtanh.pop %v3908
  %v3933 = vtanh.pop %v3909
  %v3934 = vtanh.pop %v3910
  %v3935 = vtanh.pop %v3911
  %v3936 = vtanh.pop %v3912
  %v3937 = vtanh.pop %v3913
  %v3938 = vtanh.pop %v3914
  %v3939 = vmul.f32 %v3915, 0.5
  %v3940 = vmul.f32 %v3916, 0.5
  %v3941 = vmul.f32 %v3917, 0.5
  %v3942 = vmul.f32 %v3918, 0.5
  %v3943 = vmul.f32 %v3919, 0.5
  %v3944 = vmul.f32 %v3920, 0.5
  %v3945 = vmul.f32 %v3921, 0.5
  %v3946 = vmul.f32 %v3922, 0.5
  %v3947 = vmul.f32 %v3923, 0.5
  %v3948 = vmul.f32 %v3924, 0.5
  %v3949 = vmul.f32 %v3925, 0.5
  %v3950 = vmul.f32 %v3926, 0.5
  %v3951 = vmul.f32 %v3927, 0.5
  %v3952 = vmul.f32 %v3928, 0.5
  %v3953 = vmul.f32 %v3929, 0.5
  %v3954 = vmul.f32 %v3930, 0.5
  %v3955 = vmul.f32 %v3931, 0.5
  %v3956 = vmul.f32 %v3932, 0.5
  %v3957 = vmul.f32 %v3933, 0.5
  %v3958 = vmul.f32 %v3934, 0.5
  %v3959 = vmul.f32 %v3935, 0.5
  %v3960 = vmul.f32 %v3936, 0.5
  %v3961 = vmul.f32 %v3937, 0.5
  %v3962 = vmul.f32 %v3938, 0.5
  %v3963 = vadd.f32 %v3939, 0.5
  %v3964 = vadd.f32 %v3940, 0.5
  %v3965 = vadd.f32 %v3941, 0.5
  %v3966 = vadd.f32 %v3942, 0.5
  %v3967 = vadd.f32 %v3943, 0.5
  %v3968 = vadd.f32 %v3944, 0.5
  %v3969 = vadd.f32 %v3945, 0.5
  %v3970 = vadd.f32 %v3946, 0.5
  %v3971 = vadd.f32 %v3947, 0.5
  %v3972 = vadd.f32 %v3948, 0.5
  %v3973 = vadd.f32 %v3949, 0.5
  %v3974 = vadd.f32 %v3950, 0.5
  %v3975 = vadd.f32 %v3951, 0.5
  %v3976 = vadd.f32 %v3952, 0.5
  %v3977 = vadd.f32 %v3953, 0.5
  %v3978 = vadd.f32 %v3954, 0.5
  %v3979 = vadd.f32 %v3955, 0.5
  %v3980 = vadd.f32 %v3956, 0.5
  %v3981 = vadd.f32 %v3957, 0.5
  %v3982 = vadd.f32 %v3958, 0.5
  %v3983 = vadd.f32 %v3959, 0.5
  %v3984 = vadd.f32 %v3960, 0.5
  %v3985 = vadd.f32 %v3961, 0.5
  %v3986 = vadd.f32 %v3962, 0.5
  %v3987 = vtanh.pop %v3853
  %v3988 = vtanh.pop %v3858
  %v3989 = vtanh.pop %v3863
  %v3990 = vtanh.pop %v3868
  %v3991 = vtanh.pop %v3873
  %v3992 = vtanh.pop %v3878
  %v3993 = vtanh.pop %v3883
  %v3994 = vtanh.pop %v3888
  %v3995 = vmul.f32 %v3971, %v3261
  %v3996 = vmul.f32 %v3972, %v3262
  %v3997 = vmul.f32 %v3973, %v3263
  %v3998 = vmul.f32 %v3974, %v3264
  %v3999 = vmul.f32 %v3975, %v3265
  %v4000 = vmul.f32 %v3976, %v3266
  %v4001 = vmul.f32 %v3977, %v3267
  %v4002 = vmul.f32 %v3978, %v3268
  %v4003 = vmul.f32 %v3963, %v3987
  %v4004 = vmul.f32 %v3964, %v3988
  %v4005 = vmul.f32 %v3965, %v3989
  %v4006 = vmul.f32 %v3966, %v3990
  %v4007 = vmul.f32 %v3967, %v3991
  %v4008 = vmul.f32 %v3968, %v3992
  %v4009 = vmul.f32 %v3969, %v3993
  %v4010 = vmul.f32 %v3970, %v3994
  %v4011 = vadd.f32 %v3995, %v4003
  %v4012 = vadd.f32 %v3996, %v4004
  %v4013 = vadd.f32 %v3997, %v4005
  %v4014 = vadd.f32 %v3998, %v4006
  %v4015 = vadd.f32 %v3999, %v4007
  %v4016 = vadd.f32 %v4000, %v4008
  %v4017 = vadd.f32 %v4001, %v4009
  %v4018 = vadd.f32 %v4002, %v4010
  %v4019 = vtanh.pop %v4011
  %v4020 = vtanh.pop %v4012
  %v4021 = vtanh.pop %v4013
  %v4022 = vtanh.pop %v4014
  %v4023 = vtanh.pop %v4015
  %v4024 = vtanh.pop %v4016
  %v4025 = vtanh.pop %v4017
  %v4026 = vtanh.pop %v4018
  %v4027 = vmul.f32 %v3979, %v4019
  %v4028 = vmul.f32 %v3980, %v4020
  %v4029 = vmul.f32 %v3981, %v4021
  %v4030 = vmul.f32 %v3982, %v4022
  %v4031 = vmul.f32 %v3983, %v4023
  %v4032 = vmul.f32 %v3984, %v4024
  %v4033 = vmul.f32 %v3985, %v4025
  %v4034 = vmul.f32 %v3986, %v4026
  %4035 = vmatprep.subr.mxu0 0.0
  %4036 = vmatpush1.msra.mxu0 %v3627
  %4037 = vmatprep.subr.mxu0 0.0
  %4038 = vmatpush1.msra.mxu0 %v3629
  %4039 = vmatprep.subr.mxu0 0.0
  %4040 = vmatpush1.msra.mxu0 %v3631
  %4041 = vmatprep.subr.mxu0 0.0
  %4042 = vmatpush1.msra.mxu0 %v3633
  %4043 = vmatprep.subr.mxu0 0.0
  %4044 = vmatpush1.msra.mxu0 0.0
  %4045 = vmatprep.subr.mxu0 0.0
  %4046 = vmatpush1.msra.mxu0 0.0
  %4047 = vmatprep.subr.mxu0 0.0
  %4048 = vmatpush1.msra.mxu0 0.0
  %4049 = vmatprep.subr.mxu0 0.0
  %4050 = vmatpush1.msra.mxu0 0.0
  %4051 = vmatprep.subr.mxu0 0.0
  %4052 = vmatpush1.msra.mxu0 0.0
  %4053 = vmatprep.subr.mxu0 0.0
  %4054 = vmatpush1.msra.mxu0 0.0
  %4055 = vmatprep.subr.mxu0 0.0
  %4056 = vmatpush1.msra.mxu0 0.0
  %4057 = vmatprep.subr.mxu0 0.0
  %4058 = vmatpush1.msra.mxu0 0.0
  %4059 = vmatprep.subr.mxu0 0.0
  %4060 = vmatpush1.msra.mxu0 0.0
  %4061 = vmatprep.subr.mxu0 0.0
  %4062 = vmatpush1.msra.mxu0 0.0
  %4063 = vmatprep.subr.mxu0 0.0
  %4064 = vmatpush1.msra.mxu0 0.0
  %4065 = vmatprep.subr.mxu0 0.0
  %4066 = vmatpush1.msra.mxu0 0.0
  %4067 = vmatprep.subr.mxu0 0.0
  %4068 = vmatpush1.msra.mxu0 0.0
  %4069 = vmatprep.subr.mxu0 0.0
  %4070 = vmatpush1.msra.mxu0 0.0
  %4071 = vmatprep.subr.mxu0 0.0
  %4072 = vmatpush1.msra.mxu0 0.0
  %4073 = vmatprep.subr.mxu0 0.0
  %4074 = vmatpush1.msra.mxu0 0.0
  %4075 = vmatprep.subr.mxu0 0.0
  %4076 = vmatpush1.msra.mxu0 0.0
  %4077 = vmatprep.subr.mxu0 0.0
  %4078 = vmatpush1.msra.mxu0 0.0
  %4079 = vmatprep.subr.mxu0 0.0
  %4080 = vmatpush1.msra.mxu0 0.0
  %4081 = vmatprep.subr.mxu0 0.0
  %4082 = vmatpush1.msra.mxu0 0.0
  %4083 = vmatprep.subr.mxu0 0.0
  %4084 = vmatpush1.msra.mxu0 0.0
  %4085 = vmatprep.subr.mxu0 0.0
  %4086 = vmatpush1.msra.mxu0 0.0
  %4087 = vmatprep.subr.mxu0 0.0
  %4088 = vmatpush1.msra.mxu0 0.0
  %4089 = vmatprep.subr.mxu0 0.0
  %4090 = vmatpush1.msra.mxu0 0.0
  %4091 = vmatprep.subr.mxu0 0.0
  %4092 = vmatpush1.msra.mxu0 0.0
  %4093 = vmatprep.subr.mxu0 0.0
  %4094 = vmatpush1.msra.mxu0 0.0
  %4095 = vmatprep.subr.mxu0 0.0
  %4096 = vmatpush1.msra.mxu0 0.0
  %4097 = vmatprep.subr.mxu0 0.0
  %4098 = vmatpush1.msra.mxu0 0.0
  %4099 = vmatprep.mubr.f32.mxu0 0.0
  %4100 = vmatmul.mubr.f32.gmra.mrb[0].mxu0 %v253
  %v4101 = vpop.f32.mrb[0].mxu0
  %v4102 = vadd.f32 0.0, %v4101
  %v4103 = vpop.f32.mrb[0].mxu0
  %4104 = vmatprep.mubr.f32.mxu0 0.0
  %4105 = vmatmul.mubr.f32.gmra.mrb[0].mxu0 %v256
  %v4106 = vpop.f32.mrb[0].mxu0
  %v4107 = vadd.f32 0.0, %v4106
  %v4108 = vpop.f32.mrb[0].mxu0
  %4109 = vmatprep.mubr.f32.mxu0 0.0
  %4110 = vmatmul.mubr.f32.gmra.mrb[0].mxu0 %v259
  %v4111 = vpop.f32.mrb[0].mxu0
  %v4112 = vadd.f32 0.0, %v4111
  %v4113 = vpop.f32.mrb[0].mxu0
  %4114 = vmatprep.mubr.f32.mxu0 0.0
  %4115 = vmatmul.mubr.f32.gmra.mrb[0].mxu0 %v262
  %v4116 = vpop.f32.mrb[0].mxu0
  %v4117 = vadd.f32 0.0, %v4116
  %v4118 = vpop.f32.mrb[0].mxu0
  %4119 = vmatprep.mubr.f32.mxu0 0.0
  %4120 = vmatmul.mubr.f32.gmra.mrb[0].mxu0 %v265
  %v4121 = vpop.f32.mrb[0].mxu0
  %v4122 = vadd.f32 0.0, %v4121
  %v4123 = vpop.f32.mrb[0].mxu0
  %4124 = vmatprep.mubr.f32.mxu0 0.0
  %4125 = vmatmul.mubr.f32.gmra.mrb[0].mxu0 %v268
  %v4126 = vpop.f32.mrb[0].mxu0
  %v4127 = vadd.f32 0.0, %v4126
  %v4128 = vpop.f32.mrb[0].mxu0
  %4129 = vmatprep.mubr.f32.mxu0 0.0
  %4130 = vmatmul.mubr.f32.gmra.mrb[0].mxu0 %v271
  %v4131 = vpop.f32.mrb[0].mxu0
  %v4132 = vadd.f32 0.0, %v4131
  %v4133 = vpop.f32.mrb[0].mxu0
  %4134 = vmatprep.mubr.f32.mxu0 0.0
  %4135 = vmatmul.mubr.f32.gmra.mrb[0].mxu0 %v274
  %v4136 = vpop.f32.mrb[0].mxu0
  %v4137 = vadd.f32 0.0, %v4136
  %v4138 = vpop.f32.mrb[0].mxu0
  %4139 = vmatprep.mubr.f32.mxu0 0.0
  %4140 = vmatmul.mubr.f32.gmra.mrb[0].mxu0 %v277
  %v4141 = vpop.f32.mrb[0].mxu0
  %v4142 = vadd.f32 0.0, %v4141
  %v4143 = vpop.f32.mrb[0].mxu0
  %4144 = vmatprep.mubr.f32.mxu0 0.0
  %4145 = vmatmul.mubr.f32.gmra.mrb[0].mxu0 %v280
  %v4146 = vpop.f32.mrb[0].mxu0
  %v4147 = vadd.f32 0.0, %v4146
  %v4148 = vpop.f32.mrb[0].mxu0
  %4149 = vmatprep.mubr.f32.mxu0 0.0
  %4150 = vmatmul.mubr.f32.gmra.mrb[0].mxu0 %v283
  %v4151 = vpop.f32.mrb[0].mxu0
  %v4152 = vadd.f32 0.0, %v4151
  %v4153 = vpop.f32.mrb[0].mxu0
  %4154 = vmatprep.mubr.f32.mxu0 0.0
  %4155 = vmatmul.mubr.f32.gmra.mrb[0].mxu0 %v286
  %v4156 = vpop.f32.mrb[0].mxu0
  %v4157 = vadd.f32 0.0, %v4156
  %v4158 = vpop.f32.mrb[0].mxu0
  %4159 = vmatprep.mubr.f32.mxu0 0.0
  %4160 = vmatmul.mubr.f32.gmra.mrb[0].mxu0 %v289
  %v4161 = vpop.f32.mrb[0].mxu0
  %v4162 = vadd.f32 0.0, %v4161
  %v4163 = vpop.f32.mrb[0].mxu0
  %4164 = vmatprep.mubr.f32.mxu0 0.0
  %4165 = vmatmul.mubr.f32.gmra.mrb[0].mxu0 %v292
  %v4166 = vpop.f32.mrb[0].mxu0
  %v4167 = vadd.f32 0.0, %v4166
  %v4168 = vpop.f32.mrb[0].mxu0
  %4169 = vmatprep.mubr.f32.mxu0 0.0
  %4170 = vmatmul.mubr.f32.gmra.mrb[0].mxu0 %v295
  %v4171 = vpop.f32.mrb[0].mxu0
  %v4172 = vadd.f32 0.0, %v4171
  %v4173 = vpop.f32.mrb[0].mxu0
  %4174 = vmatprep.mubr.f32.mxu0 0.0
  %4175 = vmatmul.mubr.f32.gmra.mrb[0].mxu0 %v298
  %v4176 = vpop.f32.mrb[0].mxu0
  %v4177 = vadd.f32 0.0, %v4176
  %v4178 = vpop.f32.mrb[0].mxu0
  %4179 = vdwg.mxu0
  %4196 = vrot.lane.b32.xlu0 %v4102, 10
  %v4197 = vpop.permute.xlu0 %4196
  %4198 = vrot.lane.b32.xlu0 %v4107, 10
  %v4199 = vpop.permute.xlu0 %4198
  %4200 = vrot.lane.b32.xlu0 %v4112, 10
  %v4201 = vpop.permute.xlu0 %4200
  %4202 = vrot.lane.b32.xlu0 %v4117, 10
  %v4203 = vpop.permute.xlu0 %4202
  %4204 = vrot.lane.b32.xlu0 %v4122, 10
  %v4205 = vpop.permute.xlu0 %4204
  %4206 = vrot.lane.b32.xlu0 %v4127, 10
  %v4207 = vpop.permute.xlu0 %4206
  %4208 = vrot.lane.b32.xlu0 %v4132, 10
  %v4209 = vpop.permute.xlu0 %4208
  %4210 = vrot.lane.b32.xlu0 %v4137, 10
  %v4211 = vpop.permute.xlu0 %4210
  %4212 = vrot.lane.b32.xlu0 %v4142, 10
  %v4213 = vpop.permute.xlu0 %4212
  %4214 = vrot.lane.b32.xlu0 %v4147, 10
  %v4215 = vpop.permute.xlu0 %4214
  %4216 = vrot.lane.b32.xlu0 %v4152, 10
  %v4217 = vpop.permute.xlu0 %4216
  %4218 = vrot.lane.b32.xlu0 %v4157, 10
  %v4219 = vpop.permute.xlu0 %4218
  %4220 = vrot.lane.b32.xlu0 %v4162, 10
  %v4221 = vpop.permute.xlu0 %4220
  %4222 = vrot.lane.b32.xlu0 %v4167, 10
  %v4223 = vpop.permute.xlu0 %4222
  %4224 = vrot.lane.b32.xlu0 %v4172, 10
  %v4225 = vpop.permute.xlu0 %4224
  %4226 = vrot.lane.b32.xlu0 %v4177, 10
  %v4227 = vpop.permute.xlu0 %4226
  %v4244 = vadd.f32 %v157, %v4197
  %v4245 = vadd.f32 %v162, %v4199
  %v4246 = vadd.f32 %v167, %v4201
  %v4247 = vadd.f32 %v172, %v4203
  %v4248 = vadd.f32 %v177, %v4205
  %v4249 = vadd.f32 %v182, %v4207
  %v4250 = vadd.f32 %v187, %v4209
  %v4251 = vadd.f32 %v192, %v4211
  %v4252 = vadd.f32 %v197, %v4213
  %v4253 = vadd.f32 %v202, %v4215
  %v4254 = vadd.f32 %v207, %v4217
  %v4255 = vadd.f32 %v212, %v4219
  %v4256 = vadd.f32 %v217, %v4221
  %v4257 = vadd.f32 %v222, %v4223
  %v4258 = vadd.f32 %v227, %v4225
  %v4259 = vadd.f32 %v232, %v4227
  %v4260 = vmul.f32 %v4244, 0.5
  %v4261 = vmul.f32 %v4245, 0.5
  %v4262 = vmul.f32 %v4246, 0.5
  %v4263 = vmul.f32 %v4247, 0.5
  %v4264 = vmul.f32 %v4248, 0.5
  %v4265 = vmul.f32 %v4249, 0.5
  %v4266 = vmul.f32 %v4250, 0.5
  %v4267 = vmul.f32 %v4251, 0.5
  %v4268 = vmul.f32 %v4252, 0.5
  %v4269 = vmul.f32 %v4253, 0.5
  %v4270 = vmul.f32 %v4254, 0.5
  %v4271 = vmul.f32 %v4255, 0.5
  %v4272 = vtanh.pop %v4260
  %v4273 = vtanh.pop %v4261
  %v4274 = vtanh.pop %v4262
  %v4275 = vtanh.pop %v4263
  %v4276 = vtanh.pop %v4264
  %v4277 = vtanh.pop %v4265
  %v4278 = vtanh.pop %v4266
  %v4279 = vtanh.pop %v4267
  %v4280 = vtanh.pop %v4268
  %v4281 = vtanh.pop %v4269
  %v4282 = vtanh.pop %v4270
  %v4283 = vtanh.pop %v4271
  %v4284 = vmul.f32 %v4272, 0.5
  %v4285 = vmul.f32 %v4273, 0.5
  %v4286 = vmul.f32 %v4274, 0.5
  %v4287 = vmul.f32 %v4275, 0.5
  %v4288 = vmul.f32 %v4276, 0.5
  %v4289 = vmul.f32 %v4277, 0.5
  %v4290 = vmul.f32 %v4278, 0.5
  %v4291 = vmul.f32 %v4279, 0.5
  %v4292 = vmul.f32 %v4280, 0.5
  %v4293 = vmul.f32 %v4281, 0.5
  %v4294 = vmul.f32 %v4282, 0.5
  %v4295 = vmul.f32 %v4283, 0.5
  %v4296 = vadd.f32 %v4284, 0.5
  %v4297 = vadd.f32 %v4285, 0.5
  %v4298 = vadd.f32 %v4286, 0.5
  %v4299 = vadd.f32 %v4287, 0.5
  %v4300 = vadd.f32 %v4288, 0.5
  %v4301 = vadd.f32 %v4289, 0.5
  %v4302 = vadd.f32 %v4290, 0.5
  %v4303 = vadd.f32 %v4291, 0.5
  %v4304 = vadd.f32 %v4292, 0.5
  %v4305 = vadd.f32 %v4293, 0.5
  %v4306 = vadd.f32 %v4294, 0.5
  %v4307 = vadd.f32 %v4295, 0.5
  %v4308 = vtanh.pop %v4256
  %v4309 = vtanh.pop %v4257
  %v4310 = vtanh.pop %v4258
  %v4311 = vtanh.pop %v4259
  %4316 = vrot.lane.b32.xlu0 %v3586, 2
  %v4317 = vpop.permute.xlu0 %4316
  %4318 = vrot.lane.b32.xlu0 %v3587, 2
  %v4319 = vpop.permute.xlu0 %4318
  %4320 = vrot.lane.b32.xlu0 %v3588, 2
  %v4321 = vpop.permute.xlu0 %4320
  %4322 = vrot.lane.b32.xlu0 %v3589, 2
  %v4323 = vpop.permute.xlu0 %4322
  %v4328 = vmul.f32 %v4300, %v4317
  %v4329 = vmul.f32 %v4301, %v4319
  %v4330 = vmul.f32 %v4302, %v4321
  %v4331 = vmul.f32 %v4303, %v4323
  %v4332 = vmul.f32 %v4296, %v4308
  %v4333 = vmul.f32 %v4297, %v4309
  %v4334 = vmul.f32 %v4298, %v4310
  %v4335 = vmul.f32 %v4299, %v4311
  %v4336 = vadd.f32 %v4328, %v4332
  %v4337 = vadd.f32 %v4329, %v4333
  %v4338 = vadd.f32 %v4330, %v4334
  %v4339 = vadd.f32 %v4331, %v4335
  %v4340 = vtanh.pop %v4336
  %v4341 = vtanh.pop %v4337
  %v4342 = vtanh.pop %v4338
  %v4343 = vtanh.pop %v4339
  %v4344 = vmul.f32 %v4304, %v4340
  %v4345 = vmul.f32 %v4305, %v4341
  %v4346 = vmul.f32 %v4306, %v4342
  %v4347 = vmul.f32 %v4307, %v4343
  %4356 = vrot.lane.b32.xlu0 %v4027, 10
  %v4357 = vpop.permute.xlu0 %4356
  %4358 = vrot.lane.b32.xlu0 %v4028, 10
  %v4359 = vpop.permute.xlu0 %4358
  %4360 = vrot.lane.b32.xlu0 %v4029, 10
  %v4361 = vpop.permute.xlu0 %4360
  %4362 = vrot.lane.b32.xlu0 %v4030, 10
  %v4363 = vpop.permute.xlu0 %4362
  %4364 = vrot.lane.b32.xlu0 %v4031, 10
  %v4365 = vpop.permute.xlu0 %4364
  %4366 = vrot.lane.b32.xlu0 %v4032, 10
  %v4367 = vpop.permute.xlu0 %4366
  %4368 = vrot.lane.b32.xlu0 %v4033, 10
  %v4369 = vpop.permute.xlu0 %4368
  %4370 = vrot.lane.b32.xlu0 %v4034, 10
  %v4371 = vpop.permute.xlu0 %4370
  %4376 = vrot.lane.b32.xlu0 %v4344, 118
  %v4377 = vpop.permute.xlu0 %4376
  %4378 = vrot.lane.b32.xlu0 %v4345, 118
  %v4379 = vpop.permute.xlu0 %4378
  %4380 = vrot.lane.b32.xlu0 %v4346, 118
  %v4381 = vpop.permute.xlu0 %4380
  %4382 = vrot.lane.b32.xlu0 %v4347, 118
  %v4383 = vpop.permute.xlu0 %4382
  %4384 = vrot.lane.b32.xlu0 %v4357, 118
  %v4385 = vpop.permute.xlu0 %4384
  %4386 = vrot.lane.b32.xlu0 %v4359, 118
  %v4387 = vpop.permute.xlu0 %4386
  %4388 = vrot.lane.b32.xlu0 %v4361, 118
  %v4389 = vpop.permute.xlu0 %4388
  %4390 = vrot.lane.b32.xlu0 %v4363, 118
  %v4391 = vpop.permute.xlu0 %4390
  %4392 = vrot.lane.b32.xlu0 %v4365, 118
  %v4393 = vpop.permute.xlu0 %4392
  %4394 = vrot.lane.b32.xlu0 %v4367, 118
  %v4395 = vpop.permute.xlu0 %4394
  %4396 = vrot.lane.b32.xlu0 %v4369, 118
  %v4397 = vpop.permute.xlu0 %4396
  %4398 = vrot.lane.b32.xlu0 %v4371, 118
  %v4399 = vpop.permute.xlu0 %4398
  %4400 = vrot.lane.b32.xlu0 1.0, 118
  %v4401 = vpop.permute.xlu0 %4400
  %v4414 = vsel %vm662, %v4401, 0
  %4416 = vmatprep.subr.mxu0 0.0
  %4417 = vmatpush1.msra.mxu0 %v4377
  %4418 = vmatprep.subr.mxu0 0.0
  %4419 = vmatpush1.msra.mxu0 %v4379
  %4420 = vmatprep.subr.mxu0 0.0
  %4421 = vmatpush1.msra.mxu0 %v4381
  %4422 = vmatprep.subr.mxu0 0.0
  %4423 = vmatpush1.msra.mxu0 %v4383
  %4424 = vmatprep.subr.mxu0 0.0
  %4425 = vmatpush1.msra.mxu0 %v4385
  %4426 = vmatprep.subr.mxu0 0.0
  %4427 = vmatpush1.msra.mxu0 %v4387
  %4428 = vmatprep.subr.mxu0 0.0
  %4429 = vmatpush1.msra.mxu0 %v4389
  %4430 = vmatprep.subr.mxu0 0.0
  %4431 = vmatpush1.msra.mxu0 %v4391
  %4432 = vmatprep.subr.mxu0 0.0
  %4433 = vmatpush1.msra.mxu0 %v4393
  %4434 = vmatprep.subr.mxu0 0.0
  %4435 = vmatpush1.msra.mxu0 %v4395
  %4436 = vmatprep.subr.mxu0 0.0
  %4437 = vmatpush1.msra.mxu0 %v4397
  %4438 = vmatprep.subr.mxu0 0.0
  %4439 = vmatpush1.msra.mxu0 %v4399
  %4440 = vmatprep.subr.mxu0 0.0
  %4441 = vmatpush1.msra.mxu0 %v4414
  %4442 = vmatprep.subr.mxu0 0.0
  %4443 = vmatpush1.msra.mxu0 0.0
  %4444 = vmatprep.subr.mxu0 0.0
  %4445 = vmatpush1.msra.mxu0 0.0
  %4446 = vmatprep.subr.mxu0 0.0
  %4447 = vmatpush1.msra.mxu0 0.0
  %4448 = vmatprep.subr.mxu0 0.0
  %4449 = vmatpush1.msra.mxu0 0.0
  %4450 = vmatprep.subr.mxu0 0.0
  %4451 = vmatpush1.msra.mxu0 0.0
  %4452 = vmatprep.subr.mxu0 0.0
  %4453 = vmatpush1.msra.mxu0 0.0
  %4454 = vmatprep.subr.mxu0 0.0
  %4455 = vmatpush1.msra.mxu0 0.0
  %4456 = vmatprep.subr.mxu0 0.0
  %4457 = vmatpush1.msra.mxu0 0.0
  %4458 = vmatprep.subr.mxu0 0.0
  %4459 = vmatpush1.msra.mxu0 0.0
  %4460 = vmatprep.subr.mxu0 0.0
  %4461 = vmatpush1.msra.mxu0 0.0
  %4462 = vmatprep.subr.mxu0 0.0
  %4463 = vmatpush1.msra.mxu0 0.0
  %4464 = vmatprep.subr.mxu0 0.0
  %4465 = vmatpush1.msra.mxu0 0.0
  %4466 = vmatprep.subr.mxu0 0.0
  %4467 = vmatpush1.msra.mxu0 0.0
  %4468 = vmatprep.subr.mxu0 0.0
  %4469 = vmatpush1.msra.mxu0 0.0
  %4470 = vmatprep.subr.mxu0 0.0
  %4471 = vmatpush1.msra.mxu0 0.0
  %4472 = vmatprep.subr.mxu0 0.0
  %4473 = vmatpush1.msra.mxu0 0.0
  %4474 = vmatprep.subr.mxu0 0.0
  %4475 = vmatpush1.msra.mxu0 0.0
  %4476 = vmatprep.subr.mxu0 0.0
  %4477 = vmatpush1.msra.mxu0 0.0
  %4478 = vmatprep.subr.mxu0 0.0
  %4479 = vmatpush1.msra.mxu0 0.0
  %4480 = vmatprep.mubr.f32.mxu0 0.0
  %4481 = vmatmul.mubr.f32.gmra.mrb[0].mxu0 %v567
  %v4482 = vpop.f32.mrb[0].mxu0
  %v4483 = vadd.f32 0.0, %v4482
  %v4484 = vpop.f32.mrb[0].mxu0
  %4485 = vmatprep.mubr.f32.mxu0 0.0
  %4486 = vmatmul.mubr.f32.gmra.mrb[0].mxu0 %v570
  %v4487 = vpop.f32.mrb[0].mxu0
  %v4488 = vadd.f32 0.0, %v4487
  %v4489 = vpop.f32.mrb[0].mxu0
  %4490 = vmatprep.mubr.f32.mxu0 0.0
  %4491 = vmatmul.mubr.f32.gmra.mrb[0].mxu0 %v573
  %v4492 = vpop.f32.mrb[0].mxu0
  %v4493 = vadd.f32 0.0, %v4492
  %v4494 = vpop.f32.mrb[0].mxu0
  %4495 = vmatprep.mubr.f32.mxu0 0.0
  %4496 = vmatmul.mubr.f32.gmra.mrb[0].mxu0 %v576
  %v4497 = vpop.f32.mrb[0].mxu0
  %v4498 = vadd.f32 0.0, %v4497
  %v4499 = vpop.f32.mrb[0].mxu0
  %4500 = vmatprep.mubr.f32.mxu0 0.0
  %4501 = vmatmul.mubr.f32.gmra.mrb[0].mxu0 %v579
  %v4502 = vpop.f32.mrb[0].mxu0
  %v4503 = vadd.f32 0.0, %v4502
  %v4504 = vpop.f32.mrb[0].mxu0
  %4505 = vmatprep.mubr.f32.mxu0 0.0
  %4506 = vmatmul.mubr.f32.gmra.mrb[0].mxu0 %v582
  %v4507 = vpop.f32.mrb[0].mxu0
  %v4508 = vadd.f32 0.0, %v4507
  %v4509 = vpop.f32.mrb[0].mxu0
  %4510 = vmatprep.mubr.f32.mxu0 0.0
  %4511 = vmatmul.mubr.f32.gmra.mrb[0].mxu0 %v585
  %v4512 = vpop.f32.mrb[0].mxu0
  %v4513 = vadd.f32 0.0, %v4512
  %v4514 = vpop.f32.mrb[0].mxu0
  %4515 = vmatprep.mubr.f32.mxu0 0.0
  %4516 = vmatmul.mubr.f32.gmra.mrb[0].mxu0 %v588
  %v4517 = vpop.f32.mrb[0].mxu0
  %v4518 = vadd.f32 0.0, %v4517
  %v4519 = vpop.f32.mrb[0].mxu0
  %4520 = vmatprep.mubr.f32.mxu0 0.0
  %4521 = vmatmul.mubr.f32.gmra.mrb[0].mxu0 %v591
  %v4522 = vpop.f32.mrb[0].mxu0
  %v4523 = vadd.f32 0.0, %v4522
  %v4524 = vpop.f32.mrb[0].mxu0
  %4525 = vmatprep.mubr.f32.mxu0 0.0
  %4526 = vmatmul.mubr.f32.gmra.mrb[0].mxu0 %v594
  %v4527 = vpop.f32.mrb[0].mxu0
  %v4528 = vadd.f32 0.0, %v4527
  %v4529 = vpop.f32.mrb[0].mxu0
  %4530 = vmatprep.mubr.f32.mxu0 0.0
  %4531 = vmatmul.mubr.f32.gmra.mrb[0].mxu0 %v597
  %v4532 = vpop.f32.mrb[0].mxu0
  %v4533 = vadd.f32 0.0, %v4532
  %v4534 = vpop.f32.mrb[0].mxu0
  %4535 = vmatprep.mubr.f32.mxu0 0.0
  %4536 = vmatmul.mubr.f32.gmra.mrb[0].mxu0 %v600
  %v4537 = vpop.f32.mrb[0].mxu0
  %v4538 = vadd.f32 0.0, %v4537
  %v4539 = vpop.f32.mrb[0].mxu0
  %4540 = vmatprep.mubr.f32.mxu0 0.0
  %4541 = vmatmul.mubr.f32.gmra.mrb[0].mxu0 %v603
  %v4542 = vpop.f32.mrb[0].mxu0
  %v4543 = vadd.f32 0.0, %v4542
  %v4544 = vpop.f32.mrb[0].mxu0
  %4545 = vmatprep.mubr.f32.mxu0 0.0
  %4546 = vmatmul.mubr.f32.gmra.mrb[0].mxu0 %v606
  %v4547 = vpop.f32.mrb[0].mxu0
  %v4548 = vadd.f32 0.0, %v4547
  %v4549 = vpop.f32.mrb[0].mxu0
  %4550 = vmatprep.mubr.f32.mxu0 0.0
  %4551 = vmatmul.mubr.f32.gmra.mrb[0].mxu0 %v609
  %v4552 = vpop.f32.mrb[0].mxu0
  %v4553 = vadd.f32 0.0, %v4552
  %v4554 = vpop.f32.mrb[0].mxu0
  %4555 = vmatprep.mubr.f32.mxu0 0.0
  %4556 = vmatmul.mubr.f32.gmra.mrb[0].mxu0 %v612
  %v4557 = vpop.f32.mrb[0].mxu0
  %v4558 = vadd.f32 0.0, %v4557
  %v4559 = vpop.f32.mrb[0].mxu0
  %4560 = vmatprep.mubr.f32.mxu0 0.0
  %4561 = vmatmul.mubr.f32.gmra.mrb[0].mxu0 %v615
  %v4562 = vpop.f32.mrb[0].mxu0
  %v4563 = vadd.f32 0.0, %v4562
  %v4564 = vpop.f32.mrb[0].mxu0
  %4565 = vmatprep.mubr.f32.mxu0 0.0
  %4566 = vmatmul.mubr.f32.gmra.mrb[0].mxu0 %v618
  %v4567 = vpop.f32.mrb[0].mxu0
  %v4568 = vadd.f32 0.0, %v4567
  %v4569 = vpop.f32.mrb[0].mxu0
  %4570 = vmatprep.mubr.f32.mxu0 0.0
  %4571 = vmatmul.mubr.f32.gmra.mrb[0].mxu0 %v621
  %v4572 = vpop.f32.mrb[0].mxu0
  %v4573 = vadd.f32 0.0, %v4572
  %v4574 = vpop.f32.mrb[0].mxu0
  %4575 = vmatprep.mubr.f32.mxu0 0.0
  %4576 = vmatmul.mubr.f32.gmra.mrb[0].mxu0 %v624
  %v4577 = vpop.f32.mrb[0].mxu0
  %v4578 = vadd.f32 0.0, %v4577
  %v4579 = vpop.f32.mrb[0].mxu0
  %4580 = vmatprep.mubr.f32.mxu0 0.0
  %4581 = vmatmul.mubr.f32.gmra.mrb[0].mxu0 %v627
  %v4582 = vpop.f32.mrb[0].mxu0
  %v4583 = vadd.f32 0.0, %v4582
  %v4584 = vpop.f32.mrb[0].mxu0
  %4585 = vmatprep.mubr.f32.mxu0 0.0
  %4586 = vmatmul.mubr.f32.gmra.mrb[0].mxu0 %v630
  %v4587 = vpop.f32.mrb[0].mxu0
  %v4588 = vadd.f32 0.0, %v4587
  %v4589 = vpop.f32.mrb[0].mxu0
  %4590 = vmatprep.mubr.f32.mxu0 0.0
  %4591 = vmatmul.mubr.f32.gmra.mrb[0].mxu0 %v633
  %v4592 = vpop.f32.mrb[0].mxu0
  %v4593 = vadd.f32 0.0, %v4592
  %v4594 = vpop.f32.mrb[0].mxu0
  %4595 = vmatprep.mubr.f32.mxu0 0.0
  %4596 = vmatmul.mubr.f32.gmra.mrb[0].mxu0 %v636
  %v4597 = vpop.f32.mrb[0].mxu0
  %v4598 = vadd.f32 0.0, %v4597
  %v4599 = vpop.f32.mrb[0].mxu0
  %4600 = vmatprep.mubr.f32.mxu0 0.0
  %4601 = vmatmul.mubr.f32.gmra.mrb[0].mxu0 %v639
  %v4602 = vpop.f32.mrb[0].mxu0
  %v4603 = vadd.f32 0.0, %v4602
  %v4604 = vpop.f32.mrb[0].mxu0
  %4605 = vmatprep.mubr.f32.mxu0 0.0
  %4606 = vmatmul.mubr.f32.gmra.mrb[0].mxu0 %v642
  %v4607 = vpop.f32.mrb[0].mxu0
  %v4608 = vadd.f32 0.0, %v4607
  %v4609 = vpop.f32.mrb[0].mxu0
  %4610 = vmatprep.mubr.f32.mxu0 0.0
  %4611 = vmatmul.mubr.f32.gmra.mrb[0].mxu0 %v645
  %v4612 = vpop.f32.mrb[0].mxu0
  %v4613 = vadd.f32 0.0, %v4612
  %v4614 = vpop.f32.mrb[0].mxu0
  %4615 = vmatprep.mubr.f32.mxu0 0.0
  %4616 = vmatmul.mubr.f32.gmra.mrb[0].mxu0 %v648
  %v4617 = vpop.f32.mrb[0].mxu0
  %v4618 = vadd.f32 0.0, %v4617
  %v4619 = vpop.f32.mrb[0].mxu0
  %4620 = vmatprep.mubr.f32.mxu0 0.0
  %4621 = vmatmul.mubr.f32.gmra.mrb[0].mxu0 %v651
  %v4622 = vpop.f32.mrb[0].mxu0
  %v4623 = vadd.f32 0.0, %v4622
  %v4624 = vpop.f32.mrb[0].mxu0
  %4625 = vmatprep.mubr.f32.mxu0 0.0
  %4626 = vmatmul.mubr.f32.gmra.mrb[0].mxu0 %v654
  %v4627 = vpop.f32.mrb[0].mxu0
  %v4628 = vadd.f32 0.0, %v4627
  %v4629 = vpop.f32.mrb[0].mxu0
  %4630 = vmatprep.mubr.f32.mxu0 0.0
  %4631 = vmatmul.mubr.f32.gmra.mrb[0].mxu0 %v657
  %v4632 = vpop.f32.mrb[0].mxu0
  %v4633 = vadd.f32 0.0, %v4632
  %v4634 = vpop.f32.mrb[0].mxu0
  %4635 = vmatprep.mubr.f32.mxu0 0.0
  %4636 = vmatmul.mubr.f32.gmra.mrb[0].mxu0 %v660
  %v4637 = vpop.f32.mrb[0].mxu0
  %v4638 = vadd.f32 0.0, %v4637
  %v4639 = vpop.f32.mrb[0].mxu0
  %4640 = vdwg.mxu0
  %v4641 = vmul.f32 %v4483, 0.5
  %v4642 = vmul.f32 %v4488, 0.5
  %v4643 = vmul.f32 %v4493, 0.5
  %v4644 = vmul.f32 %v4498, 0.5
  %v4645 = vmul.f32 %v4503, 0.5
  %v4646 = vmul.f32 %v4508, 0.5
  %v4647 = vmul.f32 %v4513, 0.5
  %v4648 = vmul.f32 %v4518, 0.5
  %v4649 = vmul.f32 %v4523, 0.5
  %v4650 = vmul.f32 %v4528, 0.5
  %v4651 = vmul.f32 %v4533, 0.5
  %v4652 = vmul.f32 %v4538, 0.5
  %v4653 = vmul.f32 %v4543, 0.5
  %v4654 = vmul.f32 %v4548, 0.5
  %v4655 = vmul.f32 %v4553, 0.5
  %v4656 = vmul.f32 %v4558, 0.5
  %v4657 = vmul.f32 %v4563, 0.5
  %v4658 = vmul.f32 %v4568, 0.5
  %v4659 = vmul.f32 %v4573, 0.5
  %v4660 = vmul.f32 %v4578, 0.5
  %v4661 = vmul.f32 %v4583, 0.5
  %v4662 = vmul.f32 %v4588, 0.5
  %v4663 = vmul.f32 %v4593, 0.5
  %v4664 = vmul.f32 %v4598, 0.5
  %v4665 = vtanh.pop %v4641
  %v4666 = vtanh.pop %v4642
  %v4667 = vtanh.pop %v4643
  %v4668 = vtanh.pop %v4644
  %v4669 = vtanh.pop %v4645
  %v4670 = vtanh.pop %v4646
  %v4671 = vtanh.pop %v4647
  %v4672 = vtanh.pop %v4648
  %v4673 = vtanh.pop %v4649
  %v4674 = vtanh.pop %v4650
  %v4675 = vtanh.pop %v4651
  %v4676 = vtanh.pop %v4652
  %v4677 = vtanh.pop %v4653
  %v4678 = vtanh.pop %v4654
  %v4679 = vtanh.pop %v4655
  %v4680 = vtanh.pop %v4656
  %v4681 = vtanh.pop %v4657
  %v4682 = vtanh.pop %v4658
  %v4683 = vtanh.pop %v4659
  %v4684 = vtanh.pop %v4660
  %v4685 = vtanh.pop %v4661
  %v4686 = vtanh.pop %v4662
  %v4687 = vtanh.pop %v4663
  %v4688 = vtanh.pop %v4664
  %v4689 = vmul.f32 %v4665, 0.5
  %v4690 = vmul.f32 %v4666, 0.5
  %v4691 = vmul.f32 %v4667, 0.5
  %v4692 = vmul.f32 %v4668, 0.5
  %v4693 = vmul.f32 %v4669, 0.5
  %v4694 = vmul.f32 %v4670, 0.5
  %v4695 = vmul.f32 %v4671, 0.5
  %v4696 = vmul.f32 %v4672, 0.5
  %v4697 = vmul.f32 %v4673, 0.5
  %v4698 = vmul.f32 %v4674, 0.5
  %v4699 = vmul.f32 %v4675, 0.5
  %v4700 = vmul.f32 %v4676, 0.5
  %v4701 = vmul.f32 %v4677, 0.5
  %v4702 = vmul.f32 %v4678, 0.5
  %v4703 = vmul.f32 %v4679, 0.5
  %v4704 = vmul.f32 %v4680, 0.5
  %v4705 = vmul.f32 %v4681, 0.5
  %v4706 = vmul.f32 %v4682, 0.5
  %v4707 = vmul.f32 %v4683, 0.5
  %v4708 = vmul.f32 %v4684, 0.5
  %v4709 = vmul.f32 %v4685, 0.5
  %v4710 = vmul.f32 %v4686, 0.5
  %v4711 = vmul.f32 %v4687, 0.5
  %v4712 = vmul.f32 %v4688, 0.5
  %v4713 = vadd.f32 %v4689, 0.5
  %v4714 = vadd.f32 %v4690, 0.5
  %v4715 = vadd.f32 %v4691, 0.5
  %v4716 = vadd.f32 %v4692, 0.5
  %v4717 = vadd.f32 %v4693, 0.5
  %v4718 = vadd.f32 %v4694, 0.5
  %v4719 = vadd.f32 %v4695, 0.5
  %v4720 = vadd.f32 %v4696, 0.5
  %v4721 = vadd.f32 %v4697, 0.5
  %v4722 = vadd.f32 %v4698, 0.5
  %v4723 = vadd.f32 %v4699, 0.5
  %v4724 = vadd.f32 %v4700, 0.5
  %v4725 = vadd.f32 %v4701, 0.5
  %v4726 = vadd.f32 %v4702, 0.5
  %v4727 = vadd.f32 %v4703, 0.5
  %v4728 = vadd.f32 %v4704, 0.5
  %v4729 = vadd.f32 %v4705, 0.5
  %v4730 = vadd.f32 %v4706, 0.5
  %v4731 = vadd.f32 %v4707, 0.5
  %v4732 = vadd.f32 %v4708, 0.5
  %v4733 = vadd.f32 %v4709, 0.5
  %v4734 = vadd.f32 %v4710, 0.5
  %v4735 = vadd.f32 %v4711, 0.5
  %v4736 = vadd.f32 %v4712, 0.5
  %v4737 = vtanh.pop %v4603
  %v4738 = vtanh.pop %v4608
  %v4739 = vtanh.pop %v4613
  %v4740 = vtanh.pop %v4618
  %v4741 = vtanh.pop %v4623
  %v4742 = vtanh.pop %v4628
  %v4743 = vtanh.pop %v4633
  %v4744 = vtanh.pop %v4638
  %v4745 = vmul.f32 %v4721, %v4011
  %v4746 = vmul.f32 %v4722, %v4012
  %v4747 = vmul.f32 %v4723, %v4013
  %v4748 = vmul.f32 %v4724, %v4014
  %v4749 = vmul.f32 %v4725, %v4015
  %v4750 = vmul.f32 %v4726, %v4016
  %v4751 = vmul.f32 %v4727, %v4017
  %v4752 = vmul.f32 %v4728, %v4018
  %v4753 = vmul.f32 %v4713, %v4737
  %v4754 = vmul.f32 %v4714, %v4738
  %v4755 = vmul.f32 %v4715, %v4739
  %v4756 = vmul.f32 %v4716, %v4740
  %v4757 = vmul.f32 %v4717, %v4741
  %v4758 = vmul.f32 %v4718, %v4742
  %v4759 = vmul.f32 %v4719, %v4743
  %v4760 = vmul.f32 %v4720, %v4744
  %v4761 = vadd.f32 %v4745, %v4753
  %v4762 = vadd.f32 %v4746, %v4754
  %v4763 = vadd.f32 %v4747, %v4755
  %v4764 = vadd.f32 %v4748, %v4756
  %v4765 = vadd.f32 %v4749, %v4757
  %v4766 = vadd.f32 %v4750, %v4758
  %v4767 = vadd.f32 %v4751, %v4759
  %v4768 = vadd.f32 %v4752, %v4760
  %v4769 = vtanh.pop %v4761
  %v4770 = vtanh.pop %v4762
  %v4771 = vtanh.pop %v4763
  %v4772 = vtanh.pop %v4764
  %v4773 = vtanh.pop %v4765
  %v4774 = vtanh.pop %v4766
  %v4775 = vtanh.pop %v4767
  %v4776 = vtanh.pop %v4768
  %v4777 = vmul.f32 %v4729, %v4769
  %v4778 = vmul.f32 %v4730, %v4770
  %v4779 = vmul.f32 %v4731, %v4771
  %v4780 = vmul.f32 %v4732, %v4772
  %v4781 = vmul.f32 %v4733, %v4773
  %v4782 = vmul.f32 %v4734, %v4774
  %v4783 = vmul.f32 %v4735, %v4775
  %v4784 = vmul.f32 %v4736, %v4776
  %4785 = vmatprep.subr.mxu0 0.0
  %4786 = vmatpush1.msra.mxu0 %v4377
  %4787 = vmatprep.subr.mxu0 0.0
  %4788 = vmatpush1.msra.mxu0 %v4379
  %4789 = vmatprep.subr.mxu0 0.0
  %4790 = vmatpush1.msra.mxu0 %v4381
  %4791 = vmatprep.subr.mxu0 0.0
  %4792 = vmatpush1.msra.mxu0 %v4383
  %4793 = vmatprep.subr.mxu0 0.0
  %4794 = vmatpush1.msra.mxu0 0.0
  %4795 = vmatprep.subr.mxu0 0.0
  %4796 = vmatpush1.msra.mxu0 0.0
  %4797 = vmatprep.subr.mxu0 0.0
  %4798 = vmatpush1.msra.mxu0 0.0
  %4799 = vmatprep.subr.mxu0 0.0
  %4800 = vmatpush1.msra.mxu0 0.0
  %4801 = vmatprep.subr.mxu0 0.0
  %4802 = vmatpush1.msra.mxu0 0.0
  %4803 = vmatprep.subr.mxu0 0.0
  %4804 = vmatpush1.msra.mxu0 0.0
  %4805 = vmatprep.subr.mxu0 0.0
  %4806 = vmatpush1.msra.mxu0 0.0
  %4807 = vmatprep.subr.mxu0 0.0
  %4808 = vmatpush1.msra.mxu0 0.0
  %4809 = vmatprep.subr.mxu0 0.0
  %4810 = vmatpush1.msra.mxu0 0.0
  %4811 = vmatprep.subr.mxu0 0.0
  %4812 = vmatpush1.msra.mxu0 0.0
  %4813 = vmatprep.subr.mxu0 0.0
  %4814 = vmatpush1.msra.mxu0 0.0
  %4815 = vmatprep.subr.mxu0 0.0
  %4816 = vmatpush1.msra.mxu0 0.0
  %4817 = vmatprep.subr.mxu0 0.0
  %4818 = vmatpush1.msra.mxu0 0.0
  %4819 = vmatprep.subr.mxu0 0.0
  %4820 = vmatpush1.msra.mxu0 0.0
  %4821 = vmatprep.subr.mxu0 0.0
  %4822 = vmatpush1.msra.mxu0 0.0
  %4823 = vmatprep.subr.mxu0 0.0
  %4824 = vmatpush1.msra.mxu0 0.0
  %4825 = vmatprep.subr.mxu0 0.0
  %4826 = vmatpush1.msra.mxu0 0.0
  %4827 = vmatprep.subr.mxu0 0.0
  %4828 = vmatpush1.msra.mxu0 0.0
  %4829 = vmatprep.subr.mxu0 0.0
  %4830 = vmatpush1.msra.mxu0 0.0
  %4831 = vmatprep.subr.mxu0 0.0
  %4832 = vmatpush1.msra.mxu0 0.0
  %4833 = vmatprep.subr.mxu0 0.0
  %4834 = vmatpush1.msra.mxu0 0.0
  %4835 = vmatprep.subr.mxu0 0.0
  %4836 = vmatpush1.msra.mxu0 0.0
  %4837 = vmatprep.subr.mxu0 0.0
  %4838 = vmatpush1.msra.mxu0 0.0
  %4839 = vmatprep.subr.mxu0 0.0
  %4840 = vmatpush1.msra.mxu0 0.0
  %4841 = vmatprep.subr.mxu0 0.0
  %4842 = vmatpush1.msra.mxu0 0.0
  %4843 = vmatprep.subr.mxu0 0.0
  %4844 = vmatpush1.msra.mxu0 0.0
  %4845 = vmatprep.subr.mxu0 0.0
  %4846 = vmatpush1.msra.mxu0 0.0
  %4847 = vmatprep.subr.mxu0 0.0
  %4848 = vmatpush1.msra.mxu0 0.0
  %4849 = vmatprep.mubr.f32.mxu0 0.0
  %4850 = vmatmul.mubr.f32.gmra.mrb[0].mxu0 %v253
  %v4851 = vpop.f32.mrb[0].mxu0
  %v4852 = vadd.f32 0.0, %v4851
  %v4853 = vpop.f32.mrb[0].mxu0
  %4854 = vmatprep.mubr.f32.mxu0 0.0
  %4855 = vmatmul.mubr.f32.gmra.mrb[0].mxu0 %v256
  %v4856 = vpop.f32.mrb[0].mxu0
  %v4857 = vadd.f32 0.0, %v4856
  %v4858 = vpop.f32.mrb[0].mxu0
  %4859 = vmatprep.mubr.f32.mxu0 0.0
  %4860 = vmatmul.mubr.f32.gmra.mrb[0].mxu0 %v259
  %v4861 = vpop.f32.mrb[0].mxu0
  %v4862 = vadd.f32 0.0, %v4861
  %v4863 = vpop.f32.mrb[0].mxu0
  %4864 = vmatprep.mubr.f32.mxu0 0.0
  %4865 = vmatmul.mubr.f32.gmra.mrb[0].mxu0 %v262
  %v4866 = vpop.f32.mrb[0].mxu0
  %v4867 = vadd.f32 0.0, %v4866
  %v4868 = vpop.f32.mrb[0].mxu0
  %4869 = vmatprep.mubr.f32.mxu0 0.0
  %4870 = vmatmul.mubr.f32.gmra.mrb[0].mxu0 %v265
  %v4871 = vpop.f32.mrb[0].mxu0
  %v4872 = vadd.f32 0.0, %v4871
  %v4873 = vpop.f32.mrb[0].mxu0
  %4874 = vmatprep.mubr.f32.mxu0 0.0
  %4875 = vmatmul.mubr.f32.gmra.mrb[0].mxu0 %v268
  %v4876 = vpop.f32.mrb[0].mxu0
  %v4877 = vadd.f32 0.0, %v4876
  %v4878 = vpop.f32.mrb[0].mxu0
  %4879 = vmatprep.mubr.f32.mxu0 0.0
  %4880 = vmatmul.mubr.f32.gmra.mrb[0].mxu0 %v271
  %v4881 = vpop.f32.mrb[0].mxu0
  %v4882 = vadd.f32 0.0, %v4881
  %v4883 = vpop.f32.mrb[0].mxu0
  %4884 = vmatprep.mubr.f32.mxu0 0.0
  %4885 = vmatmul.mubr.f32.gmra.mrb[0].mxu0 %v274
  %v4886 = vpop.f32.mrb[0].mxu0
  %v4887 = vadd.f32 0.0, %v4886
  %v4888 = vpop.f32.mrb[0].mxu0
  %4889 = vmatprep.mubr.f32.mxu0 0.0
  %4890 = vmatmul.mubr.f32.gmra.mrb[0].mxu0 %v277
  %v4891 = vpop.f32.mrb[0].mxu0
  %v4892 = vadd.f32 0.0, %v4891
  %v4893 = vpop.f32.mrb[0].mxu0
  %4894 = vmatprep.mubr.f32.mxu0 0.0
  %4895 = vmatmul.mubr.f32.gmra.mrb[0].mxu0 %v280
  %v4896 = vpop.f32.mrb[0].mxu0
  %v4897 = vadd.f32 0.0, %v4896
  %v4898 = vpop.f32.mrb[0].mxu0
  %4899 = vmatprep.mubr.f32.mxu0 0.0
  %4900 = vmatmul.mubr.f32.gmra.mrb[0].mxu0 %v283
  %v4901 = vpop.f32.mrb[0].mxu0
  %v4902 = vadd.f32 0.0, %v4901
  %v4903 = vpop.f32.mrb[0].mxu0
  %4904 = vmatprep.mubr.f32.mxu0 0.0
  %4905 = vmatmul.mubr.f32.gmra.mrb[0].mxu0 %v286
  %v4906 = vpop.f32.mrb[0].mxu0
  %v4907 = vadd.f32 0.0, %v4906
  %v4908 = vpop.f32.mrb[0].mxu0
  %4909 = vmatprep.mubr.f32.mxu0 0.0
  %4910 = vmatmul.mubr.f32.gmra.mrb[0].mxu0 %v289
  %v4911 = vpop.f32.mrb[0].mxu0
  %v4912 = vadd.f32 0.0, %v4911
  %v4913 = vpop.f32.mrb[0].mxu0
  %4914 = vmatprep.mubr.f32.mxu0 0.0
  %4915 = vmatmul.mubr.f32.gmra.mrb[0].mxu0 %v292
  %v4916 = vpop.f32.mrb[0].mxu0
  %v4917 = vadd.f32 0.0, %v4916
  %v4918 = vpop.f32.mrb[0].mxu0
  %4919 = vmatprep.mubr.f32.mxu0 0.0
  %4920 = vmatmul.mubr.f32.gmra.mrb[0].mxu0 %v295
  %v4921 = vpop.f32.mrb[0].mxu0
  %v4922 = vadd.f32 0.0, %v4921
  %v4923 = vpop.f32.mrb[0].mxu0
  %4924 = vmatprep.mubr.f32.mxu0 0.0
  %4925 = vmatmul.mubr.f32.gmra.mrb[0].mxu0 %v298
  %v4926 = vpop.f32.mrb[0].mxu0
  %v4927 = vadd.f32 0.0, %v4926
  %v4928 = vpop.f32.mrb[0].mxu0
  %4929 = vdwg.mxu0
  %4946 = vrot.lane.b32.xlu0 %v4852, 12
  %v4947 = vpop.permute.xlu0 %4946
  %4948 = vrot.lane.b32.xlu0 %v4857, 12
  %v4949 = vpop.permute.xlu0 %4948
  %4950 = vrot.lane.b32.xlu0 %v4862, 12
  %v4951 = vpop.permute.xlu0 %4950
  %4952 = vrot.lane.b32.xlu0 %v4867, 12
  %v4953 = vpop.permute.xlu0 %4952
  %4954 = vrot.lane.b32.xlu0 %v4872, 12
  %v4955 = vpop.permute.xlu0 %4954
  %4956 = vrot.lane.b32.xlu0 %v4877, 12
  %v4957 = vpop.permute.xlu0 %4956
  %4958 = vrot.lane.b32.xlu0 %v4882, 12
  %v4959 = vpop.permute.xlu0 %4958
  %4960 = vrot.lane.b32.xlu0 %v4887, 12
  %v4961 = vpop.permute.xlu0 %4960
  %4962 = vrot.lane.b32.xlu0 %v4892, 12
  %v4963 = vpop.permute.xlu0 %4962
  %4964 = vrot.lane.b32.xlu0 %v4897, 12
  %v4965 = vpop.permute.xlu0 %4964
  %4966 = vrot.lane.b32.xlu0 %v4902, 12
  %v4967 = vpop.permute.xlu0 %4966
  %4968 = vrot.lane.b32.xlu0 %v4907, 12
  %v4969 = vpop.permute.xlu0 %4968
  %4970 = vrot.lane.b32.xlu0 %v4912, 12
  %v4971 = vpop.permute.xlu0 %4970
  %4972 = vrot.lane.b32.xlu0 %v4917, 12
  %v4973 = vpop.permute.xlu0 %4972
  %4974 = vrot.lane.b32.xlu0 %v4922, 12
  %v4975 = vpop.permute.xlu0 %4974
  %4976 = vrot.lane.b32.xlu0 %v4927, 12
  %v4977 = vpop.permute.xlu0 %4976
  %v4994 = vadd.f32 %v157, %v4947
  %v4995 = vadd.f32 %v162, %v4949
  %v4996 = vadd.f32 %v167, %v4951
  %v4997 = vadd.f32 %v172, %v4953
  %v4998 = vadd.f32 %v177, %v4955
  %v4999 = vadd.f32 %v182, %v4957
  %v5000 = vadd.f32 %v187, %v4959
  %v5001 = vadd.f32 %v192, %v4961
  %v5002 = vadd.f32 %v197, %v4963
  %v5003 = vadd.f32 %v202, %v4965
  %v5004 = vadd.f32 %v207, %v4967
  %v5005 = vadd.f32 %v212, %v4969
  %v5006 = vadd.f32 %v217, %v4971
  %v5007 = vadd.f32 %v222, %v4973
  %v5008 = vadd.f32 %v227, %v4975
  %v5009 = vadd.f32 %v232, %v4977
  %v5010 = vmul.f32 %v4994, 0.5
  %v5011 = vmul.f32 %v4995, 0.5
  %v5012 = vmul.f32 %v4996, 0.5
  %v5013 = vmul.f32 %v4997, 0.5
  %v5014 = vmul.f32 %v4998, 0.5
  %v5015 = vmul.f32 %v4999, 0.5
  %v5016 = vmul.f32 %v5000, 0.5
  %v5017 = vmul.f32 %v5001, 0.5
  %v5018 = vmul.f32 %v5002, 0.5
  %v5019 = vmul.f32 %v5003, 0.5
  %v5020 = vmul.f32 %v5004, 0.5
  %v5021 = vmul.f32 %v5005, 0.5
  %v5022 = vtanh.pop %v5010
  %v5023 = vtanh.pop %v5011
  %v5024 = vtanh.pop %v5012
  %v5025 = vtanh.pop %v5013
  %v5026 = vtanh.pop %v5014
  %v5027 = vtanh.pop %v5015
  %v5028 = vtanh.pop %v5016
  %v5029 = vtanh.pop %v5017
  %v5030 = vtanh.pop %v5018
  %v5031 = vtanh.pop %v5019
  %v5032 = vtanh.pop %v5020
  %v5033 = vtanh.pop %v5021
  %v5034 = vmul.f32 %v5022, 0.5
  %v5035 = vmul.f32 %v5023, 0.5
  %v5036 = vmul.f32 %v5024, 0.5
  %v5037 = vmul.f32 %v5025, 0.5
  %v5038 = vmul.f32 %v5026, 0.5
  %v5039 = vmul.f32 %v5027, 0.5
  %v5040 = vmul.f32 %v5028, 0.5
  %v5041 = vmul.f32 %v5029, 0.5
  %v5042 = vmul.f32 %v5030, 0.5
  %v5043 = vmul.f32 %v5031, 0.5
  %v5044 = vmul.f32 %v5032, 0.5
  %v5045 = vmul.f32 %v5033, 0.5
  %v5046 = vadd.f32 %v5034, 0.5
  %v5047 = vadd.f32 %v5035, 0.5
  %v5048 = vadd.f32 %v5036, 0.5
  %v5049 = vadd.f32 %v5037, 0.5
  %v5050 = vadd.f32 %v5038, 0.5
  %v5051 = vadd.f32 %v5039, 0.5
  %v5052 = vadd.f32 %v5040, 0.5
  %v5053 = vadd.f32 %v5041, 0.5
  %v5054 = vadd.f32 %v5042, 0.5
  %v5055 = vadd.f32 %v5043, 0.5
  %v5056 = vadd.f32 %v5044, 0.5
  %v5057 = vadd.f32 %v5045, 0.5
  %v5058 = vtanh.pop %v5006
  %v5059 = vtanh.pop %v5007
  %v5060 = vtanh.pop %v5008
  %v5061 = vtanh.pop %v5009
  %5066 = vrot.lane.b32.xlu0 %v4336, 2
  %v5067 = vpop.permute.xlu0 %5066
  %5068 = vrot.lane.b32.xlu0 %v4337, 2
  %v5069 = vpop.permute.xlu0 %5068
  %5070 = vrot.lane.b32.xlu0 %v4338, 2
  %v5071 = vpop.permute.xlu0 %5070
  %5072 = vrot.lane.b32.xlu0 %v4339, 2
  %v5073 = vpop.permute.xlu0 %5072
  %v5078 = vmul.f32 %v5050, %v5067
  %v5079 = vmul.f32 %v5051, %v5069
  %v5080 = vmul.f32 %v5052, %v5071
  %v5081 = vmul.f32 %v5053, %v5073
  %v5082 = vmul.f32 %v5046, %v5058
  %v5083 = vmul.f32 %v5047, %v5059
  %v5084 = vmul.f32 %v5048, %v5060
  %v5085 = vmul.f32 %v5049, %v5061
  %v5086 = vadd.f32 %v5078, %v5082
  %v5087 = vadd.f32 %v5079, %v5083
  %v5088 = vadd.f32 %v5080, %v5084
  %v5089 = vadd.f32 %v5081, %v5085
  %v5090 = vtanh.pop %v5086
  %v5091 = vtanh.pop %v5087
  %v5092 = vtanh.pop %v5088
  %v5093 = vtanh.pop %v5089
  %v5094 = vmul.f32 %v5054, %v5090
  %v5095 = vmul.f32 %v5055, %v5091
  %v5096 = vmul.f32 %v5056, %v5092
  %v5097 = vmul.f32 %v5057, %v5093
  %5106 = vrot.lane.b32.xlu0 %v4777, 12
  %v5107 = vpop.permute.xlu0 %5106
  %5108 = vrot.lane.b32.xlu0 %v4778, 12
  %v5109 = vpop.permute.xlu0 %5108
  %5110 = vrot.lane.b32.xlu0 %v4779, 12
  %v5111 = vpop.permute.xlu0 %5110
  %5112 = vrot.lane.b32.xlu0 %v4780, 12
  %v5113 = vpop.permute.xlu0 %5112
  %5114 = vrot.lane.b32.xlu0 %v4781, 12
  %v5115 = vpop.permute.xlu0 %5114
  %5116 = vrot.lane.b32.xlu0 %v4782, 12
  %v5117 = vpop.permute.xlu0 %5116
  %5118 = vrot.lane.b32.xlu0 %v4783, 12
  %v5119 = vpop.permute.xlu0 %5118
  %5120 = vrot.lane.b32.xlu0 %v4784, 12
  %v5121 = vpop.permute.xlu0 %5120
  %5126 = vrot.lane.b32.xlu0 %v5094, 116
  %v5127 = vpop.permute.xlu0 %5126
  %5128 = vrot.lane.b32.xlu0 %v5095, 116
  %v5129 = vpop.permute.xlu0 %5128
  %5130 = vrot.lane.b32.xlu0 %v5096, 116
  %v5131 = vpop.permute.xlu0 %5130
  %5132 = vrot.lane.b32.xlu0 %v5097, 116
  %v5133 = vpop.permute.xlu0 %5132
  %5134 = vrot.lane.b32.xlu0 %v5107, 116
  %v5135 = vpop.permute.xlu0 %5134
  %5136 = vrot.lane.b32.xlu0 %v5109, 116
  %v5137 = vpop.permute.xlu0 %5136
  %5138 = vrot.lane.b32.xlu0 %v5111, 116
  %v5139 = vpop.permute.xlu0 %5138
  %5140 = vrot.lane.b32.xlu0 %v5113, 116
  %v5141 = vpop.permute.xlu0 %5140
  %5142 = vrot.lane.b32.xlu0 %v5115, 116
  %v5143 = vpop.permute.xlu0 %5142
  %5144 = vrot.lane.b32.xlu0 %v5117, 116
  %v5145 = vpop.permute.xlu0 %5144
  %5146 = vrot.lane.b32.xlu0 %v5119, 116
  %v5147 = vpop.permute.xlu0 %5146
  %5148 = vrot.lane.b32.xlu0 %v5121, 116
  %v5149 = vpop.permute.xlu0 %5148
  %5150 = vrot.lane.b32.xlu0 1.0, 116
  %v5151 = vpop.permute.xlu0 %5150
  %v5164 = vsel %vm662, %v5151, 0
  %5166 = vmatprep.subr.mxu0 0.0
  %5167 = vmatpush1.msra.mxu0 %v5127
  %5168 = vmatprep.subr.mxu0 0.0
  %5169 = vmatpush1.msra.mxu0 %v5129
  %5170 = vmatprep.subr.mxu0 0.0
  %5171 = vmatpush1.msra.mxu0 %v5131
  %5172 = vmatprep.subr.mxu0 0.0
  %5173 = vmatpush1.msra.mxu0 %v5133
  %5174 = vmatprep.subr.mxu0 0.0
  %5175 = vmatpush1.msra.mxu0 %v5135
  %5176 = vmatprep.subr.mxu0 0.0
  %5177 = vmatpush1.msra.mxu0 %v5137
  %5178 = vmatprep.subr.mxu0 0.0
  %5179 = vmatpush1.msra.mxu0 %v5139
  %5180 = vmatprep.subr.mxu0 0.0
  %5181 = vmatpush1.msra.mxu0 %v5141
  %5182 = vmatprep.subr.mxu0 0.0
  %5183 = vmatpush1.msra.mxu0 %v5143
  %5184 = vmatprep.subr.mxu0 0.0
  %5185 = vmatpush1.msra.mxu0 %v5145
  %5186 = vmatprep.subr.mxu0 0.0
  %5187 = vmatpush1.msra.mxu0 %v5147
  %5188 = vmatprep.subr.mxu0 0.0
  %5189 = vmatpush1.msra.mxu0 %v5149
  %5190 = vmatprep.subr.mxu0 0.0
  %5191 = vmatpush1.msra.mxu0 %v5164
  %5192 = vmatprep.subr.mxu0 0.0
  %5193 = vmatpush1.msra.mxu0 0.0
  %5194 = vmatprep.subr.mxu0 0.0
  %5195 = vmatpush1.msra.mxu0 0.0
  %5196 = vmatprep.subr.mxu0 0.0
  %5197 = vmatpush1.msra.mxu0 0.0
  %5198 = vmatprep.subr.mxu0 0.0
  %5199 = vmatpush1.msra.mxu0 0.0
  %5200 = vmatprep.subr.mxu0 0.0
  %5201 = vmatpush1.msra.mxu0 0.0
  %5202 = vmatprep.subr.mxu0 0.0
  %5203 = vmatpush1.msra.mxu0 0.0
  %5204 = vmatprep.subr.mxu0 0.0
  %5205 = vmatpush1.msra.mxu0 0.0
  %5206 = vmatprep.subr.mxu0 0.0
  %5207 = vmatpush1.msra.mxu0 0.0
  %5208 = vmatprep.subr.mxu0 0.0
  %5209 = vmatpush1.msra.mxu0 0.0
  %5210 = vmatprep.subr.mxu0 0.0
  %5211 = vmatpush1.msra.mxu0 0.0
  %5212 = vmatprep.subr.mxu0 0.0
  %5213 = vmatpush1.msra.mxu0 0.0
  %5214 = vmatprep.subr.mxu0 0.0
  %5215 = vmatpush1.msra.mxu0 0.0
  %5216 = vmatprep.subr.mxu0 0.0
  %5217 = vmatpush1.msra.mxu0 0.0
  %5218 = vmatprep.subr.mxu0 0.0
  %5219 = vmatpush1.msra.mxu0 0.0
  %5220 = vmatprep.subr.mxu0 0.0
  %5221 = vmatpush1.msra.mxu0 0.0
  %5222 = vmatprep.subr.mxu0 0.0
  %5223 = vmatpush1.msra.mxu0 0.0
  %5224 = vmatprep.subr.mxu0 0.0
  %5225 = vmatpush1.msra.mxu0 0.0
  %5226 = vmatprep.subr.mxu0 0.0
  %5227 = vmatpush1.msra.mxu0 0.0
  %5228 = vmatprep.subr.mxu0 0.0
  %5229 = vmatpush1.msra.mxu0 0.0
  %5230 = vmatprep.mubr.f32.mxu0 0.0
  %5231 = vmatmul.mubr.f32.gmra.mrb[0].mxu0 %v567
  %v5232 = vpop.f32.mrb[0].mxu0
  %v5233 = vadd.f32 0.0, %v5232
  %v5234 = vpop.f32.mrb[0].mxu0
  %5235 = vmatprep.mubr.f32.mxu0 0.0
  %5236 = vmatmul.mubr.f32.gmra.mrb[0].mxu0 %v570
  %v5237 = vpop.f32.mrb[0].mxu0
  %v5238 = vadd.f32 0.0, %v5237
  %v5239 = vpop.f32.mrb[0].mxu0
  %5240 = vmatprep.mubr.f32.mxu0 0.0
  %5241 = vmatmul.mubr.f32.gmra.mrb[0].mxu0 %v573
  %v5242 = vpop.f32.mrb[0].mxu0
  %v5243 = vadd.f32 0.0, %v5242
  %v5244 = vpop.f32.mrb[0].mxu0
  %5245 = vmatprep.mubr.f32.mxu0 0.0
  %5246 = vmatmul.mubr.f32.gmra.mrb[0].mxu0 %v576
  %v5247 = vpop.f32.mrb[0].mxu0
  %v5248 = vadd.f32 0.0, %v5247
  %v5249 = vpop.f32.mrb[0].mxu0
  %5250 = vmatprep.mubr.f32.mxu0 0.0
  %5251 = vmatmul.mubr.f32.gmra.mrb[0].mxu0 %v579
  %v5252 = vpop.f32.mrb[0].mxu0
  %v5253 = vadd.f32 0.0, %v5252
  %v5254 = vpop.f32.mrb[0].mxu0
  %5255 = vmatprep.mubr.f32.mxu0 0.0
  %5256 = vmatmul.mubr.f32.gmra.mrb[0].mxu0 %v582
  %v5257 = vpop.f32.mrb[0].mxu0
  %v5258 = vadd.f32 0.0, %v5257
  %v5259 = vpop.f32.mrb[0].mxu0
  %5260 = vmatprep.mubr.f32.mxu0 0.0
  %5261 = vmatmul.mubr.f32.gmra.mrb[0].mxu0 %v585
  %v5262 = vpop.f32.mrb[0].mxu0
  %v5263 = vadd.f32 0.0, %v5262
  %v5264 = vpop.f32.mrb[0].mxu0
  %5265 = vmatprep.mubr.f32.mxu0 0.0
  %5266 = vmatmul.mubr.f32.gmra.mrb[0].mxu0 %v588
  %v5267 = vpop.f32.mrb[0].mxu0
  %v5268 = vadd.f32 0.0, %v5267
  %v5269 = vpop.f32.mrb[0].mxu0
  %5270 = vmatprep.mubr.f32.mxu0 0.0
  %5271 = vmatmul.mubr.f32.gmra.mrb[0].mxu0 %v591
  %v5272 = vpop.f32.mrb[0].mxu0
  %v5273 = vadd.f32 0.0, %v5272
  %v5274 = vpop.f32.mrb[0].mxu0
  %5275 = vmatprep.mubr.f32.mxu0 0.0
  %5276 = vmatmul.mubr.f32.gmra.mrb[0].mxu0 %v594
  %v5277 = vpop.f32.mrb[0].mxu0
  %v5278 = vadd.f32 0.0, %v5277
  %v5279 = vpop.f32.mrb[0].mxu0
  %5280 = vmatprep.mubr.f32.mxu0 0.0
  %5281 = vmatmul.mubr.f32.gmra.mrb[0].mxu0 %v597
  %v5282 = vpop.f32.mrb[0].mxu0
  %v5283 = vadd.f32 0.0, %v5282
  %v5284 = vpop.f32.mrb[0].mxu0
  %5285 = vmatprep.mubr.f32.mxu0 0.0
  %5286 = vmatmul.mubr.f32.gmra.mrb[0].mxu0 %v600
  %v5287 = vpop.f32.mrb[0].mxu0
  %v5288 = vadd.f32 0.0, %v5287
  %v5289 = vpop.f32.mrb[0].mxu0
  %5290 = vmatprep.mubr.f32.mxu0 0.0
  %5291 = vmatmul.mubr.f32.gmra.mrb[0].mxu0 %v603
  %v5292 = vpop.f32.mrb[0].mxu0
  %v5293 = vadd.f32 0.0, %v5292
  %v5294 = vpop.f32.mrb[0].mxu0
  %5295 = vmatprep.mubr.f32.mxu0 0.0
  %5296 = vmatmul.mubr.f32.gmra.mrb[0].mxu0 %v606
  %v5297 = vpop.f32.mrb[0].mxu0
  %v5298 = vadd.f32 0.0, %v5297
  %v5299 = vpop.f32.mrb[0].mxu0
  %5300 = vmatprep.mubr.f32.mxu0 0.0
  %5301 = vmatmul.mubr.f32.gmra.mrb[0].mxu0 %v609
  %v5302 = vpop.f32.mrb[0].mxu0
  %v5303 = vadd.f32 0.0, %v5302
  %v5304 = vpop.f32.mrb[0].mxu0
  %5305 = vmatprep.mubr.f32.mxu0 0.0
  %5306 = vmatmul.mubr.f32.gmra.mrb[0].mxu0 %v612
  %v5307 = vpop.f32.mrb[0].mxu0
  %v5308 = vadd.f32 0.0, %v5307
  %v5309 = vpop.f32.mrb[0].mxu0
  %5310 = vmatprep.mubr.f32.mxu0 0.0
  %5311 = vmatmul.mubr.f32.gmra.mrb[0].mxu0 %v615
  %v5312 = vpop.f32.mrb[0].mxu0
  %v5313 = vadd.f32 0.0, %v5312
  %v5314 = vpop.f32.mrb[0].mxu0
  %5315 = vmatprep.mubr.f32.mxu0 0.0
  %5316 = vmatmul.mubr.f32.gmra.mrb[0].mxu0 %v618
  %v5317 = vpop.f32.mrb[0].mxu0
  %v5318 = vadd.f32 0.0, %v5317
  %v5319 = vpop.f32.mrb[0].mxu0
  %5320 = vmatprep.mubr.f32.mxu0 0.0
  %5321 = vmatmul.mubr.f32.gmra.mrb[0].mxu0 %v621
  %v5322 = vpop.f32.mrb[0].mxu0
  %v5323 = vadd.f32 0.0, %v5322
  %v5324 = vpop.f32.mrb[0].mxu0
  %5325 = vmatprep.mubr.f32.mxu0 0.0
  %5326 = vmatmul.mubr.f32.gmra.mrb[0].mxu0 %v624
  %v5327 = vpop.f32.mrb[0].mxu0
  %v5328 = vadd.f32 0.0, %v5327
  %v5329 = vpop.f32.mrb[0].mxu0
  %5330 = vmatprep.mubr.f32.mxu0 0.0
  %5331 = vmatmul.mubr.f32.gmra.mrb[0].mxu0 %v627
  %v5332 = vpop.f32.mrb[0].mxu0
  %v5333 = vadd.f32 0.0, %v5332
  %v5334 = vpop.f32.mrb[0].mxu0
  %5335 = vmatprep.mubr.f32.mxu0 0.0
  %5336 = vmatmul.mubr.f32.gmra.mrb[0].mxu0 %v630
  %v5337 = vpop.f32.mrb[0].mxu0
  %v5338 = vadd.f32 0.0, %v5337
  %v5339 = vpop.f32.mrb[0].mxu0
  %5340 = vmatprep.mubr.f32.mxu0 0.0
  %5341 = vmatmul.mubr.f32.gmra.mrb[0].mxu0 %v633
  %v5342 = vpop.f32.mrb[0].mxu0
  %v5343 = vadd.f32 0.0, %v5342
  %v5344 = vpop.f32.mrb[0].mxu0
  %5345 = vmatprep.mubr.f32.mxu0 0.0
  %5346 = vmatmul.mubr.f32.gmra.mrb[0].mxu0 %v636
  %v5347 = vpop.f32.mrb[0].mxu0
  %v5348 = vadd.f32 0.0, %v5347
  %v5349 = vpop.f32.mrb[0].mxu0
  %5350 = vmatprep.mubr.f32.mxu0 0.0
  %5351 = vmatmul.mubr.f32.gmra.mrb[0].mxu0 %v639
  %v5352 = vpop.f32.mrb[0].mxu0
  %v5353 = vadd.f32 0.0, %v5352
  %v5354 = vpop.f32.mrb[0].mxu0
  %5355 = vmatprep.mubr.f32.mxu0 0.0
  %5356 = vmatmul.mubr.f32.gmra.mrb[0].mxu0 %v642
  %v5357 = vpop.f32.mrb[0].mxu0
  %v5358 = vadd.f32 0.0, %v5357
  %v5359 = vpop.f32.mrb[0].mxu0
  %5360 = vmatprep.mubr.f32.mxu0 0.0
  %5361 = vmatmul.mubr.f32.gmra.mrb[0].mxu0 %v645
  %v5362 = vpop.f32.mrb[0].mxu0
  %v5363 = vadd.f32 0.0, %v5362
  %v5364 = vpop.f32.mrb[0].mxu0
  %5365 = vmatprep.mubr.f32.mxu0 0.0
  %5366 = vmatmul.mubr.f32.gmra.mrb[0].mxu0 %v648
  %v5367 = vpop.f32.mrb[0].mxu0
  %v5368 = vadd.f32 0.0, %v5367
  %v5369 = vpop.f32.mrb[0].mxu0
  %5370 = vmatprep.mubr.f32.mxu0 0.0
  %5371 = vmatmul.mubr.f32.gmra.mrb[0].mxu0 %v651
  %v5372 = vpop.f32.mrb[0].mxu0
  %v5373 = vadd.f32 0.0, %v5372
  %v5374 = vpop.f32.mrb[0].mxu0
  %5375 = vmatprep.mubr.f32.mxu0 0.0
  %5376 = vmatmul.mubr.f32.gmra.mrb[0].mxu0 %v654
  %v5377 = vpop.f32.mrb[0].mxu0
  %v5378 = vadd.f32 0.0, %v5377
  %v5379 = vpop.f32.mrb[0].mxu0
  %5380 = vmatprep.mubr.f32.mxu0 0.0
  %5381 = vmatmul.mubr.f32.gmra.mrb[0].mxu0 %v657
  %v5382 = vpop.f32.mrb[0].mxu0
  %v5383 = vadd.f32 0.0, %v5382
  %v5384 = vpop.f32.mrb[0].mxu0
  %5385 = vmatprep.mubr.f32.mxu0 0.0
  %5386 = vmatmul.mubr.f32.gmra.mrb[0].mxu0 %v660
  %v5387 = vpop.f32.mrb[0].mxu0
  %v5388 = vadd.f32 0.0, %v5387
  %v5389 = vpop.f32.mrb[0].mxu0
  %5390 = vdwg.mxu0
  %v5391 = vmul.f32 %v5233, 0.5
  %v5392 = vmul.f32 %v5238, 0.5
  %v5393 = vmul.f32 %v5243, 0.5
  %v5394 = vmul.f32 %v5248, 0.5
  %v5395 = vmul.f32 %v5253, 0.5
  %v5396 = vmul.f32 %v5258, 0.5
  %v5397 = vmul.f32 %v5263, 0.5
  %v5398 = vmul.f32 %v5268, 0.5
  %v5399 = vmul.f32 %v5273, 0.5
  %v5400 = vmul.f32 %v5278, 0.5
  %v5401 = vmul.f32 %v5283, 0.5
  %v5402 = vmul.f32 %v5288, 0.5
  %v5403 = vmul.f32 %v5293, 0.5
  %v5404 = vmul.f32 %v5298, 0.5
  %v5405 = vmul.f32 %v5303, 0.5
  %v5406 = vmul.f32 %v5308, 0.5
  %v5407 = vmul.f32 %v5313, 0.5
  %v5408 = vmul.f32 %v5318, 0.5
  %v5409 = vmul.f32 %v5323, 0.5
  %v5410 = vmul.f32 %v5328, 0.5
  %v5411 = vmul.f32 %v5333, 0.5
  %v5412 = vmul.f32 %v5338, 0.5
  %v5413 = vmul.f32 %v5343, 0.5
  %v5414 = vmul.f32 %v5348, 0.5
  %v5415 = vtanh.pop %v5391
  %v5416 = vtanh.pop %v5392
  %v5417 = vtanh.pop %v5393
  %v5418 = vtanh.pop %v5394
  %v5419 = vtanh.pop %v5395
  %v5420 = vtanh.pop %v5396
  %v5421 = vtanh.pop %v5397
  %v5422 = vtanh.pop %v5398
  %v5423 = vtanh.pop %v5399
  %v5424 = vtanh.pop %v5400
  %v5425 = vtanh.pop %v5401
  %v5426 = vtanh.pop %v5402
  %v5427 = vtanh.pop %v5403
  %v5428 = vtanh.pop %v5404
  %v5429 = vtanh.pop %v5405
  %v5430 = vtanh.pop %v5406
  %v5431 = vtanh.pop %v5407
  %v5432 = vtanh.pop %v5408
  %v5433 = vtanh.pop %v5409
  %v5434 = vtanh.pop %v5410
  %v5435 = vtanh.pop %v5411
  %v5436 = vtanh.pop %v5412
  %v5437 = vtanh.pop %v5413
  %v5438 = vtanh.pop %v5414
  %v5439 = vmul.f32 %v5415, 0.5
  %v5440 = vmul.f32 %v5416, 0.5
  %v5441 = vmul.f32 %v5417, 0.5
  %v5442 = vmul.f32 %v5418, 0.5
  %v5443 = vmul.f32 %v5419, 0.5
  %v5444 = vmul.f32 %v5420, 0.5
  %v5445 = vmul.f32 %v5421, 0.5
  %v5446 = vmul.f32 %v5422, 0.5
  %v5447 = vmul.f32 %v5423, 0.5
  %v5448 = vmul.f32 %v5424, 0.5
  %v5449 = vmul.f32 %v5425, 0.5
  %v5450 = vmul.f32 %v5426, 0.5
  %v5451 = vmul.f32 %v5427, 0.5
  %v5452 = vmul.f32 %v5428, 0.5
  %v5453 = vmul.f32 %v5429, 0.5
  %v5454 = vmul.f32 %v5430, 0.5
  %v5455 = vmul.f32 %v5431, 0.5
  %v5456 = vmul.f32 %v5432, 0.5
  %v5457 = vmul.f32 %v5433, 0.5
  %v5458 = vmul.f32 %v5434, 0.5
  %v5459 = vmul.f32 %v5435, 0.5
  %v5460 = vmul.f32 %v5436, 0.5
  %v5461 = vmul.f32 %v5437, 0.5
  %v5462 = vmul.f32 %v5438, 0.5
  %v5463 = vadd.f32 %v5439, 0.5
  %v5464 = vadd.f32 %v5440, 0.5
  %v5465 = vadd.f32 %v5441, 0.5
  %v5466 = vadd.f32 %v5442, 0.5
  %v5467 = vadd.f32 %v5443, 0.5
  %v5468 = vadd.f32 %v5444, 0.5
  %v5469 = vadd.f32 %v5445, 0.5
  %v5470 = vadd.f32 %v5446, 0.5
  %v5471 = vadd.f32 %v5447, 0.5
  %v5472 = vadd.f32 %v5448, 0.5
  %v5473 = vadd.f32 %v5449, 0.5
  %v5474 = vadd.f32 %v5450, 0.5
  %v5475 = vadd.f32 %v5451, 0.5
  %v5476 = vadd.f32 %v5452, 0.5
  %v5477 = vadd.f32 %v5453, 0.5
  %v5478 = vadd.f32 %v5454, 0.5
  %v5479 = vadd.f32 %v5455, 0.5
  %v5480 = vadd.f32 %v5456, 0.5
  %v5481 = vadd.f32 %v5457, 0.5
  %v5482 = vadd.f32 %v5458, 0.5
  %v5483 = vadd.f32 %v5459, 0.5
  %v5484 = vadd.f32 %v5460, 0.5
  %v5485 = vadd.f32 %v5461, 0.5
  %v5486 = vadd.f32 %v5462, 0.5
  %v5487 = vtanh.pop %v5353
  %v5488 = vtanh.pop %v5358
  %v5489 = vtanh.pop %v5363
  %v5490 = vtanh.pop %v5368
  %v5491 = vtanh.pop %v5373
  %v5492 = vtanh.pop %v5378
  %v5493 = vtanh.pop %v5383
  %v5494 = vtanh.pop %v5388
  %v5495 = vmul.f32 %v5471, %v4761
  %v5496 = vmul.f32 %v5472, %v4762
  %v5497 = vmul.f32 %v5473, %v4763
  %v5498 = vmul.f32 %v5474, %v4764
  %v5499 = vmul.f32 %v5475, %v4765
  %v5500 = vmul.f32 %v5476, %v4766
  %v5501 = vmul.f32 %v5477, %v4767
  %v5502 = vmul.f32 %v5478, %v4768
  %v5503 = vmul.f32 %v5463, %v5487
  %v5504 = vmul.f32 %v5464, %v5488
  %v5505 = vmul.f32 %v5465, %v5489
  %v5506 = vmul.f32 %v5466, %v5490
  %v5507 = vmul.f32 %v5467, %v5491
  %v5508 = vmul.f32 %v5468, %v5492
  %v5509 = vmul.f32 %v5469, %v5493
  %v5510 = vmul.f32 %v5470, %v5494
  %v5511 = vadd.f32 %v5495, %v5503
  %v5512 = vadd.f32 %v5496, %v5504
  %v5513 = vadd.f32 %v5497, %v5505
  %v5514 = vadd.f32 %v5498, %v5506
  %v5515 = vadd.f32 %v5499, %v5507
  %v5516 = vadd.f32 %v5500, %v5508
  %v5517 = vadd.f32 %v5501, %v5509
  %v5518 = vadd.f32 %v5502, %v5510
  %v5519 = vtanh.pop %v5511
  %v5520 = vtanh.pop %v5512
  %v5521 = vtanh.pop %v5513
  %v5522 = vtanh.pop %v5514
  %v5523 = vtanh.pop %v5515
  %v5524 = vtanh.pop %v5516
  %v5525 = vtanh.pop %v5517
  %v5526 = vtanh.pop %v5518
  %v5527 = vmul.f32 %v5479, %v5519
  %v5528 = vmul.f32 %v5480, %v5520
  %v5529 = vmul.f32 %v5481, %v5521
  %v5530 = vmul.f32 %v5482, %v5522
  %v5531 = vmul.f32 %v5483, %v5523
  %v5532 = vmul.f32 %v5484, %v5524
  %v5533 = vmul.f32 %v5485, %v5525
  %v5534 = vmul.f32 %v5486, %v5526
  %5535 = vmatprep.subr.mxu0 0.0
  %5536 = vmatpush1.msra.mxu0 %v5127
  %5537 = vmatprep.subr.mxu0 0.0
  %5538 = vmatpush1.msra.mxu0 %v5129
  %5539 = vmatprep.subr.mxu0 0.0
  %5540 = vmatpush1.msra.mxu0 %v5131
  %5541 = vmatprep.subr.mxu0 0.0
  %5542 = vmatpush1.msra.mxu0 %v5133
  %5543 = vmatprep.subr.mxu0 0.0
  %5544 = vmatpush1.msra.mxu0 0.0
  %5545 = vmatprep.subr.mxu0 0.0
  %5546 = vmatpush1.msra.mxu0 0.0
  %5547 = vmatprep.subr.mxu0 0.0
  %5548 = vmatpush1.msra.mxu0 0.0
  %5549 = vmatprep.subr.mxu0 0.0
  %5550 = vmatpush1.msra.mxu0 0.0
  %5551 = vmatprep.subr.mxu0 0.0
  %5552 = vmatpush1.msra.mxu0 0.0
  %5553 = vmatprep.subr.mxu0 0.0
  %5554 = vmatpush1.msra.mxu0 0.0
  %5555 = vmatprep.subr.mxu0 0.0
  %5556 = vmatpush1.msra.mxu0 0.0
  %5557 = vmatprep.subr.mxu0 0.0
  %5558 = vmatpush1.msra.mxu0 0.0
  %5559 = vmatprep.subr.mxu0 0.0
  %5560 = vmatpush1.msra.mxu0 0.0
  %5561 = vmatprep.subr.mxu0 0.0
  %5562 = vmatpush1.msra.mxu0 0.0
  %5563 = vmatprep.subr.mxu0 0.0
  %5564 = vmatpush1.msra.mxu0 0.0
  %5565 = vmatprep.subr.mxu0 0.0
  %5566 = vmatpush1.msra.mxu0 0.0
  %5567 = vmatprep.subr.mxu0 0.0
  %5568 = vmatpush1.msra.mxu0 0.0
  %5569 = vmatprep.subr.mxu0 0.0
  %5570 = vmatpush1.msra.mxu0 0.0
  %5571 = vmatprep.subr.mxu0 0.0
  %5572 = vmatpush1.msra.mxu0 0.0
  %5573 = vmatprep.subr.mxu0 0.0
  %5574 = vmatpush1.msra.mxu0 0.0
  %5575 = vmatprep.subr.mxu0 0.0
  %5576 = vmatpush1.msra.mxu0 0.0
  %5577 = vmatprep.subr.mxu0 0.0
  %5578 = vmatpush1.msra.mxu0 0.0
  %5579 = vmatprep.subr.mxu0 0.0
  %5580 = vmatpush1.msra.mxu0 0.0
  %5581 = vmatprep.subr.mxu0 0.0
  %5582 = vmatpush1.msra.mxu0 0.0
  %5583 = vmatprep.subr.mxu0 0.0
  %5584 = vmatpush1.msra.mxu0 0.0
  %5585 = vmatprep.subr.mxu0 0.0
  %5586 = vmatpush1.msra.mxu0 0.0
  %5587 = vmatprep.subr.mxu0 0.0
  %5588 = vmatpush1.msra.mxu0 0.0
  %5589 = vmatprep.subr.mxu0 0.0
  %5590 = vmatpush1.msra.mxu0 0.0
  %5591 = vmatprep.subr.mxu0 0.0
  %5592 = vmatpush1.msra.mxu0 0.0
  %5593 = vmatprep.subr.mxu0 0.0
  %5594 = vmatpush1.msra.mxu0 0.0
  %5595 = vmatprep.subr.mxu0 0.0
  %5596 = vmatpush1.msra.mxu0 0.0
  %5597 = vmatprep.subr.mxu0 0.0
  %5598 = vmatpush1.msra.mxu0 0.0
  %5599 = vmatprep.mubr.f32.mxu0 0.0
  %5600 = vmatmul.mubr.f32.gmra.mrb[0].mxu0 %v253
  %v5601 = vpop.f32.mrb[0].mxu0
  %v5602 = vadd.f32 0.0, %v5601
  %v5603 = vpop.f32.mrb[0].mxu0
  %5604 = vmatprep.mubr.f32.mxu0 0.0
  %5605 = vmatmul.mubr.f32.gmra.mrb[0].mxu0 %v256
  %v5606 = vpop.f32.mrb[0].mxu0
  %v5607 = vadd.f32 0.0, %v5606
  %v5608 = vpop.f32.mrb[0].mxu0
  %5609 = vmatprep.mubr.f32.mxu0 0.0
  %5610 = vmatmul.mubr.f32.gmra.mrb[0].mxu0 %v259
  %v5611 = vpop.f32.mrb[0].mxu0
  %v5612 = vadd.f32 0.0, %v5611
  %v5613 = vpop.f32.mrb[0].mxu0
  %5614 = vmatprep.mubr.f32.mxu0 0.0
  %5615 = vmatmul.mubr.f32.gmra.mrb[0].mxu0 %v262
  %v5616 = vpop.f32.mrb[0].mxu0
  %v5617 = vadd.f32 0.0, %v5616
  %v5618 = vpop.f32.mrb[0].mxu0
  %5619 = vmatprep.mubr.f32.mxu0 0.0
  %5620 = vmatmul.mubr.f32.gmra.mrb[0].mxu0 %v265
  %v5621 = vpop.f32.mrb[0].mxu0
  %v5622 = vadd.f32 0.0, %v5621
  %v5623 = vpop.f32.mrb[0].mxu0
  %5624 = vmatprep.mubr.f32.mxu0 0.0
  %5625 = vmatmul.mubr.f32.gmra.mrb[0].mxu0 %v268
  %v5626 = vpop.f32.mrb[0].mxu0
  %v5627 = vadd.f32 0.0, %v5626
  %v5628 = vpop.f32.mrb[0].mxu0
  %5629 = vmatprep.mubr.f32.mxu0 0.0
  %5630 = vmatmul.mubr.f32.gmra.mrb[0].mxu0 %v271
  %v5631 = vpop.f32.mrb[0].mxu0
  %v5632 = vadd.f32 0.0, %v5631
  %v5633 = vpop.f32.mrb[0].mxu0
  %5634 = vmatprep.mubr.f32.mxu0 0.0
  %5635 = vmatmul.mubr.f32.gmra.mrb[0].mxu0 %v274
  %v5636 = vpop.f32.mrb[0].mxu0
  %v5637 = vadd.f32 0.0, %v5636
  %v5638 = vpop.f32.mrb[0].mxu0
  %5639 = vmatprep.mubr.f32.mxu0 0.0
  %5640 = vmatmul.mubr.f32.gmra.mrb[0].mxu0 %v277
  %v5641 = vpop.f32.mrb[0].mxu0
  %v5642 = vadd.f32 0.0, %v5641
  %v5643 = vpop.f32.mrb[0].mxu0
  %5644 = vmatprep.mubr.f32.mxu0 0.0
  %5645 = vmatmul.mubr.f32.gmra.mrb[0].mxu0 %v280
  %v5646 = vpop.f32.mrb[0].mxu0
  %v5647 = vadd.f32 0.0, %v5646
  %v5648 = vpop.f32.mrb[0].mxu0
  %5649 = vmatprep.mubr.f32.mxu0 0.0
  %5650 = vmatmul.mubr.f32.gmra.mrb[0].mxu0 %v283
  %v5651 = vpop.f32.mrb[0].mxu0
  %v5652 = vadd.f32 0.0, %v5651
  %v5653 = vpop.f32.mrb[0].mxu0
  %5654 = vmatprep.mubr.f32.mxu0 0.0
  %5655 = vmatmul.mubr.f32.gmra.mrb[0].mxu0 %v286
  %v5656 = vpop.f32.mrb[0].mxu0
  %v5657 = vadd.f32 0.0, %v5656
  %v5658 = vpop.f32.mrb[0].mxu0
  %5659 = vmatprep.mubr.f32.mxu0 0.0
  %5660 = vmatmul.mubr.f32.gmra.mrb[0].mxu0 %v289
  %v5661 = vpop.f32.mrb[0].mxu0
  %v5662 = vadd.f32 0.0, %v5661
  %v5663 = vpop.f32.mrb[0].mxu0
  %5664 = vmatprep.mubr.f32.mxu0 0.0
  %5665 = vmatmul.mubr.f32.gmra.mrb[0].mxu0 %v292
  %v5666 = vpop.f32.mrb[0].mxu0
  %v5667 = vadd.f32 0.0, %v5666
  %v5668 = vpop.f32.mrb[0].mxu0
  %5669 = vmatprep.mubr.f32.mxu0 0.0
  %5670 = vmatmul.mubr.f32.gmra.mrb[0].mxu0 %v295
  %v5671 = vpop.f32.mrb[0].mxu0
  %v5672 = vadd.f32 0.0, %v5671
  %v5673 = vpop.f32.mrb[0].mxu0
  %5674 = vmatprep.mubr.f32.mxu0 0.0
  %5675 = vmatmul.mubr.f32.gmra.mrb[0].mxu0 %v298
  %v5676 = vpop.f32.mrb[0].mxu0
  %v5677 = vadd.f32 0.0, %v5676
  %v5678 = vpop.f32.mrb[0].mxu0
  %5679 = vdwg.mxu0
  %5696 = vrot.lane.b32.xlu0 %v5602, 14
  %v5697 = vpop.permute.xlu0 %5696
  %5698 = vrot.lane.b32.xlu0 %v5607, 14
  %v5699 = vpop.permute.xlu0 %5698
  %5700 = vrot.lane.b32.xlu0 %v5612, 14
  %v5701 = vpop.permute.xlu0 %5700
  %5702 = vrot.lane.b32.xlu0 %v5617, 14
  %v5703 = vpop.permute.xlu0 %5702
  %5704 = vrot.lane.b32.xlu0 %v5622, 14
  %v5705 = vpop.permute.xlu0 %5704
  %5706 = vrot.lane.b32.xlu0 %v5627, 14
  %v5707 = vpop.permute.xlu0 %5706
  %5708 = vrot.lane.b32.xlu0 %v5632, 14
  %v5709 = vpop.permute.xlu0 %5708
  %5710 = vrot.lane.b32.xlu0 %v5637, 14
  %v5711 = vpop.permute.xlu0 %5710
  %5712 = vrot.lane.b32.xlu0 %v5642, 14
  %v5713 = vpop.permute.xlu0 %5712
  %5714 = vrot.lane.b32.xlu0 %v5647, 14
  %v5715 = vpop.permute.xlu0 %5714
  %5716 = vrot.lane.b32.xlu0 %v5652, 14
  %v5717 = vpop.permute.xlu0 %5716
  %5718 = vrot.lane.b32.xlu0 %v5657, 14
  %v5719 = vpop.permute.xlu0 %5718
  %5720 = vrot.lane.b32.xlu0 %v5662, 14
  %v5721 = vpop.permute.xlu0 %5720
  %5722 = vrot.lane.b32.xlu0 %v5667, 14
  %v5723 = vpop.permute.xlu0 %5722
  %5724 = vrot.lane.b32.xlu0 %v5672, 14
  %v5725 = vpop.permute.xlu0 %5724
  %5726 = vrot.lane.b32.xlu0 %v5677, 14
  %v5727 = vpop.permute.xlu0 %5726
  %v5744 = vadd.f32 %v157, %v5697
  %v5745 = vadd.f32 %v162, %v5699
  %v5746 = vadd.f32 %v167, %v5701
  %v5747 = vadd.f32 %v172, %v5703
  %v5748 = vadd.f32 %v177, %v5705
  %v5749 = vadd.f32 %v182, %v5707
  %v5750 = vadd.f32 %v187, %v5709
  %v5751 = vadd.f32 %v192, %v5711
  %v5752 = vadd.f32 %v197, %v5713
  %v5753 = vadd.f32 %v202, %v5715
  %v5754 = vadd.f32 %v207, %v5717
  %v5755 = vadd.f32 %v212, %v5719
  %v5756 = vadd.f32 %v217, %v5721
  %v5757 = vadd.f32 %v222, %v5723
  %v5758 = vadd.f32 %v227, %v5725
  %v5759 = vadd.f32 %v232, %v5727
  %v5760 = vmul.f32 %v5744, 0.5
  %v5761 = vmul.f32 %v5745, 0.5
  %v5762 = vmul.f32 %v5746, 0.5
  %v5763 = vmul.f32 %v5747, 0.5
  %v5764 = vmul.f32 %v5748, 0.5
  %v5765 = vmul.f32 %v5749, 0.5
  %v5766 = vmul.f32 %v5750, 0.5
  %v5767 = vmul.f32 %v5751, 0.5
  %v5768 = vmul.f32 %v5752, 0.5
  %v5769 = vmul.f32 %v5753, 0.5
  %v5770 = vmul.f32 %v5754, 0.5
  %v5771 = vmul.f32 %v5755, 0.5
  %v5772 = vtanh.pop %v5760
  %v5773 = vtanh.pop %v5761
  %v5774 = vtanh.pop %v5762
  %v5775 = vtanh.pop %v5763
  %v5776 = vtanh.pop %v5764
  %v5777 = vtanh.pop %v5765
  %v5778 = vtanh.pop %v5766
  %v5779 = vtanh.pop %v5767
  %v5780 = vtanh.pop %v5768
  %v5781 = vtanh.pop %v5769
  %v5782 = vtanh.pop %v5770
  %v5783 = vtanh.pop %v5771
  %v5784 = vmul.f32 %v5772, 0.5
  %v5785 = vmul.f32 %v5773, 0.5
  %v5786 = vmul.f32 %v5774, 0.5
  %v5787 = vmul.f32 %v5775, 0.5
  %v5788 = vmul.f32 %v5776, 0.5
  %v5789 = vmul.f32 %v5777, 0.5
  %v5790 = vmul.f32 %v5778, 0.5
  %v5791 = vmul.f32 %v5779, 0.5
  %v5792 = vmul.f32 %v5780, 0.5
  %v5793 = vmul.f32 %v5781, 0.5
  %v5794 = vmul.f32 %v5782, 0.5
  %v5795 = vmul.f32 %v5783, 0.5
  %v5796 = vadd.f32 %v5784, 0.5
  %v5797 = vadd.f32 %v5785, 0.5
  %v5798 = vadd.f32 %v5786, 0.5
  %v5799 = vadd.f32 %v5787, 0.5
  %v5800 = vadd.f32 %v5788, 0.5
  %v5801 = vadd.f32 %v5789, 0.5
  %v5802 = vadd.f32 %v5790, 0.5
  %v5803 = vadd.f32 %v5791, 0.5
  %v5804 = vadd.f32 %v5792, 0.5
  %v5805 = vadd.f32 %v5793, 0.5
  %v5806 = vadd.f32 %v5794, 0.5
  %v5807 = vadd.f32 %v5795, 0.5
  %v5808 = vtanh.pop %v5756
  %v5809 = vtanh.pop %v5757
  %v5810 = vtanh.pop %v5758
  %v5811 = vtanh.pop %v5759
  %5816 = vrot.lane.b32.xlu0 %v5086, 2
  %v5817 = vpop.permute.xlu0 %5816
  %5818 = vrot.lane.b32.xlu0 %v5087, 2
  %v5819 = vpop.permute.xlu0 %5818
  %5820 = vrot.lane.b32.xlu0 %v5088, 2
  %v5821 = vpop.permute.xlu0 %5820
  %5822 = vrot.lane.b32.xlu0 %v5089, 2
  %v5823 = vpop.permute.xlu0 %5822
  %v5828 = vmul.f32 %v5800, %v5817
  %v5829 = vmul.f32 %v5801, %v5819
  %v5830 = vmul.f32 %v5802, %v5821
  %v5831 = vmul.f32 %v5803, %v5823
  %v5832 = vmul.f32 %v5796, %v5808
  %v5833 = vmul.f32 %v5797, %v5809
  %v5834 = vmul.f32 %v5798, %v5810
  %v5835 = vmul.f32 %v5799, %v5811
  %v5836 = vadd.f32 %v5828, %v5832
  %v5837 = vadd.f32 %v5829, %v5833
  %v5838 = vadd.f32 %v5830, %v5834
  %v5839 = vadd.f32 %v5831, %v5835
  %v5840 = vtanh.pop %v5836
  %v5841 = vtanh.pop %v5837
  %v5842 = vtanh.pop %v5838
  %v5843 = vtanh.pop %v5839
  %v5844 = vmul.f32 %v5804, %v5840
  %v5845 = vmul.f32 %v5805, %v5841
  %v5846 = vmul.f32 %v5806, %v5842
  %v5847 = vmul.f32 %v5807, %v5843
  %5856 = vrot.lane.b32.xlu0 %v5527, 14
  %v5857 = vpop.permute.xlu0 %5856
  %5858 = vrot.lane.b32.xlu0 %v5528, 14
  %v5859 = vpop.permute.xlu0 %5858
  %5860 = vrot.lane.b32.xlu0 %v5529, 14
  %v5861 = vpop.permute.xlu0 %5860
  %5862 = vrot.lane.b32.xlu0 %v5530, 14
  %v5863 = vpop.permute.xlu0 %5862
  %5864 = vrot.lane.b32.xlu0 %v5531, 14
  %v5865 = vpop.permute.xlu0 %5864
  %5866 = vrot.lane.b32.xlu0 %v5532, 14
  %v5867 = vpop.permute.xlu0 %5866
  %5868 = vrot.lane.b32.xlu0 %v5533, 14
  %v5869 = vpop.permute.xlu0 %5868
  %5870 = vrot.lane.b32.xlu0 %v5534, 14
  %v5871 = vpop.permute.xlu0 %5870
  %5876 = vrot.lane.b32.xlu0 %v5844, 114
  %v5877 = vpop.permute.xlu0 %5876
  %5878 = vrot.lane.b32.xlu0 %v5845, 114
  %v5879 = vpop.permute.xlu0 %5878
  %5880 = vrot.lane.b32.xlu0 %v5846, 114
  %v5881 = vpop.permute.xlu0 %5880
  %5882 = vrot.lane.b32.xlu0 %v5847, 114
  %v5883 = vpop.permute.xlu0 %5882
  %5884 = vrot.lane.b32.xlu0 %v5857, 114
  %v5885 = vpop.permute.xlu0 %5884
  %5886 = vrot.lane.b32.xlu0 %v5859, 114
  %v5887 = vpop.permute.xlu0 %5886
  %5888 = vrot.lane.b32.xlu0 %v5861, 114
  %v5889 = vpop.permute.xlu0 %5888
  %5890 = vrot.lane.b32.xlu0 %v5863, 114
  %v5891 = vpop.permute.xlu0 %5890
  %5892 = vrot.lane.b32.xlu0 %v5865, 114
  %v5893 = vpop.permute.xlu0 %5892
  %5894 = vrot.lane.b32.xlu0 %v5867, 114
  %v5895 = vpop.permute.xlu0 %5894
  %5896 = vrot.lane.b32.xlu0 %v5869, 114
  %v5897 = vpop.permute.xlu0 %5896
  %5898 = vrot.lane.b32.xlu0 %v5871, 114
  %v5899 = vpop.permute.xlu0 %5898
  %5900 = vrot.lane.b32.xlu0 1.0, 114
  %v5901 = vpop.permute.xlu0 %5900
  %v5914 = vsel %vm662, %v5901, 0
  %5916 = vmatprep.subr.mxu0 0.0
  %5917 = vmatpush1.msra.mxu0 %v5877
  %5918 = vmatprep.subr.mxu0 0.0
  %5919 = vmatpush1.msra.mxu0 %v5879
  %5920 = vmatprep.subr.mxu0 0.0
  %5921 = vmatpush1.msra.mxu0 %v5881
  %5922 = vmatprep.subr.mxu0 0.0
  %5923 = vmatpush1.msra.mxu0 %v5883
  %5924 = vmatprep.subr.mxu0 0.0
  %5925 = vmatpush1.msra.mxu0 %v5885
  %5926 = vmatprep.subr.mxu0 0.0
  %5927 = vmatpush1.msra.mxu0 %v5887
  %5928 = vmatprep.subr.mxu0 0.0
  %5929 = vmatpush1.msra.mxu0 %v5889
  %5930 = vmatprep.subr.mxu0 0.0
  %5931 = vmatpush1.msra.mxu0 %v5891
  %5932 = vmatprep.subr.mxu0 0.0
  %5933 = vmatpush1.msra.mxu0 %v5893
  %5934 = vmatprep.subr.mxu0 0.0
  %5935 = vmatpush1.msra.mxu0 %v5895
  %5936 = vmatprep.subr.mxu0 0.0
  %5937 = vmatpush1.msra.mxu0 %v5897
  %5938 = vmatprep.subr.mxu0 0.0
  %5939 = vmatpush1.msra.mxu0 %v5899
  %5940 = vmatprep.subr.mxu0 0.0
  %5941 = vmatpush1.msra.mxu0 %v5914
  %5942 = vmatprep.subr.mxu0 0.0
  %5943 = vmatpush1.msra.mxu0 0.0
  %5944 = vmatprep.subr.mxu0 0.0
  %5945 = vmatpush1.msra.mxu0 0.0
  %5946 = vmatprep.subr.mxu0 0.0
  %5947 = vmatpush1.msra.mxu0 0.0
  %5948 = vmatprep.subr.mxu0 0.0
  %5949 = vmatpush1.msra.mxu0 0.0
  %5950 = vmatprep.subr.mxu0 0.0
  %5951 = vmatpush1.msra.mxu0 0.0
  %5952 = vmatprep.subr.mxu0 0.0
  %5953 = vmatpush1.msra.mxu0 0.0
  %5954 = vmatprep.subr.mxu0 0.0
  %5955 = vmatpush1.msra.mxu0 0.0
  %5956 = vmatprep.subr.mxu0 0.0
  %5957 = vmatpush1.msra.mxu0 0.0
  %5958 = vmatprep.subr.mxu0 0.0
  %5959 = vmatpush1.msra.mxu0 0.0
  %5960 = vmatprep.subr.mxu0 0.0
  %5961 = vmatpush1.msra.mxu0 0.0
  %5962 = vmatprep.subr.mxu0 0.0
  %5963 = vmatpush1.msra.mxu0 0.0
  %5964 = vmatprep.subr.mxu0 0.0
  %5965 = vmatpush1.msra.mxu0 0.0
  %5966 = vmatprep.subr.mxu0 0.0
  %5967 = vmatpush1.msra.mxu0 0.0
  %5968 = vmatprep.subr.mxu0 0.0
  %5969 = vmatpush1.msra.mxu0 0.0
  %5970 = vmatprep.subr.mxu0 0.0
  %5971 = vmatpush1.msra.mxu0 0.0
  %5972 = vmatprep.subr.mxu0 0.0
  %5973 = vmatpush1.msra.mxu0 0.0
  %5974 = vmatprep.subr.mxu0 0.0
  %5975 = vmatpush1.msra.mxu0 0.0
  %5976 = vmatprep.subr.mxu0 0.0
  %5977 = vmatpush1.msra.mxu0 0.0
  %5978 = vmatprep.subr.mxu0 0.0
  %5979 = vmatpush1.msra.mxu0 0.0
  %5980 = vmatprep.mubr.f32.mxu0 0.0
  %5981 = vmatmul.mubr.f32.gmra.mrb[0].mxu0 %v567
  %v5982 = vpop.f32.mrb[0].mxu0
  %v5983 = vadd.f32 0.0, %v5982
  %v5984 = vpop.f32.mrb[0].mxu0
  %5985 = vmatprep.mubr.f32.mxu0 0.0
  %5986 = vmatmul.mubr.f32.gmra.mrb[0].mxu0 %v570
  %v5987 = vpop.f32.mrb[0].mxu0
  %v5988 = vadd.f32 0.0, %v5987
  %v5989 = vpop.f32.mrb[0].mxu0
  %5990 = vmatprep.mubr.f32.mxu0 0.0
  %5991 = vmatmul.mubr.f32.gmra.mrb[0].mxu0 %v573
  %v5992 = vpop.f32.mrb[0].mxu0
  %v5993 = vadd.f32 0.0, %v5992
  %v5994 = vpop.f32.mrb[0].mxu0
  %5995 = vmatprep.mubr.f32.mxu0 0.0
  %5996 = vmatmul.mubr.f32.gmra.mrb[0].mxu0 %v576
  %v5997 = vpop.f32.mrb[0].mxu0
  %v5998 = vadd.f32 0.0, %v5997
  %v5999 = vpop.f32.mrb[0].mxu0
  %6000 = vmatprep.mubr.f32.mxu0 0.0
  %6001 = vmatmul.mubr.f32.gmra.mrb[0].mxu0 %v579
  %v6002 = vpop.f32.mrb[0].mxu0
  %v6003 = vadd.f32 0.0, %v6002
  %v6004 = vpop.f32.mrb[0].mxu0
  %6005 = vmatprep.mubr.f32.mxu0 0.0
  %6006 = vmatmul.mubr.f32.gmra.mrb[0].mxu0 %v582
  %v6007 = vpop.f32.mrb[0].mxu0
  %v6008 = vadd.f32 0.0, %v6007
  %v6009 = vpop.f32.mrb[0].mxu0
  %6010 = vmatprep.mubr.f32.mxu0 0.0
  %6011 = vmatmul.mubr.f32.gmra.mrb[0].mxu0 %v585
  %v6012 = vpop.f32.mrb[0].mxu0
  %v6013 = vadd.f32 0.0, %v6012
  %v6014 = vpop.f32.mrb[0].mxu0
  %6015 = vmatprep.mubr.f32.mxu0 0.0
  %6016 = vmatmul.mubr.f32.gmra.mrb[0].mxu0 %v588
  %v6017 = vpop.f32.mrb[0].mxu0
  %v6018 = vadd.f32 0.0, %v6017
  %v6019 = vpop.f32.mrb[0].mxu0
  %6020 = vmatprep.mubr.f32.mxu0 0.0
  %6021 = vmatmul.mubr.f32.gmra.mrb[0].mxu0 %v591
  %v6022 = vpop.f32.mrb[0].mxu0
  %v6023 = vadd.f32 0.0, %v6022
  %v6024 = vpop.f32.mrb[0].mxu0
  %6025 = vmatprep.mubr.f32.mxu0 0.0
  %6026 = vmatmul.mubr.f32.gmra.mrb[0].mxu0 %v594
  %v6027 = vpop.f32.mrb[0].mxu0
  %v6028 = vadd.f32 0.0, %v6027
  %v6029 = vpop.f32.mrb[0].mxu0
  %6030 = vmatprep.mubr.f32.mxu0 0.0
  %6031 = vmatmul.mubr.f32.gmra.mrb[0].mxu0 %v597
  %v6032 = vpop.f32.mrb[0].mxu0
  %v6033 = vadd.f32 0.0, %v6032
  %v6034 = vpop.f32.mrb[0].mxu0
  %6035 = vmatprep.mubr.f32.mxu0 0.0
  %6036 = vmatmul.mubr.f32.gmra.mrb[0].mxu0 %v600
  %v6037 = vpop.f32.mrb[0].mxu0
  %v6038 = vadd.f32 0.0, %v6037
  %v6039 = vpop.f32.mrb[0].mxu0
  %6040 = vmatprep.mubr.f32.mxu0 0.0
  %6041 = vmatmul.mubr.f32.gmra.mrb[0].mxu0 %v603
  %v6042 = vpop.f32.mrb[0].mxu0
  %v6043 = vadd.f32 0.0, %v6042
  %v6044 = vpop.f32.mrb[0].mxu0
  %6045 = vmatprep.mubr.f32.mxu0 0.0
  %6046 = vmatmul.mubr.f32.gmra.mrb[0].mxu0 %v606
  %v6047 = vpop.f32.mrb[0].mxu0
  %v6048 = vadd.f32 0.0, %v6047
  %v6049 = vpop.f32.mrb[0].mxu0
  %6050 = vmatprep.mubr.f32.mxu0 0.0
  %6051 = vmatmul.mubr.f32.gmra.mrb[0].mxu0 %v609
  %v6052 = vpop.f32.mrb[0].mxu0
  %v6053 = vadd.f32 0.0, %v6052
  %v6054 = vpop.f32.mrb[0].mxu0
  %6055 = vmatprep.mubr.f32.mxu0 0.0
  %6056 = vmatmul.mubr.f32.gmra.mrb[0].mxu0 %v612
  %v6057 = vpop.f32.mrb[0].mxu0
  %v6058 = vadd.f32 0.0, %v6057
  %v6059 = vpop.f32.mrb[0].mxu0
  %6060 = vmatprep.mubr.f32.mxu0 0.0
  %6061 = vmatmul.mubr.f32.gmra.mrb[0].mxu0 %v615
  %v6062 = vpop.f32.mrb[0].mxu0
  %v6063 = vadd.f32 0.0, %v6062
  %v6064 = vpop.f32.mrb[0].mxu0
  %6065 = vmatprep.mubr.f32.mxu0 0.0
  %6066 = vmatmul.mubr.f32.gmra.mrb[0].mxu0 %v618
  %v6067 = vpop.f32.mrb[0].mxu0
  %v6068 = vadd.f32 0.0, %v6067
  %v6069 = vpop.f32.mrb[0].mxu0
  %6070 = vmatprep.mubr.f32.mxu0 0.0
  %6071 = vmatmul.mubr.f32.gmra.mrb[0].mxu0 %v621
  %v6072 = vpop.f32.mrb[0].mxu0
  %v6073 = vadd.f32 0.0, %v6072
  %v6074 = vpop.f32.mrb[0].mxu0
  %6075 = vmatprep.mubr.f32.mxu0 0.0
  %6076 = vmatmul.mubr.f32.gmra.mrb[0].mxu0 %v624
  %v6077 = vpop.f32.mrb[0].mxu0
  %v6078 = vadd.f32 0.0, %v6077
  %v6079 = vpop.f32.mrb[0].mxu0
  %6080 = vmatprep.mubr.f32.mxu0 0.0
  %6081 = vmatmul.mubr.f32.gmra.mrb[0].mxu0 %v627
  %v6082 = vpop.f32.mrb[0].mxu0
  %v6083 = vadd.f32 0.0, %v6082
  %v6084 = vpop.f32.mrb[0].mxu0
  %6085 = vmatprep.mubr.f32.mxu0 0.0
  %6086 = vmatmul.mubr.f32.gmra.mrb[0].mxu0 %v630
  %v6087 = vpop.f32.mrb[0].mxu0
  %v6088 = vadd.f32 0.0, %v6087
  %v6089 = vpop.f32.mrb[0].mxu0
  %6090 = vmatprep.mubr.f32.mxu0 0.0
  %6091 = vmatmul.mubr.f32.gmra.mrb[0].mxu0 %v633
  %v6092 = vpop.f32.mrb[0].mxu0
  %v6093 = vadd.f32 0.0, %v6092
  %v6094 = vpop.f32.mrb[0].mxu0
  %6095 = vmatprep.mubr.f32.mxu0 0.0
  %6096 = vmatmul.mubr.f32.gmra.mrb[0].mxu0 %v636
  %v6097 = vpop.f32.mrb[0].mxu0
  %v6098 = vadd.f32 0.0, %v6097
  %v6099 = vpop.f32.mrb[0].mxu0
  %6100 = vmatprep.mubr.f32.mxu0 0.0
  %6101 = vmatmul.mubr.f32.gmra.mrb[0].mxu0 %v639
  %v6102 = vpop.f32.mrb[0].mxu0
  %v6103 = vadd.f32 0.0, %v6102
  %v6104 = vpop.f32.mrb[0].mxu0
  %6105 = vmatprep.mubr.f32.mxu0 0.0
  %6106 = vmatmul.mubr.f32.gmra.mrb[0].mxu0 %v642
  %v6107 = vpop.f32.mrb[0].mxu0
  %v6108 = vadd.f32 0.0, %v6107
  %v6109 = vpop.f32.mrb[0].mxu0
  %6110 = vmatprep.mubr.f32.mxu0 0.0
  %6111 = vmatmul.mubr.f32.gmra.mrb[0].mxu0 %v645
  %v6112 = vpop.f32.mrb[0].mxu0
  %v6113 = vadd.f32 0.0, %v6112
  %v6114 = vpop.f32.mrb[0].mxu0
  %6115 = vmatprep.mubr.f32.mxu0 0.0
  %6116 = vmatmul.mubr.f32.gmra.mrb[0].mxu0 %v648
  %v6117 = vpop.f32.mrb[0].mxu0
  %v6118 = vadd.f32 0.0, %v6117
  %v6119 = vpop.f32.mrb[0].mxu0
  %6120 = vmatprep.mubr.f32.mxu0 0.0
  %6121 = vmatmul.mubr.f32.gmra.mrb[0].mxu0 %v651
  %v6122 = vpop.f32.mrb[0].mxu0
  %v6123 = vadd.f32 0.0, %v6122
  %v6124 = vpop.f32.mrb[0].mxu0
  %6125 = vmatprep.mubr.f32.mxu0 0.0
  %6126 = vmatmul.mubr.f32.gmra.mrb[0].mxu0 %v654
  %v6127 = vpop.f32.mrb[0].mxu0
  %v6128 = vadd.f32 0.0, %v6127
  %v6129 = vpop.f32.mrb[0].mxu0
  %6130 = vmatprep.mubr.f32.mxu0 0.0
  %6131 = vmatmul.mubr.f32.gmra.mrb[0].mxu0 %v657
  %v6132 = vpop.f32.mrb[0].mxu0
  %v6133 = vadd.f32 0.0, %v6132
  %v6134 = vpop.f32.mrb[0].mxu0
  %6135 = vmatprep.mubr.f32.mxu0 0.0
  %6136 = vmatmul.mubr.f32.gmra.mrb[0].mxu0 %v660
  %v6137 = vpop.f32.mrb[0].mxu0
  %v6138 = vadd.f32 0.0, %v6137
  %v6139 = vpop.f32.mrb[0].mxu0
  %6140 = vdwg.mxu0
  %v6141 = vmul.f32 %v5983, 0.5
  %v6142 = vmul.f32 %v5988, 0.5
  %v6143 = vmul.f32 %v5993, 0.5
  %v6144 = vmul.f32 %v5998, 0.5
  %v6145 = vmul.f32 %v6003, 0.5
  %v6146 = vmul.f32 %v6008, 0.5
  %v6147 = vmul.f32 %v6013, 0.5
  %v6148 = vmul.f32 %v6018, 0.5
  %v6149 = vmul.f32 %v6023, 0.5
  %v6150 = vmul.f32 %v6028, 0.5
  %v6151 = vmul.f32 %v6033, 0.5
  %v6152 = vmul.f32 %v6038, 0.5
  %v6153 = vmul.f32 %v6043, 0.5
  %v6154 = vmul.f32 %v6048, 0.5
  %v6155 = vmul.f32 %v6053, 0.5
  %v6156 = vmul.f32 %v6058, 0.5
  %v6157 = vmul.f32 %v6063, 0.5
  %v6158 = vmul.f32 %v6068, 0.5
  %v6159 = vmul.f32 %v6073, 0.5
  %v6160 = vmul.f32 %v6078, 0.5
  %v6161 = vmul.f32 %v6083, 0.5
  %v6162 = vmul.f32 %v6088, 0.5
  %v6163 = vmul.f32 %v6093, 0.5
  %v6164 = vmul.f32 %v6098, 0.5
  %v6165 = vtanh.pop %v6141
  %v6166 = vtanh.pop %v6142
  %v6167 = vtanh.pop %v6143
  %v6168 = vtanh.pop %v6144
  %v6169 = vtanh.pop %v6145
  %v6170 = vtanh.pop %v6146
  %v6171 = vtanh.pop %v6147
  %v6172 = vtanh.pop %v6148
  %v6173 = vtanh.pop %v6149
  %v6174 = vtanh.pop %v6150
  %v6175 = vtanh.pop %v6151
  %v6176 = vtanh.pop %v6152
  %v6177 = vtanh.pop %v6153
  %v6178 = vtanh.pop %v6154
  %v6179 = vtanh.pop %v6155
  %v6180 = vtanh.pop %v6156
  %v6181 = vtanh.pop %v6157
  %v6182 = vtanh.pop %v6158
  %v6183 = vtanh.pop %v6159
  %v6184 = vtanh.pop %v6160
  %v6185 = vtanh.pop %v6161
  %v6186 = vtanh.pop %v6162
  %v6187 = vtanh.pop %v6163
  %v6188 = vtanh.pop %v6164
  %v6189 = vmul.f32 %v6165, 0.5
  %v6190 = vmul.f32 %v6166, 0.5
  %v6191 = vmul.f32 %v6167, 0.5
  %v6192 = vmul.f32 %v6168, 0.5
  %v6193 = vmul.f32 %v6169, 0.5
  %v6194 = vmul.f32 %v6170, 0.5
  %v6195 = vmul.f32 %v6171, 0.5
  %v6196 = vmul.f32 %v6172, 0.5
  %v6197 = vmul.f32 %v6173, 0.5
  %v6198 = vmul.f32 %v6174, 0.5
  %v6199 = vmul.f32 %v6175, 0.5
  %v6200 = vmul.f32 %v6176, 0.5
  %v6201 = vmul.f32 %v6177, 0.5
  %v6202 = vmul.f32 %v6178, 0.5
  %v6203 = vmul.f32 %v6179, 0.5
  %v6204 = vmul.f32 %v6180, 0.5
  %v6205 = vmul.f32 %v6181, 0.5
  %v6206 = vmul.f32 %v6182, 0.5
  %v6207 = vmul.f32 %v6183, 0.5
  %v6208 = vmul.f32 %v6184, 0.5
  %v6209 = vmul.f32 %v6185, 0.5
  %v6210 = vmul.f32 %v6186, 0.5
  %v6211 = vmul.f32 %v6187, 0.5
  %v6212 = vmul.f32 %v6188, 0.5
  %v6213 = vadd.f32 %v6189, 0.5
  %v6214 = vadd.f32 %v6190, 0.5
  %v6215 = vadd.f32 %v6191, 0.5
  %v6216 = vadd.f32 %v6192, 0.5
  %v6217 = vadd.f32 %v6193, 0.5
  %v6218 = vadd.f32 %v6194, 0.5
  %v6219 = vadd.f32 %v6195, 0.5
  %v6220 = vadd.f32 %v6196, 0.5
  %v6221 = vadd.f32 %v6197, 0.5
  %v6222 = vadd.f32 %v6198, 0.5
  %v6223 = vadd.f32 %v6199, 0.5
  %v6224 = vadd.f32 %v6200, 0.5
  %v6225 = vadd.f32 %v6201, 0.5
  %v6226 = vadd.f32 %v6202, 0.5
  %v6227 = vadd.f32 %v6203, 0.5
  %v6228 = vadd.f32 %v6204, 0.5
  %v6229 = vadd.f32 %v6205, 0.5
  %v6230 = vadd.f32 %v6206, 0.5
  %v6231 = vadd.f32 %v6207, 0.5
  %v6232 = vadd.f32 %v6208, 0.5
  %v6233 = vadd.f32 %v6209, 0.5
  %v6234 = vadd.f32 %v6210, 0.5
  %v6235 = vadd.f32 %v6211, 0.5
  %v6236 = vadd.f32 %v6212, 0.5
  %v6237 = vtanh.pop %v6103
  %v6238 = vtanh.pop %v6108
  %v6239 = vtanh.pop %v6113
  %v6240 = vtanh.pop %v6118
  %v6241 = vtanh.pop %v6123
  %v6242 = vtanh.pop %v6128
  %v6243 = vtanh.pop %v6133
  %v6244 = vtanh.pop %v6138
  %v6245 = vmul.f32 %v6221, %v5511
  %v6246 = vmul.f32 %v6222, %v5512
  %v6247 = vmul.f32 %v6223, %v5513
  %v6248 = vmul.f32 %v6224, %v5514
  %v6249 = vmul.f32 %v6225, %v5515
  %v6250 = vmul.f32 %v6226, %v5516
  %v6251 = vmul.f32 %v6227, %v5517
  %v6252 = vmul.f32 %v6228, %v5518
  %v6253 = vmul.f32 %v6213, %v6237
  %v6254 = vmul.f32 %v6214, %v6238
  %v6255 = vmul.f32 %v6215, %v6239
  %v6256 = vmul.f32 %v6216, %v6240
  %v6257 = vmul.f32 %v6217, %v6241
  %v6258 = vmul.f32 %v6218, %v6242
  %v6259 = vmul.f32 %v6219, %v6243
  %v6260 = vmul.f32 %v6220, %v6244
  %v6261 = vadd.f32 %v6245, %v6253
  %v6262 = vadd.f32 %v6246, %v6254
  %v6263 = vadd.f32 %v6247, %v6255
  %v6264 = vadd.f32 %v6248, %v6256
  %v6265 = vadd.f32 %v6249, %v6257
  %v6266 = vadd.f32 %v6250, %v6258
  %v6267 = vadd.f32 %v6251, %v6259
  %v6268 = vadd.f32 %v6252, %v6260
  %v6269 = vtanh.pop %v6261
  %v6270 = vtanh.pop %v6262
  %v6271 = vtanh.pop %v6263
  %v6272 = vtanh.pop %v6264
  %v6273 = vtanh.pop %v6265
  %v6274 = vtanh.pop %v6266
  %v6275 = vtanh.pop %v6267
  %v6276 = vtanh.pop %v6268
  %v6277 = vmul.f32 %v6229, %v6269
  %v6278 = vmul.f32 %v6230, %v6270
  %v6279 = vmul.f32 %v6231, %v6271
  %v6280 = vmul.f32 %v6232, %v6272
  %v6281 = vmul.f32 %v6233, %v6273
  %v6282 = vmul.f32 %v6234, %v6274
  %v6283 = vmul.f32 %v6235, %v6275
  %v6284 = vmul.f32 %v6236, %v6276
  %v6285 = vld [vmem:[%s4] sm:$0xff]
  %vm6286 = vcmask 531456
  %v6288 = vsel %vm6286, %v6285, 0
  %6290 = vmatprep.subr.mxu0 0.0
  %6291 = vmatpush1.msra.mxu0 %v6277
  %6292 = vmatprep.subr.mxu0 0.0
  %6293 = vmatpush1.msra.mxu0 %v6278
  %6294 = vmatprep.subr.mxu0 0.0
  %6295 = vmatpush1.msra.mxu0 %v6279
  %6296 = vmatprep.subr.mxu0 0.0
  %6297 = vmatpush1.msra.mxu0 %v6280
  %6298 = vmatprep.subr.mxu0 0.0
  %6299 = vmatpush1.msra.mxu0 %v6281
  %6300 = vmatprep.subr.mxu0 0.0
  %6301 = vmatpush1.msra.mxu0 %v6282
  %6302 = vmatprep.subr.mxu0 0.0
  %6303 = vmatpush1.msra.mxu0 %v6283
  %6304 = vmatprep.subr.mxu0 0.0
  %6305 = vmatpush1.msra.mxu0 %v6284
  %6306 = vmatprep.subr.mxu0 0.0
  %6307 = vmatpush1.msra.mxu0 %v664
  %6308 = vmatprep.subr.mxu0 0.0
  %6309 = vmatpush1.msra.mxu0 0.0
  %6310 = vmatprep.subr.mxu0 0.0
  %6311 = vmatpush1.msra.mxu0 0.0
  %6312 = vmatprep.subr.mxu0 0.0
  %6313 = vmatpush1.msra.mxu0 0.0
  %6314 = vmatprep.subr.mxu0 0.0
  %6315 = vmatpush1.msra.mxu0 0.0
  %6316 = vmatprep.subr.mxu0 0.0
  %6317 = vmatpush1.msra.mxu0 0.0
  %6318 = vmatprep.subr.mxu0 0.0
  %6319 = vmatpush1.msra.mxu0 0.0
  %6320 = vmatprep.subr.mxu0 0.0
  %6321 = vmatpush1.msra.mxu0 0.0
  %6322 = vmatprep.subr.mxu0 0.0
  %6323 = vmatpush1.msra.mxu0 0.0
  %6324 = vmatprep.subr.mxu0 0.0
  %6325 = vmatpush1.msra.mxu0 0.0
  %6326 = vmatprep.subr.mxu0 0.0
  %6327 = vmatpush1.msra.mxu0 0.0
  %6328 = vmatprep.subr.mxu0 0.0
  %6329 = vmatpush1.msra.mxu0 0.0
  %6330 = vmatprep.subr.mxu0 0.0
  %6331 = vmatpush1.msra.mxu0 0.0
  %6332 = vmatprep.subr.mxu0 0.0
  %6333 = vmatpush1.msra.mxu0 0.0
  %6334 = vmatprep.subr.mxu0 0.0
  %6335 = vmatpush1.msra.mxu0 0.0
  %6336 = vmatprep.subr.mxu0 0.0
  %6337 = vmatpush1.msra.mxu0 0.0
  %6338 = vmatprep.subr.mxu0 0.0
  %6339 = vmatpush1.msra.mxu0 0.0
  %6340 = vmatprep.subr.mxu0 0.0
  %6341 = vmatpush1.msra.mxu0 0.0
  %6342 = vmatprep.subr.mxu0 0.0
  %6343 = vmatpush1.msra.mxu0 0.0
  %6344 = vmatprep.subr.mxu0 0.0
  %6345 = vmatpush1.msra.mxu0 0.0
  %6346 = vmatprep.subr.mxu0 0.0
  %6347 = vmatpush1.msra.mxu0 0.0
  %6348 = vmatprep.subr.mxu0 0.0
  %6349 = vmatpush1.msra.mxu0 0.0
  %6350 = vmatprep.subr.mxu0 0.0
  %6351 = vmatpush1.msra.mxu0 0.0
  %6352 = vmatprep.subr.mxu0 0.0
  %6353 = vmatpush1.msra.mxu0 0.0
  %6354 = vmatprep.mubr.f32.mxu0 0.0
  %6355 = vmatmul.mubr.f32.gmra.mrb[0].mxu0 %v6288
  %v6356 = vpop.f32.mrb[0].mxu0
  %v6357 = vadd.f32 0.0, %v6356
  %v6358 = vpop.f32.mrb[0].mxu0
  %6359 = vdwg.mxu0
  %vm6360 = vcmask 15360
  %6361 = vst.msk [vmem:[%s5] sm:$0xff] %vm6360, %v6357
  // Predicated region
  $region22: #{lstm_01_forward.1} parent=0 // pred_check
    _
  $region23: #{lstm_01_forward.1} parent=0 // pred_check_branch
    %6363 = sbr.rel (0) target = $region25
  $region24: #{lstm_01_forward.1} parent=0 // pred_region
    _
  $region25: #{lstm_01_forward.1} parent=0 // pred_fallthru
    _
  // Predicated region
  $region26: #{lstm_01_forward.1} parent=0 // pred_check
    _
  $region27: #{lstm_01_forward.1} parent=0 // pred_check_branch
    %6365 = sbr.rel (0) target = $region29
  $region28: #{lstm_01_forward.1} parent=0 // pred_region
    _
  $region29: #{lstm_01_forward.1} parent=0 // pred_fallthru
    _

</llo_original>
